<compile_context>
chip_gen: v7x
topology: tpu7x:2x2x1
jax: 0.10.0
libtpu: 0.0.40
codegen_flags: <defaults>
</compile_context>

<pallas_src>
import functools

import jax
import jax.numpy as jnp
import numpy as np
from jax.experimental import pallas as pl
from jax.experimental.pallas import tpu as pltpu


def fused_gat_kernel(x_ref, mb_ref, ones_ref, eye_ref,
                     w1_ref, as1_ref, ad1_ref, b1_ref,
                     w2_ref, as2_ref, ad2_ref, b2_ref,
                     w3_ref, as3_ref, ad3_ref, b3_ref,
                     out_ref,
                     h1_ref, h2_ref, xp_ref,
                     *, n_dst, heads12, f12, heads3, f3):
    n_src = x_ref.shape[0]
    slab = xp_ref.shape[1]

    # Zero the padded src rows of the activation scratch ONCE.  VMEM scratch is
    # uninitialized; these rows feed the next layer's x @ W matmul / a_src logits, and
    # NaN or Inf garbage there would poison every output row (0 * NaN = NaN in the
    # p @ xh aggregation and in the row-max reduction).
    if n_src > n_dst:
        pad_zeros = jnp.zeros((n_src - n_dst, slab), jnp.float32)
        h1_ref[n_dst:, :] = pad_zeros
        h2_ref[n_dst:, :] = pad_zeros

    def gat_layer(x, w_ref, asrc_ref, adst_ref, bias_ref, heads, f_out, apply_relu):
        # Linear transform for all heads (MXU).
        xp = jnp.dot(x, w_ref[...], preferred_element_type=jnp.float32)       # (n_src, H*F)
        # All per-head attention logit pieces via two small MXU matmuls.
        a_dst = jnp.dot(xp[:n_dst, :], adst_ref[...],
                        preferred_element_type=jnp.float32)                   # (n_dst, H)
        a_src_t = jax.lax.dot_general(                                        # (H, n_src)
            asrc_ref[...], xp,
            dimension_numbers=(((1,), (1,)), ((), ())),
            preferred_element_type=jnp.float32)
        # Stage xp in VMEM; the head loop reads narrow per-head slices from the ref
        # instead of holding the full 16-vreg xp value live across all heads.
        xp_ref[...] = xp

        y_full = None
        for h in range(heads):                                                # H is 4 or 1
            # s[i, j] = a_dst[i, h] + a_src[j, h]   (dst rows x 128 src lanes)
            s = a_dst[:, h:h + 1] + a_src_t[h:h + 1, :]                       # (n_dst, n_src)
            s = jnp.maximum(s, 0.2 * s)                                       # LeakyReLU(0.2)
            s = s + mb_ref[...]                                               # additive edge mask
            row_max = jnp.max(s, axis=-1, keepdims=True)                      # exact row max
            p = jnp.exp(s - row_max)                                          # unnormalized alpha
            xh = xp_ref[:, h * f_out:(h + 1) * f_out]                         # (n_src, F) from VMEM
            y = jnp.dot(p, xh, preferred_element_type=jnp.float32)            # (n_dst, F)
            # Softmax denominator on the (idle) MXU instead of an XLU row-sum.
            denom = jnp.dot(p, ones_ref[...],
                            preferred_element_type=jnp.float32)               # (n_dst, 8)
            y = y * pl.reciprocal(denom[:, 0:1], approx=False)                # exact reciprocal
            if heads == 1:
                y_full = y                                                    # already a full slab
            else:
                # Place this head's F columns at lane offset h*F via a tiny identity
                # matmul (idle MXU) and accumulate, so the layer store is ONE unmasked
                # 128-lane slab instead of H narrow masked column stores.
                placed = jnp.dot(y, eye_ref[h * f_out:(h + 1) * f_out, :],
                                 preferred_element_type=jnp.float32)          # (n_dst, H*F)
                y_full = placed if y_full is None else y_full + placed
        y_full = y_full + bias_ref[...]
        if apply_relu:
            y_full = jnp.maximum(y_full, 0.0)
        return y_full

    # conv1 (4 heads) -> ReLU -> dropout (identity in eval mode)
    h1_ref[:n_dst, :] = gat_layer(x_ref[...], w1_ref, as1_ref, ad1_ref, b1_ref,
                                  heads12, f12, True)
    # conv2 (4 heads) -> ReLU -> dropout (identity in eval mode)
    h2_ref[:n_dst, :] = gat_layer(h1_ref[...], w2_ref, as2_ref, ad2_ref, b2_ref,
                                  heads12, f12, True)
    # conv3 (1 head classifier, no ReLU)
    out_ref[...] = gat_layer(h2_ref[...], w3_ref, as3_ref, ad3_ref, b3_ref,
                             heads3, f3, False)


def gat_forward(x_pad, mask_bias, ones_rhs, eye_mat, kp1, kp2, kp3):
    """Single fused pallas_call for the whole 3-layer GAT forward pass."""
    n_src = x_pad.shape[0]
    n_dst = mask_bias.shape[0]
    heads12 = kp1[1].shape[0]
    f12 = kp1[1].shape[1] // heads12
    heads3 = kp3[1].shape[0]
    f3 = kp3[1].shape[1] // heads3
    slab = heads12 * f12

    kernel = functools.partial(fused_gat_kernel, n_dst=n_dst,
                               heads12=heads12, f12=f12, heads3=heads3, f3=f3)

    args = (x_pad, mask_bias, ones_rhs, eye_mat) + tuple(kp1) + tuple(kp2) + tuple(kp3)

    def spec(a):
        shp = a.shape
        return pl.BlockSpec(shp, lambda *_, r=len(shp): (0,) * r)

    return pl.pallas_call(
        kernel,
        out_shape=jax.ShapeDtypeStruct((n_dst, heads3 * f3), jnp.float32),
        grid=(1,),
        in_specs=[spec(a) for a in args],
        out_specs=pl.BlockSpec((n_dst, heads3 * f3), lambda *_: (0, 0)),
        scratch_shapes=[pltpu.VMEM((n_src, slab), jnp.float32),   # h1 (layer-1 activations)
                        pltpu.VMEM((n_src, slab), jnp.float32),   # h2 (layer-2 activations)
                        pltpu.VMEM((n_src, slab), jnp.float32)],  # xp staging buffer
        compiler_params=pltpu.CompilerParams(
            dimension_semantics=("arbitrary",)),
    )(*args)


# ---------------- pure-JAX reference (for correctness check) ----------------
def gatconv_ref(x, w, att_src, att_dst, bias, adj, apply_relu):
    n = x.shape[0]
    heads, f_out = att_src.shape
    xp = (x @ w).reshape(n, heads, f_out)
    a_src = jnp.einsum('nhf,hf->nh', xp, att_src)
    a_dst = jnp.einsum('nhf,hf->nh', xp, att_dst)
    s = a_dst[:, None, :] + a_src[None, :, :]                 # (N_dst, N_src, H)
    s = jnp.where(s > 0, s, 0.2 * s)
    mask = adj[:, :, None] > 0
    s = jnp.where(mask, s, -jnp.inf)
    alpha = jax.nn.softmax(s, axis=1)
    alpha = jnp.where(mask, alpha, 0.0)
    out = jnp.einsum('dsh,shf->dhf', alpha, xp).reshape(n, heads * f_out)
    out = out + bias
    if apply_relu:
        out = jnp.maximum(out, 0.0)
    return out


def init_gatconv(key, f_in, f_out, heads):
    k1, k2, k3, k4 = jax.random.split(key, 4)
    scale = 1.0 / np.sqrt(f_in)
    w = scale * jax.random.normal(k1, (f_in, heads * f_out), jnp.float32)
    att_src = 0.1 * jax.random.normal(k2, (heads, f_out), jnp.float32)
    att_dst = 0.1 * jax.random.normal(k3, (heads, f_out), jnp.float32)
    bias = 0.01 * jax.random.normal(k4, (1, heads * f_out), jnp.float32)
    return w, att_src, att_dst, bias


def pack_layer(params, f_out_pad=None):
    """Build kernel-side (w, asrc_mat, adst_mat, bias), padding F_out if requested."""
    w, att_src, att_dst, bias = params
    heads, f_out = att_src.shape
    fp = f_out if f_out_pad is None else f_out_pad
    w_np = np.asarray(w)
    b_np = np.asarray(bias)
    asrc_np = np.asarray(att_src)
    adst_np = np.asarray(att_dst)

    asrc_mat = np.zeros((heads, heads * fp), np.float32)
    adst_mat = np.zeros((heads * fp, heads), np.float32)
    w_pad = np.zeros((w_np.shape[0], heads * fp), np.float32)
    b_pad = np.zeros((1, heads * fp), np.float32)
    for h in range(heads):
        asrc_mat[h, h * fp:h * fp + f_out] = asrc_np[h]
        adst_mat[h * fp:h * fp + f_out, h] = adst_np[h]
        w_pad[:, h * fp:h * fp + f_out] = w_np[:, h * f_out:(h + 1) * f_out]
        b_pad[:, h * fp:h * fp + f_out] = b_np[:, h * f_out:(h + 1) * f_out]
    return (jnp.asarray(w_pad), jnp.asarray(asrc_mat),
            jnp.asarray(adst_mat), jnp.asarray(b_pad))


if __name__ == "__main__":
    key = jax.random.PRNGKey(0)
    N = 64           # num nodes
    N_DST = 64       # dst-row extent (multiple of 8 is enough on the sublane axis)
    N_SRC = 128      # lane-dense src axis
    F_IN = 16        # num_node_features
    HID = 32         # hidden_dim (kept small)
    CLASSES = 8      # num_classes
    HEADS = 4
    F3_PAD = 128     # lane-dense classifier output (sliced back to CLASSES)

    k_e, k_x, k_p = jax.random.split(key, 3)

    # Graph: ring + random edges.  PyG edge_index layout: row0 = src, row1 = dst.
    ring_src = jnp.arange(N, dtype=jnp.int32)
    ring_dst = (ring_src + 1) % N
    rnd_src = jax.random.randint(k_e, (N,), 0, N, dtype=jnp.int32)
    rnd_dst = jax.random.randint(jax.random.fold_in(k_e, 1), (N,), 0, N, dtype=jnp.int32)
    edge_index = jnp.stack([jnp.concatenate([ring_src, rnd_src]),
                            jnp.concatenate([ring_dst, rnd_dst])])      # (2, 128)

    x = jax.random.normal(k_x, (N, F_IN), jnp.float32)

    # Dense adjacency mask adj[dst, src] (+ self loops, PyG default).
    adj = jnp.zeros((N, N), jnp.float32).at[edge_index[1], edge_index[0]].set(1.0)
    adj = jnp.maximum(adj, jnp.eye(N, dtype=jnp.float32))

    # Kernel-side tensors: src axis padded to 128 lanes, dst axis kept at 64 rows.
    x_pad = jnp.zeros((N_SRC, F_IN), jnp.float32).at[:N].set(x)
    adj_dst = jnp.zeros((N_DST, N_SRC), jnp.float32).at[:N, :N].set(adj)   # (dst, src)
    # Additive edge mask (hoisted out of the kernel's hot loop).
    mask_bias = jnp.where(adj_dst > 0, 0.0, -1e30).astype(jnp.float32)
    ones_rhs = jnp.ones((N_SRC, 8), jnp.float32)          # MXU RHS for the softmax row-sum
    eye_mat = jnp.eye(HEADS * HID, dtype=jnp.float32)     # head-slab placement matrix

    p1 = init_gatconv(jax.random.fold_in(k_p, 1), F_IN, HID, HEADS)
    p2 = init_gatconv(jax.random.fold_in(k_p, 2), HID * HEADS, HID, HEADS)
    p3 = init_gatconv(jax.random.fold_in(k_p, 3), HID * HEADS, CLASSES, 1)

    kp1 = pack_layer(p1)                       # (w, asrc_mat, adst_mat, bias)
    kp2 = pack_layer(p2)
    kp3 = pack_layer(p3, f_out_pad=F3_PAD)     # classifier padded to 128 lanes

    fwd = jax.jit(gat_forward)
    out_pad = fwd(x_pad, mask_bias, ones_rhs, eye_mat, kp1, kp2, kp3)
    jax.block_until_ready(out_pad)
    out = out_pad[:N, :CLASSES]

    # Reference check (unpadded f32, exact softmax).  Tolerance tightened from 2e-2
    # (approx reciprocal removed); remaining slack covers MXU f32-pass differences
    # between the XLA-compiled reference and the Mosaic kernel.
    ref = x
    ref = gatconv_ref(ref, *p1, adj, True)
    ref = gatconv_ref(ref, *p2, adj, True)
    ref = gatconv_ref(ref, *p3, adj, False)
    np.testing.assert_allclose(np.asarray(out), np.asarray(ref), rtol=5e-3, atol=5e-3)

    print("KERNEL_OK")
</pallas_src>

<mosaic_0001>
module attributes {stable_mosaic.version = 11 : i64} {
  func.func @fused_gat_kernel(%arg0: i32, %arg1: memref<128x16xf32, #tpu.memory_space<vmem>>, %arg2: memref<64x128xf32, #tpu.memory_space<vmem>>, %arg3: memref<128x8xf32, #tpu.memory_space<vmem>>, %arg4: memref<128x128xf32, #tpu.memory_space<vmem>>, %arg5: memref<16x128xf32, #tpu.memory_space<vmem>>, %arg6: memref<4x128xf32, #tpu.memory_space<vmem>>, %arg7: memref<128x4xf32, #tpu.memory_space<vmem>>, %arg8: memref<1x128xf32, #tpu.memory_space<vmem>>, %arg9: memref<128x128xf32, #tpu.memory_space<vmem>>, %arg10: memref<4x128xf32, #tpu.memory_space<vmem>>, %arg11: memref<128x4xf32, #tpu.memory_space<vmem>>, %arg12: memref<1x128xf32, #tpu.memory_space<vmem>>, %arg13: memref<128x128xf32, #tpu.memory_space<vmem>>, %arg14: memref<1x128xf32, #tpu.memory_space<vmem>>, %arg15: memref<128x1xf32, #tpu.memory_space<vmem>>, %arg16: memref<1x128xf32, #tpu.memory_space<vmem>>, %arg17: memref<64x128xf32, #tpu.memory_space<vmem>>, %arg18: memref<128x128xf32, #tpu.memory_space<vmem>>, %arg19: memref<128x128xf32, #tpu.memory_space<vmem>>, %arg20: memref<128x128xf32, #tpu.memory_space<vmem>>) attributes {dimension_semantics = [#tpu.dimension_semantics<arbitrary>], iteration_bounds = array<i64: 1>, scalar_prefetch = 0 : i64, scratch_operands = 3 : i64, tpu.core_type = #tpu.core_type<tc>, window_params = [{pipeline_mode = #tpu.pipeline_mode<synchronous>, transform_indices = @transform_0, window_bounds = array<i64: 128, 16>}, {pipeline_mode = #tpu.pipeline_mode<synchronous>, transform_indices = @transform_1, window_bounds = array<i64: 64, 128>}, {pipeline_mode = #tpu.pipeline_mode<synchronous>, transform_indices = @transform_2, window_bounds = array<i64: 128, 8>}, {pipeline_mode = #tpu.pipeline_mode<synchronous>, transform_indices = @transform_3, window_bounds = array<i64: 128, 128>}, {pipeline_mode = #tpu.pipeline_mode<synchronous>, transform_indices = @transform_4, window_bounds = array<i64: 16, 128>}, {pipeline_mode = #tpu.pipeline_mode<synchronous>, transform_indices = @transform_5, window_bounds = array<i64: 4, 128>}, {pipeline_mode = #tpu.pipeline_mode<synchronous>, transform_indices = @transform_6, window_bounds = array<i64: 128, 4>}, {pipeline_mode = #tpu.pipeline_mode<synchronous>, transform_indices = @transform_7, window_bounds = array<i64: 1, 128>}, {pipeline_mode = #tpu.pipeline_mode<synchronous>, transform_indices = @transform_8, window_bounds = array<i64: 128, 128>}, {pipeline_mode = #tpu.pipeline_mode<synchronous>, transform_indices = @transform_9, window_bounds = array<i64: 4, 128>}, {pipeline_mode = #tpu.pipeline_mode<synchronous>, transform_indices = @transform_10, window_bounds = array<i64: 128, 4>}, {pipeline_mode = #tpu.pipeline_mode<synchronous>, transform_indices = @transform_11, window_bounds = array<i64: 1, 128>}, {pipeline_mode = #tpu.pipeline_mode<synchronous>, transform_indices = @transform_12, window_bounds = array<i64: 128, 128>}, {pipeline_mode = #tpu.pipeline_mode<synchronous>, transform_indices = @transform_13, window_bounds = array<i64: 1, 128>}, {pipeline_mode = #tpu.pipeline_mode<synchronous>, transform_indices = @transform_14, window_bounds = array<i64: 128, 1>}, {pipeline_mode = #tpu.pipeline_mode<synchronous>, transform_indices = @transform_15, window_bounds = array<i64: 1, 128>}, {pipeline_mode = #tpu.pipeline_mode<synchronous>, transform_indices = @transform_16, window_bounds = array<i64: 64, 128>}]} {
    %cst = arith.constant 0.000000e+00 : f32
    %0 = vector.broadcast %cst : f32 to vector<64x128xf32>
    %c64 = arith.constant 64 : index
    %c0 = arith.constant 0 : index
    %1 = vector.load %arg18[%c64, %c0] : memref<128x128xf32, #tpu.memory_space<vmem>>, vector<64x128xf32>
    tpu.vector_store %arg18[%c64, %c0], %0 {strides = array<i32>} : memref<128x128xf32, #tpu.memory_space<vmem>>, vector<64x128xf32>,
    %c64_0 = arith.constant 64 : index
    %c0_1 = arith.constant 0 : index
    %2 = vector.load %arg19[%c64_0, %c0_1] : memref<128x128xf32, #tpu.memory_space<vmem>>, vector<64x128xf32>
    tpu.vector_store %arg19[%c64_0, %c0_1], %0 {strides = array<i32>} : memref<128x128xf32, #tpu.memory_space<vmem>>, vector<64x128xf32>,
    %c0_2 = arith.constant 0 : index
    %c0_3 = arith.constant 0 : index
    %3 = vector.load %arg1[%c0_2, %c0_3] : memref<128x16xf32, #tpu.memory_space<vmem>>, vector<128x16xf32>
    %c0_4 = arith.constant 0 : index
    %c0_5 = arith.constant 0 : index
    %4 = vector.load %arg5[%c0_4, %c0_5] : memref<16x128xf32, #tpu.memory_space<vmem>>, vector<16x128xf32>
    %cst_6 = arith.constant dense<0.000000e+00> : vector<128x128xf32>
    %5 = tpu.matmul %3, %4, %cst_6 {dimension_numbers = #tpu.dot_dimension_numbers<[1], [0], [0], [1], [0, 0, 1, 1], [], []>} : vector<128x16xf32>, vector<16x128xf32>, vector<128x128xf32> -> vector<128x128xf32>
    %6 = vector.extract_strided_slice %5 {offsets = [0, 0], sizes = [64, 128], strides = [1, 1]} : vector<128x128xf32> to vector<64x128xf32>
    %c0_7 = arith.constant 0 : index
    %c0_8 = arith.constant 0 : index
    %7 = vector.load %arg7[%c0_7, %c0_8] : memref<128x4xf32, #tpu.memory_space<vmem>>, vector<128x4xf32>
    %cst_9 = arith.constant dense<0.000000e+00> : vector<64x4xf32>
    %8 = tpu.matmul %6, %7, %cst_9 {dimension_numbers = #tpu.dot_dimension_numbers<[1], [0], [0], [1], [0, 0, 1, 1], [], []>} : vector<64x128xf32>, vector<128x4xf32>, vector<64x4xf32> -> vector<64x4xf32>
    %c0_10 = arith.constant 0 : index
    %c0_11 = arith.constant 0 : index
    %9 = vector.load %arg6[%c0_10, %c0_11] : memref<4x128xf32, #tpu.memory_space<vmem>>, vector<4x128xf32>
    %cst_12 = arith.constant dense<0.000000e+00> : vector<4x128xf32>
    %10 = tpu.matmul %9, %5, %cst_12 {dimension_numbers = #tpu.dot_dimension_numbers<[1], [1], [0], [0], [0, 0, 1, 0], [], []>} : vector<4x128xf32>, vector<128x128xf32>, vector<4x128xf32> -> vector<4x128xf32>
    %c0_13 = arith.constant 0 : index
    %c0_14 = arith.constant 0 : index
    %11 = vector.load %arg20[%c0_13, %c0_14] : memref<128x128xf32, #tpu.memory_space<vmem>>, vector<128x128xf32>
    tpu.vector_store %arg20[%c0_13, %c0_14], %5 {strides = array<i32>} : memref<128x128xf32, #tpu.memory_space<vmem>>, vector<128x128xf32>,
    %12 = vector.extract_strided_slice %8 {offsets = [0, 0], sizes = [64, 1], strides = [1, 1]} : vector<64x4xf32> to vector<64x1xf32>
    %13 = vector.extract_strided_slice %10 {offsets = [0, 0], sizes = [1, 128], strides = [1, 1]} : vector<4x128xf32> to vector<1x128xf32>
    %14 = vector.broadcast %12 : vector<64x1xf32> to vector<64x128xf32>
    %15 = vector.broadcast %13 : vector<1x128xf32> to vector<64x128xf32>
    %16 = arith.addf %14, %15 : vector<64x128xf32>
    %cst_15 = arith.constant 2.000000e-01 : f32
    %17 = vector.broadcast %cst_15 : f32 to vector<64x128xf32>
    %18 = arith.mulf %17, %16 : vector<64x128xf32>
    %19 = arith.maximumf %16, %18 : vector<64x128xf32>
    %c0_16 = arith.constant 0 : index
    %c0_17 = arith.constant 0 : index
    %20 = vector.load %arg2[%c0_16, %c0_17] : memref<64x128xf32, #tpu.memory_space<vmem>>, vector<64x128xf32>
    %21 = arith.addf %19, %20 : vector<64x128xf32>
    %cst_18 = arith.constant dense<0xFF800000> : vector<64xf32>
    %22 = vector.multi_reduction <maximumf>, %21, %cst_18 [1] : vector<64x128xf32> to vector<64xf32>
    %23 = vector.shape_cast %22 : vector<64xf32> to vector<64x1xf32>
    %24 = vector.broadcast %23 : vector<64x1xf32> to vector<64x128xf32>
    %25 = arith.subf %21, %24 : vector<64x128xf32>
    %26 = math.exp %25 : vector<64x128xf32>
    %c0_19 = arith.constant 0 : index
    %c0_20 = arith.constant 0 : index
    %27 = vector.load %arg20[%c0_19, %c0_20] : memref<128x128xf32, #tpu.memory_space<vmem>>, vector<128x32xf32>
    %cst_21 = arith.constant dense<0.000000e+00> : vector<64x32xf32>
    %28 = tpu.matmul %26, %27, %cst_21 {dimension_numbers = #tpu.dot_dimension_numbers<[1], [0], [0], [1], [0, 0, 1, 1], [], []>} : vector<64x128xf32>, vector<128x32xf32>, vector<64x32xf32> -> vector<64x32xf32>
    %c0_22 = arith.constant 0 : index
    %c0_23 = arith.constant 0 : index
    %29 = vector.load %arg3[%c0_22, %c0_23] : memref<128x8xf32, #tpu.memory_space<vmem>>, vector<128x8xf32>
    %cst_24 = arith.constant dense<0.000000e+00> : vector<64x8xf32>
    %30 = tpu.matmul %26, %29, %cst_24 {dimension_numbers = #tpu.dot_dimension_numbers<[1], [0], [0], [1], [0, 0, 1, 1], [], []>} : vector<64x128xf32>, vector<128x8xf32>, vector<64x8xf32> -> vector<64x8xf32>
    %31 = vector.extract_strided_slice %30 {offsets = [0, 0], sizes = [64, 1], strides = [1, 1]} : vector<64x8xf32> to vector<64x1xf32>
    %32 = tpu.reciprocal %31 : vector<64x1xf32> -> vector<64x1xf32>
    %33 = vector.broadcast %32 : vector<64x1xf32> to vector<64x32xf32>
    %34 = arith.mulf %28, %33 : vector<64x32xf32>
    %c0_25 = arith.constant 0 : index
    %c0_26 = arith.constant 0 : index
    %35 = vector.load %arg4[%c0_25, %c0_26] : memref<128x128xf32, #tpu.memory_space<vmem>>, vector<32x128xf32>
    %cst_27 = arith.constant dense<0.000000e+00> : vector<64x128xf32>
    %36 = tpu.matmul %34, %35, %cst_27 {dimension_numbers = #tpu.dot_dimension_numbers<[1], [0], [0], [1], [0, 0, 1, 1], [], []>} : vector<64x32xf32>, vector<32x128xf32>, vector<64x128xf32> -> vector<64x128xf32>
    %37 = vector.extract_strided_slice %8 {offsets = [0, 1], sizes = [64, 1], strides = [1, 1]} : vector<64x4xf32> to vector<64x1xf32>
    %38 = vector.extract_strided_slice %10 {offsets = [1, 0], sizes = [1, 128], strides = [1, 1]} : vector<4x128xf32> to vector<1x128xf32>
    %39 = vector.broadcast %37 : vector<64x1xf32> to vector<64x128xf32>
    %40 = vector.broadcast %38 : vector<1x128xf32> to vector<64x128xf32>
    %41 = arith.addf %39, %40 : vector<64x128xf32>
    %cst_28 = arith.constant 2.000000e-01 : f32
    %42 = vector.broadcast %cst_28 : f32 to vector<64x128xf32>
    %43 = arith.mulf %42, %41 : vector<64x128xf32>
    %44 = arith.maximumf %41, %43 : vector<64x128xf32>
    %c0_29 = arith.constant 0 : index
    %c0_30 = arith.constant 0 : index
    %45 = vector.load %arg2[%c0_29, %c0_30] : memref<64x128xf32, #tpu.memory_space<vmem>>, vector<64x128xf32>
    %46 = arith.addf %44, %45 : vector<64x128xf32>
    %cst_31 = arith.constant dense<0xFF800000> : vector<64xf32>
    %47 = vector.multi_reduction <maximumf>, %46, %cst_31 [1] : vector<64x128xf32> to vector<64xf32>
    %48 = vector.shape_cast %47 : vector<64xf32> to vector<64x1xf32>
    %49 = vector.broadcast %48 : vector<64x1xf32> to vector<64x128xf32>
    %50 = arith.subf %46, %49 : vector<64x128xf32>
    %51 = math.exp %50 : vector<64x128xf32>
    %c0_32 = arith.constant 0 : index
    %c32 = arith.constant 32 : index
    %52 = vector.load %arg20[%c0_32, %c32] : memref<128x128xf32, #tpu.memory_space<vmem>>, vector<128x32xf32>
    %cst_33 = arith.constant dense<0.000000e+00> : vector<64x32xf32>
    %53 = tpu.matmul %51, %52, %cst_33 {dimension_numbers = #tpu.dot_dimension_numbers<[1], [0], [0], [1], [0, 0, 1, 1], [], []>} : vector<64x128xf32>, vector<128x32xf32>, vector<64x32xf32> -> vector<64x32xf32>
    %c0_34 = arith.constant 0 : index
    %c0_35 = arith.constant 0 : index
    %54 = vector.load %arg3[%c0_34, %c0_35] : memref<128x8xf32, #tpu.memory_space<vmem>>, vector<128x8xf32>
    %cst_36 = arith.constant dense<0.000000e+00> : vector<64x8xf32>
    %55 = tpu.matmul %51, %54, %cst_36 {dimension_numbers = #tpu.dot_dimension_numbers<[1], [0], [0], [1], [0, 0, 1, 1], [], []>} : vector<64x128xf32>, vector<128x8xf32>, vector<64x8xf32> -> vector<64x8xf32>
    %56 = vector.extract_strided_slice %55 {offsets = [0, 0], sizes = [64, 1], strides = [1, 1]} : vector<64x8xf32> to vector<64x1xf32>
    %57 = tpu.reciprocal %56 : vector<64x1xf32> -> vector<64x1xf32>
    %58 = vector.broadcast %57 : vector<64x1xf32> to vector<64x32xf32>
    %59 = arith.mulf %53, %58 : vector<64x32xf32>
    %c32_37 = arith.constant 32 : index
    %c0_38 = arith.constant 0 : index
    %60 = vector.load %arg4[%c32_37, %c0_38] : memref<128x128xf32, #tpu.memory_space<vmem>>, vector<32x128xf32>
    %cst_39 = arith.constant dense<0.000000e+00> : vector<64x128xf32>
    %61 = tpu.matmul %59, %60, %cst_39 {dimension_numbers = #tpu.dot_dimension_numbers<[1], [0], [0], [1], [0, 0, 1, 1], [], []>} : vector<64x32xf32>, vector<32x128xf32>, vector<64x128xf32> -> vector<64x128xf32>
    %62 = arith.addf %36, %61 : vector<64x128xf32>
    %63 = vector.extract_strided_slice %8 {offsets = [0, 2], sizes = [64, 1], strides = [1, 1]} : vector<64x4xf32> to vector<64x1xf32>
    %64 = vector.extract_strided_slice %10 {offsets = [2, 0], sizes = [1, 128], strides = [1, 1]} : vector<4x128xf32> to vector<1x128xf32>
    %65 = vector.broadcast %63 : vector<64x1xf32> to vector<64x128xf32>
    %66 = vector.broadcast %64 : vector<1x128xf32> to vector<64x128xf32>
    %67 = arith.addf %65, %66 : vector<64x128xf32>
    %cst_40 = arith.constant 2.000000e-01 : f32
    %68 = vector.broadcast %cst_40 : f32 to vector<64x128xf32>
    %69 = arith.mulf %68, %67 : vector<64x128xf32>
    %70 = arith.maximumf %67, %69 : vector<64x128xf32>
    %c0_41 = arith.constant 0 : index
    %c0_42 = arith.constant 0 : index
    %71 = vector.load %arg2[%c0_41, %c0_42] : memref<64x128xf32, #tpu.memory_space<vmem>>, vector<64x128xf32>
    %72 = arith.addf %70, %71 : vector<64x128xf32>
    %cst_43 = arith.constant dense<0xFF800000> : vector<64xf32>
    %73 = vector.multi_reduction <maximumf>, %72, %cst_43 [1] : vector<64x128xf32> to vector<64xf32>
    %74 = vector.shape_cast %73 : vector<64xf32> to vector<64x1xf32>
    %75 = vector.broadcast %74 : vector<64x1xf32> to vector<64x128xf32>
    %76 = arith.subf %72, %75 : vector<64x128xf32>
    %77 = math.exp %76 : vector<64x128xf32>
    %c0_44 = arith.constant 0 : index
    %c64_45 = arith.constant 64 : index
    %78 = vector.load %arg20[%c0_44, %c64_45] : memref<128x128xf32, #tpu.memory_space<vmem>>, vector<128x32xf32>
    %cst_46 = arith.constant dense<0.000000e+00> : vector<64x32xf32>
    %79 = tpu.matmul %77, %78, %cst_46 {dimension_numbers = #tpu.dot_dimension_numbers<[1], [0], [0], [1], [0, 0, 1, 1], [], []>} : vector<64x128xf32>, vector<128x32xf32>, vector<64x32xf32> -> vector<64x32xf32>
    %c0_47 = arith.constant 0 : index
    %c0_48 = arith.constant 0 : index
    %80 = vector.load %arg3[%c0_47, %c0_48] : memref<128x8xf32, #tpu.memory_space<vmem>>, vector<128x8xf32>
    %cst_49 = arith.constant dense<0.000000e+00> : vector<64x8xf32>
    %81 = tpu.matmul %77, %80, %cst_49 {dimension_numbers = #tpu.dot_dimension_numbers<[1], [0], [0], [1], [0, 0, 1, 1], [], []>} : vector<64x128xf32>, vector<128x8xf32>, vector<64x8xf32> -> vector<64x8xf32>
    %82 = vector.extract_strided_slice %81 {offsets = [0, 0], sizes = [64, 1], strides = [1, 1]} : vector<64x8xf32> to vector<64x1xf32>
    %83 = tpu.reciprocal %82 : vector<64x1xf32> -> vector<64x1xf32>
    %84 = vector.broadcast %83 : vector<64x1xf32> to vector<64x32xf32>
    %85 = arith.mulf %79, %84 : vector<64x32xf32>
    %c64_50 = arith.constant 64 : index
    %c0_51 = arith.constant 0 : index
    %86 = vector.load %arg4[%c64_50, %c0_51] : memref<128x128xf32, #tpu.memory_space<vmem>>, vector<32x128xf32>
    %cst_52 = arith.constant dense<0.000000e+00> : vector<64x128xf32>
    %87 = tpu.matmul %85, %86, %cst_52 {dimension_numbers = #tpu.dot_dimension_numbers<[1], [0], [0], [1], [0, 0, 1, 1], [], []>} : vector<64x32xf32>, vector<32x128xf32>, vector<64x128xf32> -> vector<64x128xf32>
    %88 = arith.addf %62, %87 : vector<64x128xf32>
    %89 = vector.extract_strided_slice %8 {offsets = [0, 3], sizes = [64, 1], strides = [1, 1]} : vector<64x4xf32> to vector<64x1xf32>
    %90 = vector.extract_strided_slice %10 {offsets = [3, 0], sizes = [1, 128], strides = [1, 1]} : vector<4x128xf32> to vector<1x128xf32>
    %91 = vector.broadcast %89 : vector<64x1xf32> to vector<64x128xf32>
    %92 = vector.broadcast %90 : vector<1x128xf32> to vector<64x128xf32>
    %93 = arith.addf %91, %92 : vector<64x128xf32>
    %cst_53 = arith.constant 2.000000e-01 : f32
    %94 = vector.broadcast %cst_53 : f32 to vector<64x128xf32>
    %95 = arith.mulf %94, %93 : vector<64x128xf32>
    %96 = arith.maximumf %93, %95 : vector<64x128xf32>
    %c0_54 = arith.constant 0 : index
    %c0_55 = arith.constant 0 : index
    %97 = vector.load %arg2[%c0_54, %c0_55] : memref<64x128xf32, #tpu.memory_space<vmem>>, vector<64x128xf32>
    %98 = arith.addf %96, %97 : vector<64x128xf32>
    %cst_56 = arith.constant dense<0xFF800000> : vector<64xf32>
    %99 = vector.multi_reduction <maximumf>, %98, %cst_56 [1] : vector<64x128xf32> to vector<64xf32>
    %100 = vector.shape_cast %99 : vector<64xf32> to vector<64x1xf32>
    %101 = vector.broadcast %100 : vector<64x1xf32> to vector<64x128xf32>
    %102 = arith.subf %98, %101 : vector<64x128xf32>
    %103 = math.exp %102 : vector<64x128xf32>
    %c0_57 = arith.constant 0 : index
    %c96 = arith.constant 96 : index
    %104 = vector.load %arg20[%c0_57, %c96] : memref<128x128xf32, #tpu.memory_space<vmem>>, vector<128x32xf32>
    %cst_58 = arith.constant dense<0.000000e+00> : vector<64x32xf32>
    %105 = tpu.matmul %103, %104, %cst_58 {dimension_numbers = #tpu.dot_dimension_numbers<[1], [0], [0], [1], [0, 0, 1, 1], [], []>} : vector<64x128xf32>, vector<128x32xf32>, vector<64x32xf32> -> vector<64x32xf32>
    %c0_59 = arith.constant 0 : index
    %c0_60 = arith.constant 0 : index
    %106 = vector.load %arg3[%c0_59, %c0_60] : memref<128x8xf32, #tpu.memory_space<vmem>>, vector<128x8xf32>
    %cst_61 = arith.constant dense<0.000000e+00> : vector<64x8xf32>
    %107 = tpu.matmul %103, %106, %cst_61 {dimension_numbers = #tpu.dot_dimension_numbers<[1], [0], [0], [1], [0, 0, 1, 1], [], []>} : vector<64x128xf32>, vector<128x8xf32>, vector<64x8xf32> -> vector<64x8xf32>
    %108 = vector.extract_strided_slice %107 {offsets = [0, 0], sizes = [64, 1], strides = [1, 1]} : vector<64x8xf32> to vector<64x1xf32>
    %109 = tpu.reciprocal %108 : vector<64x1xf32> -> vector<64x1xf32>
    %110 = vector.broadcast %109 : vector<64x1xf32> to vector<64x32xf32>
    %111 = arith.mulf %105, %110 : vector<64x32xf32>
    %c96_62 = arith.constant 96 : index
    %c0_63 = arith.constant 0 : index
    %112 = vector.load %arg4[%c96_62, %c0_63] : memref<128x128xf32, #tpu.memory_space<vmem>>, vector<32x128xf32>
    %cst_64 = arith.constant dense<0.000000e+00> : vector<64x128xf32>
    %113 = tpu.matmul %111, %112, %cst_64 {dimension_numbers = #tpu.dot_dimension_numbers<[1], [0], [0], [1], [0, 0, 1, 1], [], []>} : vector<64x32xf32>, vector<32x128xf32>, vector<64x128xf32> -> vector<64x128xf32>
    %114 = arith.addf %88, %113 : vector<64x128xf32>
    %c0_65 = arith.constant 0 : index
    %c0_66 = arith.constant 0 : index
    %115 = vector.load %arg8[%c0_65, %c0_66] : memref<1x128xf32, #tpu.memory_space<vmem>>, vector<1x128xf32>
    %116 = vector.broadcast %115 : vector<1x128xf32> to vector<64x128xf32>
    %117 = arith.addf %114, %116 : vector<64x128xf32>
    %cst_67 = arith.constant 0.000000e+00 : f32
    %118 = vector.broadcast %cst_67 : f32 to vector<64x128xf32>
    %119 = arith.maximumf %117, %118 : vector<64x128xf32>
    %c0_68 = arith.constant 0 : index
    %c0_69 = arith.constant 0 : index
    %120 = vector.load %arg18[%c0_68, %c0_69] : memref<128x128xf32, #tpu.memory_space<vmem>>, vector<64x128xf32>
    tpu.vector_store %arg18[%c0_68, %c0_69], %119 {strides = array<i32>} : memref<128x128xf32, #tpu.memory_space<vmem>>, vector<64x128xf32>,
    %c0_70 = arith.constant 0 : index
    %c0_71 = arith.constant 0 : index
    %121 = vector.load %arg18[%c0_70, %c0_71] : memref<128x128xf32, #tpu.memory_space<vmem>>, vector<128x128xf32>
    %c0_72 = arith.constant 0 : index
    %c0_73 = arith.constant 0 : index
    %122 = vector.load %arg9[%c0_72, %c0_73] : memref<128x128xf32, #tpu.memory_space<vmem>>, vector<128x128xf32>
    %cst_74 = arith.constant dense<0.000000e+00> : vector<128x128xf32>
    %123 = tpu.matmul %121, %122, %cst_74 {dimension_numbers = #tpu.dot_dimension_numbers<[1], [0], [0], [1], [0, 0, 1, 1], [], []>} : vector<128x128xf32>, vector<128x128xf32>, vector<128x128xf32> -> vector<128x128xf32>
    %124 = vector.extract_strided_slice %123 {offsets = [0, 0], sizes = [64, 128], strides = [1, 1]} : vector<128x128xf32> to vector<64x128xf32>
    %c0_75 = arith.constant 0 : index
    %c0_76 = arith.constant 0 : index
    %125 = vector.load %arg11[%c0_75, %c0_76] : memref<128x4xf32, #tpu.memory_space<vmem>>, vector<128x4xf32>
    %cst_77 = arith.constant dense<0.000000e+00> : vector<64x4xf32>
    %126 = tpu.matmul %124, %125, %cst_77 {dimension_numbers = #tpu.dot_dimension_numbers<[1], [0], [0], [1], [0, 0, 1, 1], [], []>} : vector<64x128xf32>, vector<128x4xf32>, vector<64x4xf32> -> vector<64x4xf32>
    %c0_78 = arith.constant 0 : index
    %c0_79 = arith.constant 0 : index
    %127 = vector.load %arg10[%c0_78, %c0_79] : memref<4x128xf32, #tpu.memory_space<vmem>>, vector<4x128xf32>
    %cst_80 = arith.constant dense<0.000000e+00> : vector<4x128xf32>
    %128 = tpu.matmul %127, %123, %cst_80 {dimension_numbers = #tpu.dot_dimension_numbers<[1], [1], [0], [0], [0, 0, 1, 0], [], []>} : vector<4x128xf32>, vector<128x128xf32>, vector<4x128xf32> -> vector<4x128xf32>
    %c0_81 = arith.constant 0 : index
    %c0_82 = arith.constant 0 : index
    %129 = vector.load %arg20[%c0_81, %c0_82] : memref<128x128xf32, #tpu.memory_space<vmem>>, vector<128x128xf32>
    tpu.vector_store %arg20[%c0_81, %c0_82], %123 {strides = array<i32>} : memref<128x128xf32, #tpu.memory_space<vmem>>, vector<128x128xf32>,
    %130 = vector.extract_strided_slice %126 {offsets = [0, 0], sizes = [64, 1], strides = [1, 1]} : vector<64x4xf32> to vector<64x1xf32>
    %131 = vector.extract_strided_slice %128 {offsets = [0, 0], sizes = [1, 128], strides = [1, 1]} : vector<4x128xf32> to vector<1x128xf32>
    %132 = vector.broadcast %130 : vector<64x1xf32> to vector<64x128xf32>
    %133 = vector.broadcast %131 : vector<1x128xf32> to vector<64x128xf32>
    %134 = arith.addf %132, %133 : vector<64x128xf32>
    %cst_83 = arith.constant 2.000000e-01 : f32
    %135 = vector.broadcast %cst_83 : f32 to vector<64x128xf32>
    %136 = arith.mulf %135, %134 : vector<64x128xf32>
    %137 = arith.maximumf %134, %136 : vector<64x128xf32>
    %c0_84 = arith.constant 0 : index
    %c0_85 = arith.constant 0 : index
    %138 = vector.load %arg2[%c0_84, %c0_85] : memref<64x128xf32, #tpu.memory_space<vmem>>, vector<64x128xf32>
    %139 = arith.addf %137, %138 : vector<64x128xf32>
    %cst_86 = arith.constant dense<0xFF800000> : vector<64xf32>
    %140 = vector.multi_reduction <maximumf>, %139, %cst_86 [1] : vector<64x128xf32> to vector<64xf32>
    %141 = vector.shape_cast %140 : vector<64xf32> to vector<64x1xf32>
    %142 = vector.broadcast %141 : vector<64x1xf32> to vector<64x128xf32>
    %143 = arith.subf %139, %142 : vector<64x128xf32>
    %144 = math.exp %143 : vector<64x128xf32>
    %c0_87 = arith.constant 0 : index
    %c0_88 = arith.constant 0 : index
    %145 = vector.load %arg20[%c0_87, %c0_88] : memref<128x128xf32, #tpu.memory_space<vmem>>, vector<128x32xf32>
    %cst_89 = arith.constant dense<0.000000e+00> : vector<64x32xf32>
    %146 = tpu.matmul %144, %145, %cst_89 {dimension_numbers = #tpu.dot_dimension_numbers<[1], [0], [0], [1], [0, 0, 1, 1], [], []>} : vector<64x128xf32>, vector<128x32xf32>, vector<64x32xf32> -> vector<64x32xf32>
    %c0_90 = arith.constant 0 : index
    %c0_91 = arith.constant 0 : index
    %147 = vector.load %arg3[%c0_90, %c0_91] : memref<128x8xf32, #tpu.memory_space<vmem>>, vector<128x8xf32>
    %cst_92 = arith.constant dense<0.000000e+00> : vector<64x8xf32>
    %148 = tpu.matmul %144, %147, %cst_92 {dimension_numbers = #tpu.dot_dimension_numbers<[1], [0], [0], [1], [0, 0, 1, 1], [], []>} : vector<64x128xf32>, vector<128x8xf32>, vector<64x8xf32> -> vector<64x8xf32>
    %149 = vector.extract_strided_slice %148 {offsets = [0, 0], sizes = [64, 1], strides = [1, 1]} : vector<64x8xf32> to vector<64x1xf32>
    %150 = tpu.reciprocal %149 : vector<64x1xf32> -> vector<64x1xf32>
    %151 = vector.broadcast %150 : vector<64x1xf32> to vector<64x32xf32>
    %152 = arith.mulf %146, %151 : vector<64x32xf32>
    %c0_93 = arith.constant 0 : index
    %c0_94 = arith.constant 0 : index
    %153 = vector.load %arg4[%c0_93, %c0_94] : memref<128x128xf32, #tpu.memory_space<vmem>>, vector<32x128xf32>
    %cst_95 = arith.constant dense<0.000000e+00> : vector<64x128xf32>
    %154 = tpu.matmul %152, %153, %cst_95 {dimension_numbers = #tpu.dot_dimension_numbers<[1], [0], [0], [1], [0, 0, 1, 1], [], []>} : vector<64x32xf32>, vector<32x128xf32>, vector<64x128xf32> -> vector<64x128xf32>
    %155 = vector.extract_strided_slice %126 {offsets = [0, 1], sizes = [64, 1], strides = [1, 1]} : vector<64x4xf32> to vector<64x1xf32>
    %156 = vector.extract_strided_slice %128 {offsets = [1, 0], sizes = [1, 128], strides = [1, 1]} : vector<4x128xf32> to vector<1x128xf32>
    %157 = vector.broadcast %155 : vector<64x1xf32> to vector<64x128xf32>
    %158 = vector.broadcast %156 : vector<1x128xf32> to vector<64x128xf32>
    %159 = arith.addf %157, %158 : vector<64x128xf32>
    %cst_96 = arith.constant 2.000000e-01 : f32
    %160 = vector.broadcast %cst_96 : f32 to vector<64x128xf32>
    %161 = arith.mulf %160, %159 : vector<64x128xf32>
    %162 = arith.maximumf %159, %161 : vector<64x128xf32>
    %c0_97 = arith.constant 0 : index
    %c0_98 = arith.constant 0 : index
    %163 = vector.load %arg2[%c0_97, %c0_98] : memref<64x128xf32, #tpu.memory_space<vmem>>, vector<64x128xf32>
    %164 = arith.addf %162, %163 : vector<64x128xf32>
    %cst_99 = arith.constant dense<0xFF800000> : vector<64xf32>
    %165 = vector.multi_reduction <maximumf>, %164, %cst_99 [1] : vector<64x128xf32> to vector<64xf32>
    %166 = vector.shape_cast %165 : vector<64xf32> to vector<64x1xf32>
    %167 = vector.broadcast %166 : vector<64x1xf32> to vector<64x128xf32>
    %168 = arith.subf %164, %167 : vector<64x128xf32>
    %169 = math.exp %168 : vector<64x128xf32>
    %c0_100 = arith.constant 0 : index
    %c32_101 = arith.constant 32 : index
    %170 = vector.load %arg20[%c0_100, %c32_101] : memref<128x128xf32, #tpu.memory_space<vmem>>, vector<128x32xf32>
    %cst_102 = arith.constant dense<0.000000e+00> : vector<64x32xf32>
    %171 = tpu.matmul %169, %170, %cst_102 {dimension_numbers = #tpu.dot_dimension_numbers<[1], [0], [0], [1], [0, 0, 1, 1], [], []>} : vector<64x128xf32>, vector<128x32xf32>, vector<64x32xf32> -> vector<64x32xf32>
    %c0_103 = arith.constant 0 : index
    %c0_104 = arith.constant 0 : index
    %172 = vector.load %arg3[%c0_103, %c0_104] : memref<128x8xf32, #tpu.memory_space<vmem>>, vector<128x8xf32>
    %cst_105 = arith.constant dense<0.000000e+00> : vector<64x8xf32>
    %173 = tpu.matmul %169, %172, %cst_105 {dimension_numbers = #tpu.dot_dimension_numbers<[1], [0], [0], [1], [0, 0, 1, 1], [], []>} : vector<64x128xf32>, vector<128x8xf32>, vector<64x8xf32> -> vector<64x8xf32>
    %174 = vector.extract_strided_slice %173 {offsets = [0, 0], sizes = [64, 1], strides = [1, 1]} : vector<64x8xf32> to vector<64x1xf32>
    %175 = tpu.reciprocal %174 : vector<64x1xf32> -> vector<64x1xf32>
    %176 = vector.broadcast %175 : vector<64x1xf32> to vector<64x32xf32>
    %177 = arith.mulf %171, %176 : vector<64x32xf32>
    %c32_106 = arith.constant 32 : index
    %c0_107 = arith.constant 0 : index
    %178 = vector.load %arg4[%c32_106, %c0_107] : memref<128x128xf32, #tpu.memory_space<vmem>>, vector<32x128xf32>
    %cst_108 = arith.constant dense<0.000000e+00> : vector<64x128xf32>
    %179 = tpu.matmul %177, %178, %cst_108 {dimension_numbers = #tpu.dot_dimension_numbers<[1], [0], [0], [1], [0, 0, 1, 1], [], []>} : vector<64x32xf32>, vector<32x128xf32>, vector<64x128xf32> -> vector<64x128xf32>
    %180 = arith.addf %154, %179 : vector<64x128xf32>
    %181 = vector.extract_strided_slice %126 {offsets = [0, 2], sizes = [64, 1], strides = [1, 1]} : vector<64x4xf32> to vector<64x1xf32>
    %182 = vector.extract_strided_slice %128 {offsets = [2, 0], sizes = [1, 128], strides = [1, 1]} : vector<4x128xf32> to vector<1x128xf32>
    %183 = vector.broadcast %181 : vector<64x1xf32> to vector<64x128xf32>
    %184 = vector.broadcast %182 : vector<1x128xf32> to vector<64x128xf32>
    %185 = arith.addf %183, %184 : vector<64x128xf32>
    %cst_109 = arith.constant 2.000000e-01 : f32
    %186 = vector.broadcast %cst_109 : f32 to vector<64x128xf32>
    %187 = arith.mulf %186, %185 : vector<64x128xf32>
    %188 = arith.maximumf %185, %187 : vector<64x128xf32>
    %c0_110 = arith.constant 0 : index
    %c0_111 = arith.constant 0 : index
    %189 = vector.load %arg2[%c0_110, %c0_111] : memref<64x128xf32, #tpu.memory_space<vmem>>, vector<64x128xf32>
    %190 = arith.addf %188, %189 : vector<64x128xf32>
    %cst_112 = arith.constant dense<0xFF800000> : vector<64xf32>
    %191 = vector.multi_reduction <maximumf>, %190, %cst_112 [1] : vector<64x128xf32> to vector<64xf32>
    %192 = vector.shape_cast %191 : vector<64xf32> to vector<64x1xf32>
    %193 = vector.broadcast %192 : vector<64x1xf32> to vector<64x128xf32>
    %194 = arith.subf %190, %193 : vector<64x128xf32>
    %195 = math.exp %194 : vector<64x128xf32>
    %c0_113 = arith.constant 0 : index
    %c64_114 = arith.constant 64 : index
    %196 = vector.load %arg20[%c0_113, %c64_114] : memref<128x128xf32, #tpu.memory_space<vmem>>, vector<128x32xf32>
    %cst_115 = arith.constant dense<0.000000e+00> : vector<64x32xf32>
    %197 = tpu.matmul %195, %196, %cst_115 {dimension_numbers = #tpu.dot_dimension_numbers<[1], [0], [0], [1], [0, 0, 1, 1], [], []>} : vector<64x128xf32>, vector<128x32xf32>, vector<64x32xf32> -> vector<64x32xf32>
    %c0_116 = arith.constant 0 : index
    %c0_117 = arith.constant 0 : index
    %198 = vector.load %arg3[%c0_116, %c0_117] : memref<128x8xf32, #tpu.memory_space<vmem>>, vector<128x8xf32>
    %cst_118 = arith.constant dense<0.000000e+00> : vector<64x8xf32>
    %199 = tpu.matmul %195, %198, %cst_118 {dimension_numbers = #tpu.dot_dimension_numbers<[1], [0], [0], [1], [0, 0, 1, 1], [], []>} : vector<64x128xf32>, vector<128x8xf32>, vector<64x8xf32> -> vector<64x8xf32>
    %200 = vector.extract_strided_slice %199 {offsets = [0, 0], sizes = [64, 1], strides = [1, 1]} : vector<64x8xf32> to vector<64x1xf32>
    %201 = tpu.reciprocal %200 : vector<64x1xf32> -> vector<64x1xf32>
    %202 = vector.broadcast %201 : vector<64x1xf32> to vector<64x32xf32>
    %203 = arith.mulf %197, %202 : vector<64x32xf32>
    %c64_119 = arith.constant 64 : index
    %c0_120 = arith.constant 0 : index
    %204 = vector.load %arg4[%c64_119, %c0_120] : memref<128x128xf32, #tpu.memory_space<vmem>>, vector<32x128xf32>
    %cst_121 = arith.constant dense<0.000000e+00> : vector<64x128xf32>
    %205 = tpu.matmul %203, %204, %cst_121 {dimension_numbers = #tpu.dot_dimension_numbers<[1], [0], [0], [1], [0, 0, 1, 1], [], []>} : vector<64x32xf32>, vector<32x128xf32>, vector<64x128xf32> -> vector<64x128xf32>
    %206 = arith.addf %180, %205 : vector<64x128xf32>
    %207 = vector.extract_strided_slice %126 {offsets = [0, 3], sizes = [64, 1], strides = [1, 1]} : vector<64x4xf32> to vector<64x1xf32>
    %208 = vector.extract_strided_slice %128 {offsets = [3, 0], sizes = [1, 128], strides = [1, 1]} : vector<4x128xf32> to vector<1x128xf32>
    %209 = vector.broadcast %207 : vector<64x1xf32> to vector<64x128xf32>
    %210 = vector.broadcast %208 : vector<1x128xf32> to vector<64x128xf32>
    %211 = arith.addf %209, %210 : vector<64x128xf32>
    %cst_122 = arith.constant 2.000000e-01 : f32
    %212 = vector.broadcast %cst_122 : f32 to vector<64x128xf32>
    %213 = arith.mulf %212, %211 : vector<64x128xf32>
    %214 = arith.maximumf %211, %213 : vector<64x128xf32>
    %c0_123 = arith.constant 0 : index
    %c0_124 = arith.constant 0 : index
    %215 = vector.load %arg2[%c0_123, %c0_124] : memref<64x128xf32, #tpu.memory_space<vmem>>, vector<64x128xf32>
    %216 = arith.addf %214, %215 : vector<64x128xf32>
    %cst_125 = arith.constant dense<0xFF800000> : vector<64xf32>
    %217 = vector.multi_reduction <maximumf>, %216, %cst_125 [1] : vector<64x128xf32> to vector<64xf32>
    %218 = vector.shape_cast %217 : vector<64xf32> to vector<64x1xf32>
    %219 = vector.broadcast %218 : vector<64x1xf32> to vector<64x128xf32>
    %220 = arith.subf %216, %219 : vector<64x128xf32>
    %221 = math.exp %220 : vector<64x128xf32>
    %c0_126 = arith.constant 0 : index
    %c96_127 = arith.constant 96 : index
    %222 = vector.load %arg20[%c0_126, %c96_127] : memref<128x128xf32, #tpu.memory_space<vmem>>, vector<128x32xf32>
    %cst_128 = arith.constant dense<0.000000e+00> : vector<64x32xf32>
    %223 = tpu.matmul %221, %222, %cst_128 {dimension_numbers = #tpu.dot_dimension_numbers<[1], [0], [0], [1], [0, 0, 1, 1], [], []>} : vector<64x128xf32>, vector<128x32xf32>, vector<64x32xf32> -> vector<64x32xf32>
    %c0_129 = arith.constant 0 : index
    %c0_130 = arith.constant 0 : index
    %224 = vector.load %arg3[%c0_129, %c0_130] : memref<128x8xf32, #tpu.memory_space<vmem>>, vector<128x8xf32>
    %cst_131 = arith.constant dense<0.000000e+00> : vector<64x8xf32>
    %225 = tpu.matmul %221, %224, %cst_131 {dimension_numbers = #tpu.dot_dimension_numbers<[1], [0], [0], [1], [0, 0, 1, 1], [], []>} : vector<64x128xf32>, vector<128x8xf32>, vector<64x8xf32> -> vector<64x8xf32>
    %226 = vector.extract_strided_slice %225 {offsets = [0, 0], sizes = [64, 1], strides = [1, 1]} : vector<64x8xf32> to vector<64x1xf32>
    %227 = tpu.reciprocal %226 : vector<64x1xf32> -> vector<64x1xf32>
    %228 = vector.broadcast %227 : vector<64x1xf32> to vector<64x32xf32>
    %229 = arith.mulf %223, %228 : vector<64x32xf32>
    %c96_132 = arith.constant 96 : index
    %c0_133 = arith.constant 0 : index
    %230 = vector.load %arg4[%c96_132, %c0_133] : memref<128x128xf32, #tpu.memory_space<vmem>>, vector<32x128xf32>
    %cst_134 = arith.constant dense<0.000000e+00> : vector<64x128xf32>
    %231 = tpu.matmul %229, %230, %cst_134 {dimension_numbers = #tpu.dot_dimension_numbers<[1], [0], [0], [1], [0, 0, 1, 1], [], []>} : vector<64x32xf32>, vector<32x128xf32>, vector<64x128xf32> -> vector<64x128xf32>
    %232 = arith.addf %206, %231 : vector<64x128xf32>
    %c0_135 = arith.constant 0 : index
    %c0_136 = arith.constant 0 : index
    %233 = vector.load %arg12[%c0_135, %c0_136] : memref<1x128xf32, #tpu.memory_space<vmem>>, vector<1x128xf32>
    %234 = vector.broadcast %233 : vector<1x128xf32> to vector<64x128xf32>
    %235 = arith.addf %232, %234 : vector<64x128xf32>
    %cst_137 = arith.constant 0.000000e+00 : f32
    %236 = vector.broadcast %cst_137 : f32 to vector<64x128xf32>
    %237 = arith.maximumf %235, %236 : vector<64x128xf32>
    %c0_138 = arith.constant 0 : index
    %c0_139 = arith.constant 0 : index
    %238 = vector.load %arg19[%c0_138, %c0_139] : memref<128x128xf32, #tpu.memory_space<vmem>>, vector<64x128xf32>
    tpu.vector_store %arg19[%c0_138, %c0_139], %237 {strides = array<i32>} : memref<128x128xf32, #tpu.memory_space<vmem>>, vector<64x128xf32>,
    %c0_140 = arith.constant 0 : index
    %c0_141 = arith.constant 0 : index
    %239 = vector.load %arg19[%c0_140, %c0_141] : memref<128x128xf32, #tpu.memory_space<vmem>>, vector<128x128xf32>
    %c0_142 = arith.constant 0 : index
    %c0_143 = arith.constant 0 : index
    %240 = vector.load %arg13[%c0_142, %c0_143] : memref<128x128xf32, #tpu.memory_space<vmem>>, vector<128x128xf32>
    %cst_144 = arith.constant dense<0.000000e+00> : vector<128x128xf32>
    %241 = tpu.matmul %239, %240, %cst_144 {dimension_numbers = #tpu.dot_dimension_numbers<[1], [0], [0], [1], [0, 0, 1, 1], [], []>} : vector<128x128xf32>, vector<128x128xf32>, vector<128x128xf32> -> vector<128x128xf32>
    %242 = vector.extract_strided_slice %241 {offsets = [0, 0], sizes = [64, 128], strides = [1, 1]} : vector<128x128xf32> to vector<64x128xf32>
    %c0_145 = arith.constant 0 : index
    %c0_146 = arith.constant 0 : index
    %243 = vector.load %arg15[%c0_145, %c0_146] : memref<128x1xf32, #tpu.memory_space<vmem>>, vector<128x1xf32>
    %cst_147 = arith.constant dense<0.000000e+00> : vector<64x1xf32>
    %244 = tpu.matmul %242, %243, %cst_147 {dimension_numbers = #tpu.dot_dimension_numbers<[1], [0], [0], [1], [0, 0, 1, 1], [], []>} : vector<64x128xf32>, vector<128x1xf32>, vector<64x1xf32> -> vector<64x1xf32>
    %c0_148 = arith.constant 0 : index
    %c0_149 = arith.constant 0 : index
    %245 = vector.load %arg14[%c0_148, %c0_149] : memref<1x128xf32, #tpu.memory_space<vmem>>, vector<1x128xf32>
    %cst_150 = arith.constant dense<0.000000e+00> : vector<1x128xf32>
    %246 = tpu.matmul %245, %241, %cst_150 {dimension_numbers = #tpu.dot_dimension_numbers<[1], [1], [0], [0], [0, 0, 1, 0], [], []>} : vector<1x128xf32>, vector<128x128xf32>, vector<1x128xf32> -> vector<1x128xf32>
    %c0_151 = arith.constant 0 : index
    %c0_152 = arith.constant 0 : index
    %247 = vector.load %arg20[%c0_151, %c0_152] : memref<128x128xf32, #tpu.memory_space<vmem>>, vector<128x128xf32>
    tpu.vector_store %arg20[%c0_151, %c0_152], %241 {strides = array<i32>} : memref<128x128xf32, #tpu.memory_space<vmem>>, vector<128x128xf32>,
    %248 = vector.broadcast %244 : vector<64x1xf32> to vector<64x128xf32>
    %249 = vector.broadcast %246 : vector<1x128xf32> to vector<64x128xf32>
    %250 = arith.addf %248, %249 : vector<64x128xf32>
    %cst_153 = arith.constant 2.000000e-01 : f32
    %251 = vector.broadcast %cst_153 : f32 to vector<64x128xf32>
    %252 = arith.mulf %251, %250 : vector<64x128xf32>
    %253 = arith.maximumf %250, %252 : vector<64x128xf32>
    %c0_154 = arith.constant 0 : index
    %c0_155 = arith.constant 0 : index
    %254 = vector.load %arg2[%c0_154, %c0_155] : memref<64x128xf32, #tpu.memory_space<vmem>>, vector<64x128xf32>
    %255 = arith.addf %253, %254 : vector<64x128xf32>
    %cst_156 = arith.constant dense<0xFF800000> : vector<64xf32>
    %256 = vector.multi_reduction <maximumf>, %255, %cst_156 [1] : vector<64x128xf32> to vector<64xf32>
    %257 = vector.shape_cast %256 : vector<64xf32> to vector<64x1xf32>
    %258 = vector.broadcast %257 : vector<64x1xf32> to vector<64x128xf32>
    %259 = arith.subf %255, %258 : vector<64x128xf32>
    %260 = math.exp %259 : vector<64x128xf32>
    %c0_157 = arith.constant 0 : index
    %c0_158 = arith.constant 0 : index
    %261 = vector.load %arg20[%c0_157, %c0_158] : memref<128x128xf32, #tpu.memory_space<vmem>>, vector<128x128xf32>
    %cst_159 = arith.constant dense<0.000000e+00> : vector<64x128xf32>
    %262 = tpu.matmul %260, %261, %cst_159 {dimension_numbers = #tpu.dot_dimension_numbers<[1], [0], [0], [1], [0, 0, 1, 1], [], []>} : vector<64x128xf32>, vector<128x128xf32>, vector<64x128xf32> -> vector<64x128xf32>
    %c0_160 = arith.constant 0 : index
    %c0_161 = arith.constant 0 : index
    %263 = vector.load %arg3[%c0_160, %c0_161] : memref<128x8xf32, #tpu.memory_space<vmem>>, vector<128x8xf32>
    %cst_162 = arith.constant dense<0.000000e+00> : vector<64x8xf32>
    %264 = tpu.matmul %260, %263, %cst_162 {dimension_numbers = #tpu.dot_dimension_numbers<[1], [0], [0], [1], [0, 0, 1, 1], [], []>} : vector<64x128xf32>, vector<128x8xf32>, vector<64x8xf32> -> vector<64x8xf32>
    %265 = vector.extract_strided_slice %264 {offsets = [0, 0], sizes = [64, 1], strides = [1, 1]} : vector<64x8xf32> to vector<64x1xf32>
    %266 = tpu.reciprocal %265 : vector<64x1xf32> -> vector<64x1xf32>
    %267 = vector.broadcast %266 : vector<64x1xf32> to vector<64x128xf32>
    %268 = arith.mulf %262, %267 : vector<64x128xf32>
    %c0_163 = arith.constant 0 : index
    %c0_164 = arith.constant 0 : index
    %269 = vector.load %arg16[%c0_163, %c0_164] : memref<1x128xf32, #tpu.memory_space<vmem>>, vector<1x128xf32>
    %270 = vector.broadcast %269 : vector<1x128xf32> to vector<64x128xf32>
    %271 = arith.addf %268, %270 : vector<64x128xf32>
    %c0_165 = arith.constant 0 : index
    %c0_166 = arith.constant 0 : index
    %272 = vector.load %arg17[%c0_165, %c0_166] : memref<64x128xf32, #tpu.memory_space<vmem>>, vector<64x128xf32>
    tpu.vector_store %arg17[%c0_165, %c0_166], %271 {strides = array<i32>} : memref<64x128xf32, #tpu.memory_space<vmem>>, vector<64x128xf32>,
    return
  }
  func.func @transform_0(%arg0: i32) -> (i32, i32) {
    %c0_i32 = arith.constant 0 : i32
    %c0_i32_0 = arith.constant 0 : i32
    %c0_i32_1 = arith.constant 0 : i32
    return %c0_i32, %c0_i32_0 : i32, i32
  }
  func.func @transform_1(%arg0: i32) -> (i32, i32) {
    %c0_i32 = arith.constant 0 : i32
    %c0_i32_0 = arith.constant 0 : i32
    %c0_i32_1 = arith.constant 0 : i32
    return %c0_i32, %c0_i32_0 : i32, i32
  }
  func.func @transform_2(%arg0: i32) -> (i32, i32) {
    %c0_i32 = arith.constant 0 : i32
    %c0_i32_0 = arith.constant 0 : i32
    %c0_i32_1 = arith.constant 0 : i32
    return %c0_i32, %c0_i32_0 : i32, i32
  }
  func.func @transform_3(%arg0: i32) -> (i32, i32) {
    %c0_i32 = arith.constant 0 : i32
    %c0_i32_0 = arith.constant 0 : i32
    %c0_i32_1 = arith.constant 0 : i32
    return %c0_i32, %c0_i32_0 : i32, i32
  }
  func.func @transform_4(%arg0: i32) -> (i32, i32) {
    %c0_i32 = arith.constant 0 : i32
    %c0_i32_0 = arith.constant 0 : i32
    %c0_i32_1 = arith.constant 0 : i32
    return %c0_i32, %c0_i32_0 : i32, i32
  }
  func.func @transform_5(%arg0: i32) -> (i32, i32) {
    %c0_i32 = arith.constant 0 : i32
    %c0_i32_0 = arith.constant 0 : i32
    %c0_i32_1 = arith.constant 0 : i32
    return %c0_i32, %c0_i32_0 : i32, i32
  }
  func.func @transform_6(%arg0: i32) -> (i32, i32) {
    %c0_i32 = arith.constant 0 : i32
    %c0_i32_0 = arith.constant 0 : i32
    %c0_i32_1 = arith.constant 0 : i32
    return %c0_i32, %c0_i32_0 : i32, i32
  }
  func.func @transform_7(%arg0: i32) -> (i32, i32) {
    %c0_i32 = arith.constant 0 : i32
    %c0_i32_0 = arith.constant 0 : i32
    %c0_i32_1 = arith.constant 0 : i32
    return %c0_i32, %c0_i32_0 : i32, i32
  }
  func.func @transform_8(%arg0: i32) -> (i32, i32) {
    %c0_i32 = arith.constant 0 : i32
    %c0_i32_0 = arith.constant 0 : i32
    %c0_i32_1 = arith.constant 0 : i32
    return %c0_i32, %c0_i32_0 : i32, i32
  }
  func.func @transform_9(%arg0: i32) -> (i32, i32) {
    %c0_i32 = arith.constant 0 : i32
    %c0_i32_0 = arith.constant 0 : i32
    %c0_i32_1 = arith.constant 0 : i32
    return %c0_i32, %c0_i32_0 : i32, i32
  }
  func.func @transform_10(%arg0: i32) -> (i32, i32) {
    %c0_i32 = arith.constant 0 : i32
    %c0_i32_0 = arith.constant 0 : i32
    %c0_i32_1 = arith.constant 0 : i32
    return %c0_i32, %c0_i32_0 : i32, i32
  }
  func.func @transform_11(%arg0: i32) -> (i32, i32) {
    %c0_i32 = arith.constant 0 : i32
    %c0_i32_0 = arith.constant 0 : i32
    %c0_i32_1 = arith.constant 0 : i32
    return %c0_i32, %c0_i32_0 : i32, i32
  }
  func.func @transform_12(%arg0: i32) -> (i32, i32) {
    %c0_i32 = arith.constant 0 : i32
    %c0_i32_0 = arith.constant 0 : i32
    %c0_i32_1 = arith.constant 0 : i32
    return %c0_i32, %c0_i32_0 : i32, i32
  }
  func.func @transform_13(%arg0: i32) -> (i32, i32) {
    %c0_i32 = arith.constant 0 : i32
    %c0_i32_0 = arith.constant 0 : i32
    %c0_i32_1 = arith.constant 0 : i32
    return %c0_i32, %c0_i32_0 : i32, i32
  }
  func.func @transform_14(%arg0: i32) -> (i32, i32) {
    %c0_i32 = arith.constant 0 : i32
    %c0_i32_0 = arith.constant 0 : i32
    %c0_i32_1 = arith.constant 0 : i32
    return %c0_i32, %c0_i32_0 : i32, i32
  }
  func.func @transform_15(%arg0: i32) -> (i32, i32) {
    %c0_i32 = arith.constant 0 : i32
    %c0_i32_0 = arith.constant 0 : i32
    %c0_i32_1 = arith.constant 0 : i32
    return %c0_i32, %c0_i32_0 : i32, i32
  }
  func.func @transform_16(%arg0: i32) -> (i32, i32) {
    %c0_i32 = arith.constant 0 : i32
    %c0_i32_0 = arith.constant 0 : i32
    %c0_i32_1 = arith.constant 0 : i32
    return %c0_i32, %c0_i32_0 : i32, i32
  }
}

</mosaic_0001>

<llo_original>
// kernel: gat_forward.1
$region0: #{gat_forward.1}
  #allocation0 [shape = 'u32[]', space=smem, size = 0x4, offset = 0x4, fixed_abs, tag = 'smem constant byte address 0x4 - core index']
  #allocation1 [shape = 'u32[144,128]{1,0:T(1,128)}', space=vmem, size = 0x12000, scoped, tag = 'internal scratch']
  #allocation2 [shape = 'f32[128,128]{1,0:T(8,128)}', space=vmem, size = 0x10000, scoped, tag = 'scratch operand']
  #allocation3 [shape = 'f32[128,128]{1,0:T(8,128)}', space=vmem, size = 0x10000, scoped, tag = 'scratch operand']
  #allocation4 [shape = 'f32[128,128]{1,0:T(8,128)}', space=vmem, size = 0x10000, scoped, tag = 'scratch operand']
  %s0 = inlined_call_operand.vmem [shape: f32[128,16], index: 0, kind: input, shape index: {}]
  %s1 = inlined_call_operand.vmem [shape: f32[64,128], index: 1, kind: input, shape index: {}]
  %s2 = inlined_call_operand.vmem [shape: f32[128,8], index: 2, kind: input, shape index: {}]
  %s3 = inlined_call_operand.vmem [shape: f32[128,128], index: 3, kind: input, shape index: {}]
  %s4 = inlined_call_operand.vmem [shape: f32[16,128], index: 4, kind: input, shape index: {}]
  %s5 = inlined_call_operand.vmem [shape: f32[4,128], index: 5, kind: input, shape index: {}]
  %s6 = inlined_call_operand.vmem [shape: f32[128,4], index: 6, kind: input, shape index: {}]
  %s7 = inlined_call_operand.vmem [shape: f32[1,128], index: 7, kind: input, shape index: {}]
  %s8 = inlined_call_operand.vmem [shape: f32[128,128], index: 8, kind: input, shape index: {}]
  %s9 = inlined_call_operand.vmem [shape: f32[4,128], index: 9, kind: input, shape index: {}]
  %s10 = inlined_call_operand.vmem [shape: f32[128,4], index: 10, kind: input, shape index: {}]
  %s11 = inlined_call_operand.vmem [shape: f32[1,128], index: 11, kind: input, shape index: {}]
  %s12 = inlined_call_operand.vmem [shape: f32[128,128], index: 12, kind: input, shape index: {}]
  %s13 = inlined_call_operand.vmem [shape: f32[1,128], index: 13, kind: input, shape index: {}]
  %s14 = inlined_call_operand.vmem [shape: f32[128,1], index: 14, kind: input, shape index: {}]
  %s15 = inlined_call_operand.vmem [shape: f32[1,128], index: 15, kind: input, shape index: {}]
  %s16 = inlined_call_operand.hbm [shape: f32[64,128], index: 16, kind: output, shape index: {}]
  %s17 = sld [smem:[#allocation0]]
  $region74: #{gat_forward.1} parent=0
    _
  %s19 = ssub.s32 1, %s17
  %s20 = scalar_select 0, %s19, %s17
  $region1: #{gat_forward.1} parent=0
    #allocation5 [shape = 'u8[32768]{0}', space=vmem, size = 0x8000, scoped, tag = 'output window, operand 0, single buffered']
    #allocation6 [shape = 's32[1]{0}', space=sflag, size = 0x4, scoped, tag = 'scoped memory for gat_forward.1']
    %21 = vsyncpa [#allocation6], 0
    // Predicated region
    $region2: #{gat_forward.1} parent=1 // pred_check
      _
    $region3: #{gat_forward.1} parent=1 // pred_check_branch
      %23 = sbr.rel (0) target = $region5
    $region4: #{gat_forward.1} parent=1 // pred_region
      _
    $region5: #{gat_forward.1} parent=1 // pred_fallthru
      _
    // Predicated region
    $region6: #{gat_forward.1} parent=1 // pred_check
      _
    $region7: #{gat_forward.1} parent=1 // pred_check_branch
      %25 = sbr.rel (0) target = $region9
    $region8: #{gat_forward.1} parent=1 // pred_region
      _
    $region9: #{gat_forward.1} parent=1 // pred_fallthru
      _
    // Predicated region
    $region10: #{gat_forward.1} parent=1 // pred_check
      _
    $region11: #{gat_forward.1} parent=1 // pred_check_branch
      %27 = sbr.rel (0) target = $region13
    $region12: #{gat_forward.1} parent=1 // pred_region
      _
    $region13: #{gat_forward.1} parent=1 // pred_fallthru
      _
    // Predicated region
    $region14: #{gat_forward.1} parent=1 // pred_check
      _
    $region15: #{gat_forward.1} parent=1 // pred_check_branch
      %29 = sbr.rel (0) target = $region17
    $region16: #{gat_forward.1} parent=1 // pred_region
      _
    $region17: #{gat_forward.1} parent=1 // pred_fallthru
      _
    // Predicated region
    $region18: #{gat_forward.1} parent=1 // pred_check
      _
    $region19: #{gat_forward.1} parent=1 // pred_check_branch
      %31 = sbr.rel (0) target = $region21
    $region20: #{gat_forward.1} parent=1 // pred_region
      _
    $region21: #{gat_forward.1} parent=1 // pred_fallthru
      _
    // Predicated region
    $region22: #{gat_forward.1} parent=1 // pred_check
      _
    $region23: #{gat_forward.1} parent=1 // pred_check_branch
      %33 = sbr.rel (0) target = $region25
    $region24: #{gat_forward.1} parent=1 // pred_region
      _
    $region25: #{gat_forward.1} parent=1 // pred_fallthru
      _
    // Predicated region
    $region26: #{gat_forward.1} parent=1 // pred_check
      _
    $region27: #{gat_forward.1} parent=1 // pred_check_branch
      %35 = sbr.rel (0) target = $region29
    $region28: #{gat_forward.1} parent=1 // pred_region
      _
    $region29: #{gat_forward.1} parent=1 // pred_fallthru
      _
    // Predicated region
    $region30: #{gat_forward.1} parent=1 // pred_check
      _
    $region31: #{gat_forward.1} parent=1 // pred_check_branch
      %37 = sbr.rel (0) target = $region33
    $region32: #{gat_forward.1} parent=1 // pred_region
      _
    $region33: #{gat_forward.1} parent=1 // pred_fallthru
      _
    // Predicated region
    $region34: #{gat_forward.1} parent=1 // pred_check
      _
    $region35: #{gat_forward.1} parent=1 // pred_check_branch
      %39 = sbr.rel (0) target = $region37
    $region36: #{gat_forward.1} parent=1 // pred_region
      _
    $region37: #{gat_forward.1} parent=1 // pred_fallthru
      _
    // Predicated region
    $region38: #{gat_forward.1} parent=1 // pred_check
      _
    $region39: #{gat_forward.1} parent=1 // pred_check_branch
      %41 = sbr.rel (0) target = $region41
    $region40: #{gat_forward.1} parent=1 // pred_region
      _
    $region41: #{gat_forward.1} parent=1 // pred_fallthru
      _
    // Predicated region
    $region42: #{gat_forward.1} parent=1 // pred_check
      _
    $region43: #{gat_forward.1} parent=1 // pred_check_branch
      %43 = sbr.rel (0) target = $region45
    $region44: #{gat_forward.1} parent=1 // pred_region
      _
    $region45: #{gat_forward.1} parent=1 // pred_fallthru
      _
    // Predicated region
    $region46: #{gat_forward.1} parent=1 // pred_check
      _
    $region47: #{gat_forward.1} parent=1 // pred_check_branch
      %45 = sbr.rel (0) target = $region49
    $region48: #{gat_forward.1} parent=1 // pred_region
      _
    $region49: #{gat_forward.1} parent=1 // pred_fallthru
      _
    // Predicated region
    $region50: #{gat_forward.1} parent=1 // pred_check
      _
    $region51: #{gat_forward.1} parent=1 // pred_check_branch
      %47 = sbr.rel (0) target = $region53
    $region52: #{gat_forward.1} parent=1 // pred_region
      _
    $region53: #{gat_forward.1} parent=1 // pred_fallthru
      _
    // Predicated region
    $region54: #{gat_forward.1} parent=1 // pred_check
      _
    $region55: #{gat_forward.1} parent=1 // pred_check_branch
      %49 = sbr.rel (0) target = $region57
    $region56: #{gat_forward.1} parent=1 // pred_region
      _
    $region57: #{gat_forward.1} parent=1 // pred_fallthru
      _
    // Predicated region
    $region58: #{gat_forward.1} parent=1 // pred_check
      _
    $region59: #{gat_forward.1} parent=1 // pred_check_branch
      %51 = sbr.rel (0) target = $region61
    $region60: #{gat_forward.1} parent=1 // pred_region
      _
    $region61: #{gat_forward.1} parent=1 // pred_fallthru
      _
    // Predicated region
    $region62: #{gat_forward.1} parent=1 // pred_check
      _
    $region63: #{gat_forward.1} parent=1 // pred_check_branch
      %53 = sbr.rel (0) target = $region65
    $region64: #{gat_forward.1} parent=1 // pred_region
      _
    $region65: #{gat_forward.1} parent=1 // pred_fallthru
      _
    %54 = vst [vmem:[#allocation2 + $0x40] sm:$0xff] 0.0
    %55 = vst [vmem:[#allocation2 + $0x48] sm:$0xff] 0.0
    %56 = vst [vmem:[#allocation2 + $0x50] sm:$0xff] 0.0
    %57 = vst [vmem:[#allocation2 + $0x58] sm:$0xff] 0.0
    %58 = vst [vmem:[#allocation2 + $0x60] sm:$0xff] 0.0
    %59 = vst [vmem:[#allocation2 + $0x68] sm:$0xff] 0.0
    %60 = vst [vmem:[#allocation2 + $0x70] sm:$0xff] 0.0
    %61 = vst [vmem:[#allocation2 + $0x78] sm:$0xff] 0.0
    %62 = vst [vmem:[#allocation3 + $0x40] sm:$0xff] 0.0
    %63 = vst [vmem:[#allocation3 + $0x48] sm:$0xff] 0.0
    %64 = vst [vmem:[#allocation3 + $0x50] sm:$0xff] 0.0
    %65 = vst [vmem:[#allocation3 + $0x58] sm:$0xff] 0.0
    %66 = vst [vmem:[#allocation3 + $0x60] sm:$0xff] 0.0
    %67 = vst [vmem:[#allocation3 + $0x68] sm:$0xff] 0.0
    %68 = vst [vmem:[#allocation3 + $0x70] sm:$0xff] 0.0
    %69 = vst [vmem:[#allocation3 + $0x78] sm:$0xff] 0.0
    %v70 = vld [vmem:[%s0] sm:$0xff]
    %v71 = vld [vmem:[%s0 + $0x8] sm:$0xff]
    %v72 = vld [vmem:[%s0 + $0x10] sm:$0xff]
    %v73 = vld [vmem:[%s0 + $0x18] sm:$0xff]
    %v74 = vld [vmem:[%s0 + $0x20] sm:$0xff]
    %v75 = vld [vmem:[%s0 + $0x28] sm:$0xff]
    %v76 = vld [vmem:[%s0 + $0x30] sm:$0xff]
    %v77 = vld [vmem:[%s0 + $0x38] sm:$0xff]
    %v78 = vld [vmem:[%s0 + $0x40] sm:$0xff]
    %v79 = vld [vmem:[%s0 + $0x48] sm:$0xff]
    %v80 = vld [vmem:[%s0 + $0x50] sm:$0xff]
    %v81 = vld [vmem:[%s0 + $0x58] sm:$0xff]
    %v82 = vld [vmem:[%s0 + $0x60] sm:$0xff]
    %v83 = vld [vmem:[%s0 + $0x68] sm:$0xff]
    %v84 = vld [vmem:[%s0 + $0x70] sm:$0xff]
    %v85 = vld [vmem:[%s0 + $0x78] sm:$0xff]
    %v86 = vld [vmem:[%s4] sm:$0xff]
    %v87 = vld [vmem:[%s4 + $0x8] sm:$0xff]
    %vm88 = vcmask 130048
    %v90 = vsel %vm88, %v70, 0
    %v93 = vsel %vm88, %v71, 0
    %v96 = vsel %vm88, %v72, 0
    %v99 = vsel %vm88, %v73, 0
    %v102 = vsel %vm88, %v74, 0
    %v105 = vsel %vm88, %v75, 0
    %v108 = vsel %vm88, %v76, 0
    %v111 = vsel %vm88, %v77, 0
    %v114 = vsel %vm88, %v78, 0
    %v117 = vsel %vm88, %v79, 0
    %v120 = vsel %vm88, %v80, 0
    %v123 = vsel %vm88, %v81, 0
    %v126 = vsel %vm88, %v82, 0
    %v129 = vsel %vm88, %v83, 0
    %v132 = vsel %vm88, %v84, 0
    %v135 = vsel %vm88, %v85, 0
    %137 = vmatprep.subr.mxu0 0.0
    %138 = vmatpush1.msra.mxu0 %v86
    %139 = vmatprep.subr.mxu0 0.0
    %140 = vmatpush1.msra.mxu0 %v87
    %141 = vmatprep.subr.mxu0 0.0
    %142 = vmatpush1.msra.mxu0 0.0
    %143 = vmatprep.subr.mxu0 0.0
    %144 = vmatpush1.msra.mxu0 0.0
    %145 = vmatprep.subr.mxu0 0.0
    %146 = vmatpush1.msra.mxu0 0.0
    %147 = vmatprep.subr.mxu0 0.0
    %148 = vmatpush1.msra.mxu0 0.0
    %149 = vmatprep.subr.mxu0 0.0
    %150 = vmatpush1.msra.mxu0 0.0
    %151 = vmatprep.subr.mxu0 0.0
    %152 = vmatpush1.msra.mxu0 0.0
    %153 = vmatprep.subr.mxu0 0.0
    %154 = vmatpush1.msra.mxu0 0.0
    %155 = vmatprep.subr.mxu0 0.0
    %156 = vmatpush1.msra.mxu0 0.0
    %157 = vmatprep.subr.mxu0 0.0
    %158 = vmatpush1.msra.mxu0 0.0
    %159 = vmatprep.subr.mxu0 0.0
    %160 = vmatpush1.msra.mxu0 0.0
    %161 = vmatprep.subr.mxu0 0.0
    %162 = vmatpush1.msra.mxu0 0.0
    %163 = vmatprep.subr.mxu0 0.0
    %164 = vmatpush1.msra.mxu0 0.0
    %165 = vmatprep.subr.mxu0 0.0
    %166 = vmatpush1.msra.mxu0 0.0
    %167 = vmatprep.subr.mxu0 0.0
    %168 = vmatpush1.msra.mxu0 0.0
    %169 = vmatprep.subr.mxu0 0.0
    %170 = vmatpush1.msra.mxu0 0.0
    %171 = vmatprep.subr.mxu0 0.0
    %172 = vmatpush1.msra.mxu0 0.0
    %173 = vmatprep.subr.mxu0 0.0
    %174 = vmatpush1.msra.mxu0 0.0
    %175 = vmatprep.subr.mxu0 0.0
    %176 = vmatpush1.msra.mxu0 0.0
    %177 = vmatprep.subr.mxu0 0.0
    %178 = vmatpush1.msra.mxu0 0.0
    %179 = vmatprep.subr.mxu0 0.0
    %180 = vmatpush1.msra.mxu0 0.0
    %181 = vmatprep.subr.mxu0 0.0
    %182 = vmatpush1.msra.mxu0 0.0
    %183 = vmatprep.subr.mxu0 0.0
    %184 = vmatpush1.msra.mxu0 0.0
    %185 = vmatprep.subr.mxu0 0.0
    %186 = vmatpush1.msra.mxu0 0.0
    %187 = vmatprep.subr.mxu0 0.0
    %188 = vmatpush1.msra.mxu0 0.0
    %189 = vmatprep.subr.mxu0 0.0
    %190 = vmatpush1.msra.mxu0 0.0
    %191 = vmatprep.subr.mxu0 0.0
    %192 = vmatpush1.msra.mxu0 0.0
    %193 = vmatprep.subr.mxu0 0.0
    %194 = vmatpush1.msra.mxu0 0.0
    %195 = vmatprep.subr.mxu0 0.0
    %196 = vmatpush1.msra.mxu0 0.0
    %197 = vmatprep.subr.mxu0 0.0
    %198 = vmatpush1.msra.mxu0 0.0
    %199 = vmatprep.subr.mxu0 0.0
    %200 = vmatpush1.msra.mxu0 0.0
    %201 = vmatprep.mubr.f32.mxu0 0.0
    %202 = vmatmul.mubr.f32.gmra.mrb[0].mxu0 %v90
    %v203 = vpop.f32.mrb[0].mxu0
    %v204 = vadd.f32 0.0, %v203
    %v205 = vpop.f32.mrb[0].mxu0
    %206 = vmatprep.mubr.f32.mxu0 0.0
    %207 = vmatmul.mubr.f32.gmra.mrb[0].mxu0 %v93
    %v208 = vpop.f32.mrb[0].mxu0
    %v209 = vadd.f32 0.0, %v208
    %v210 = vpop.f32.mrb[0].mxu0
    %211 = vmatprep.mubr.f32.mxu0 0.0
    %212 = vmatmul.mubr.f32.gmra.mrb[0].mxu0 %v96
    %v213 = vpop.f32.mrb[0].mxu0
    %v214 = vadd.f32 0.0, %v213
    %v215 = vpop.f32.mrb[0].mxu0
    %216 = vmatprep.mubr.f32.mxu0 0.0
    %217 = vmatmul.mubr.f32.gmra.mrb[0].mxu0 %v99
    %v218 = vpop.f32.mrb[0].mxu0
    %v219 = vadd.f32 0.0, %v218
    %v220 = vpop.f32.mrb[0].mxu0
    %221 = vmatprep.mubr.f32.mxu0 0.0
    %222 = vmatmul.mubr.f32.gmra.mrb[0].mxu0 %v102
    %v223 = vpop.f32.mrb[0].mxu0
    %v224 = vadd.f32 0.0, %v223
    %v225 = vpop.f32.mrb[0].mxu0
    %226 = vmatprep.mubr.f32.mxu0 0.0
    %227 = vmatmul.mubr.f32.gmra.mrb[0].mxu0 %v105
    %v228 = vpop.f32.mrb[0].mxu0
    %v229 = vadd.f32 0.0, %v228
    %v230 = vpop.f32.mrb[0].mxu0
    %231 = vmatprep.mubr.f32.mxu0 0.0
    %232 = vmatmul.mubr.f32.gmra.mrb[0].mxu0 %v108
    %v233 = vpop.f32.mrb[0].mxu0
    %v234 = vadd.f32 0.0, %v233
    %v235 = vpop.f32.mrb[0].mxu0
    %236 = vmatprep.mubr.f32.mxu0 0.0
    %237 = vmatmul.mubr.f32.gmra.mrb[0].mxu0 %v111
    %v238 = vpop.f32.mrb[0].mxu0
    %v239 = vadd.f32 0.0, %v238
    %v240 = vpop.f32.mrb[0].mxu0
    %241 = vmatprep.mubr.f32.mxu0 0.0
    %242 = vmatmul.mubr.f32.gmra.mrb[0].mxu0 %v114
    %v243 = vpop.f32.mrb[0].mxu0
    %v244 = vadd.f32 0.0, %v243
    %v245 = vpop.f32.mrb[0].mxu0
    %246 = vmatprep.mubr.f32.mxu0 0.0
    %247 = vmatmul.mubr.f32.gmra.mrb[0].mxu0 %v117
    %v248 = vpop.f32.mrb[0].mxu0
    %v249 = vadd.f32 0.0, %v248
    %v250 = vpop.f32.mrb[0].mxu0
    %251 = vmatprep.mubr.f32.mxu0 0.0
    %252 = vmatmul.mubr.f32.gmra.mrb[0].mxu0 %v120
    %v253 = vpop.f32.mrb[0].mxu0
    %v254 = vadd.f32 0.0, %v253
    %v255 = vpop.f32.mrb[0].mxu0
    %256 = vmatprep.mubr.f32.mxu0 0.0
    %257 = vmatmul.mubr.f32.gmra.mrb[0].mxu0 %v123
    %v258 = vpop.f32.mrb[0].mxu0
    %v259 = vadd.f32 0.0, %v258
    %v260 = vpop.f32.mrb[0].mxu0
    %261 = vmatprep.mubr.f32.mxu0 0.0
    %262 = vmatmul.mubr.f32.gmra.mrb[0].mxu0 %v126
    %v263 = vpop.f32.mrb[0].mxu0
    %v264 = vadd.f32 0.0, %v263
    %v265 = vpop.f32.mrb[0].mxu0
    %266 = vmatprep.mubr.f32.mxu0 0.0
    %267 = vmatmul.mubr.f32.gmra.mrb[0].mxu0 %v129
    %v268 = vpop.f32.mrb[0].mxu0
    %v269 = vadd.f32 0.0, %v268
    %v270 = vpop.f32.mrb[0].mxu0
    %271 = vmatprep.mubr.f32.mxu0 0.0
    %272 = vmatmul.mubr.f32.gmra.mrb[0].mxu0 %v132
    %v273 = vpop.f32.mrb[0].mxu0
    %v274 = vadd.f32 0.0, %v273
    %v275 = vpop.f32.mrb[0].mxu0
    %276 = vmatprep.mubr.f32.mxu0 0.0
    %277 = vmatmul.mubr.f32.gmra.mrb[0].mxu0 %v135
    %v278 = vpop.f32.mrb[0].mxu0
    %v279 = vadd.f32 0.0, %v278
    %v280 = vpop.f32.mrb[0].mxu0
    %281 = vdwg.mxu0
    %v282 = vld [vmem:[%s6] sm:$0xff]
    %v283 = vld [vmem:[%s6 + $0x8] sm:$0xff]
    %v284 = vld [vmem:[%s6 + $0x10] sm:$0xff]
    %v285 = vld [vmem:[%s6 + $0x18] sm:$0xff]
    %v286 = vld [vmem:[%s6 + $0x20] sm:$0xff]
    %v287 = vld [vmem:[%s6 + $0x28] sm:$0xff]
    %v288 = vld [vmem:[%s6 + $0x30] sm:$0xff]
    %v289 = vld [vmem:[%s6 + $0x38] sm:$0xff]
    %v290 = vld [vmem:[%s6 + $0x40] sm:$0xff]
    %v291 = vld [vmem:[%s6 + $0x48] sm:$0xff]
    %v292 = vld [vmem:[%s6 + $0x50] sm:$0xff]
    %v293 = vld [vmem:[%s6 + $0x58] sm:$0xff]
    %v294 = vld [vmem:[%s6 + $0x60] sm:$0xff]
    %v295 = vld [vmem:[%s6 + $0x68] sm:$0xff]
    %v296 = vld [vmem:[%s6 + $0x70] sm:$0xff]
    %v297 = vld [vmem:[%s6 + $0x78] sm:$0xff]
    %298 = vmatprep.subr.mxu0 0.0
    %299 = vmatpush1.msra.mxu0 %v282
    %300 = vmatprep.subr.mxu0 0.0
    %301 = vmatpush1.msra.mxu0 %v283
    %302 = vmatprep.subr.mxu0 0.0
    %303 = vmatpush1.msra.mxu0 %v284
    %304 = vmatprep.subr.mxu0 0.0
    %305 = vmatpush1.msra.mxu0 %v285
    %306 = vmatprep.subr.mxu0 0.0
    %307 = vmatpush1.msra.mxu0 %v286
    %308 = vmatprep.subr.mxu0 0.0
    %309 = vmatpush1.msra.mxu0 %v287
    %310 = vmatprep.subr.mxu0 0.0
    %311 = vmatpush1.msra.mxu0 %v288
    %312 = vmatprep.subr.mxu0 0.0
    %313 = vmatpush1.msra.mxu0 %v289
    %314 = vmatprep.subr.mxu0 0.0
    %315 = vmatpush1.msra.mxu0 %v290
    %316 = vmatprep.subr.mxu0 0.0
    %317 = vmatpush1.msra.mxu0 %v291
    %318 = vmatprep.subr.mxu0 0.0
    %319 = vmatpush1.msra.mxu0 %v292
    %320 = vmatprep.subr.mxu0 0.0
    %321 = vmatpush1.msra.mxu0 %v293
    %322 = vmatprep.subr.mxu0 0.0
    %323 = vmatpush1.msra.mxu0 %v294
    %324 = vmatprep.subr.mxu0 0.0
    %325 = vmatpush1.msra.mxu0 %v295
    %326 = vmatprep.subr.mxu0 0.0
    %327 = vmatpush1.msra.mxu0 %v296
    %328 = vmatprep.subr.mxu0 0.0
    %329 = vmatpush1.msra.mxu0 %v297
    %330 = vmatprep.subr.mxu0 0.0
    %331 = vmatpush1.msra.mxu0 0.0
    %332 = vmatprep.subr.mxu0 0.0
    %333 = vmatpush1.msra.mxu0 0.0
    %334 = vmatprep.subr.mxu0 0.0
    %335 = vmatpush1.msra.mxu0 0.0
    %336 = vmatprep.subr.mxu0 0.0
    %337 = vmatpush1.msra.mxu0 0.0
    %338 = vmatprep.subr.mxu0 0.0
    %339 = vmatpush1.msra.mxu0 0.0
    %340 = vmatprep.subr.mxu0 0.0
    %341 = vmatpush1.msra.mxu0 0.0
    %342 = vmatprep.subr.mxu0 0.0
    %343 = vmatpush1.msra.mxu0 0.0
    %344 = vmatprep.subr.mxu0 0.0
    %345 = vmatpush1.msra.mxu0 0.0
    %346 = vmatprep.subr.mxu0 0.0
    %347 = vmatpush1.msra.mxu0 0.0
    %348 = vmatprep.subr.mxu0 0.0
    %349 = vmatpush1.msra.mxu0 0.0
    %350 = vmatprep.subr.mxu0 0.0
    %351 = vmatpush1.msra.mxu0 0.0
    %352 = vmatprep.subr.mxu0 0.0
    %353 = vmatpush1.msra.mxu0 0.0
    %354 = vmatprep.subr.mxu0 0.0
    %355 = vmatpush1.msra.mxu0 0.0
    %356 = vmatprep.subr.mxu0 0.0
    %357 = vmatpush1.msra.mxu0 0.0
    %358 = vmatprep.subr.mxu0 0.0
    %359 = vmatpush1.msra.mxu0 0.0
    %360 = vmatprep.subr.mxu0 0.0
    %361 = vmatpush1.msra.mxu0 0.0
    %362 = vmatprep.mubr.f32.mxu0 0.0
    %363 = vmatmul.mubr.f32.gmra.mrb[0].mxu0 %v204
    %v364 = vpop.f32.mrb[0].mxu0
    %v365 = vadd.f32 0.0, %v364
    %v366 = vpop.f32.mrb[0].mxu0
    %367 = vmatprep.mubr.f32.mxu0 0.0
    %368 = vmatmul.mubr.f32.gmra.mrb[0].mxu0 %v209
    %v369 = vpop.f32.mrb[0].mxu0
    %v370 = vadd.f32 0.0, %v369
    %v371 = vpop.f32.mrb[0].mxu0
    %372 = vmatprep.mubr.f32.mxu0 0.0
    %373 = vmatmul.mubr.f32.gmra.mrb[0].mxu0 %v214
    %v374 = vpop.f32.mrb[0].mxu0
    %v375 = vadd.f32 0.0, %v374
    %v376 = vpop.f32.mrb[0].mxu0
    %377 = vmatprep.mubr.f32.mxu0 0.0
    %378 = vmatmul.mubr.f32.gmra.mrb[0].mxu0 %v219
    %v379 = vpop.f32.mrb[0].mxu0
    %v380 = vadd.f32 0.0, %v379
    %v381 = vpop.f32.mrb[0].mxu0
    %382 = vmatprep.mubr.f32.mxu0 0.0
    %383 = vmatmul.mubr.f32.gmra.mrb[0].mxu0 %v224
    %v384 = vpop.f32.mrb[0].mxu0
    %v385 = vadd.f32 0.0, %v384
    %v386 = vpop.f32.mrb[0].mxu0
    %387 = vmatprep.mubr.f32.mxu0 0.0
    %388 = vmatmul.mubr.f32.gmra.mrb[0].mxu0 %v229
    %v389 = vpop.f32.mrb[0].mxu0
    %v390 = vadd.f32 0.0, %v389
    %v391 = vpop.f32.mrb[0].mxu0
    %392 = vmatprep.mubr.f32.mxu0 0.0
    %393 = vmatmul.mubr.f32.gmra.mrb[0].mxu0 %v234
    %v394 = vpop.f32.mrb[0].mxu0
    %v395 = vadd.f32 0.0, %v394
    %v396 = vpop.f32.mrb[0].mxu0
    %397 = vmatprep.mubr.f32.mxu0 0.0
    %398 = vmatmul.mubr.f32.gmra.mrb[0].mxu0 %v239
    %v399 = vpop.f32.mrb[0].mxu0
    %v400 = vadd.f32 0.0, %v399
    %v401 = vpop.f32.mrb[0].mxu0
    %402 = vdwg.mxu0
    %v403 = vld [vmem:[%s5] sm:$0xf]
    %404 = vmatprep.subr.mxu0 0.0
    %405 = vmatpush1.xpose.msra.mxu0 %v204
    %406 = vmatprep.subr.mxu0 0.0
    %407 = vmatpush1.xpose.msra.mxu0 %v209
    %408 = vmatprep.subr.mxu0 0.0
    %409 = vmatpush1.xpose.msra.mxu0 %v214
    %410 = vmatprep.subr.mxu0 0.0
    %411 = vmatpush1.xpose.msra.mxu0 %v219
    %412 = vmatprep.subr.mxu0 0.0
    %413 = vmatpush1.xpose.msra.mxu0 %v224
    %414 = vmatprep.subr.mxu0 0.0
    %415 = vmatpush1.xpose.msra.mxu0 %v229
    %416 = vmatprep.subr.mxu0 0.0
    %417 = vmatpush1.xpose.msra.mxu0 %v234
    %418 = vmatprep.subr.mxu0 0.0
    %419 = vmatpush1.xpose.msra.mxu0 %v239
    %420 = vmatprep.subr.mxu0 0.0
    %421 = vmatpush1.xpose.msra.mxu0 %v244
    %422 = vmatprep.subr.mxu0 0.0
    %423 = vmatpush1.xpose.msra.mxu0 %v249
    %424 = vmatprep.subr.mxu0 0.0
    %425 = vmatpush1.xpose.msra.mxu0 %v254
    %426 = vmatprep.subr.mxu0 0.0
    %427 = vmatpush1.xpose.msra.mxu0 %v259
    %428 = vmatprep.subr.mxu0 0.0
    %429 = vmatpush1.xpose.msra.mxu0 %v264
    %430 = vmatprep.subr.mxu0 0.0
    %431 = vmatpush1.xpose.msra.mxu0 %v269
    %432 = vmatprep.subr.mxu0 0.0
    %433 = vmatpush1.xpose.msra.mxu0 %v274
    %434 = vmatprep.subr.mxu0 0.0
    %435 = vmatpush1.xpose.msra.mxu0 %v279
    %436 = vmatprep.subr.mxu0 0.0
    %437 = vmatpush1.xpose.msra.mxu0 0.0
    %438 = vmatprep.subr.mxu0 0.0
    %439 = vmatpush1.xpose.msra.mxu0 0.0
    %440 = vmatprep.subr.mxu0 0.0
    %441 = vmatpush1.xpose.msra.mxu0 0.0
    %442 = vmatprep.subr.mxu0 0.0
    %443 = vmatpush1.xpose.msra.mxu0 0.0
    %444 = vmatprep.subr.mxu0 0.0
    %445 = vmatpush1.xpose.msra.mxu0 0.0
    %446 = vmatprep.subr.mxu0 0.0
    %447 = vmatpush1.xpose.msra.mxu0 0.0
    %448 = vmatprep.subr.mxu0 0.0
    %449 = vmatpush1.xpose.msra.mxu0 0.0
    %450 = vmatprep.subr.mxu0 0.0
    %451 = vmatpush1.xpose.msra.mxu0 0.0
    %452 = vmatprep.subr.mxu0 0.0
    %453 = vmatpush1.xpose.msra.mxu0 0.0
    %454 = vmatprep.subr.mxu0 0.0
    %455 = vmatpush1.xpose.msra.mxu0 0.0
    %456 = vmatprep.subr.mxu0 0.0
    %457 = vmatpush1.xpose.msra.mxu0 0.0
    %458 = vmatprep.subr.mxu0 0.0
    %459 = vmatpush1.xpose.msra.mxu0 0.0
    %460 = vmatprep.subr.mxu0 0.0
    %461 = vmatpush1.xpose.msra.mxu0 0.0
    %462 = vmatprep.subr.mxu0 0.0
    %463 = vmatpush1.xpose.msra.mxu0 0.0
    %464 = vmatprep.subr.mxu0 0.0
    %465 = vmatpush1.xpose.msra.mxu0 0.0
    %466 = vmatprep.subr.mxu0 0.0
    %467 = vmatpush1.xpose.msra.mxu0 0.0
    %468 = vmatprep.mubr.f32.mxu0 0.0
    %469 = vmatmul.mubr.f32.gmra.mrb[0].mxu0 %v403
    %v470 = vpop.f32.mrb[0].mxu0
    %v471 = vadd.f32 0.0, %v470
    %v472 = vpop.f32.mrb[0].mxu0
    %473 = vdwg.mxu0
    %474 = vst [vmem:[#allocation4] sm:$0xff] %v204
    %475 = vst [vmem:[#allocation4 + $0x8] sm:$0xff] %v209
    %476 = vst [vmem:[#allocation4 + $0x10] sm:$0xff] %v214
    %477 = vst [vmem:[#allocation4 + $0x18] sm:$0xff] %v219
    %478 = vst [vmem:[#allocation4 + $0x20] sm:$0xff] %v224
    %479 = vst [vmem:[#allocation4 + $0x28] sm:$0xff] %v229
    %480 = vst [vmem:[#allocation4 + $0x30] sm:$0xff] %v234
    %481 = vst [vmem:[#allocation4 + $0x38] sm:$0xff] %v239
    %482 = vst [vmem:[#allocation4 + $0x40] sm:$0xff] %v244
    %483 = vst [vmem:[#allocation4 + $0x48] sm:$0xff] %v249
    %484 = vst [vmem:[#allocation4 + $0x50] sm:$0xff] %v254
    %485 = vst [vmem:[#allocation4 + $0x58] sm:$0xff] %v259
    %486 = vst [vmem:[#allocation4 + $0x60] sm:$0xff] %v264
    %487 = vst [vmem:[#allocation4 + $0x68] sm:$0xff] %v269
    %488 = vst [vmem:[#allocation4 + $0x70] sm:$0xff] %v274
    %489 = vst [vmem:[#allocation4 + $0x78] sm:$0xff] %v279
    %491 = vset.pattern.permute.xlu0 0
    %492 = vperm.xlu0 %491, %v365
    %v493 = vpop.permute.xlu0 %492
    %496 = vset.pattern.permute.xlu0 0
    %497 = vperm.xlu0 %496, %v370
    %v498 = vpop.permute.xlu0 %497
    %501 = vset.pattern.permute.xlu0 0
    %502 = vperm.xlu0 %501, %v375
    %v503 = vpop.permute.xlu0 %502
    %506 = vset.pattern.permute.xlu0 0
    %507 = vperm.xlu0 %506, %v380
    %v508 = vpop.permute.xlu0 %507
    %511 = vset.pattern.permute.xlu0 0
    %512 = vperm.xlu0 %511, %v385
    %v513 = vpop.permute.xlu0 %512
    %516 = vset.pattern.permute.xlu0 0
    %517 = vperm.xlu0 %516, %v390
    %v518 = vpop.permute.xlu0 %517
    %521 = vset.pattern.permute.xlu0 0
    %522 = vperm.xlu0 %521, %v395
    %v523 = vpop.permute.xlu0 %522
    %526 = vset.pattern.permute.xlu0 0
    %527 = vperm.xlu0 %526, %v400
    %v528 = vpop.permute.xlu0 %527
    %v530 = vlaneseq
    %v531 = vshrl.u32 %v530, 7
    %v532 = vsub.s32 0, %v531
    %v533 = vrot.slane %v471, %v532
    %v534 = vadd.f32 %v493, %v533
    %v535 = vadd.f32 %v498, %v533
    %v536 = vadd.f32 %v503, %v533
    %v537 = vadd.f32 %v508, %v533
    %v538 = vadd.f32 %v513, %v533
    %v539 = vadd.f32 %v518, %v533
    %v540 = vadd.f32 %v523, %v533
    %v541 = vadd.f32 %v528, %v533
    %v542 = vmul.f32 %v534, 0.2
    %v543 = vmul.f32 %v535, 0.2
    %v544 = vmul.f32 %v536, 0.2
    %v545 = vmul.f32 %v537, 0.2
    %v546 = vmul.f32 %v538, 0.2
    %v547 = vmul.f32 %v539, 0.2
    %v548 = vmul.f32 %v540, 0.2
    %v549 = vmul.f32 %v541, 0.2
    %v550 = vmax.f32 %v534, %v542
    %v551 = vmax.f32 %v535, %v543
    %v552 = vmax.f32 %v536, %v544
    %v553 = vmax.f32 %v537, %v545
    %v554 = vmax.f32 %v538, %v546
    %v555 = vmax.f32 %v539, %v547
    %v556 = vmax.f32 %v540, %v548
    %v557 = vmax.f32 %v541, %v549
    %v558 = vld [vmem:[%s1] sm:$0xff]
    %v559 = vld [vmem:[%s1 + $0x8] sm:$0xff]
    %v560 = vld [vmem:[%s1 + $0x10] sm:$0xff]
    %v561 = vld [vmem:[%s1 + $0x18] sm:$0xff]
    %v562 = vld [vmem:[%s1 + $0x20] sm:$0xff]
    %v563 = vld [vmem:[%s1 + $0x28] sm:$0xff]
    %v564 = vld [vmem:[%s1 + $0x30] sm:$0xff]
    %v565 = vld [vmem:[%s1 + $0x38] sm:$0xff]
    %v566 = vadd.f32 %v550, %v558
    %v567 = vadd.f32 %v551, %v559
    %v568 = vadd.f32 %v552, %v560
    %v569 = vadd.f32 %v553, %v561
    %v570 = vadd.f32 %v554, %v562
    %v571 = vadd.f32 %v555, %v563
    %v572 = vadd.f32 %v556, %v564
    %v573 = vadd.f32 %v557, %v565
    %574 = vmax.xlane.f32.xlu0 %v566
    %v575 = vpop.xlane.xlu0 %574
    %576 = vmax.xlane.f32.xlu0 %v567
    %v577 = vpop.xlane.xlu0 %576
    %578 = vmax.xlane.f32.xlu0 %v568
    %v579 = vpop.xlane.xlu0 %578
    %580 = vmax.xlane.f32.xlu0 %v569
    %v581 = vpop.xlane.xlu0 %580
    %582 = vmax.xlane.f32.xlu0 %v570
    %v583 = vpop.xlane.xlu0 %582
    %584 = vmax.xlane.f32.xlu0 %v571
    %v585 = vpop.xlane.xlu0 %584
    %586 = vmax.xlane.f32.xlu0 %v572
    %v587 = vpop.xlane.xlu0 %586
    %588 = vmax.xlane.f32.xlu0 %v573
    %v589 = vpop.xlane.xlu0 %588
    %v590 = vsub.f32 %v566, %v575
    %v591 = vsub.f32 %v567, %v577
    %v592 = vsub.f32 %v568, %v579
    %v593 = vsub.f32 %v569, %v581
    %v594 = vsub.f32 %v570, %v583
    %v595 = vsub.f32 %v571, %v585
    %v596 = vsub.f32 %v572, %v587
    %v597 = vsub.f32 %v573, %v589
    %v598 = vmul.f32 %v590, 1.442695
    %v599 = vpow.pop %v598
    %v600 = vmul.f32 %v591, 1.442695
    %v601 = vpow.pop %v600
    %v602 = vmul.f32 %v592, 1.442695
    %v603 = vpow.pop %v602
    %v604 = vmul.f32 %v593, 1.442695
    %v605 = vpow.pop %v604
    %v606 = vmul.f32 %v594, 1.442695
    %v607 = vpow.pop %v606
    %v608 = vmul.f32 %v595, 1.442695
    %v609 = vpow.pop %v608
    %v610 = vmul.f32 %v596, 1.442695
    %v611 = vpow.pop %v610
    %v612 = vmul.f32 %v597, 1.442695
    %v613 = vpow.pop %v612
    %v614 = vld [vmem:[#allocation4] sm:$0xff]
    %v615 = vld [vmem:[#allocation4 + $0x8] sm:$0xff]
    %v616 = vld [vmem:[#allocation4 + $0x10] sm:$0xff]
    %v617 = vld [vmem:[#allocation4 + $0x18] sm:$0xff]
    %v618 = vld [vmem:[#allocation4 + $0x20] sm:$0xff]
    %v619 = vld [vmem:[#allocation4 + $0x28] sm:$0xff]
    %v620 = vld [vmem:[#allocation4 + $0x30] sm:$0xff]
    %v621 = vld [vmem:[#allocation4 + $0x38] sm:$0xff]
    %v622 = vld [vmem:[#allocation4 + $0x40] sm:$0xff]
    %v623 = vld [vmem:[#allocation4 + $0x48] sm:$0xff]
    %v624 = vld [vmem:[#allocation4 + $0x50] sm:$0xff]
    %v625 = vld [vmem:[#allocation4 + $0x58] sm:$0xff]
    %v626 = vld [vmem:[#allocation4 + $0x60] sm:$0xff]
    %v627 = vld [vmem:[#allocation4 + $0x68] sm:$0xff]
    %v628 = vld [vmem:[#allocation4 + $0x70] sm:$0xff]
    %v629 = vld [vmem:[#allocation4 + $0x78] sm:$0xff]
    %630 = vmatprep.subr.mxu0 0.0
    %631 = vmatpush1.msra.mxu0 %v614
    %632 = vmatprep.subr.mxu0 0.0
    %633 = vmatpush1.msra.mxu0 %v615
    %634 = vmatprep.subr.mxu0 0.0
    %635 = vmatpush1.msra.mxu0 %v616
    %636 = vmatprep.subr.mxu0 0.0
    %637 = vmatpush1.msra.mxu0 %v617
    %638 = vmatprep.subr.mxu0 0.0
    %639 = vmatpush1.msra.mxu0 %v618
    %640 = vmatprep.subr.mxu0 0.0
    %641 = vmatpush1.msra.mxu0 %v619
    %642 = vmatprep.subr.mxu0 0.0
    %643 = vmatpush1.msra.mxu0 %v620
    %644 = vmatprep.subr.mxu0 0.0
    %645 = vmatpush1.msra.mxu0 %v621
    %646 = vmatprep.subr.mxu0 0.0
    %647 = vmatpush1.msra.mxu0 %v622
    %648 = vmatprep.subr.mxu0 0.0
    %649 = vmatpush1.msra.mxu0 %v623
    %650 = vmatprep.subr.mxu0 0.0
    %651 = vmatpush1.msra.mxu0 %v624
    %652 = vmatprep.subr.mxu0 0.0
    %653 = vmatpush1.msra.mxu0 %v625
    %654 = vmatprep.subr.mxu0 0.0
    %655 = vmatpush1.msra.mxu0 %v626
    %656 = vmatprep.subr.mxu0 0.0
    %657 = vmatpush1.msra.mxu0 %v627
    %658 = vmatprep.subr.mxu0 0.0
    %659 = vmatpush1.msra.mxu0 %v628
    %660 = vmatprep.subr.mxu0 0.0
    %661 = vmatpush1.msra.mxu0 %v629
    %662 = vmatprep.subr.mxu0 0.0
    %663 = vmatpush1.msra.mxu0 0.0
    %664 = vmatprep.subr.mxu0 0.0
    %665 = vmatpush1.msra.mxu0 0.0
    %666 = vmatprep.subr.mxu0 0.0
    %667 = vmatpush1.msra.mxu0 0.0
    %668 = vmatprep.subr.mxu0 0.0
    %669 = vmatpush1.msra.mxu0 0.0
    %670 = vmatprep.subr.mxu0 0.0
    %671 = vmatpush1.msra.mxu0 0.0
    %672 = vmatprep.subr.mxu0 0.0
    %673 = vmatpush1.msra.mxu0 0.0
    %674 = vmatprep.subr.mxu0 0.0
    %675 = vmatpush1.msra.mxu0 0.0
    %676 = vmatprep.subr.mxu0 0.0
    %677 = vmatpush1.msra.mxu0 0.0
    %678 = vmatprep.subr.mxu0 0.0
    %679 = vmatpush1.msra.mxu0 0.0
    %680 = vmatprep.subr.mxu0 0.0
    %681 = vmatpush1.msra.mxu0 0.0
    %682 = vmatprep.subr.mxu0 0.0
    %683 = vmatpush1.msra.mxu0 0.0
    %684 = vmatprep.subr.mxu0 0.0
    %685 = vmatpush1.msra.mxu0 0.0
    %686 = vmatprep.subr.mxu0 0.0
    %687 = vmatpush1.msra.mxu0 0.0
    %688 = vmatprep.subr.mxu0 0.0
    %689 = vmatpush1.msra.mxu0 0.0
    %690 = vmatprep.subr.mxu0 0.0
    %691 = vmatpush1.msra.mxu0 0.0
    %692 = vmatprep.subr.mxu0 0.0
    %693 = vmatpush1.msra.mxu0 0.0
    %694 = vmatprep.mubr.f32.mxu0 0.0
    %695 = vmatmul.mubr.f32.gmra.mrb[0].mxu0 %v599
    %v696 = vpop.f32.mrb[0].mxu0
    %v697 = vadd.f32 0.0, %v696
    %v698 = vpop.f32.mrb[0].mxu0
    %699 = vmatprep.mubr.f32.mxu0 0.0
    %700 = vmatmul.mubr.f32.gmra.mrb[0].mxu0 %v601
    %v701 = vpop.f32.mrb[0].mxu0
    %v702 = vadd.f32 0.0, %v701
    %v703 = vpop.f32.mrb[0].mxu0
    %704 = vmatprep.mubr.f32.mxu0 0.0
    %705 = vmatmul.mubr.f32.gmra.mrb[0].mxu0 %v603
    %v706 = vpop.f32.mrb[0].mxu0
    %v707 = vadd.f32 0.0, %v706
    %v708 = vpop.f32.mrb[0].mxu0
    %709 = vmatprep.mubr.f32.mxu0 0.0
    %710 = vmatmul.mubr.f32.gmra.mrb[0].mxu0 %v605
    %v711 = vpop.f32.mrb[0].mxu0
    %v712 = vadd.f32 0.0, %v711
    %v713 = vpop.f32.mrb[0].mxu0
    %714 = vmatprep.mubr.f32.mxu0 0.0
    %715 = vmatmul.mubr.f32.gmra.mrb[0].mxu0 %v607
    %v716 = vpop.f32.mrb[0].mxu0
    %v717 = vadd.f32 0.0, %v716
    %v718 = vpop.f32.mrb[0].mxu0
    %719 = vmatprep.mubr.f32.mxu0 0.0
    %720 = vmatmul.mubr.f32.gmra.mrb[0].mxu0 %v609
    %v721 = vpop.f32.mrb[0].mxu0
    %v722 = vadd.f32 0.0, %v721
    %v723 = vpop.f32.mrb[0].mxu0
    %724 = vmatprep.mubr.f32.mxu0 0.0
    %725 = vmatmul.mubr.f32.gmra.mrb[0].mxu0 %v611
    %v726 = vpop.f32.mrb[0].mxu0
    %v727 = vadd.f32 0.0, %v726
    %v728 = vpop.f32.mrb[0].mxu0
    %729 = vmatprep.mubr.f32.mxu0 0.0
    %730 = vmatmul.mubr.f32.gmra.mrb[0].mxu0 %v613
    %v731 = vpop.f32.mrb[0].mxu0
    %v732 = vadd.f32 0.0, %v731
    %v733 = vpop.f32.mrb[0].mxu0
    %734 = vdwg.mxu0
    %v735 = vld [vmem:[%s2] sm:$0xff]
    %v736 = vld [vmem:[%s2 + $0x8] sm:$0xff]
    %v737 = vld [vmem:[%s2 + $0x10] sm:$0xff]
    %v738 = vld [vmem:[%s2 + $0x18] sm:$0xff]
    %v739 = vld [vmem:[%s2 + $0x20] sm:$0xff]
    %v740 = vld [vmem:[%s2 + $0x28] sm:$0xff]
    %v741 = vld [vmem:[%s2 + $0x30] sm:$0xff]
    %v742 = vld [vmem:[%s2 + $0x38] sm:$0xff]
    %v743 = vld [vmem:[%s2 + $0x40] sm:$0xff]
    %v744 = vld [vmem:[%s2 + $0x48] sm:$0xff]
    %v745 = vld [vmem:[%s2 + $0x50] sm:$0xff]
    %v746 = vld [vmem:[%s2 + $0x58] sm:$0xff]
    %v747 = vld [vmem:[%s2 + $0x60] sm:$0xff]
    %v748 = vld [vmem:[%s2 + $0x68] sm:$0xff]
    %v749 = vld [vmem:[%s2 + $0x70] sm:$0xff]
    %v750 = vld [vmem:[%s2 + $0x78] sm:$0xff]
    %751 = vmatprep.subr.mxu0 0.0
    %752 = vmatpush1.msra.mxu0 %v735
    %753 = vmatprep.subr.mxu0 0.0
    %754 = vmatpush1.msra.mxu0 %v736
    %755 = vmatprep.subr.mxu0 0.0
    %756 = vmatpush1.msra.mxu0 %v737
    %757 = vmatprep.subr.mxu0 0.0
    %758 = vmatpush1.msra.mxu0 %v738
    %759 = vmatprep.subr.mxu0 0.0
    %760 = vmatpush1.msra.mxu0 %v739
    %761 = vmatprep.subr.mxu0 0.0
    %762 = vmatpush1.msra.mxu0 %v740
    %763 = vmatprep.subr.mxu0 0.0
    %764 = vmatpush1.msra.mxu0 %v741
    %765 = vmatprep.subr.mxu0 0.0
    %766 = vmatpush1.msra.mxu0 %v742
    %767 = vmatprep.subr.mxu0 0.0
    %768 = vmatpush1.msra.mxu0 %v743
    %769 = vmatprep.subr.mxu0 0.0
    %770 = vmatpush1.msra.mxu0 %v744
    %771 = vmatprep.subr.mxu0 0.0
    %772 = vmatpush1.msra.mxu0 %v745
    %773 = vmatprep.subr.mxu0 0.0
    %774 = vmatpush1.msra.mxu0 %v746
    %775 = vmatprep.subr.mxu0 0.0
    %776 = vmatpush1.msra.mxu0 %v747
    %777 = vmatprep.subr.mxu0 0.0
    %778 = vmatpush1.msra.mxu0 %v748
    %779 = vmatprep.subr.mxu0 0.0
    %780 = vmatpush1.msra.mxu0 %v749
    %781 = vmatprep.subr.mxu0 0.0
    %782 = vmatpush1.msra.mxu0 %v750
    %783 = vmatprep.subr.mxu0 0.0
    %784 = vmatpush1.msra.mxu0 0.0
    %785 = vmatprep.subr.mxu0 0.0
    %786 = vmatpush1.msra.mxu0 0.0
    %787 = vmatprep.subr.mxu0 0.0
    %788 = vmatpush1.msra.mxu0 0.0
    %789 = vmatprep.subr.mxu0 0.0
    %790 = vmatpush1.msra.mxu0 0.0
    %791 = vmatprep.subr.mxu0 0.0
    %792 = vmatpush1.msra.mxu0 0.0
    %793 = vmatprep.subr.mxu0 0.0
    %794 = vmatpush1.msra.mxu0 0.0
    %795 = vmatprep.subr.mxu0 0.0
    %796 = vmatpush1.msra.mxu0 0.0
    %797 = vmatprep.subr.mxu0 0.0
    %798 = vmatpush1.msra.mxu0 0.0
    %799 = vmatprep.subr.mxu0 0.0
    %800 = vmatpush1.msra.mxu0 0.0
    %801 = vmatprep.subr.mxu0 0.0
    %802 = vmatpush1.msra.mxu0 0.0
    %803 = vmatprep.subr.mxu0 0.0
    %804 = vmatpush1.msra.mxu0 0.0
    %805 = vmatprep.subr.mxu0 0.0
    %806 = vmatpush1.msra.mxu0 0.0
    %807 = vmatprep.subr.mxu0 0.0
    %808 = vmatpush1.msra.mxu0 0.0
    %809 = vmatprep.subr.mxu0 0.0
    %810 = vmatpush1.msra.mxu0 0.0
    %811 = vmatprep.subr.mxu0 0.0
    %812 = vmatpush1.msra.mxu0 0.0
    %813 = vmatprep.subr.mxu0 0.0
    %814 = vmatpush1.msra.mxu0 0.0
    %815 = vmatprep.mubr.f32.mxu0 0.0
    %816 = vmatmul.mubr.f32.gmra.mrb[0].mxu0 %v599
    %v817 = vpop.f32.mrb[0].mxu0
    %v818 = vadd.f32 0.0, %v817
    %v819 = vpop.f32.mrb[0].mxu0
    %820 = vmatprep.mubr.f32.mxu0 0.0
    %821 = vmatmul.mubr.f32.gmra.mrb[0].mxu0 %v601
    %v822 = vpop.f32.mrb[0].mxu0
    %v823 = vadd.f32 0.0, %v822
    %v824 = vpop.f32.mrb[0].mxu0
    %825 = vmatprep.mubr.f32.mxu0 0.0
    %826 = vmatmul.mubr.f32.gmra.mrb[0].mxu0 %v603
    %v827 = vpop.f32.mrb[0].mxu0
    %v828 = vadd.f32 0.0, %v827
    %v829 = vpop.f32.mrb[0].mxu0
    %830 = vmatprep.mubr.f32.mxu0 0.0
    %831 = vmatmul.mubr.f32.gmra.mrb[0].mxu0 %v605
    %v832 = vpop.f32.mrb[0].mxu0
    %v833 = vadd.f32 0.0, %v832
    %v834 = vpop.f32.mrb[0].mxu0
    %835 = vmatprep.mubr.f32.mxu0 0.0
    %836 = vmatmul.mubr.f32.gmra.mrb[0].mxu0 %v607
    %v837 = vpop.f32.mrb[0].mxu0
    %v838 = vadd.f32 0.0, %v837
    %v839 = vpop.f32.mrb[0].mxu0
    %840 = vmatprep.mubr.f32.mxu0 0.0
    %841 = vmatmul.mubr.f32.gmra.mrb[0].mxu0 %v609
    %v842 = vpop.f32.mrb[0].mxu0
    %v843 = vadd.f32 0.0, %v842
    %v844 = vpop.f32.mrb[0].mxu0
    %845 = vmatprep.mubr.f32.mxu0 0.0
    %846 = vmatmul.mubr.f32.gmra.mrb[0].mxu0 %v611
    %v847 = vpop.f32.mrb[0].mxu0
    %v848 = vadd.f32 0.0, %v847
    %v849 = vpop.f32.mrb[0].mxu0
    %850 = vmatprep.mubr.f32.mxu0 0.0
    %851 = vmatmul.mubr.f32.gmra.mrb[0].mxu0 %v613
    %v852 = vpop.f32.mrb[0].mxu0
    %v853 = vadd.f32 0.0, %v852
    %v854 = vpop.f32.mrb[0].mxu0
    %855 = vdwg.mxu0
    %v856 = vrcp.pop %v818
    %v857 = vrcp.pop %v823
    %v858 = vrcp.pop %v828
    %v859 = vrcp.pop %v833
    %v860 = vrcp.pop %v838
    %v861 = vrcp.pop %v843
    %v862 = vrcp.pop %v848
    %v863 = vrcp.pop %v853
    %865 = vset.pattern.permute.xlu0 0
    %866 = vperm.xlu0 %865, %v856
    %v867 = vpop.permute.xlu0 %866
    %870 = vset.pattern.permute.xlu0 0
    %871 = vperm.xlu0 %870, %v857
    %v872 = vpop.permute.xlu0 %871
    %875 = vset.pattern.permute.xlu0 0
    %876 = vperm.xlu0 %875, %v858
    %v877 = vpop.permute.xlu0 %876
    %880 = vset.pattern.permute.xlu0 0
    %881 = vperm.xlu0 %880, %v859
    %v882 = vpop.permute.xlu0 %881
    %885 = vset.pattern.permute.xlu0 0
    %886 = vperm.xlu0 %885, %v860
    %v887 = vpop.permute.xlu0 %886
    %890 = vset.pattern.permute.xlu0 0
    %891 = vperm.xlu0 %890, %v861
    %v892 = vpop.permute.xlu0 %891
    %895 = vset.pattern.permute.xlu0 0
    %896 = vperm.xlu0 %895, %v862
    %v897 = vpop.permute.xlu0 %896
    %900 = vset.pattern.permute.xlu0 0
    %901 = vperm.xlu0 %900, %v863
    %v902 = vpop.permute.xlu0 %901
    %v904 = vmul.f32 %v697, %v867
    %v905 = vmul.f32 %v702, %v872
    %v906 = vmul.f32 %v707, %v877
    %v907 = vmul.f32 %v712, %v882
    %v908 = vmul.f32 %v717, %v887
    %v909 = vmul.f32 %v722, %v892
    %v910 = vmul.f32 %v727, %v897
    %v911 = vmul.f32 %v732, %v902
    %v912 = vld [vmem:[%s3] sm:$0xff]
    %v913 = vld [vmem:[%s3 + $0x8] sm:$0xff]
    %v914 = vld [vmem:[%s3 + $0x10] sm:$0xff]
    %v915 = vld [vmem:[%s3 + $0x18] sm:$0xff]
    %916 = vset.pattern.permute.xlu0 1
    %917 = vperm.xlu0 %916, %v365
    %v918 = vpop.permute.xlu0 %917
    %920 = vset.pattern.permute.xlu0 1
    %921 = vperm.xlu0 %920, %v370
    %v922 = vpop.permute.xlu0 %921
    %924 = vset.pattern.permute.xlu0 1
    %925 = vperm.xlu0 %924, %v375
    %v926 = vpop.permute.xlu0 %925
    %928 = vset.pattern.permute.xlu0 1
    %929 = vperm.xlu0 %928, %v380
    %v930 = vpop.permute.xlu0 %929
    %932 = vset.pattern.permute.xlu0 1
    %933 = vperm.xlu0 %932, %v385
    %v934 = vpop.permute.xlu0 %933
    %936 = vset.pattern.permute.xlu0 1
    %937 = vperm.xlu0 %936, %v390
    %v938 = vpop.permute.xlu0 %937
    %940 = vset.pattern.permute.xlu0 1
    %941 = vperm.xlu0 %940, %v395
    %v942 = vpop.permute.xlu0 %941
    %944 = vset.pattern.permute.xlu0 1
    %945 = vperm.xlu0 %944, %v400
    %v946 = vpop.permute.xlu0 %945
    %v948 = vlaneseq
    %v949 = vshrl.u32 %v948, 7
    %v950 = vsub.s32 1, %v949
    %v951 = vrot.slane %v471, %v950
    %v952 = vadd.f32 %v918, %v951
    %v953 = vadd.f32 %v922, %v951
    %v954 = vadd.f32 %v926, %v951
    %v955 = vadd.f32 %v930, %v951
    %v956 = vadd.f32 %v934, %v951
    %v957 = vadd.f32 %v938, %v951
    %v958 = vadd.f32 %v942, %v951
    %v959 = vadd.f32 %v946, %v951
    %v960 = vmul.f32 %v952, 0.2
    %v961 = vmul.f32 %v953, 0.2
    %v962 = vmul.f32 %v954, 0.2
    %v963 = vmul.f32 %v955, 0.2
    %v964 = vmul.f32 %v956, 0.2
    %v965 = vmul.f32 %v957, 0.2
    %v966 = vmul.f32 %v958, 0.2
    %v967 = vmul.f32 %v959, 0.2
    %v968 = vmax.f32 %v952, %v960
    %v969 = vmax.f32 %v953, %v961
    %v970 = vmax.f32 %v954, %v962
    %v971 = vmax.f32 %v955, %v963
    %v972 = vmax.f32 %v956, %v964
    %v973 = vmax.f32 %v957, %v965
    %v974 = vmax.f32 %v958, %v966
    %v975 = vmax.f32 %v959, %v967
    %v976 = vadd.f32 %v968, %v558
    %v977 = vadd.f32 %v969, %v559
    %v978 = vadd.f32 %v970, %v560
    %v979 = vadd.f32 %v971, %v561
    %v980 = vadd.f32 %v972, %v562
    %v981 = vadd.f32 %v973, %v563
    %v982 = vadd.f32 %v974, %v564
    %v983 = vadd.f32 %v975, %v565
    %984 = vmax.xlane.f32.xlu0 %v976
    %v985 = vpop.xlane.xlu0 %984
    %986 = vmax.xlane.f32.xlu0 %v977
    %v987 = vpop.xlane.xlu0 %986
    %988 = vmax.xlane.f32.xlu0 %v978
    %v989 = vpop.xlane.xlu0 %988
    %990 = vmax.xlane.f32.xlu0 %v979
    %v991 = vpop.xlane.xlu0 %990
    %992 = vmax.xlane.f32.xlu0 %v980
    %v993 = vpop.xlane.xlu0 %992
    %994 = vmax.xlane.f32.xlu0 %v981
    %v995 = vpop.xlane.xlu0 %994
    %996 = vmax.xlane.f32.xlu0 %v982
    %v997 = vpop.xlane.xlu0 %996
    %998 = vmax.xlane.f32.xlu0 %v983
    %v999 = vpop.xlane.xlu0 %998
    %v1000 = vsub.f32 %v976, %v985
    %v1001 = vsub.f32 %v977, %v987
    %v1002 = vsub.f32 %v978, %v989
    %v1003 = vsub.f32 %v979, %v991
    %v1004 = vsub.f32 %v980, %v993
    %v1005 = vsub.f32 %v981, %v995
    %v1006 = vsub.f32 %v982, %v997
    %v1007 = vsub.f32 %v983, %v999
    %v1008 = vmul.f32 %v1000, 1.442695
    %v1009 = vpow.pop %v1008
    %v1010 = vmul.f32 %v1001, 1.442695
    %v1011 = vpow.pop %v1010
    %v1012 = vmul.f32 %v1002, 1.442695
    %v1013 = vpow.pop %v1012
    %v1014 = vmul.f32 %v1003, 1.442695
    %v1015 = vpow.pop %v1014
    %v1016 = vmul.f32 %v1004, 1.442695
    %v1017 = vpow.pop %v1016
    %v1018 = vmul.f32 %v1005, 1.442695
    %v1019 = vpow.pop %v1018
    %v1020 = vmul.f32 %v1006, 1.442695
    %v1021 = vpow.pop %v1020
    %v1022 = vmul.f32 %v1007, 1.442695
    %v1023 = vpow.pop %v1022
    %1040 = vrot.lane.b32.xlu0 %v614, 96
    %v1041 = vpop.permute.xlu0 %1040
    %1042 = vrot.lane.b32.xlu0 %v615, 96
    %v1043 = vpop.permute.xlu0 %1042
    %1044 = vrot.lane.b32.xlu0 %v616, 96
    %v1045 = vpop.permute.xlu0 %1044
    %1046 = vrot.lane.b32.xlu0 %v617, 96
    %v1047 = vpop.permute.xlu0 %1046
    %1048 = vrot.lane.b32.xlu0 %v618, 96
    %v1049 = vpop.permute.xlu0 %1048
    %1050 = vrot.lane.b32.xlu0 %v619, 96
    %v1051 = vpop.permute.xlu0 %1050
    %1052 = vrot.lane.b32.xlu0 %v620, 96
    %v1053 = vpop.permute.xlu0 %1052
    %1054 = vrot.lane.b32.xlu0 %v621, 96
    %v1055 = vpop.permute.xlu0 %1054
    %1056 = vrot.lane.b32.xlu0 %v622, 96
    %v1057 = vpop.permute.xlu0 %1056
    %1058 = vrot.lane.b32.xlu0 %v623, 96
    %v1059 = vpop.permute.xlu0 %1058
    %1060 = vrot.lane.b32.xlu0 %v624, 96
    %v1061 = vpop.permute.xlu0 %1060
    %1062 = vrot.lane.b32.xlu0 %v625, 96
    %v1063 = vpop.permute.xlu0 %1062
    %1064 = vrot.lane.b32.xlu0 %v626, 96
    %v1065 = vpop.permute.xlu0 %1064
    %1066 = vrot.lane.b32.xlu0 %v627, 96
    %v1067 = vpop.permute.xlu0 %1066
    %1068 = vrot.lane.b32.xlu0 %v628, 96
    %v1069 = vpop.permute.xlu0 %1068
    %1070 = vrot.lane.b32.xlu0 %v629, 96
    %v1071 = vpop.permute.xlu0 %1070
    %1088 = vmatprep.subr.mxu0 0.0
    %1089 = vmatpush1.msra.mxu0 %v1041
    %1090 = vmatprep.subr.mxu0 0.0
    %1091 = vmatpush1.msra.mxu0 %v1043
    %1092 = vmatprep.subr.mxu0 0.0
    %1093 = vmatpush1.msra.mxu0 %v1045
    %1094 = vmatprep.subr.mxu0 0.0
    %1095 = vmatpush1.msra.mxu0 %v1047
    %1096 = vmatprep.subr.mxu0 0.0
    %1097 = vmatpush1.msra.mxu0 %v1049
    %1098 = vmatprep.subr.mxu0 0.0
    %1099 = vmatpush1.msra.mxu0 %v1051
    %1100 = vmatprep.subr.mxu0 0.0
    %1101 = vmatpush1.msra.mxu0 %v1053
    %1102 = vmatprep.subr.mxu0 0.0
    %1103 = vmatpush1.msra.mxu0 %v1055
    %1104 = vmatprep.subr.mxu0 0.0
    %1105 = vmatpush1.msra.mxu0 %v1057
    %1106 = vmatprep.subr.mxu0 0.0
    %1107 = vmatpush1.msra.mxu0 %v1059
    %1108 = vmatprep.subr.mxu0 0.0
    %1109 = vmatpush1.msra.mxu0 %v1061
    %1110 = vmatprep.subr.mxu0 0.0
    %1111 = vmatpush1.msra.mxu0 %v1063
    %1112 = vmatprep.subr.mxu0 0.0
    %1113 = vmatpush1.msra.mxu0 %v1065
    %1114 = vmatprep.subr.mxu0 0.0
    %1115 = vmatpush1.msra.mxu0 %v1067
    %1116 = vmatprep.subr.mxu0 0.0
    %1117 = vmatpush1.msra.mxu0 %v1069
    %1118 = vmatprep.subr.mxu0 0.0
    %1119 = vmatpush1.msra.mxu0 %v1071
    %1120 = vmatprep.subr.mxu0 0.0
    %1121 = vmatpush1.msra.mxu0 0.0
    %1122 = vmatprep.subr.mxu0 0.0
    %1123 = vmatpush1.msra.mxu0 0.0
    %1124 = vmatprep.subr.mxu0 0.0
    %1125 = vmatpush1.msra.mxu0 0.0
    %1126 = vmatprep.subr.mxu0 0.0
    %1127 = vmatpush1.msra.mxu0 0.0
    %1128 = vmatprep.subr.mxu0 0.0
    %1129 = vmatpush1.msra.mxu0 0.0
    %1130 = vmatprep.subr.mxu0 0.0
    %1131 = vmatpush1.msra.mxu0 0.0
    %1132 = vmatprep.subr.mxu0 0.0
    %1133 = vmatpush1.msra.mxu0 0.0
    %1134 = vmatprep.subr.mxu0 0.0
    %1135 = vmatpush1.msra.mxu0 0.0
    %1136 = vmatprep.subr.mxu0 0.0
    %1137 = vmatpush1.msra.mxu0 0.0
    %1138 = vmatprep.subr.mxu0 0.0
    %1139 = vmatpush1.msra.mxu0 0.0
    %1140 = vmatprep.subr.mxu0 0.0
    %1141 = vmatpush1.msra.mxu0 0.0
    %1142 = vmatprep.subr.mxu0 0.0
    %1143 = vmatpush1.msra.mxu0 0.0
    %1144 = vmatprep.subr.mxu0 0.0
    %1145 = vmatpush1.msra.mxu0 0.0
    %1146 = vmatprep.subr.mxu0 0.0
    %1147 = vmatpush1.msra.mxu0 0.0
    %1148 = vmatprep.subr.mxu0 0.0
    %1149 = vmatpush1.msra.mxu0 0.0
    %1150 = vmatprep.subr.mxu0 0.0
    %1151 = vmatpush1.msra.mxu0 0.0
    %1152 = vmatprep.mubr.f32.mxu0 0.0
    %1153 = vmatmul.mubr.f32.gmra.mrb[0].mxu0 %v1009
    %v1154 = vpop.f32.mrb[0].mxu0
    %v1155 = vadd.f32 0.0, %v1154
    %v1156 = vpop.f32.mrb[0].mxu0
    %1157 = vmatprep.mubr.f32.mxu0 0.0
    %1158 = vmatmul.mubr.f32.gmra.mrb[0].mxu0 %v1011
    %v1159 = vpop.f32.mrb[0].mxu0
    %v1160 = vadd.f32 0.0, %v1159
    %v1161 = vpop.f32.mrb[0].mxu0
    %1162 = vmatprep.mubr.f32.mxu0 0.0
    %1163 = vmatmul.mubr.f32.gmra.mrb[0].mxu0 %v1013
    %v1164 = vpop.f32.mrb[0].mxu0
    %v1165 = vadd.f32 0.0, %v1164
    %v1166 = vpop.f32.mrb[0].mxu0
    %1167 = vmatprep.mubr.f32.mxu0 0.0
    %1168 = vmatmul.mubr.f32.gmra.mrb[0].mxu0 %v1015
    %v1169 = vpop.f32.mrb[0].mxu0
    %v1170 = vadd.f32 0.0, %v1169
    %v1171 = vpop.f32.mrb[0].mxu0
    %1172 = vmatprep.mubr.f32.mxu0 0.0
    %1173 = vmatmul.mubr.f32.gmra.mrb[0].mxu0 %v1017
    %v1174 = vpop.f32.mrb[0].mxu0
    %v1175 = vadd.f32 0.0, %v1174
    %v1176 = vpop.f32.mrb[0].mxu0
    %1177 = vmatprep.mubr.f32.mxu0 0.0
    %1178 = vmatmul.mubr.f32.gmra.mrb[0].mxu0 %v1019
    %v1179 = vpop.f32.mrb[0].mxu0
    %v1180 = vadd.f32 0.0, %v1179
    %v1181 = vpop.f32.mrb[0].mxu0
    %1182 = vmatprep.mubr.f32.mxu0 0.0
    %1183 = vmatmul.mubr.f32.gmra.mrb[0].mxu0 %v1021
    %v1184 = vpop.f32.mrb[0].mxu0
    %v1185 = vadd.f32 0.0, %v1184
    %v1186 = vpop.f32.mrb[0].mxu0
    %1187 = vmatprep.mubr.f32.mxu0 0.0
    %1188 = vmatmul.mubr.f32.gmra.mrb[0].mxu0 %v1023
    %v1189 = vpop.f32.mrb[0].mxu0
    %v1190 = vadd.f32 0.0, %v1189
    %v1191 = vpop.f32.mrb[0].mxu0
    %1192 = vdwg.mxu0
    %1193 = vmatprep.subr.mxu0 0.0
    %1194 = vmatpush1.msra.mxu0 %v735
    %1195 = vmatprep.subr.mxu0 0.0
    %1196 = vmatpush1.msra.mxu0 %v736
    %1197 = vmatprep.subr.mxu0 0.0
    %1198 = vmatpush1.msra.mxu0 %v737
    %1199 = vmatprep.subr.mxu0 0.0
    %1200 = vmatpush1.msra.mxu0 %v738
    %1201 = vmatprep.subr.mxu0 0.0
    %1202 = vmatpush1.msra.mxu0 %v739
    %1203 = vmatprep.subr.mxu0 0.0
    %1204 = vmatpush1.msra.mxu0 %v740
    %1205 = vmatprep.subr.mxu0 0.0
    %1206 = vmatpush1.msra.mxu0 %v741
    %1207 = vmatprep.subr.mxu0 0.0
    %1208 = vmatpush1.msra.mxu0 %v742
    %1209 = vmatprep.subr.mxu0 0.0
    %1210 = vmatpush1.msra.mxu0 %v743
    %1211 = vmatprep.subr.mxu0 0.0
    %1212 = vmatpush1.msra.mxu0 %v744
    %1213 = vmatprep.subr.mxu0 0.0
    %1214 = vmatpush1.msra.mxu0 %v745
    %1215 = vmatprep.subr.mxu0 0.0
    %1216 = vmatpush1.msra.mxu0 %v746
    %1217 = vmatprep.subr.mxu0 0.0
    %1218 = vmatpush1.msra.mxu0 %v747
    %1219 = vmatprep.subr.mxu0 0.0
    %1220 = vmatpush1.msra.mxu0 %v748
    %1221 = vmatprep.subr.mxu0 0.0
    %1222 = vmatpush1.msra.mxu0 %v749
    %1223 = vmatprep.subr.mxu0 0.0
    %1224 = vmatpush1.msra.mxu0 %v750
    %1225 = vmatprep.subr.mxu0 0.0
    %1226 = vmatpush1.msra.mxu0 0.0
    %1227 = vmatprep.subr.mxu0 0.0
    %1228 = vmatpush1.msra.mxu0 0.0
    %1229 = vmatprep.subr.mxu0 0.0
    %1230 = vmatpush1.msra.mxu0 0.0
    %1231 = vmatprep.subr.mxu0 0.0
    %1232 = vmatpush1.msra.mxu0 0.0
    %1233 = vmatprep.subr.mxu0 0.0
    %1234 = vmatpush1.msra.mxu0 0.0
    %1235 = vmatprep.subr.mxu0 0.0
    %1236 = vmatpush1.msra.mxu0 0.0
    %1237 = vmatprep.subr.mxu0 0.0
    %1238 = vmatpush1.msra.mxu0 0.0
    %1239 = vmatprep.subr.mxu0 0.0
    %1240 = vmatpush1.msra.mxu0 0.0
    %1241 = vmatprep.subr.mxu0 0.0
    %1242 = vmatpush1.msra.mxu0 0.0
    %1243 = vmatprep.subr.mxu0 0.0
    %1244 = vmatpush1.msra.mxu0 0.0
    %1245 = vmatprep.subr.mxu0 0.0
    %1246 = vmatpush1.msra.mxu0 0.0
    %1247 = vmatprep.subr.mxu0 0.0
    %1248 = vmatpush1.msra.mxu0 0.0
    %1249 = vmatprep.subr.mxu0 0.0
    %1250 = vmatpush1.msra.mxu0 0.0
    %1251 = vmatprep.subr.mxu0 0.0
    %1252 = vmatpush1.msra.mxu0 0.0
    %1253 = vmatprep.subr.mxu0 0.0
    %1254 = vmatpush1.msra.mxu0 0.0
    %1255 = vmatprep.subr.mxu0 0.0
    %1256 = vmatpush1.msra.mxu0 0.0
    %1257 = vmatprep.mubr.f32.mxu0 0.0
    %1258 = vmatmul.mubr.f32.gmra.mrb[0].mxu0 %v1009
    %v1259 = vpop.f32.mrb[0].mxu0
    %v1260 = vadd.f32 0.0, %v1259
    %v1261 = vpop.f32.mrb[0].mxu0
    %1262 = vmatprep.mubr.f32.mxu0 0.0
    %1263 = vmatmul.mubr.f32.gmra.mrb[0].mxu0 %v1011
    %v1264 = vpop.f32.mrb[0].mxu0
    %v1265 = vadd.f32 0.0, %v1264
    %v1266 = vpop.f32.mrb[0].mxu0
    %1267 = vmatprep.mubr.f32.mxu0 0.0
    %1268 = vmatmul.mubr.f32.gmra.mrb[0].mxu0 %v1013
    %v1269 = vpop.f32.mrb[0].mxu0
    %v1270 = vadd.f32 0.0, %v1269
    %v1271 = vpop.f32.mrb[0].mxu0
    %1272 = vmatprep.mubr.f32.mxu0 0.0
    %1273 = vmatmul.mubr.f32.gmra.mrb[0].mxu0 %v1015
    %v1274 = vpop.f32.mrb[0].mxu0
    %v1275 = vadd.f32 0.0, %v1274
    %v1276 = vpop.f32.mrb[0].mxu0
    %1277 = vmatprep.mubr.f32.mxu0 0.0
    %1278 = vmatmul.mubr.f32.gmra.mrb[0].mxu0 %v1017
    %v1279 = vpop.f32.mrb[0].mxu0
    %v1280 = vadd.f32 0.0, %v1279
    %v1281 = vpop.f32.mrb[0].mxu0
    %1282 = vmatprep.mubr.f32.mxu0 0.0
    %1283 = vmatmul.mubr.f32.gmra.mrb[0].mxu0 %v1019
    %v1284 = vpop.f32.mrb[0].mxu0
    %v1285 = vadd.f32 0.0, %v1284
    %v1286 = vpop.f32.mrb[0].mxu0
    %1287 = vmatprep.mubr.f32.mxu0 0.0
    %1288 = vmatmul.mubr.f32.gmra.mrb[0].mxu0 %v1021
    %v1289 = vpop.f32.mrb[0].mxu0
    %v1290 = vadd.f32 0.0, %v1289
    %v1291 = vpop.f32.mrb[0].mxu0
    %1292 = vmatprep.mubr.f32.mxu0 0.0
    %1293 = vmatmul.mubr.f32.gmra.mrb[0].mxu0 %v1023
    %v1294 = vpop.f32.mrb[0].mxu0
    %v1295 = vadd.f32 0.0, %v1294
    %v1296 = vpop.f32.mrb[0].mxu0
    %1297 = vdwg.mxu0
    %v1298 = vrcp.pop %v1260
    %v1299 = vrcp.pop %v1265
    %v1300 = vrcp.pop %v1270
    %v1301 = vrcp.pop %v1275
    %v1302 = vrcp.pop %v1280
    %v1303 = vrcp.pop %v1285
    %v1304 = vrcp.pop %v1290
    %v1305 = vrcp.pop %v1295
    %1307 = vset.pattern.permute.xlu0 0
    %1308 = vperm.xlu0 %1307, %v1298
    %v1309 = vpop.permute.xlu0 %1308
    %1312 = vset.pattern.permute.xlu0 0
    %1313 = vperm.xlu0 %1312, %v1299
    %v1314 = vpop.permute.xlu0 %1313
    %1317 = vset.pattern.permute.xlu0 0
    %1318 = vperm.xlu0 %1317, %v1300
    %v1319 = vpop.permute.xlu0 %1318
    %1322 = vset.pattern.permute.xlu0 0
    %1323 = vperm.xlu0 %1322, %v1301
    %v1324 = vpop.permute.xlu0 %1323
    %1327 = vset.pattern.permute.xlu0 0
    %1328 = vperm.xlu0 %1327, %v1302
    %v1329 = vpop.permute.xlu0 %1328
    %1332 = vset.pattern.permute.xlu0 0
    %1333 = vperm.xlu0 %1332, %v1303
    %v1334 = vpop.permute.xlu0 %1333
    %1337 = vset.pattern.permute.xlu0 0
    %1338 = vperm.xlu0 %1337, %v1304
    %v1339 = vpop.permute.xlu0 %1338
    %1342 = vset.pattern.permute.xlu0 0
    %1343 = vperm.xlu0 %1342, %v1305
    %v1344 = vpop.permute.xlu0 %1343
    %v1346 = vmul.f32 %v1155, %v1309
    %v1347 = vmul.f32 %v1160, %v1314
    %v1348 = vmul.f32 %v1165, %v1319
    %v1349 = vmul.f32 %v1170, %v1324
    %v1350 = vmul.f32 %v1175, %v1329
    %v1351 = vmul.f32 %v1180, %v1334
    %v1352 = vmul.f32 %v1185, %v1339
    %v1353 = vmul.f32 %v1190, %v1344
    %v1354 = vld [vmem:[%s3 + $0x20] sm:$0xff]
    %v1355 = vld [vmem:[%s3 + $0x28] sm:$0xff]
    %v1356 = vld [vmem:[%s3 + $0x30] sm:$0xff]
    %v1357 = vld [vmem:[%s3 + $0x38] sm:$0xff]
    %vm1358 = vcmask 261120
    %v1360 = vsel %vm1358, %v1346, 0
    %v1363 = vsel %vm1358, %v1347, 0
    %v1366 = vsel %vm1358, %v1348, 0
    %v1369 = vsel %vm1358, %v1349, 0
    %v1372 = vsel %vm1358, %v1350, 0
    %v1375 = vsel %vm1358, %v1351, 0
    %v1378 = vsel %vm1358, %v1352, 0
    %v1381 = vsel %vm1358, %v1353, 0
    %1383 = vmatprep.subr.mxu0 0.0
    %1384 = vmatpush1.msra.mxu0 %v1354
    %1385 = vmatprep.subr.mxu0 0.0
    %1386 = vmatpush1.msra.mxu0 %v1355
    %1387 = vmatprep.subr.mxu0 0.0
    %1388 = vmatpush1.msra.mxu0 %v1356
    %1389 = vmatprep.subr.mxu0 0.0
    %1390 = vmatpush1.msra.mxu0 %v1357
    %1391 = vmatprep.subr.mxu0 0.0
    %1392 = vmatpush1.msra.mxu0 0.0
    %1393 = vmatprep.subr.mxu0 0.0
    %1394 = vmatpush1.msra.mxu0 0.0
    %1395 = vmatprep.subr.mxu0 0.0
    %1396 = vmatpush1.msra.mxu0 0.0
    %1397 = vmatprep.subr.mxu0 0.0
    %1398 = vmatpush1.msra.mxu0 0.0
    %1399 = vmatprep.subr.mxu0 0.0
    %1400 = vmatpush1.msra.mxu0 0.0
    %1401 = vmatprep.subr.mxu0 0.0
    %1402 = vmatpush1.msra.mxu0 0.0
    %1403 = vmatprep.subr.mxu0 0.0
    %1404 = vmatpush1.msra.mxu0 0.0
    %1405 = vmatprep.subr.mxu0 0.0
    %1406 = vmatpush1.msra.mxu0 0.0
    %1407 = vmatprep.subr.mxu0 0.0
    %1408 = vmatpush1.msra.mxu0 0.0
    %1409 = vmatprep.subr.mxu0 0.0
    %1410 = vmatpush1.msra.mxu0 0.0
    %1411 = vmatprep.subr.mxu0 0.0
    %1412 = vmatpush1.msra.mxu0 0.0
    %1413 = vmatprep.subr.mxu0 0.0
    %1414 = vmatpush1.msra.mxu0 0.0
    %1415 = vmatprep.subr.mxu0 0.0
    %1416 = vmatpush1.msra.mxu0 0.0
    %1417 = vmatprep.subr.mxu0 0.0
    %1418 = vmatpush1.msra.mxu0 0.0
    %1419 = vmatprep.subr.mxu0 0.0
    %1420 = vmatpush1.msra.mxu0 0.0
    %1421 = vmatprep.subr.mxu0 0.0
    %1422 = vmatpush1.msra.mxu0 0.0
    %1423 = vmatprep.subr.mxu0 0.0
    %1424 = vmatpush1.msra.mxu0 0.0
    %1425 = vmatprep.subr.mxu0 0.0
    %1426 = vmatpush1.msra.mxu0 0.0
    %1427 = vmatprep.subr.mxu0 0.0
    %1428 = vmatpush1.msra.mxu0 0.0
    %1429 = vmatprep.subr.mxu0 0.0
    %1430 = vmatpush1.msra.mxu0 0.0
    %1431 = vmatprep.subr.mxu0 0.0
    %1432 = vmatpush1.msra.mxu0 0.0
    %1433 = vmatprep.subr.mxu0 0.0
    %1434 = vmatpush1.msra.mxu0 0.0
    %1435 = vmatprep.subr.mxu0 0.0
    %1436 = vmatpush1.msra.mxu0 0.0
    %1437 = vmatprep.subr.mxu0 0.0
    %1438 = vmatpush1.msra.mxu0 0.0
    %1439 = vmatprep.subr.mxu0 0.0
    %1440 = vmatpush1.msra.mxu0 0.0
    %1441 = vmatprep.subr.mxu0 0.0
    %1442 = vmatpush1.msra.mxu0 0.0
    %1443 = vmatprep.subr.mxu0 0.0
    %1444 = vmatpush1.msra.mxu0 0.0
    %1445 = vmatprep.subr.mxu0 0.0
    %1446 = vmatpush1.msra.mxu0 0.0
    %1447 = vmatprep.mubr.f32.mxu0 0.0
    %1448 = vmatmul.mubr.f32.gmra.mrb[0].mxu0 %v1360
    %v1449 = vpop.f32.mrb[0].mxu0
    %v1450 = vadd.f32 0.0, %v1449
    %v1451 = vpop.f32.mrb[0].mxu0
    %1452 = vmatprep.mubr.f32.mxu0 0.0
    %1453 = vmatmul.mubr.f32.gmra.mrb[0].mxu0 %v1363
    %v1454 = vpop.f32.mrb[0].mxu0
    %v1455 = vadd.f32 0.0, %v1454
    %v1456 = vpop.f32.mrb[0].mxu0
    %1457 = vmatprep.mubr.f32.mxu0 0.0
    %1458 = vmatmul.mubr.f32.gmra.mrb[0].mxu0 %v1366
    %v1459 = vpop.f32.mrb[0].mxu0
    %v1460 = vadd.f32 0.0, %v1459
    %v1461 = vpop.f32.mrb[0].mxu0
    %1462 = vmatprep.mubr.f32.mxu0 0.0
    %1463 = vmatmul.mubr.f32.gmra.mrb[0].mxu0 %v1369
    %v1464 = vpop.f32.mrb[0].mxu0
    %v1465 = vadd.f32 0.0, %v1464
    %v1466 = vpop.f32.mrb[0].mxu0
    %1467 = vmatprep.mubr.f32.mxu0 0.0
    %1468 = vmatmul.mubr.f32.gmra.mrb[0].mxu0 %v1372
    %v1469 = vpop.f32.mrb[0].mxu0
    %v1470 = vadd.f32 0.0, %v1469
    %v1471 = vpop.f32.mrb[0].mxu0
    %1472 = vmatprep.mubr.f32.mxu0 0.0
    %1473 = vmatmul.mubr.f32.gmra.mrb[0].mxu0 %v1375
    %v1474 = vpop.f32.mrb[0].mxu0
    %v1475 = vadd.f32 0.0, %v1474
    %v1476 = vpop.f32.mrb[0].mxu0
    %1477 = vmatprep.mubr.f32.mxu0 0.0
    %1478 = vmatmul.mubr.f32.gmra.mrb[0].mxu0 %v1378
    %v1479 = vpop.f32.mrb[0].mxu0
    %v1480 = vadd.f32 0.0, %v1479
    %v1481 = vpop.f32.mrb[0].mxu0
    %1482 = vmatprep.mubr.f32.mxu0 0.0
    %1483 = vmatmul.mubr.f32.gmra.mrb[0].mxu0 %v1381
    %v1484 = vpop.f32.mrb[0].mxu0
    %v1485 = vadd.f32 0.0, %v1484
    %v1486 = vpop.f32.mrb[0].mxu0
    %1487 = vdwg.mxu0
    %v1489 = vsel %vm1358, %v904, 0
    %v1492 = vsel %vm1358, %v905, 0
    %v1495 = vsel %vm1358, %v906, 0
    %v1498 = vsel %vm1358, %v907, 0
    %v1501 = vsel %vm1358, %v908, 0
    %v1504 = vsel %vm1358, %v909, 0
    %v1507 = vsel %vm1358, %v910, 0
    %v1510 = vsel %vm1358, %v911, 0
    %1512 = vmatprep.subr.mxu0 0.0
    %1513 = vmatpush1.msra.mxu0 %v912
    %1514 = vmatprep.subr.mxu0 0.0
    %1515 = vmatpush1.msra.mxu0 %v913
    %1516 = vmatprep.subr.mxu0 0.0
    %1517 = vmatpush1.msra.mxu0 %v914
    %1518 = vmatprep.subr.mxu0 0.0
    %1519 = vmatpush1.msra.mxu0 %v915
    %1520 = vmatprep.subr.mxu0 0.0
    %1521 = vmatpush1.msra.mxu0 0.0
    %1522 = vmatprep.subr.mxu0 0.0
    %1523 = vmatpush1.msra.mxu0 0.0
    %1524 = vmatprep.subr.mxu0 0.0
    %1525 = vmatpush1.msra.mxu0 0.0
    %1526 = vmatprep.subr.mxu0 0.0
    %1527 = vmatpush1.msra.mxu0 0.0
    %1528 = vmatprep.subr.mxu0 0.0
    %1529 = vmatpush1.msra.mxu0 0.0
    %1530 = vmatprep.subr.mxu0 0.0
    %1531 = vmatpush1.msra.mxu0 0.0
    %1532 = vmatprep.subr.mxu0 0.0
    %1533 = vmatpush1.msra.mxu0 0.0
    %1534 = vmatprep.subr.mxu0 0.0
    %1535 = vmatpush1.msra.mxu0 0.0
    %1536 = vmatprep.subr.mxu0 0.0
    %1537 = vmatpush1.msra.mxu0 0.0
    %1538 = vmatprep.subr.mxu0 0.0
    %1539 = vmatpush1.msra.mxu0 0.0
    %1540 = vmatprep.subr.mxu0 0.0
    %1541 = vmatpush1.msra.mxu0 0.0
    %1542 = vmatprep.subr.mxu0 0.0
    %1543 = vmatpush1.msra.mxu0 0.0
    %1544 = vmatprep.subr.mxu0 0.0
    %1545 = vmatpush1.msra.mxu0 0.0
    %1546 = vmatprep.subr.mxu0 0.0
    %1547 = vmatpush1.msra.mxu0 0.0
    %1548 = vmatprep.subr.mxu0 0.0
    %1549 = vmatpush1.msra.mxu0 0.0
    %1550 = vmatprep.subr.mxu0 0.0
    %1551 = vmatpush1.msra.mxu0 0.0
    %1552 = vmatprep.subr.mxu0 0.0
    %1553 = vmatpush1.msra.mxu0 0.0
    %1554 = vmatprep.subr.mxu0 0.0
    %1555 = vmatpush1.msra.mxu0 0.0
    %1556 = vmatprep.subr.mxu0 0.0
    %1557 = vmatpush1.msra.mxu0 0.0
    %1558 = vmatprep.subr.mxu0 0.0
    %1559 = vmatpush1.msra.mxu0 0.0
    %1560 = vmatprep.subr.mxu0 0.0
    %1561 = vmatpush1.msra.mxu0 0.0
    %1562 = vmatprep.subr.mxu0 0.0
    %1563 = vmatpush1.msra.mxu0 0.0
    %1564 = vmatprep.subr.mxu0 0.0
    %1565 = vmatpush1.msra.mxu0 0.0
    %1566 = vmatprep.subr.mxu0 0.0
    %1567 = vmatpush1.msra.mxu0 0.0
    %1568 = vmatprep.subr.mxu0 0.0
    %1569 = vmatpush1.msra.mxu0 0.0
    %1570 = vmatprep.subr.mxu0 0.0
    %1571 = vmatpush1.msra.mxu0 0.0
    %1572 = vmatprep.subr.mxu0 0.0
    %1573 = vmatpush1.msra.mxu0 0.0
    %1574 = vmatprep.subr.mxu0 0.0
    %1575 = vmatpush1.msra.mxu0 0.0
    %1576 = vmatprep.mubr.f32.mxu0 0.0
    %1577 = vmatmul.mubr.f32.gmra.mrb[0].mxu0 %v1489
    %v1578 = vpop.f32.mrb[0].mxu0
    %v1579 = vadd.f32 %v1450, %v1578
    %v1580 = vpop.f32.mrb[0].mxu0
    %1581 = vmatprep.mubr.f32.mxu0 0.0
    %1582 = vmatmul.mubr.f32.gmra.mrb[0].mxu0 %v1492
    %v1583 = vpop.f32.mrb[0].mxu0
    %v1584 = vadd.f32 %v1455, %v1583
    %v1585 = vpop.f32.mrb[0].mxu0
    %1586 = vmatprep.mubr.f32.mxu0 0.0
    %1587 = vmatmul.mubr.f32.gmra.mrb[0].mxu0 %v1495
    %v1588 = vpop.f32.mrb[0].mxu0
    %v1589 = vadd.f32 %v1460, %v1588
    %v1590 = vpop.f32.mrb[0].mxu0
    %1591 = vmatprep.mubr.f32.mxu0 0.0
    %1592 = vmatmul.mubr.f32.gmra.mrb[0].mxu0 %v1498
    %v1593 = vpop.f32.mrb[0].mxu0
    %v1594 = vadd.f32 %v1465, %v1593
    %v1595 = vpop.f32.mrb[0].mxu0
    %1596 = vmatprep.mubr.f32.mxu0 0.0
    %1597 = vmatmul.mubr.f32.gmra.mrb[0].mxu0 %v1501
    %v1598 = vpop.f32.mrb[0].mxu0
    %v1599 = vadd.f32 %v1470, %v1598
    %v1600 = vpop.f32.mrb[0].mxu0
    %1601 = vmatprep.mubr.f32.mxu0 0.0
    %1602 = vmatmul.mubr.f32.gmra.mrb[0].mxu0 %v1504
    %v1603 = vpop.f32.mrb[0].mxu0
    %v1604 = vadd.f32 %v1475, %v1603
    %v1605 = vpop.f32.mrb[0].mxu0
    %1606 = vmatprep.mubr.f32.mxu0 0.0
    %1607 = vmatmul.mubr.f32.gmra.mrb[0].mxu0 %v1507
    %v1608 = vpop.f32.mrb[0].mxu0
    %v1609 = vadd.f32 %v1480, %v1608
    %v1610 = vpop.f32.mrb[0].mxu0
    %1611 = vmatprep.mubr.f32.mxu0 0.0
    %1612 = vmatmul.mubr.f32.gmra.mrb[0].mxu0 %v1510
    %v1613 = vpop.f32.mrb[0].mxu0
    %v1614 = vadd.f32 %v1485, %v1613
    %v1615 = vpop.f32.mrb[0].mxu0
    %1616 = vdwg.mxu0
    %1617 = vset.pattern.permute.xlu0 2
    %1618 = vperm.xlu0 %1617, %v365
    %v1619 = vpop.permute.xlu0 %1618
    %1621 = vset.pattern.permute.xlu0 2
    %1622 = vperm.xlu0 %1621, %v370
    %v1623 = vpop.permute.xlu0 %1622
    %1625 = vset.pattern.permute.xlu0 2
    %1626 = vperm.xlu0 %1625, %v375
    %v1627 = vpop.permute.xlu0 %1626
    %1629 = vset.pattern.permute.xlu0 2
    %1630 = vperm.xlu0 %1629, %v380
    %v1631 = vpop.permute.xlu0 %1630
    %1633 = vset.pattern.permute.xlu0 2
    %1634 = vperm.xlu0 %1633, %v385
    %v1635 = vpop.permute.xlu0 %1634
    %1637 = vset.pattern.permute.xlu0 2
    %1638 = vperm.xlu0 %1637, %v390
    %v1639 = vpop.permute.xlu0 %1638
    %1641 = vset.pattern.permute.xlu0 2
    %1642 = vperm.xlu0 %1641, %v395
    %v1643 = vpop.permute.xlu0 %1642
    %1645 = vset.pattern.permute.xlu0 2
    %1646 = vperm.xlu0 %1645, %v400
    %v1647 = vpop.permute.xlu0 %1646
    %v1649 = vlaneseq
    %v1650 = vshrl.u32 %v1649, 7
    %v1651 = vsub.s32 2, %v1650
    %v1652 = vrot.slane %v471, %v1651
    %v1653 = vadd.f32 %v1619, %v1652
    %v1654 = vadd.f32 %v1623, %v1652
    %v1655 = vadd.f32 %v1627, %v1652
    %v1656 = vadd.f32 %v1631, %v1652
    %v1657 = vadd.f32 %v1635, %v1652
    %v1658 = vadd.f32 %v1639, %v1652
    %v1659 = vadd.f32 %v1643, %v1652
    %v1660 = vadd.f32 %v1647, %v1652
    %v1661 = vmul.f32 %v1653, 0.2
    %v1662 = vmul.f32 %v1654, 0.2
    %v1663 = vmul.f32 %v1655, 0.2
    %v1664 = vmul.f32 %v1656, 0.2
    %v1665 = vmul.f32 %v1657, 0.2
    %v1666 = vmul.f32 %v1658, 0.2
    %v1667 = vmul.f32 %v1659, 0.2
    %v1668 = vmul.f32 %v1660, 0.2
    %v1669 = vmax.f32 %v1653, %v1661
    %v1670 = vmax.f32 %v1654, %v1662
    %v1671 = vmax.f32 %v1655, %v1663
    %v1672 = vmax.f32 %v1656, %v1664
    %v1673 = vmax.f32 %v1657, %v1665
    %v1674 = vmax.f32 %v1658, %v1666
    %v1675 = vmax.f32 %v1659, %v1667
    %v1676 = vmax.f32 %v1660, %v1668
    %v1677 = vadd.f32 %v1669, %v558
    %v1678 = vadd.f32 %v1670, %v559
    %v1679 = vadd.f32 %v1671, %v560
    %v1680 = vadd.f32 %v1672, %v561
    %v1681 = vadd.f32 %v1673, %v562
    %v1682 = vadd.f32 %v1674, %v563
    %v1683 = vadd.f32 %v1675, %v564
    %v1684 = vadd.f32 %v1676, %v565
    %1685 = vmax.xlane.f32.xlu0 %v1677
    %v1686 = vpop.xlane.xlu0 %1685
    %1687 = vmax.xlane.f32.xlu0 %v1678
    %v1688 = vpop.xlane.xlu0 %1687
    %1689 = vmax.xlane.f32.xlu0 %v1679
    %v1690 = vpop.xlane.xlu0 %1689
    %1691 = vmax.xlane.f32.xlu0 %v1680
    %v1692 = vpop.xlane.xlu0 %1691
    %1693 = vmax.xlane.f32.xlu0 %v1681
    %v1694 = vpop.xlane.xlu0 %1693
    %1695 = vmax.xlane.f32.xlu0 %v1682
    %v1696 = vpop.xlane.xlu0 %1695
    %1697 = vmax.xlane.f32.xlu0 %v1683
    %v1698 = vpop.xlane.xlu0 %1697
    %1699 = vmax.xlane.f32.xlu0 %v1684
    %v1700 = vpop.xlane.xlu0 %1699
    %v1701 = vsub.f32 %v1677, %v1686
    %v1702 = vsub.f32 %v1678, %v1688
    %v1703 = vsub.f32 %v1679, %v1690
    %v1704 = vsub.f32 %v1680, %v1692
    %v1705 = vsub.f32 %v1681, %v1694
    %v1706 = vsub.f32 %v1682, %v1696
    %v1707 = vsub.f32 %v1683, %v1698
    %v1708 = vsub.f32 %v1684, %v1700
    %v1709 = vmul.f32 %v1701, 1.442695
    %v1710 = vpow.pop %v1709
    %v1711 = vmul.f32 %v1702, 1.442695
    %v1712 = vpow.pop %v1711
    %v1713 = vmul.f32 %v1703, 1.442695
    %v1714 = vpow.pop %v1713
    %v1715 = vmul.f32 %v1704, 1.442695
    %v1716 = vpow.pop %v1715
    %v1717 = vmul.f32 %v1705, 1.442695
    %v1718 = vpow.pop %v1717
    %v1719 = vmul.f32 %v1706, 1.442695
    %v1720 = vpow.pop %v1719
    %v1721 = vmul.f32 %v1707, 1.442695
    %v1722 = vpow.pop %v1721
    %v1723 = vmul.f32 %v1708, 1.442695
    %v1724 = vpow.pop %v1723
    %1725 = vrot.lane.b32.xlu0 %v614, 64
    %v1726 = vpop.permute.xlu0 %1725
    %1727 = vrot.lane.b32.xlu0 %v615, 64
    %v1728 = vpop.permute.xlu0 %1727
    %1729 = vrot.lane.b32.xlu0 %v616, 64
    %v1730 = vpop.permute.xlu0 %1729
    %1731 = vrot.lane.b32.xlu0 %v617, 64
    %v1732 = vpop.permute.xlu0 %1731
    %1733 = vrot.lane.b32.xlu0 %v618, 64
    %v1734 = vpop.permute.xlu0 %1733
    %1735 = vrot.lane.b32.xlu0 %v619, 64
    %v1736 = vpop.permute.xlu0 %1735
    %1737 = vrot.lane.b32.xlu0 %v620, 64
    %v1738 = vpop.permute.xlu0 %1737
    %1739 = vrot.lane.b32.xlu0 %v621, 64
    %v1740 = vpop.permute.xlu0 %1739
    %1741 = vrot.lane.b32.xlu0 %v622, 64
    %v1742 = vpop.permute.xlu0 %1741
    %1743 = vrot.lane.b32.xlu0 %v623, 64
    %v1744 = vpop.permute.xlu0 %1743
    %1745 = vrot.lane.b32.xlu0 %v624, 64
    %v1746 = vpop.permute.xlu0 %1745
    %1747 = vrot.lane.b32.xlu0 %v625, 64
    %v1748 = vpop.permute.xlu0 %1747
    %1749 = vrot.lane.b32.xlu0 %v626, 64
    %v1750 = vpop.permute.xlu0 %1749
    %1751 = vrot.lane.b32.xlu0 %v627, 64
    %v1752 = vpop.permute.xlu0 %1751
    %1753 = vrot.lane.b32.xlu0 %v628, 64
    %v1754 = vpop.permute.xlu0 %1753
    %1755 = vrot.lane.b32.xlu0 %v629, 64
    %v1756 = vpop.permute.xlu0 %1755
    %1773 = vmatprep.subr.mxu0 0.0
    %1774 = vmatpush1.msra.mxu0 %v1726
    %1775 = vmatprep.subr.mxu0 0.0
    %1776 = vmatpush1.msra.mxu0 %v1728
    %1777 = vmatprep.subr.mxu0 0.0
    %1778 = vmatpush1.msra.mxu0 %v1730
    %1779 = vmatprep.subr.mxu0 0.0
    %1780 = vmatpush1.msra.mxu0 %v1732
    %1781 = vmatprep.subr.mxu0 0.0
    %1782 = vmatpush1.msra.mxu0 %v1734
    %1783 = vmatprep.subr.mxu0 0.0
    %1784 = vmatpush1.msra.mxu0 %v1736
    %1785 = vmatprep.subr.mxu0 0.0
    %1786 = vmatpush1.msra.mxu0 %v1738
    %1787 = vmatprep.subr.mxu0 0.0
    %1788 = vmatpush1.msra.mxu0 %v1740
    %1789 = vmatprep.subr.mxu0 0.0
    %1790 = vmatpush1.msra.mxu0 %v1742
    %1791 = vmatprep.subr.mxu0 0.0
    %1792 = vmatpush1.msra.mxu0 %v1744
    %1793 = vmatprep.subr.mxu0 0.0
    %1794 = vmatpush1.msra.mxu0 %v1746
    %1795 = vmatprep.subr.mxu0 0.0
    %1796 = vmatpush1.msra.mxu0 %v1748
    %1797 = vmatprep.subr.mxu0 0.0
    %1798 = vmatpush1.msra.mxu0 %v1750
    %1799 = vmatprep.subr.mxu0 0.0
    %1800 = vmatpush1.msra.mxu0 %v1752
    %1801 = vmatprep.subr.mxu0 0.0
    %1802 = vmatpush1.msra.mxu0 %v1754
    %1803 = vmatprep.subr.mxu0 0.0
    %1804 = vmatpush1.msra.mxu0 %v1756
    %1805 = vmatprep.subr.mxu0 0.0
    %1806 = vmatpush1.msra.mxu0 0.0
    %1807 = vmatprep.subr.mxu0 0.0
    %1808 = vmatpush1.msra.mxu0 0.0
    %1809 = vmatprep.subr.mxu0 0.0
    %1810 = vmatpush1.msra.mxu0 0.0
    %1811 = vmatprep.subr.mxu0 0.0
    %1812 = vmatpush1.msra.mxu0 0.0
    %1813 = vmatprep.subr.mxu0 0.0
    %1814 = vmatpush1.msra.mxu0 0.0
    %1815 = vmatprep.subr.mxu0 0.0
    %1816 = vmatpush1.msra.mxu0 0.0
    %1817 = vmatprep.subr.mxu0 0.0
    %1818 = vmatpush1.msra.mxu0 0.0
    %1819 = vmatprep.subr.mxu0 0.0
    %1820 = vmatpush1.msra.mxu0 0.0
    %1821 = vmatprep.subr.mxu0 0.0
    %1822 = vmatpush1.msra.mxu0 0.0
    %1823 = vmatprep.subr.mxu0 0.0
    %1824 = vmatpush1.msra.mxu0 0.0
    %1825 = vmatprep.subr.mxu0 0.0
    %1826 = vmatpush1.msra.mxu0 0.0
    %1827 = vmatprep.subr.mxu0 0.0
    %1828 = vmatpush1.msra.mxu0 0.0
    %1829 = vmatprep.subr.mxu0 0.0
    %1830 = vmatpush1.msra.mxu0 0.0
    %1831 = vmatprep.subr.mxu0 0.0
    %1832 = vmatpush1.msra.mxu0 0.0
    %1833 = vmatprep.subr.mxu0 0.0
    %1834 = vmatpush1.msra.mxu0 0.0
    %1835 = vmatprep.subr.mxu0 0.0
    %1836 = vmatpush1.msra.mxu0 0.0
    %1837 = vmatprep.mubr.f32.mxu0 0.0
    %1838 = vmatmul.mubr.f32.gmra.mrb[0].mxu0 %v1710
    %v1839 = vpop.f32.mrb[0].mxu0
    %v1840 = vadd.f32 0.0, %v1839
    %v1841 = vpop.f32.mrb[0].mxu0
    %1842 = vmatprep.mubr.f32.mxu0 0.0
    %1843 = vmatmul.mubr.f32.gmra.mrb[0].mxu0 %v1712
    %v1844 = vpop.f32.mrb[0].mxu0
    %v1845 = vadd.f32 0.0, %v1844
    %v1846 = vpop.f32.mrb[0].mxu0
    %1847 = vmatprep.mubr.f32.mxu0 0.0
    %1848 = vmatmul.mubr.f32.gmra.mrb[0].mxu0 %v1714
    %v1849 = vpop.f32.mrb[0].mxu0
    %v1850 = vadd.f32 0.0, %v1849
    %v1851 = vpop.f32.mrb[0].mxu0
    %1852 = vmatprep.mubr.f32.mxu0 0.0
    %1853 = vmatmul.mubr.f32.gmra.mrb[0].mxu0 %v1716
    %v1854 = vpop.f32.mrb[0].mxu0
    %v1855 = vadd.f32 0.0, %v1854
    %v1856 = vpop.f32.mrb[0].mxu0
    %1857 = vmatprep.mubr.f32.mxu0 0.0
    %1858 = vmatmul.mubr.f32.gmra.mrb[0].mxu0 %v1718
    %v1859 = vpop.f32.mrb[0].mxu0
    %v1860 = vadd.f32 0.0, %v1859
    %v1861 = vpop.f32.mrb[0].mxu0
    %1862 = vmatprep.mubr.f32.mxu0 0.0
    %1863 = vmatmul.mubr.f32.gmra.mrb[0].mxu0 %v1720
    %v1864 = vpop.f32.mrb[0].mxu0
    %v1865 = vadd.f32 0.0, %v1864
    %v1866 = vpop.f32.mrb[0].mxu0
    %1867 = vmatprep.mubr.f32.mxu0 0.0
    %1868 = vmatmul.mubr.f32.gmra.mrb[0].mxu0 %v1722
    %v1869 = vpop.f32.mrb[0].mxu0
    %v1870 = vadd.f32 0.0, %v1869
    %v1871 = vpop.f32.mrb[0].mxu0
    %1872 = vmatprep.mubr.f32.mxu0 0.0
    %1873 = vmatmul.mubr.f32.gmra.mrb[0].mxu0 %v1724
    %v1874 = vpop.f32.mrb[0].mxu0
    %v1875 = vadd.f32 0.0, %v1874
    %v1876 = vpop.f32.mrb[0].mxu0
    %1877 = vdwg.mxu0
    %1878 = vmatprep.subr.mxu0 0.0
    %1879 = vmatpush1.msra.mxu0 %v735
    %1880 = vmatprep.subr.mxu0 0.0
    %1881 = vmatpush1.msra.mxu0 %v736
    %1882 = vmatprep.subr.mxu0 0.0
    %1883 = vmatpush1.msra.mxu0 %v737
    %1884 = vmatprep.subr.mxu0 0.0
    %1885 = vmatpush1.msra.mxu0 %v738
    %1886 = vmatprep.subr.mxu0 0.0
    %1887 = vmatpush1.msra.mxu0 %v739
    %1888 = vmatprep.subr.mxu0 0.0
    %1889 = vmatpush1.msra.mxu0 %v740
    %1890 = vmatprep.subr.mxu0 0.0
    %1891 = vmatpush1.msra.mxu0 %v741
    %1892 = vmatprep.subr.mxu0 0.0
    %1893 = vmatpush1.msra.mxu0 %v742
    %1894 = vmatprep.subr.mxu0 0.0
    %1895 = vmatpush1.msra.mxu0 %v743
    %1896 = vmatprep.subr.mxu0 0.0
    %1897 = vmatpush1.msra.mxu0 %v744
    %1898 = vmatprep.subr.mxu0 0.0
    %1899 = vmatpush1.msra.mxu0 %v745
    %1900 = vmatprep.subr.mxu0 0.0
    %1901 = vmatpush1.msra.mxu0 %v746
    %1902 = vmatprep.subr.mxu0 0.0
    %1903 = vmatpush1.msra.mxu0 %v747
    %1904 = vmatprep.subr.mxu0 0.0
    %1905 = vmatpush1.msra.mxu0 %v748
    %1906 = vmatprep.subr.mxu0 0.0
    %1907 = vmatpush1.msra.mxu0 %v749
    %1908 = vmatprep.subr.mxu0 0.0
    %1909 = vmatpush1.msra.mxu0 %v750
    %1910 = vmatprep.subr.mxu0 0.0
    %1911 = vmatpush1.msra.mxu0 0.0
    %1912 = vmatprep.subr.mxu0 0.0
    %1913 = vmatpush1.msra.mxu0 0.0
    %1914 = vmatprep.subr.mxu0 0.0
    %1915 = vmatpush1.msra.mxu0 0.0
    %1916 = vmatprep.subr.mxu0 0.0
    %1917 = vmatpush1.msra.mxu0 0.0
    %1918 = vmatprep.subr.mxu0 0.0
    %1919 = vmatpush1.msra.mxu0 0.0
    %1920 = vmatprep.subr.mxu0 0.0
    %1921 = vmatpush1.msra.mxu0 0.0
    %1922 = vmatprep.subr.mxu0 0.0
    %1923 = vmatpush1.msra.mxu0 0.0
    %1924 = vmatprep.subr.mxu0 0.0
    %1925 = vmatpush1.msra.mxu0 0.0
    %1926 = vmatprep.subr.mxu0 0.0
    %1927 = vmatpush1.msra.mxu0 0.0
    %1928 = vmatprep.subr.mxu0 0.0
    %1929 = vmatpush1.msra.mxu0 0.0
    %1930 = vmatprep.subr.mxu0 0.0
    %1931 = vmatpush1.msra.mxu0 0.0
    %1932 = vmatprep.subr.mxu0 0.0
    %1933 = vmatpush1.msra.mxu0 0.0
    %1934 = vmatprep.subr.mxu0 0.0
    %1935 = vmatpush1.msra.mxu0 0.0
    %1936 = vmatprep.subr.mxu0 0.0
    %1937 = vmatpush1.msra.mxu0 0.0
    %1938 = vmatprep.subr.mxu0 0.0
    %1939 = vmatpush1.msra.mxu0 0.0
    %1940 = vmatprep.subr.mxu0 0.0
    %1941 = vmatpush1.msra.mxu0 0.0
    %1942 = vmatprep.mubr.f32.mxu0 0.0
    %1943 = vmatmul.mubr.f32.gmra.mrb[0].mxu0 %v1710
    %v1944 = vpop.f32.mrb[0].mxu0
    %v1945 = vadd.f32 0.0, %v1944
    %v1946 = vpop.f32.mrb[0].mxu0
    %1947 = vmatprep.mubr.f32.mxu0 0.0
    %1948 = vmatmul.mubr.f32.gmra.mrb[0].mxu0 %v1712
    %v1949 = vpop.f32.mrb[0].mxu0
    %v1950 = vadd.f32 0.0, %v1949
    %v1951 = vpop.f32.mrb[0].mxu0
    %1952 = vmatprep.mubr.f32.mxu0 0.0
    %1953 = vmatmul.mubr.f32.gmra.mrb[0].mxu0 %v1714
    %v1954 = vpop.f32.mrb[0].mxu0
    %v1955 = vadd.f32 0.0, %v1954
    %v1956 = vpop.f32.mrb[0].mxu0
    %1957 = vmatprep.mubr.f32.mxu0 0.0
    %1958 = vmatmul.mubr.f32.gmra.mrb[0].mxu0 %v1716
    %v1959 = vpop.f32.mrb[0].mxu0
    %v1960 = vadd.f32 0.0, %v1959
    %v1961 = vpop.f32.mrb[0].mxu0
    %1962 = vmatprep.mubr.f32.mxu0 0.0
    %1963 = vmatmul.mubr.f32.gmra.mrb[0].mxu0 %v1718
    %v1964 = vpop.f32.mrb[0].mxu0
    %v1965 = vadd.f32 0.0, %v1964
    %v1966 = vpop.f32.mrb[0].mxu0
    %1967 = vmatprep.mubr.f32.mxu0 0.0
    %1968 = vmatmul.mubr.f32.gmra.mrb[0].mxu0 %v1720
    %v1969 = vpop.f32.mrb[0].mxu0
    %v1970 = vadd.f32 0.0, %v1969
    %v1971 = vpop.f32.mrb[0].mxu0
    %1972 = vmatprep.mubr.f32.mxu0 0.0
    %1973 = vmatmul.mubr.f32.gmra.mrb[0].mxu0 %v1722
    %v1974 = vpop.f32.mrb[0].mxu0
    %v1975 = vadd.f32 0.0, %v1974
    %v1976 = vpop.f32.mrb[0].mxu0
    %1977 = vmatprep.mubr.f32.mxu0 0.0
    %1978 = vmatmul.mubr.f32.gmra.mrb[0].mxu0 %v1724
    %v1979 = vpop.f32.mrb[0].mxu0
    %v1980 = vadd.f32 0.0, %v1979
    %v1981 = vpop.f32.mrb[0].mxu0
    %1982 = vdwg.mxu0
    %v1983 = vrcp.pop %v1945
    %v1984 = vrcp.pop %v1950
    %v1985 = vrcp.pop %v1955
    %v1986 = vrcp.pop %v1960
    %v1987 = vrcp.pop %v1965
    %v1988 = vrcp.pop %v1970
    %v1989 = vrcp.pop %v1975
    %v1990 = vrcp.pop %v1980
    %1992 = vset.pattern.permute.xlu0 0
    %1993 = vperm.xlu0 %1992, %v1983
    %v1994 = vpop.permute.xlu0 %1993
    %1997 = vset.pattern.permute.xlu0 0
    %1998 = vperm.xlu0 %1997, %v1984
    %v1999 = vpop.permute.xlu0 %1998
    %2002 = vset.pattern.permute.xlu0 0
    %2003 = vperm.xlu0 %2002, %v1985
    %v2004 = vpop.permute.xlu0 %2003
    %2007 = vset.pattern.permute.xlu0 0
    %2008 = vperm.xlu0 %2007, %v1986
    %v2009 = vpop.permute.xlu0 %2008
    %2012 = vset.pattern.permute.xlu0 0
    %2013 = vperm.xlu0 %2012, %v1987
    %v2014 = vpop.permute.xlu0 %2013
    %2017 = vset.pattern.permute.xlu0 0
    %2018 = vperm.xlu0 %2017, %v1988
    %v2019 = vpop.permute.xlu0 %2018
    %2022 = vset.pattern.permute.xlu0 0
    %2023 = vperm.xlu0 %2022, %v1989
    %v2024 = vpop.permute.xlu0 %2023
    %2027 = vset.pattern.permute.xlu0 0
    %2028 = vperm.xlu0 %2027, %v1990
    %v2029 = vpop.permute.xlu0 %2028
    %v2031 = vmul.f32 %v1840, %v1994
    %v2032 = vmul.f32 %v1845, %v1999
    %v2033 = vmul.f32 %v1850, %v2004
    %v2034 = vmul.f32 %v1855, %v2009
    %v2035 = vmul.f32 %v1860, %v2014
    %v2036 = vmul.f32 %v1865, %v2019
    %v2037 = vmul.f32 %v1870, %v2024
    %v2038 = vmul.f32 %v1875, %v2029
    %v2039 = vld [vmem:[%s3 + $0x40] sm:$0xff]
    %v2040 = vld [vmem:[%s3 + $0x48] sm:$0xff]
    %v2041 = vld [vmem:[%s3 + $0x50] sm:$0xff]
    %v2042 = vld [vmem:[%s3 + $0x58] sm:$0xff]
    %v2044 = vsel %vm1358, %v2031, 0
    %v2047 = vsel %vm1358, %v2032, 0
    %v2050 = vsel %vm1358, %v2033, 0
    %v2053 = vsel %vm1358, %v2034, 0
    %v2056 = vsel %vm1358, %v2035, 0
    %v2059 = vsel %vm1358, %v2036, 0
    %v2062 = vsel %vm1358, %v2037, 0
    %v2065 = vsel %vm1358, %v2038, 0
    %2067 = vmatprep.subr.mxu0 0.0
    %2068 = vmatpush1.msra.mxu0 %v2039
    %2069 = vmatprep.subr.mxu0 0.0
    %2070 = vmatpush1.msra.mxu0 %v2040
    %2071 = vmatprep.subr.mxu0 0.0
    %2072 = vmatpush1.msra.mxu0 %v2041
    %2073 = vmatprep.subr.mxu0 0.0
    %2074 = vmatpush1.msra.mxu0 %v2042
    %2075 = vmatprep.subr.mxu0 0.0
    %2076 = vmatpush1.msra.mxu0 0.0
    %2077 = vmatprep.subr.mxu0 0.0
    %2078 = vmatpush1.msra.mxu0 0.0
    %2079 = vmatprep.subr.mxu0 0.0
    %2080 = vmatpush1.msra.mxu0 0.0
    %2081 = vmatprep.subr.mxu0 0.0
    %2082 = vmatpush1.msra.mxu0 0.0
    %2083 = vmatprep.subr.mxu0 0.0
    %2084 = vmatpush1.msra.mxu0 0.0
    %2085 = vmatprep.subr.mxu0 0.0
    %2086 = vmatpush1.msra.mxu0 0.0
    %2087 = vmatprep.subr.mxu0 0.0
    %2088 = vmatpush1.msra.mxu0 0.0
    %2089 = vmatprep.subr.mxu0 0.0
    %2090 = vmatpush1.msra.mxu0 0.0
    %2091 = vmatprep.subr.mxu0 0.0
    %2092 = vmatpush1.msra.mxu0 0.0
    %2093 = vmatprep.subr.mxu0 0.0
    %2094 = vmatpush1.msra.mxu0 0.0
    %2095 = vmatprep.subr.mxu0 0.0
    %2096 = vmatpush1.msra.mxu0 0.0
    %2097 = vmatprep.subr.mxu0 0.0
    %2098 = vmatpush1.msra.mxu0 0.0
    %2099 = vmatprep.subr.mxu0 0.0
    %2100 = vmatpush1.msra.mxu0 0.0
    %2101 = vmatprep.subr.mxu0 0.0
    %2102 = vmatpush1.msra.mxu0 0.0
    %2103 = vmatprep.subr.mxu0 0.0
    %2104 = vmatpush1.msra.mxu0 0.0
    %2105 = vmatprep.subr.mxu0 0.0
    %2106 = vmatpush1.msra.mxu0 0.0
    %2107 = vmatprep.subr.mxu0 0.0
    %2108 = vmatpush1.msra.mxu0 0.0
    %2109 = vmatprep.subr.mxu0 0.0
    %2110 = vmatpush1.msra.mxu0 0.0
    %2111 = vmatprep.subr.mxu0 0.0
    %2112 = vmatpush1.msra.mxu0 0.0
    %2113 = vmatprep.subr.mxu0 0.0
    %2114 = vmatpush1.msra.mxu0 0.0
    %2115 = vmatprep.subr.mxu0 0.0
    %2116 = vmatpush1.msra.mxu0 0.0
    %2117 = vmatprep.subr.mxu0 0.0
    %2118 = vmatpush1.msra.mxu0 0.0
    %2119 = vmatprep.subr.mxu0 0.0
    %2120 = vmatpush1.msra.mxu0 0.0
    %2121 = vmatprep.subr.mxu0 0.0
    %2122 = vmatpush1.msra.mxu0 0.0
    %2123 = vmatprep.subr.mxu0 0.0
    %2124 = vmatpush1.msra.mxu0 0.0
    %2125 = vmatprep.subr.mxu0 0.0
    %2126 = vmatpush1.msra.mxu0 0.0
    %2127 = vmatprep.subr.mxu0 0.0
    %2128 = vmatpush1.msra.mxu0 0.0
    %2129 = vmatprep.subr.mxu0 0.0
    %2130 = vmatpush1.msra.mxu0 0.0
    %2131 = vmatprep.mubr.f32.mxu0 0.0
    %2132 = vmatmul.mubr.f32.gmra.mrb[0].mxu0 %v2044
    %v2133 = vpop.f32.mrb[0].mxu0
    %v2134 = vadd.f32 0.0, %v2133
    %v2135 = vpop.f32.mrb[0].mxu0
    %2136 = vmatprep.mubr.f32.mxu0 0.0
    %2137 = vmatmul.mubr.f32.gmra.mrb[0].mxu0 %v2047
    %v2138 = vpop.f32.mrb[0].mxu0
    %v2139 = vadd.f32 0.0, %v2138
    %v2140 = vpop.f32.mrb[0].mxu0
    %2141 = vmatprep.mubr.f32.mxu0 0.0
    %2142 = vmatmul.mubr.f32.gmra.mrb[0].mxu0 %v2050
    %v2143 = vpop.f32.mrb[0].mxu0
    %v2144 = vadd.f32 0.0, %v2143
    %v2145 = vpop.f32.mrb[0].mxu0
    %2146 = vmatprep.mubr.f32.mxu0 0.0
    %2147 = vmatmul.mubr.f32.gmra.mrb[0].mxu0 %v2053
    %v2148 = vpop.f32.mrb[0].mxu0
    %v2149 = vadd.f32 0.0, %v2148
    %v2150 = vpop.f32.mrb[0].mxu0
    %2151 = vmatprep.mubr.f32.mxu0 0.0
    %2152 = vmatmul.mubr.f32.gmra.mrb[0].mxu0 %v2056
    %v2153 = vpop.f32.mrb[0].mxu0
    %v2154 = vadd.f32 0.0, %v2153
    %v2155 = vpop.f32.mrb[0].mxu0
    %2156 = vmatprep.mubr.f32.mxu0 0.0
    %2157 = vmatmul.mubr.f32.gmra.mrb[0].mxu0 %v2059
    %v2158 = vpop.f32.mrb[0].mxu0
    %v2159 = vadd.f32 0.0, %v2158
    %v2160 = vpop.f32.mrb[0].mxu0
    %2161 = vmatprep.mubr.f32.mxu0 0.0
    %2162 = vmatmul.mubr.f32.gmra.mrb[0].mxu0 %v2062
    %v2163 = vpop.f32.mrb[0].mxu0
    %v2164 = vadd.f32 0.0, %v2163
    %v2165 = vpop.f32.mrb[0].mxu0
    %2166 = vmatprep.mubr.f32.mxu0 0.0
    %2167 = vmatmul.mubr.f32.gmra.mrb[0].mxu0 %v2065
    %v2168 = vpop.f32.mrb[0].mxu0
    %v2169 = vadd.f32 0.0, %v2168
    %v2170 = vpop.f32.mrb[0].mxu0
    %2171 = vdwg.mxu0
    %v2172 = vadd.f32 %v1579, %v2134
    %v2173 = vadd.f32 %v1584, %v2139
    %v2174 = vadd.f32 %v1589, %v2144
    %v2175 = vadd.f32 %v1594, %v2149
    %v2176 = vadd.f32 %v1599, %v2154
    %v2177 = vadd.f32 %v1604, %v2159
    %v2178 = vadd.f32 %v1609, %v2164
    %v2179 = vadd.f32 %v1614, %v2169
    %2180 = vset.pattern.permute.xlu0 3
    %2181 = vperm.xlu0 %2180, %v365
    %v2182 = vpop.permute.xlu0 %2181
    %2184 = vset.pattern.permute.xlu0 3
    %2185 = vperm.xlu0 %2184, %v370
    %v2186 = vpop.permute.xlu0 %2185
    %2188 = vset.pattern.permute.xlu0 3
    %2189 = vperm.xlu0 %2188, %v375
    %v2190 = vpop.permute.xlu0 %2189
    %2192 = vset.pattern.permute.xlu0 3
    %2193 = vperm.xlu0 %2192, %v380
    %v2194 = vpop.permute.xlu0 %2193
    %2196 = vset.pattern.permute.xlu0 3
    %2197 = vperm.xlu0 %2196, %v385
    %v2198 = vpop.permute.xlu0 %2197
    %2200 = vset.pattern.permute.xlu0 3
    %2201 = vperm.xlu0 %2200, %v390
    %v2202 = vpop.permute.xlu0 %2201
    %2204 = vset.pattern.permute.xlu0 3
    %2205 = vperm.xlu0 %2204, %v395
    %v2206 = vpop.permute.xlu0 %2205
    %2208 = vset.pattern.permute.xlu0 3
    %2209 = vperm.xlu0 %2208, %v400
    %v2210 = vpop.permute.xlu0 %2209
    %v2212 = vlaneseq
    %v2213 = vshrl.u32 %v2212, 7
    %v2214 = vsub.s32 3, %v2213
    %v2215 = vrot.slane %v471, %v2214
    %v2216 = vadd.f32 %v2182, %v2215
    %v2217 = vadd.f32 %v2186, %v2215
    %v2218 = vadd.f32 %v2190, %v2215
    %v2219 = vadd.f32 %v2194, %v2215
    %v2220 = vadd.f32 %v2198, %v2215
    %v2221 = vadd.f32 %v2202, %v2215
    %v2222 = vadd.f32 %v2206, %v2215
    %v2223 = vadd.f32 %v2210, %v2215
    %v2224 = vmul.f32 %v2216, 0.2
    %v2225 = vmul.f32 %v2217, 0.2
    %v2226 = vmul.f32 %v2218, 0.2
    %v2227 = vmul.f32 %v2219, 0.2
    %v2228 = vmul.f32 %v2220, 0.2
    %v2229 = vmul.f32 %v2221, 0.2
    %v2230 = vmul.f32 %v2222, 0.2
    %v2231 = vmul.f32 %v2223, 0.2
    %v2232 = vmax.f32 %v2216, %v2224
    %v2233 = vmax.f32 %v2217, %v2225
    %v2234 = vmax.f32 %v2218, %v2226
    %v2235 = vmax.f32 %v2219, %v2227
    %v2236 = vmax.f32 %v2220, %v2228
    %v2237 = vmax.f32 %v2221, %v2229
    %v2238 = vmax.f32 %v2222, %v2230
    %v2239 = vmax.f32 %v2223, %v2231
    %v2240 = vadd.f32 %v2232, %v558
    %v2241 = vadd.f32 %v2233, %v559
    %v2242 = vadd.f32 %v2234, %v560
    %v2243 = vadd.f32 %v2235, %v561
    %v2244 = vadd.f32 %v2236, %v562
    %v2245 = vadd.f32 %v2237, %v563
    %v2246 = vadd.f32 %v2238, %v564
    %v2247 = vadd.f32 %v2239, %v565
    %2248 = vmax.xlane.f32.xlu0 %v2240
    %v2249 = vpop.xlane.xlu0 %2248
    %2250 = vmax.xlane.f32.xlu0 %v2241
    %v2251 = vpop.xlane.xlu0 %2250
    %2252 = vmax.xlane.f32.xlu0 %v2242
    %v2253 = vpop.xlane.xlu0 %2252
    %2254 = vmax.xlane.f32.xlu0 %v2243
    %v2255 = vpop.xlane.xlu0 %2254
    %2256 = vmax.xlane.f32.xlu0 %v2244
    %v2257 = vpop.xlane.xlu0 %2256
    %2258 = vmax.xlane.f32.xlu0 %v2245
    %v2259 = vpop.xlane.xlu0 %2258
    %2260 = vmax.xlane.f32.xlu0 %v2246
    %v2261 = vpop.xlane.xlu0 %2260
    %2262 = vmax.xlane.f32.xlu0 %v2247
    %v2263 = vpop.xlane.xlu0 %2262
    %v2264 = vsub.f32 %v2240, %v2249
    %v2265 = vsub.f32 %v2241, %v2251
    %v2266 = vsub.f32 %v2242, %v2253
    %v2267 = vsub.f32 %v2243, %v2255
    %v2268 = vsub.f32 %v2244, %v2257
    %v2269 = vsub.f32 %v2245, %v2259
    %v2270 = vsub.f32 %v2246, %v2261
    %v2271 = vsub.f32 %v2247, %v2263
    %v2272 = vmul.f32 %v2264, 1.442695
    %v2273 = vpow.pop %v2272
    %v2274 = vmul.f32 %v2265, 1.442695
    %v2275 = vpow.pop %v2274
    %v2276 = vmul.f32 %v2266, 1.442695
    %v2277 = vpow.pop %v2276
    %v2278 = vmul.f32 %v2267, 1.442695
    %v2279 = vpow.pop %v2278
    %v2280 = vmul.f32 %v2268, 1.442695
    %v2281 = vpow.pop %v2280
    %v2282 = vmul.f32 %v2269, 1.442695
    %v2283 = vpow.pop %v2282
    %v2284 = vmul.f32 %v2270, 1.442695
    %v2285 = vpow.pop %v2284
    %v2286 = vmul.f32 %v2271, 1.442695
    %v2287 = vpow.pop %v2286
    %2288 = vrot.lane.b32.xlu0 %v614, 32
    %v2289 = vpop.permute.xlu0 %2288
    %2290 = vrot.lane.b32.xlu0 %v615, 32
    %v2291 = vpop.permute.xlu0 %2290
    %2292 = vrot.lane.b32.xlu0 %v616, 32
    %v2293 = vpop.permute.xlu0 %2292
    %2294 = vrot.lane.b32.xlu0 %v617, 32
    %v2295 = vpop.permute.xlu0 %2294
    %2296 = vrot.lane.b32.xlu0 %v618, 32
    %v2297 = vpop.permute.xlu0 %2296
    %2298 = vrot.lane.b32.xlu0 %v619, 32
    %v2299 = vpop.permute.xlu0 %2298
    %2300 = vrot.lane.b32.xlu0 %v620, 32
    %v2301 = vpop.permute.xlu0 %2300
    %2302 = vrot.lane.b32.xlu0 %v621, 32
    %v2303 = vpop.permute.xlu0 %2302
    %2304 = vrot.lane.b32.xlu0 %v622, 32
    %v2305 = vpop.permute.xlu0 %2304
    %2306 = vrot.lane.b32.xlu0 %v623, 32
    %v2307 = vpop.permute.xlu0 %2306
    %2308 = vrot.lane.b32.xlu0 %v624, 32
    %v2309 = vpop.permute.xlu0 %2308
    %2310 = vrot.lane.b32.xlu0 %v625, 32
    %v2311 = vpop.permute.xlu0 %2310
    %2312 = vrot.lane.b32.xlu0 %v626, 32
    %v2313 = vpop.permute.xlu0 %2312
    %2314 = vrot.lane.b32.xlu0 %v627, 32
    %v2315 = vpop.permute.xlu0 %2314
    %2316 = vrot.lane.b32.xlu0 %v628, 32
    %v2317 = vpop.permute.xlu0 %2316
    %2318 = vrot.lane.b32.xlu0 %v629, 32
    %v2319 = vpop.permute.xlu0 %2318
    %2336 = vmatprep.subr.mxu0 0.0
    %2337 = vmatpush1.msra.mxu0 %v2289
    %2338 = vmatprep.subr.mxu0 0.0
    %2339 = vmatpush1.msra.mxu0 %v2291
    %2340 = vmatprep.subr.mxu0 0.0
    %2341 = vmatpush1.msra.mxu0 %v2293
    %2342 = vmatprep.subr.mxu0 0.0
    %2343 = vmatpush1.msra.mxu0 %v2295
    %2344 = vmatprep.subr.mxu0 0.0
    %2345 = vmatpush1.msra.mxu0 %v2297
    %2346 = vmatprep.subr.mxu0 0.0
    %2347 = vmatpush1.msra.mxu0 %v2299
    %2348 = vmatprep.subr.mxu0 0.0
    %2349 = vmatpush1.msra.mxu0 %v2301
    %2350 = vmatprep.subr.mxu0 0.0
    %2351 = vmatpush1.msra.mxu0 %v2303
    %2352 = vmatprep.subr.mxu0 0.0
    %2353 = vmatpush1.msra.mxu0 %v2305
    %2354 = vmatprep.subr.mxu0 0.0
    %2355 = vmatpush1.msra.mxu0 %v2307
    %2356 = vmatprep.subr.mxu0 0.0
    %2357 = vmatpush1.msra.mxu0 %v2309
    %2358 = vmatprep.subr.mxu0 0.0
    %2359 = vmatpush1.msra.mxu0 %v2311
    %2360 = vmatprep.subr.mxu0 0.0
    %2361 = vmatpush1.msra.mxu0 %v2313
    %2362 = vmatprep.subr.mxu0 0.0
    %2363 = vmatpush1.msra.mxu0 %v2315
    %2364 = vmatprep.subr.mxu0 0.0
    %2365 = vmatpush1.msra.mxu0 %v2317
    %2366 = vmatprep.subr.mxu0 0.0
    %2367 = vmatpush1.msra.mxu0 %v2319
    %2368 = vmatprep.subr.mxu0 0.0
    %2369 = vmatpush1.msra.mxu0 0.0
    %2370 = vmatprep.subr.mxu0 0.0
    %2371 = vmatpush1.msra.mxu0 0.0
    %2372 = vmatprep.subr.mxu0 0.0
    %2373 = vmatpush1.msra.mxu0 0.0
    %2374 = vmatprep.subr.mxu0 0.0
    %2375 = vmatpush1.msra.mxu0 0.0
    %2376 = vmatprep.subr.mxu0 0.0
    %2377 = vmatpush1.msra.mxu0 0.0
    %2378 = vmatprep.subr.mxu0 0.0
    %2379 = vmatpush1.msra.mxu0 0.0
    %2380 = vmatprep.subr.mxu0 0.0
    %2381 = vmatpush1.msra.mxu0 0.0
    %2382 = vmatprep.subr.mxu0 0.0
    %2383 = vmatpush1.msra.mxu0 0.0
    %2384 = vmatprep.subr.mxu0 0.0
    %2385 = vmatpush1.msra.mxu0 0.0
    %2386 = vmatprep.subr.mxu0 0.0
    %2387 = vmatpush1.msra.mxu0 0.0
    %2388 = vmatprep.subr.mxu0 0.0
    %2389 = vmatpush1.msra.mxu0 0.0
    %2390 = vmatprep.subr.mxu0 0.0
    %2391 = vmatpush1.msra.mxu0 0.0
    %2392 = vmatprep.subr.mxu0 0.0
    %2393 = vmatpush1.msra.mxu0 0.0
    %2394 = vmatprep.subr.mxu0 0.0
    %2395 = vmatpush1.msra.mxu0 0.0
    %2396 = vmatprep.subr.mxu0 0.0
    %2397 = vmatpush1.msra.mxu0 0.0
    %2398 = vmatprep.subr.mxu0 0.0
    %2399 = vmatpush1.msra.mxu0 0.0
    %2400 = vmatprep.mubr.f32.mxu0 0.0
    %2401 = vmatmul.mubr.f32.gmra.mrb[0].mxu0 %v2273
    %v2402 = vpop.f32.mrb[0].mxu0
    %v2403 = vadd.f32 0.0, %v2402
    %v2404 = vpop.f32.mrb[0].mxu0
    %2405 = vmatprep.mubr.f32.mxu0 0.0
    %2406 = vmatmul.mubr.f32.gmra.mrb[0].mxu0 %v2275
    %v2407 = vpop.f32.mrb[0].mxu0
    %v2408 = vadd.f32 0.0, %v2407
    %v2409 = vpop.f32.mrb[0].mxu0
    %2410 = vmatprep.mubr.f32.mxu0 0.0
    %2411 = vmatmul.mubr.f32.gmra.mrb[0].mxu0 %v2277
    %v2412 = vpop.f32.mrb[0].mxu0
    %v2413 = vadd.f32 0.0, %v2412
    %v2414 = vpop.f32.mrb[0].mxu0
    %2415 = vmatprep.mubr.f32.mxu0 0.0
    %2416 = vmatmul.mubr.f32.gmra.mrb[0].mxu0 %v2279
    %v2417 = vpop.f32.mrb[0].mxu0
    %v2418 = vadd.f32 0.0, %v2417
    %v2419 = vpop.f32.mrb[0].mxu0
    %2420 = vmatprep.mubr.f32.mxu0 0.0
    %2421 = vmatmul.mubr.f32.gmra.mrb[0].mxu0 %v2281
    %v2422 = vpop.f32.mrb[0].mxu0
    %v2423 = vadd.f32 0.0, %v2422
    %v2424 = vpop.f32.mrb[0].mxu0
    %2425 = vmatprep.mubr.f32.mxu0 0.0
    %2426 = vmatmul.mubr.f32.gmra.mrb[0].mxu0 %v2283
    %v2427 = vpop.f32.mrb[0].mxu0
    %v2428 = vadd.f32 0.0, %v2427
    %v2429 = vpop.f32.mrb[0].mxu0
    %2430 = vmatprep.mubr.f32.mxu0 0.0
    %2431 = vmatmul.mubr.f32.gmra.mrb[0].mxu0 %v2285
    %v2432 = vpop.f32.mrb[0].mxu0
    %v2433 = vadd.f32 0.0, %v2432
    %v2434 = vpop.f32.mrb[0].mxu0
    %2435 = vmatprep.mubr.f32.mxu0 0.0
    %2436 = vmatmul.mubr.f32.gmra.mrb[0].mxu0 %v2287
    %v2437 = vpop.f32.mrb[0].mxu0
    %v2438 = vadd.f32 0.0, %v2437
    %v2439 = vpop.f32.mrb[0].mxu0
    %2440 = vdwg.mxu0
    %2441 = vmatprep.subr.mxu0 0.0
    %2442 = vmatpush1.msra.mxu0 %v735
    %2443 = vmatprep.subr.mxu0 0.0
    %2444 = vmatpush1.msra.mxu0 %v736
    %2445 = vmatprep.subr.mxu0 0.0
    %2446 = vmatpush1.msra.mxu0 %v737
    %2447 = vmatprep.subr.mxu0 0.0
    %2448 = vmatpush1.msra.mxu0 %v738
    %2449 = vmatprep.subr.mxu0 0.0
    %2450 = vmatpush1.msra.mxu0 %v739
    %2451 = vmatprep.subr.mxu0 0.0
    %2452 = vmatpush1.msra.mxu0 %v740
    %2453 = vmatprep.subr.mxu0 0.0
    %2454 = vmatpush1.msra.mxu0 %v741
    %2455 = vmatprep.subr.mxu0 0.0
    %2456 = vmatpush1.msra.mxu0 %v742
    %2457 = vmatprep.subr.mxu0 0.0
    %2458 = vmatpush1.msra.mxu0 %v743
    %2459 = vmatprep.subr.mxu0 0.0
    %2460 = vmatpush1.msra.mxu0 %v744
    %2461 = vmatprep.subr.mxu0 0.0
    %2462 = vmatpush1.msra.mxu0 %v745
    %2463 = vmatprep.subr.mxu0 0.0
    %2464 = vmatpush1.msra.mxu0 %v746
    %2465 = vmatprep.subr.mxu0 0.0
    %2466 = vmatpush1.msra.mxu0 %v747
    %2467 = vmatprep.subr.mxu0 0.0
    %2468 = vmatpush1.msra.mxu0 %v748
    %2469 = vmatprep.subr.mxu0 0.0
    %2470 = vmatpush1.msra.mxu0 %v749
    %2471 = vmatprep.subr.mxu0 0.0
    %2472 = vmatpush1.msra.mxu0 %v750
    %2473 = vmatprep.subr.mxu0 0.0
    %2474 = vmatpush1.msra.mxu0 0.0
    %2475 = vmatprep.subr.mxu0 0.0
    %2476 = vmatpush1.msra.mxu0 0.0
    %2477 = vmatprep.subr.mxu0 0.0
    %2478 = vmatpush1.msra.mxu0 0.0
    %2479 = vmatprep.subr.mxu0 0.0
    %2480 = vmatpush1.msra.mxu0 0.0
    %2481 = vmatprep.subr.mxu0 0.0
    %2482 = vmatpush1.msra.mxu0 0.0
    %2483 = vmatprep.subr.mxu0 0.0
    %2484 = vmatpush1.msra.mxu0 0.0
    %2485 = vmatprep.subr.mxu0 0.0
    %2486 = vmatpush1.msra.mxu0 0.0
    %2487 = vmatprep.subr.mxu0 0.0
    %2488 = vmatpush1.msra.mxu0 0.0
    %2489 = vmatprep.subr.mxu0 0.0
    %2490 = vmatpush1.msra.mxu0 0.0
    %2491 = vmatprep.subr.mxu0 0.0
    %2492 = vmatpush1.msra.mxu0 0.0
    %2493 = vmatprep.subr.mxu0 0.0
    %2494 = vmatpush1.msra.mxu0 0.0
    %2495 = vmatprep.subr.mxu0 0.0
    %2496 = vmatpush1.msra.mxu0 0.0
    %2497 = vmatprep.subr.mxu0 0.0
    %2498 = vmatpush1.msra.mxu0 0.0
    %2499 = vmatprep.subr.mxu0 0.0
    %2500 = vmatpush1.msra.mxu0 0.0
    %2501 = vmatprep.subr.mxu0 0.0
    %2502 = vmatpush1.msra.mxu0 0.0
    %2503 = vmatprep.subr.mxu0 0.0
    %2504 = vmatpush1.msra.mxu0 0.0
    %2505 = vmatprep.mubr.f32.mxu0 0.0
    %2506 = vmatmul.mubr.f32.gmra.mrb[0].mxu0 %v2273
    %v2507 = vpop.f32.mrb[0].mxu0
    %v2508 = vadd.f32 0.0, %v2507
    %v2509 = vpop.f32.mrb[0].mxu0
    %2510 = vmatprep.mubr.f32.mxu0 0.0
    %2511 = vmatmul.mubr.f32.gmra.mrb[0].mxu0 %v2275
    %v2512 = vpop.f32.mrb[0].mxu0
    %v2513 = vadd.f32 0.0, %v2512
    %v2514 = vpop.f32.mrb[0].mxu0
    %2515 = vmatprep.mubr.f32.mxu0 0.0
    %2516 = vmatmul.mubr.f32.gmra.mrb[0].mxu0 %v2277
    %v2517 = vpop.f32.mrb[0].mxu0
    %v2518 = vadd.f32 0.0, %v2517
    %v2519 = vpop.f32.mrb[0].mxu0
    %2520 = vmatprep.mubr.f32.mxu0 0.0
    %2521 = vmatmul.mubr.f32.gmra.mrb[0].mxu0 %v2279
    %v2522 = vpop.f32.mrb[0].mxu0
    %v2523 = vadd.f32 0.0, %v2522
    %v2524 = vpop.f32.mrb[0].mxu0
    %2525 = vmatprep.mubr.f32.mxu0 0.0
    %2526 = vmatmul.mubr.f32.gmra.mrb[0].mxu0 %v2281
    %v2527 = vpop.f32.mrb[0].mxu0
    %v2528 = vadd.f32 0.0, %v2527
    %v2529 = vpop.f32.mrb[0].mxu0
    %2530 = vmatprep.mubr.f32.mxu0 0.0
    %2531 = vmatmul.mubr.f32.gmra.mrb[0].mxu0 %v2283
    %v2532 = vpop.f32.mrb[0].mxu0
    %v2533 = vadd.f32 0.0, %v2532
    %v2534 = vpop.f32.mrb[0].mxu0
    %2535 = vmatprep.mubr.f32.mxu0 0.0
    %2536 = vmatmul.mubr.f32.gmra.mrb[0].mxu0 %v2285
    %v2537 = vpop.f32.mrb[0].mxu0
    %v2538 = vadd.f32 0.0, %v2537
    %v2539 = vpop.f32.mrb[0].mxu0
    %2540 = vmatprep.mubr.f32.mxu0 0.0
    %2541 = vmatmul.mubr.f32.gmra.mrb[0].mxu0 %v2287
    %v2542 = vpop.f32.mrb[0].mxu0
    %v2543 = vadd.f32 0.0, %v2542
    %v2544 = vpop.f32.mrb[0].mxu0
    %2545 = vdwg.mxu0
    %v2546 = vrcp.pop %v2508
    %v2547 = vrcp.pop %v2513
    %v2548 = vrcp.pop %v2518
    %v2549 = vrcp.pop %v2523
    %v2550 = vrcp.pop %v2528
    %v2551 = vrcp.pop %v2533
    %v2552 = vrcp.pop %v2538
    %v2553 = vrcp.pop %v2543
    %2555 = vset.pattern.permute.xlu0 0
    %2556 = vperm.xlu0 %2555, %v2546
    %v2557 = vpop.permute.xlu0 %2556
    %2560 = vset.pattern.permute.xlu0 0
    %2561 = vperm.xlu0 %2560, %v2547
    %v2562 = vpop.permute.xlu0 %2561
    %2565 = vset.pattern.permute.xlu0 0
    %2566 = vperm.xlu0 %2565, %v2548
    %v2567 = vpop.permute.xlu0 %2566
    %2570 = vset.pattern.permute.xlu0 0
    %2571 = vperm.xlu0 %2570, %v2549
    %v2572 = vpop.permute.xlu0 %2571
    %2575 = vset.pattern.permute.xlu0 0
    %2576 = vperm.xlu0 %2575, %v2550
    %v2577 = vpop.permute.xlu0 %2576
    %2580 = vset.pattern.permute.xlu0 0
    %2581 = vperm.xlu0 %2580, %v2551
    %v2582 = vpop.permute.xlu0 %2581
    %2585 = vset.pattern.permute.xlu0 0
    %2586 = vperm.xlu0 %2585, %v2552
    %v2587 = vpop.permute.xlu0 %2586
    %2590 = vset.pattern.permute.xlu0 0
    %2591 = vperm.xlu0 %2590, %v2553
    %v2592 = vpop.permute.xlu0 %2591
    %v2594 = vmul.f32 %v2403, %v2557
    %v2595 = vmul.f32 %v2408, %v2562
    %v2596 = vmul.f32 %v2413, %v2567
    %v2597 = vmul.f32 %v2418, %v2572
    %v2598 = vmul.f32 %v2423, %v2577
    %v2599 = vmul.f32 %v2428, %v2582
    %v2600 = vmul.f32 %v2433, %v2587
    %v2601 = vmul.f32 %v2438, %v2592
    %v2602 = vld [vmem:[%s3 + $0x60] sm:$0xff]
    %v2603 = vld [vmem:[%s3 + $0x68] sm:$0xff]
    %v2604 = vld [vmem:[%s3 + $0x70] sm:$0xff]
    %v2605 = vld [vmem:[%s3 + $0x78] sm:$0xff]
    %v2607 = vsel %vm1358, %v2594, 0
    %v2610 = vsel %vm1358, %v2595, 0
    %v2613 = vsel %vm1358, %v2596, 0
    %v2616 = vsel %vm1358, %v2597, 0
    %v2619 = vsel %vm1358, %v2598, 0
    %v2622 = vsel %vm1358, %v2599, 0
    %v2625 = vsel %vm1358, %v2600, 0
    %v2628 = vsel %vm1358, %v2601, 0
    %2630 = vmatprep.subr.mxu0 0.0
    %2631 = vmatpush1.msra.mxu0 %v2602
    %2632 = vmatprep.subr.mxu0 0.0
    %2633 = vmatpush1.msra.mxu0 %v2603
    %2634 = vmatprep.subr.mxu0 0.0
    %2635 = vmatpush1.msra.mxu0 %v2604
    %2636 = vmatprep.subr.mxu0 0.0
    %2637 = vmatpush1.msra.mxu0 %v2605
    %2638 = vmatprep.subr.mxu0 0.0
    %2639 = vmatpush1.msra.mxu0 0.0
    %2640 = vmatprep.subr.mxu0 0.0
    %2641 = vmatpush1.msra.mxu0 0.0
    %2642 = vmatprep.subr.mxu0 0.0
    %2643 = vmatpush1.msra.mxu0 0.0
    %2644 = vmatprep.subr.mxu0 0.0
    %2645 = vmatpush1.msra.mxu0 0.0
    %2646 = vmatprep.subr.mxu0 0.0
    %2647 = vmatpush1.msra.mxu0 0.0
    %2648 = vmatprep.subr.mxu0 0.0
    %2649 = vmatpush1.msra.mxu0 0.0
    %2650 = vmatprep.subr.mxu0 0.0
    %2651 = vmatpush1.msra.mxu0 0.0
    %2652 = vmatprep.subr.mxu0 0.0
    %2653 = vmatpush1.msra.mxu0 0.0
    %2654 = vmatprep.subr.mxu0 0.0
    %2655 = vmatpush1.msra.mxu0 0.0
    %2656 = vmatprep.subr.mxu0 0.0
    %2657 = vmatpush1.msra.mxu0 0.0
    %2658 = vmatprep.subr.mxu0 0.0
    %2659 = vmatpush1.msra.mxu0 0.0
    %2660 = vmatprep.subr.mxu0 0.0
    %2661 = vmatpush1.msra.mxu0 0.0
    %2662 = vmatprep.subr.mxu0 0.0
    %2663 = vmatpush1.msra.mxu0 0.0
    %2664 = vmatprep.subr.mxu0 0.0
    %2665 = vmatpush1.msra.mxu0 0.0
    %2666 = vmatprep.subr.mxu0 0.0
    %2667 = vmatpush1.msra.mxu0 0.0
    %2668 = vmatprep.subr.mxu0 0.0
    %2669 = vmatpush1.msra.mxu0 0.0
    %2670 = vmatprep.subr.mxu0 0.0
    %2671 = vmatpush1.msra.mxu0 0.0
    %2672 = vmatprep.subr.mxu0 0.0
    %2673 = vmatpush1.msra.mxu0 0.0
    %2674 = vmatprep.subr.mxu0 0.0
    %2675 = vmatpush1.msra.mxu0 0.0
    %2676 = vmatprep.subr.mxu0 0.0
    %2677 = vmatpush1.msra.mxu0 0.0
    %2678 = vmatprep.subr.mxu0 0.0
    %2679 = vmatpush1.msra.mxu0 0.0
    %2680 = vmatprep.subr.mxu0 0.0
    %2681 = vmatpush1.msra.mxu0 0.0
    %2682 = vmatprep.subr.mxu0 0.0
    %2683 = vmatpush1.msra.mxu0 0.0
    %2684 = vmatprep.subr.mxu0 0.0
    %2685 = vmatpush1.msra.mxu0 0.0
    %2686 = vmatprep.subr.mxu0 0.0
    %2687 = vmatpush1.msra.mxu0 0.0
    %2688 = vmatprep.subr.mxu0 0.0
    %2689 = vmatpush1.msra.mxu0 0.0
    %2690 = vmatprep.subr.mxu0 0.0
    %2691 = vmatpush1.msra.mxu0 0.0
    %2692 = vmatprep.subr.mxu0 0.0
    %2693 = vmatpush1.msra.mxu0 0.0
    %2694 = vmatprep.mubr.f32.mxu0 0.0
    %2695 = vmatmul.mubr.f32.gmra.mrb[0].mxu0 %v2607
    %v2696 = vpop.f32.mrb[0].mxu0
    %v2697 = vadd.f32 0.0, %v2696
    %v2698 = vpop.f32.mrb[0].mxu0
    %2699 = vmatprep.mubr.f32.mxu0 0.0
    %2700 = vmatmul.mubr.f32.gmra.mrb[0].mxu0 %v2610
    %v2701 = vpop.f32.mrb[0].mxu0
    %v2702 = vadd.f32 0.0, %v2701
    %v2703 = vpop.f32.mrb[0].mxu0
    %2704 = vmatprep.mubr.f32.mxu0 0.0
    %2705 = vmatmul.mubr.f32.gmra.mrb[0].mxu0 %v2613
    %v2706 = vpop.f32.mrb[0].mxu0
    %v2707 = vadd.f32 0.0, %v2706
    %v2708 = vpop.f32.mrb[0].mxu0
    %2709 = vmatprep.mubr.f32.mxu0 0.0
    %2710 = vmatmul.mubr.f32.gmra.mrb[0].mxu0 %v2616
    %v2711 = vpop.f32.mrb[0].mxu0
    %v2712 = vadd.f32 0.0, %v2711
    %v2713 = vpop.f32.mrb[0].mxu0
    %2714 = vmatprep.mubr.f32.mxu0 0.0
    %2715 = vmatmul.mubr.f32.gmra.mrb[0].mxu0 %v2619
    %v2716 = vpop.f32.mrb[0].mxu0
    %v2717 = vadd.f32 0.0, %v2716
    %v2718 = vpop.f32.mrb[0].mxu0
    %2719 = vmatprep.mubr.f32.mxu0 0.0
    %2720 = vmatmul.mubr.f32.gmra.mrb[0].mxu0 %v2622
    %v2721 = vpop.f32.mrb[0].mxu0
    %v2722 = vadd.f32 0.0, %v2721
    %v2723 = vpop.f32.mrb[0].mxu0
    %2724 = vmatprep.mubr.f32.mxu0 0.0
    %2725 = vmatmul.mubr.f32.gmra.mrb[0].mxu0 %v2625
    %v2726 = vpop.f32.mrb[0].mxu0
    %v2727 = vadd.f32 0.0, %v2726
    %v2728 = vpop.f32.mrb[0].mxu0
    %2729 = vmatprep.mubr.f32.mxu0 0.0
    %2730 = vmatmul.mubr.f32.gmra.mrb[0].mxu0 %v2628
    %v2731 = vpop.f32.mrb[0].mxu0
    %v2732 = vadd.f32 0.0, %v2731
    %v2733 = vpop.f32.mrb[0].mxu0
    %2734 = vdwg.mxu0
    %v2735 = vadd.f32 %v2172, %v2697
    %v2736 = vadd.f32 %v2173, %v2702
    %v2737 = vadd.f32 %v2174, %v2707
    %v2738 = vadd.f32 %v2175, %v2712
    %v2739 = vadd.f32 %v2176, %v2717
    %v2740 = vadd.f32 %v2177, %v2722
    %v2741 = vadd.f32 %v2178, %v2727
    %v2742 = vadd.f32 %v2179, %v2732
    %v2743 = vld [vmem:[%s7] sm:$0x1]
    %v2745 = vlaneseq
    %v2746 = vshrl.u32 %v2745, 7
    %v2747 = vsub.s32 0, %v2746
    %v2748 = vrot.slane %v2743, %v2747
    %v2750 = vadd.f32 %v2735, %v2748
    %v2751 = vadd.f32 %v2736, %v2748
    %v2752 = vadd.f32 %v2737, %v2748
    %v2753 = vadd.f32 %v2738, %v2748
    %v2754 = vadd.f32 %v2739, %v2748
    %v2755 = vadd.f32 %v2740, %v2748
    %v2756 = vadd.f32 %v2741, %v2748
    %v2757 = vadd.f32 %v2742, %v2748
    %v2758 = vmax.f32 %v2750, 0.0
    %v2759 = vmax.f32 %v2751, 0.0
    %v2760 = vmax.f32 %v2752, 0.0
    %v2761 = vmax.f32 %v2753, 0.0
    %v2762 = vmax.f32 %v2754, 0.0
    %v2763 = vmax.f32 %v2755, 0.0
    %v2764 = vmax.f32 %v2756, 0.0
    %v2765 = vmax.f32 %v2757, 0.0
    %2766 = vst [vmem:[#allocation2] sm:$0xff] %v2758
    %2767 = vst [vmem:[#allocation2 + $0x8] sm:$0xff] %v2759
    %2768 = vst [vmem:[#allocation2 + $0x10] sm:$0xff] %v2760
    %2769 = vst [vmem:[#allocation2 + $0x18] sm:$0xff] %v2761
    %2770 = vst [vmem:[#allocation2 + $0x20] sm:$0xff] %v2762
    %2771 = vst [vmem:[#allocation2 + $0x28] sm:$0xff] %v2763
    %2772 = vst [vmem:[#allocation2 + $0x30] sm:$0xff] %v2764
    %2773 = vst [vmem:[#allocation2 + $0x38] sm:$0xff] %v2765
    %v2774 = vld [vmem:[#allocation2] sm:$0xff]
    %v2775 = vld [vmem:[#allocation2 + $0x8] sm:$0xff]
    %v2776 = vld [vmem:[#allocation2 + $0x10] sm:$0xff]
    %v2777 = vld [vmem:[#allocation2 + $0x18] sm:$0xff]
    %v2778 = vld [vmem:[#allocation2 + $0x20] sm:$0xff]
    %v2779 = vld [vmem:[#allocation2 + $0x28] sm:$0xff]
    %v2780 = vld [vmem:[#allocation2 + $0x30] sm:$0xff]
    %v2781 = vld [vmem:[#allocation2 + $0x38] sm:$0xff]
    %v2782 = vld [vmem:[#allocation2 + $0x40] sm:$0xff]
    %v2783 = vld [vmem:[#allocation2 + $0x48] sm:$0xff]
    %v2784 = vld [vmem:[#allocation2 + $0x50] sm:$0xff]
    %v2785 = vld [vmem:[#allocation2 + $0x58] sm:$0xff]
    %v2786 = vld [vmem:[#allocation2 + $0x60] sm:$0xff]
    %v2787 = vld [vmem:[#allocation2 + $0x68] sm:$0xff]
    %v2788 = vld [vmem:[#allocation2 + $0x70] sm:$0xff]
    %v2789 = vld [vmem:[#allocation2 + $0x78] sm:$0xff]
    %v2790 = vld [vmem:[%s8] sm:$0xff]
    %v2791 = vld [vmem:[%s8 + $0x8] sm:$0xff]
    %v2792 = vld [vmem:[%s8 + $0x10] sm:$0xff]
    %v2793 = vld [vmem:[%s8 + $0x18] sm:$0xff]
    %v2794 = vld [vmem:[%s8 + $0x20] sm:$0xff]
    %v2795 = vld [vmem:[%s8 + $0x28] sm:$0xff]
    %v2796 = vld [vmem:[%s8 + $0x30] sm:$0xff]
    %v2797 = vld [vmem:[%s8 + $0x38] sm:$0xff]
    %v2798 = vld [vmem:[%s8 + $0x40] sm:$0xff]
    %v2799 = vld [vmem:[%s8 + $0x48] sm:$0xff]
    %v2800 = vld [vmem:[%s8 + $0x50] sm:$0xff]
    %v2801 = vld [vmem:[%s8 + $0x58] sm:$0xff]
    %v2802 = vld [vmem:[%s8 + $0x60] sm:$0xff]
    %v2803 = vld [vmem:[%s8 + $0x68] sm:$0xff]
    %v2804 = vld [vmem:[%s8 + $0x70] sm:$0xff]
    %v2805 = vld [vmem:[%s8 + $0x78] sm:$0xff]
    %2806 = vmatprep.subr.mxu0 0.0
    %2807 = vmatpush1.msra.mxu0 %v2790
    %2808 = vmatprep.subr.mxu0 0.0
    %2809 = vmatpush1.msra.mxu0 %v2791
    %2810 = vmatprep.subr.mxu0 0.0
    %2811 = vmatpush1.msra.mxu0 %v2792
    %2812 = vmatprep.subr.mxu0 0.0
    %2813 = vmatpush1.msra.mxu0 %v2793
    %2814 = vmatprep.subr.mxu0 0.0
    %2815 = vmatpush1.msra.mxu0 %v2794
    %2816 = vmatprep.subr.mxu0 0.0
    %2817 = vmatpush1.msra.mxu0 %v2795
    %2818 = vmatprep.subr.mxu0 0.0
    %2819 = vmatpush1.msra.mxu0 %v2796
    %2820 = vmatprep.subr.mxu0 0.0
    %2821 = vmatpush1.msra.mxu0 %v2797
    %2822 = vmatprep.subr.mxu0 0.0
    %2823 = vmatpush1.msra.mxu0 %v2798
    %2824 = vmatprep.subr.mxu0 0.0
    %2825 = vmatpush1.msra.mxu0 %v2799
    %2826 = vmatprep.subr.mxu0 0.0
    %2827 = vmatpush1.msra.mxu0 %v2800
    %2828 = vmatprep.subr.mxu0 0.0
    %2829 = vmatpush1.msra.mxu0 %v2801
    %2830 = vmatprep.subr.mxu0 0.0
    %2831 = vmatpush1.msra.mxu0 %v2802
    %2832 = vmatprep.subr.mxu0 0.0
    %2833 = vmatpush1.msra.mxu0 %v2803
    %2834 = vmatprep.subr.mxu0 0.0
    %2835 = vmatpush1.msra.mxu0 %v2804
    %2836 = vmatprep.subr.mxu0 0.0
    %2837 = vmatpush1.msra.mxu0 %v2805
    %2838 = vmatprep.subr.mxu0 0.0
    %2839 = vmatpush1.msra.mxu0 0.0
    %2840 = vmatprep.subr.mxu0 0.0
    %2841 = vmatpush1.msra.mxu0 0.0
    %2842 = vmatprep.subr.mxu0 0.0
    %2843 = vmatpush1.msra.mxu0 0.0
    %2844 = vmatprep.subr.mxu0 0.0
    %2845 = vmatpush1.msra.mxu0 0.0
    %2846 = vmatprep.subr.mxu0 0.0
    %2847 = vmatpush1.msra.mxu0 0.0
    %2848 = vmatprep.subr.mxu0 0.0
    %2849 = vmatpush1.msra.mxu0 0.0
    %2850 = vmatprep.subr.mxu0 0.0
    %2851 = vmatpush1.msra.mxu0 0.0
    %2852 = vmatprep.subr.mxu0 0.0
    %2853 = vmatpush1.msra.mxu0 0.0
    %2854 = vmatprep.subr.mxu0 0.0
    %2855 = vmatpush1.msra.mxu0 0.0
    %2856 = vmatprep.subr.mxu0 0.0
    %2857 = vmatpush1.msra.mxu0 0.0
    %2858 = vmatprep.subr.mxu0 0.0
    %2859 = vmatpush1.msra.mxu0 0.0
    %2860 = vmatprep.subr.mxu0 0.0
    %2861 = vmatpush1.msra.mxu0 0.0
    %2862 = vmatprep.subr.mxu0 0.0
    %2863 = vmatpush1.msra.mxu0 0.0
    %2864 = vmatprep.subr.mxu0 0.0
    %2865 = vmatpush1.msra.mxu0 0.0
    %2866 = vmatprep.subr.mxu0 0.0
    %2867 = vmatpush1.msra.mxu0 0.0
    %2868 = vmatprep.subr.mxu0 0.0
    %2869 = vmatpush1.msra.mxu0 0.0
    %2870 = vmatprep.mubr.f32.mxu0 0.0
    %2871 = vmatmul.mubr.f32.gmra.mrb[0].mxu0 %v2774
    %v2872 = vpop.f32.mrb[0].mxu0
    %v2873 = vadd.f32 0.0, %v2872
    %v2874 = vpop.f32.mrb[0].mxu0
    %2875 = vmatprep.mubr.f32.mxu0 0.0
    %2876 = vmatmul.mubr.f32.gmra.mrb[0].mxu0 %v2775
    %v2877 = vpop.f32.mrb[0].mxu0
    %v2878 = vadd.f32 0.0, %v2877
    %v2879 = vpop.f32.mrb[0].mxu0
    %2880 = vmatprep.mubr.f32.mxu0 0.0
    %2881 = vmatmul.mubr.f32.gmra.mrb[0].mxu0 %v2776
    %v2882 = vpop.f32.mrb[0].mxu0
    %v2883 = vadd.f32 0.0, %v2882
    %v2884 = vpop.f32.mrb[0].mxu0
    %2885 = vmatprep.mubr.f32.mxu0 0.0
    %2886 = vmatmul.mubr.f32.gmra.mrb[0].mxu0 %v2777
    %v2887 = vpop.f32.mrb[0].mxu0
    %v2888 = vadd.f32 0.0, %v2887
    %v2889 = vpop.f32.mrb[0].mxu0
    %2890 = vmatprep.mubr.f32.mxu0 0.0
    %2891 = vmatmul.mubr.f32.gmra.mrb[0].mxu0 %v2778
    %v2892 = vpop.f32.mrb[0].mxu0
    %v2893 = vadd.f32 0.0, %v2892
    %v2894 = vpop.f32.mrb[0].mxu0
    %2895 = vmatprep.mubr.f32.mxu0 0.0
    %2896 = vmatmul.mubr.f32.gmra.mrb[0].mxu0 %v2779
    %v2897 = vpop.f32.mrb[0].mxu0
    %v2898 = vadd.f32 0.0, %v2897
    %v2899 = vpop.f32.mrb[0].mxu0
    %2900 = vmatprep.mubr.f32.mxu0 0.0
    %2901 = vmatmul.mubr.f32.gmra.mrb[0].mxu0 %v2780
    %v2902 = vpop.f32.mrb[0].mxu0
    %v2903 = vadd.f32 0.0, %v2902
    %v2904 = vpop.f32.mrb[0].mxu0
    %2905 = vmatprep.mubr.f32.mxu0 0.0
    %2906 = vmatmul.mubr.f32.gmra.mrb[0].mxu0 %v2781
    %v2907 = vpop.f32.mrb[0].mxu0
    %v2908 = vadd.f32 0.0, %v2907
    %v2909 = vpop.f32.mrb[0].mxu0
    %2910 = vmatprep.mubr.f32.mxu0 0.0
    %2911 = vmatmul.mubr.f32.gmra.mrb[0].mxu0 %v2782
    %v2912 = vpop.f32.mrb[0].mxu0
    %v2913 = vadd.f32 0.0, %v2912
    %v2914 = vpop.f32.mrb[0].mxu0
    %2915 = vmatprep.mubr.f32.mxu0 0.0
    %2916 = vmatmul.mubr.f32.gmra.mrb[0].mxu0 %v2783
    %v2917 = vpop.f32.mrb[0].mxu0
    %v2918 = vadd.f32 0.0, %v2917
    %v2919 = vpop.f32.mrb[0].mxu0
    %2920 = vmatprep.mubr.f32.mxu0 0.0
    %2921 = vmatmul.mubr.f32.gmra.mrb[0].mxu0 %v2784
    %v2922 = vpop.f32.mrb[0].mxu0
    %v2923 = vadd.f32 0.0, %v2922
    %v2924 = vpop.f32.mrb[0].mxu0
    %2925 = vmatprep.mubr.f32.mxu0 0.0
    %2926 = vmatmul.mubr.f32.gmra.mrb[0].mxu0 %v2785
    %v2927 = vpop.f32.mrb[0].mxu0
    %v2928 = vadd.f32 0.0, %v2927
    %v2929 = vpop.f32.mrb[0].mxu0
    %2930 = vmatprep.mubr.f32.mxu0 0.0
    %2931 = vmatmul.mubr.f32.gmra.mrb[0].mxu0 %v2786
    %v2932 = vpop.f32.mrb[0].mxu0
    %v2933 = vadd.f32 0.0, %v2932
    %v2934 = vpop.f32.mrb[0].mxu0
    %2935 = vmatprep.mubr.f32.mxu0 0.0
    %2936 = vmatmul.mubr.f32.gmra.mrb[0].mxu0 %v2787
    %v2937 = vpop.f32.mrb[0].mxu0
    %v2938 = vadd.f32 0.0, %v2937
    %v2939 = vpop.f32.mrb[0].mxu0
    %2940 = vmatprep.mubr.f32.mxu0 0.0
    %2941 = vmatmul.mubr.f32.gmra.mrb[0].mxu0 %v2788
    %v2942 = vpop.f32.mrb[0].mxu0
    %v2943 = vadd.f32 0.0, %v2942
    %v2944 = vpop.f32.mrb[0].mxu0
    %2945 = vmatprep.mubr.f32.mxu0 0.0
    %2946 = vmatmul.mubr.f32.gmra.mrb[0].mxu0 %v2789
    %v2947 = vpop.f32.mrb[0].mxu0
    %v2948 = vadd.f32 0.0, %v2947
    %v2949 = vpop.f32.mrb[0].mxu0
    %2950 = vdwg.mxu0
    %v2951 = vld [vmem:[%s10] sm:$0xff]
    %v2952 = vld [vmem:[%s10 + $0x8] sm:$0xff]
    %v2953 = vld [vmem:[%s10 + $0x10] sm:$0xff]
    %v2954 = vld [vmem:[%s10 + $0x18] sm:$0xff]
    %v2955 = vld [vmem:[%s10 + $0x20] sm:$0xff]
    %v2956 = vld [vmem:[%s10 + $0x28] sm:$0xff]
    %v2957 = vld [vmem:[%s10 + $0x30] sm:$0xff]
    %v2958 = vld [vmem:[%s10 + $0x38] sm:$0xff]
    %v2959 = vld [vmem:[%s10 + $0x40] sm:$0xff]
    %v2960 = vld [vmem:[%s10 + $0x48] sm:$0xff]
    %v2961 = vld [vmem:[%s10 + $0x50] sm:$0xff]
    %v2962 = vld [vmem:[%s10 + $0x58] sm:$0xff]
    %v2963 = vld [vmem:[%s10 + $0x60] sm:$0xff]
    %v2964 = vld [vmem:[%s10 + $0x68] sm:$0xff]
    %v2965 = vld [vmem:[%s10 + $0x70] sm:$0xff]
    %v2966 = vld [vmem:[%s10 + $0x78] sm:$0xff]
    %2967 = vmatprep.subr.mxu0 0.0
    %2968 = vmatpush1.msra.mxu0 %v2951
    %2969 = vmatprep.subr.mxu0 0.0
    %2970 = vmatpush1.msra.mxu0 %v2952
    %2971 = vmatprep.subr.mxu0 0.0
    %2972 = vmatpush1.msra.mxu0 %v2953
    %2973 = vmatprep.subr.mxu0 0.0
    %2974 = vmatpush1.msra.mxu0 %v2954
    %2975 = vmatprep.subr.mxu0 0.0
    %2976 = vmatpush1.msra.mxu0 %v2955
    %2977 = vmatprep.subr.mxu0 0.0
    %2978 = vmatpush1.msra.mxu0 %v2956
    %2979 = vmatprep.subr.mxu0 0.0
    %2980 = vmatpush1.msra.mxu0 %v2957
    %2981 = vmatprep.subr.mxu0 0.0
    %2982 = vmatpush1.msra.mxu0 %v2958
    %2983 = vmatprep.subr.mxu0 0.0
    %2984 = vmatpush1.msra.mxu0 %v2959
    %2985 = vmatprep.subr.mxu0 0.0
    %2986 = vmatpush1.msra.mxu0 %v2960
    %2987 = vmatprep.subr.mxu0 0.0
    %2988 = vmatpush1.msra.mxu0 %v2961
    %2989 = vmatprep.subr.mxu0 0.0
    %2990 = vmatpush1.msra.mxu0 %v2962
    %2991 = vmatprep.subr.mxu0 0.0
    %2992 = vmatpush1.msra.mxu0 %v2963
    %2993 = vmatprep.subr.mxu0 0.0
    %2994 = vmatpush1.msra.mxu0 %v2964
    %2995 = vmatprep.subr.mxu0 0.0
    %2996 = vmatpush1.msra.mxu0 %v2965
    %2997 = vmatprep.subr.mxu0 0.0
    %2998 = vmatpush1.msra.mxu0 %v2966
    %2999 = vmatprep.subr.mxu0 0.0
    %3000 = vmatpush1.msra.mxu0 0.0
    %3001 = vmatprep.subr.mxu0 0.0
    %3002 = vmatpush1.msra.mxu0 0.0
    %3003 = vmatprep.subr.mxu0 0.0
    %3004 = vmatpush1.msra.mxu0 0.0
    %3005 = vmatprep.subr.mxu0 0.0
    %3006 = vmatpush1.msra.mxu0 0.0
    %3007 = vmatprep.subr.mxu0 0.0
    %3008 = vmatpush1.msra.mxu0 0.0
    %3009 = vmatprep.subr.mxu0 0.0
    %3010 = vmatpush1.msra.mxu0 0.0
    %3011 = vmatprep.subr.mxu0 0.0
    %3012 = vmatpush1.msra.mxu0 0.0
    %3013 = vmatprep.subr.mxu0 0.0
    %3014 = vmatpush1.msra.mxu0 0.0
    %3015 = vmatprep.subr.mxu0 0.0
    %3016 = vmatpush1.msra.mxu0 0.0
    %3017 = vmatprep.subr.mxu0 0.0
    %3018 = vmatpush1.msra.mxu0 0.0
    %3019 = vmatprep.subr.mxu0 0.0
    %3020 = vmatpush1.msra.mxu0 0.0
    %3021 = vmatprep.subr.mxu0 0.0
    %3022 = vmatpush1.msra.mxu0 0.0
    %3023 = vmatprep.subr.mxu0 0.0
    %3024 = vmatpush1.msra.mxu0 0.0
    %3025 = vmatprep.subr.mxu0 0.0
    %3026 = vmatpush1.msra.mxu0 0.0
    %3027 = vmatprep.subr.mxu0 0.0
    %3028 = vmatpush1.msra.mxu0 0.0
    %3029 = vmatprep.subr.mxu0 0.0
    %3030 = vmatpush1.msra.mxu0 0.0
    %3031 = vmatprep.mubr.f32.mxu0 0.0
    %3032 = vmatmul.mubr.f32.gmra.mrb[0].mxu0 %v2873
    %v3033 = vpop.f32.mrb[0].mxu0
    %v3034 = vadd.f32 0.0, %v3033
    %v3035 = vpop.f32.mrb[0].mxu0
    %3036 = vmatprep.mubr.f32.mxu0 0.0
    %3037 = vmatmul.mubr.f32.gmra.mrb[0].mxu0 %v2878
    %v3038 = vpop.f32.mrb[0].mxu0
    %v3039 = vadd.f32 0.0, %v3038
    %v3040 = vpop.f32.mrb[0].mxu0
    %3041 = vmatprep.mubr.f32.mxu0 0.0
    %3042 = vmatmul.mubr.f32.gmra.mrb[0].mxu0 %v2883
    %v3043 = vpop.f32.mrb[0].mxu0
    %v3044 = vadd.f32 0.0, %v3043
    %v3045 = vpop.f32.mrb[0].mxu0
    %3046 = vmatprep.mubr.f32.mxu0 0.0
    %3047 = vmatmul.mubr.f32.gmra.mrb[0].mxu0 %v2888
    %v3048 = vpop.f32.mrb[0].mxu0
    %v3049 = vadd.f32 0.0, %v3048
    %v3050 = vpop.f32.mrb[0].mxu0
    %3051 = vmatprep.mubr.f32.mxu0 0.0
    %3052 = vmatmul.mubr.f32.gmra.mrb[0].mxu0 %v2893
    %v3053 = vpop.f32.mrb[0].mxu0
    %v3054 = vadd.f32 0.0, %v3053
    %v3055 = vpop.f32.mrb[0].mxu0
    %3056 = vmatprep.mubr.f32.mxu0 0.0
    %3057 = vmatmul.mubr.f32.gmra.mrb[0].mxu0 %v2898
    %v3058 = vpop.f32.mrb[0].mxu0
    %v3059 = vadd.f32 0.0, %v3058
    %v3060 = vpop.f32.mrb[0].mxu0
    %3061 = vmatprep.mubr.f32.mxu0 0.0
    %3062 = vmatmul.mubr.f32.gmra.mrb[0].mxu0 %v2903
    %v3063 = vpop.f32.mrb[0].mxu0
    %v3064 = vadd.f32 0.0, %v3063
    %v3065 = vpop.f32.mrb[0].mxu0
    %3066 = vmatprep.mubr.f32.mxu0 0.0
    %3067 = vmatmul.mubr.f32.gmra.mrb[0].mxu0 %v2908
    %v3068 = vpop.f32.mrb[0].mxu0
    %v3069 = vadd.f32 0.0, %v3068
    %v3070 = vpop.f32.mrb[0].mxu0
    %3071 = vdwg.mxu0
    %v3072 = vld [vmem:[%s9] sm:$0xf]
    %3073 = vmatprep.subr.mxu0 0.0
    %3074 = vmatpush1.xpose.msra.mxu0 %v2873
    %3075 = vmatprep.subr.mxu0 0.0
    %3076 = vmatpush1.xpose.msra.mxu0 %v2878
    %3077 = vmatprep.subr.mxu0 0.0
    %3078 = vmatpush1.xpose.msra.mxu0 %v2883
    %3079 = vmatprep.subr.mxu0 0.0
    %3080 = vmatpush1.xpose.msra.mxu0 %v2888
    %3081 = vmatprep.subr.mxu0 0.0
    %3082 = vmatpush1.xpose.msra.mxu0 %v2893
    %3083 = vmatprep.subr.mxu0 0.0
    %3084 = vmatpush1.xpose.msra.mxu0 %v2898
    %3085 = vmatprep.subr.mxu0 0.0
    %3086 = vmatpush1.xpose.msra.mxu0 %v2903
    %3087 = vmatprep.subr.mxu0 0.0
    %3088 = vmatpush1.xpose.msra.mxu0 %v2908
    %3089 = vmatprep.subr.mxu0 0.0
    %3090 = vmatpush1.xpose.msra.mxu0 %v2913
    %3091 = vmatprep.subr.mxu0 0.0
    %3092 = vmatpush1.xpose.msra.mxu0 %v2918
    %3093 = vmatprep.subr.mxu0 0.0
    %3094 = vmatpush1.xpose.msra.mxu0 %v2923
    %3095 = vmatprep.subr.mxu0 0.0
    %3096 = vmatpush1.xpose.msra.mxu0 %v2928
    %3097 = vmatprep.subr.mxu0 0.0
    %3098 = vmatpush1.xpose.msra.mxu0 %v2933
    %3099 = vmatprep.subr.mxu0 0.0
    %3100 = vmatpush1.xpose.msra.mxu0 %v2938
    %3101 = vmatprep.subr.mxu0 0.0
    %3102 = vmatpush1.xpose.msra.mxu0 %v2943
    %3103 = vmatprep.subr.mxu0 0.0
    %3104 = vmatpush1.xpose.msra.mxu0 %v2948
    %3105 = vmatprep.subr.mxu0 0.0
    %3106 = vmatpush1.xpose.msra.mxu0 0.0
    %3107 = vmatprep.subr.mxu0 0.0
    %3108 = vmatpush1.xpose.msra.mxu0 0.0
    %3109 = vmatprep.subr.mxu0 0.0
    %3110 = vmatpush1.xpose.msra.mxu0 0.0
    %3111 = vmatprep.subr.mxu0 0.0
    %3112 = vmatpush1.xpose.msra.mxu0 0.0
    %3113 = vmatprep.subr.mxu0 0.0
    %3114 = vmatpush1.xpose.msra.mxu0 0.0
    %3115 = vmatprep.subr.mxu0 0.0
    %3116 = vmatpush1.xpose.msra.mxu0 0.0
    %3117 = vmatprep.subr.mxu0 0.0
    %3118 = vmatpush1.xpose.msra.mxu0 0.0
    %3119 = vmatprep.subr.mxu0 0.0
    %3120 = vmatpush1.xpose.msra.mxu0 0.0
    %3121 = vmatprep.subr.mxu0 0.0
    %3122 = vmatpush1.xpose.msra.mxu0 0.0
    %3123 = vmatprep.subr.mxu0 0.0
    %3124 = vmatpush1.xpose.msra.mxu0 0.0
    %3125 = vmatprep.subr.mxu0 0.0
    %3126 = vmatpush1.xpose.msra.mxu0 0.0
    %3127 = vmatprep.subr.mxu0 0.0
    %3128 = vmatpush1.xpose.msra.mxu0 0.0
    %3129 = vmatprep.subr.mxu0 0.0
    %3130 = vmatpush1.xpose.msra.mxu0 0.0
    %3131 = vmatprep.subr.mxu0 0.0
    %3132 = vmatpush1.xpose.msra.mxu0 0.0
    %3133 = vmatprep.subr.mxu0 0.0
    %3134 = vmatpush1.xpose.msra.mxu0 0.0
    %3135 = vmatprep.subr.mxu0 0.0
    %3136 = vmatpush1.xpose.msra.mxu0 0.0
    %3137 = vmatprep.mubr.f32.mxu0 0.0
    %3138 = vmatmul.mubr.f32.gmra.mrb[0].mxu0 %v3072
    %v3139 = vpop.f32.mrb[0].mxu0
    %v3140 = vadd.f32 0.0, %v3139
    %v3141 = vpop.f32.mrb[0].mxu0
    %3142 = vdwg.mxu0
    %3143 = vst [vmem:[#allocation4] sm:$0xff] %v2873
    %3144 = vst [vmem:[#allocation4 + $0x8] sm:$0xff] %v2878
    %3145 = vst [vmem:[#allocation4 + $0x10] sm:$0xff] %v2883
    %3146 = vst [vmem:[#allocation4 + $0x18] sm:$0xff] %v2888
    %3147 = vst [vmem:[#allocation4 + $0x20] sm:$0xff] %v2893
    %3148 = vst [vmem:[#allocation4 + $0x28] sm:$0xff] %v2898
    %3149 = vst [vmem:[#allocation4 + $0x30] sm:$0xff] %v2903
    %3150 = vst [vmem:[#allocation4 + $0x38] sm:$0xff] %v2908
    %3151 = vst [vmem:[#allocation4 + $0x40] sm:$0xff] %v2913
    %3152 = vst [vmem:[#allocation4 + $0x48] sm:$0xff] %v2918
    %3153 = vst [vmem:[#allocation4 + $0x50] sm:$0xff] %v2923
    %3154 = vst [vmem:[#allocation4 + $0x58] sm:$0xff] %v2928
    %3155 = vst [vmem:[#allocation4 + $0x60] sm:$0xff] %v2933
    %3156 = vst [vmem:[#allocation4 + $0x68] sm:$0xff] %v2938
    %3157 = vst [vmem:[#allocation4 + $0x70] sm:$0xff] %v2943
    %3158 = vst [vmem:[#allocation4 + $0x78] sm:$0xff] %v2948
    %3160 = vset.pattern.permute.xlu0 0
    %3161 = vperm.xlu0 %3160, %v3034
    %v3162 = vpop.permute.xlu0 %3161
    %3165 = vset.pattern.permute.xlu0 0
    %3166 = vperm.xlu0 %3165, %v3039
    %v3167 = vpop.permute.xlu0 %3166
    %3170 = vset.pattern.permute.xlu0 0
    %3171 = vperm.xlu0 %3170, %v3044
    %v3172 = vpop.permute.xlu0 %3171
    %3175 = vset.pattern.permute.xlu0 0
    %3176 = vperm.xlu0 %3175, %v3049
    %v3177 = vpop.permute.xlu0 %3176
    %3180 = vset.pattern.permute.xlu0 0
    %3181 = vperm.xlu0 %3180, %v3054
    %v3182 = vpop.permute.xlu0 %3181
    %3185 = vset.pattern.permute.xlu0 0
    %3186 = vperm.xlu0 %3185, %v3059
    %v3187 = vpop.permute.xlu0 %3186
    %3190 = vset.pattern.permute.xlu0 0
    %3191 = vperm.xlu0 %3190, %v3064
    %v3192 = vpop.permute.xlu0 %3191
    %3195 = vset.pattern.permute.xlu0 0
    %3196 = vperm.xlu0 %3195, %v3069
    %v3197 = vpop.permute.xlu0 %3196
    %v3199 = vlaneseq
    %v3200 = vshrl.u32 %v3199, 7
    %v3201 = vsub.s32 0, %v3200
    %v3202 = vrot.slane %v3140, %v3201
    %v3203 = vadd.f32 %v3162, %v3202
    %v3204 = vadd.f32 %v3167, %v3202
    %v3205 = vadd.f32 %v3172, %v3202
    %v3206 = vadd.f32 %v3177, %v3202
    %v3207 = vadd.f32 %v3182, %v3202
    %v3208 = vadd.f32 %v3187, %v3202
    %v3209 = vadd.f32 %v3192, %v3202
    %v3210 = vadd.f32 %v3197, %v3202
    %v3211 = vmul.f32 %v3203, 0.2
    %v3212 = vmul.f32 %v3204, 0.2
    %v3213 = vmul.f32 %v3205, 0.2
    %v3214 = vmul.f32 %v3206, 0.2
    %v3215 = vmul.f32 %v3207, 0.2
    %v3216 = vmul.f32 %v3208, 0.2
    %v3217 = vmul.f32 %v3209, 0.2
    %v3218 = vmul.f32 %v3210, 0.2
    %v3219 = vmax.f32 %v3203, %v3211
    %v3220 = vmax.f32 %v3204, %v3212
    %v3221 = vmax.f32 %v3205, %v3213
    %v3222 = vmax.f32 %v3206, %v3214
    %v3223 = vmax.f32 %v3207, %v3215
    %v3224 = vmax.f32 %v3208, %v3216
    %v3225 = vmax.f32 %v3209, %v3217
    %v3226 = vmax.f32 %v3210, %v3218
    %v3227 = vld [vmem:[%s1] sm:$0xff]
    %v3228 = vld [vmem:[%s1 + $0x8] sm:$0xff]
    %v3229 = vld [vmem:[%s1 + $0x10] sm:$0xff]
    %v3230 = vld [vmem:[%s1 + $0x18] sm:$0xff]
    %v3231 = vld [vmem:[%s1 + $0x20] sm:$0xff]
    %v3232 = vld [vmem:[%s1 + $0x28] sm:$0xff]
    %v3233 = vld [vmem:[%s1 + $0x30] sm:$0xff]
    %v3234 = vld [vmem:[%s1 + $0x38] sm:$0xff]
    %v3235 = vadd.f32 %v3219, %v3227
    %v3236 = vadd.f32 %v3220, %v3228
    %v3237 = vadd.f32 %v3221, %v3229
    %v3238 = vadd.f32 %v3222, %v3230
    %v3239 = vadd.f32 %v3223, %v3231
    %v3240 = vadd.f32 %v3224, %v3232
    %v3241 = vadd.f32 %v3225, %v3233
    %v3242 = vadd.f32 %v3226, %v3234
    %3243 = vmax.xlane.f32.xlu0 %v3235
    %v3244 = vpop.xlane.xlu0 %3243
    %3245 = vmax.xlane.f32.xlu0 %v3236
    %v3246 = vpop.xlane.xlu0 %3245
    %3247 = vmax.xlane.f32.xlu0 %v3237
    %v3248 = vpop.xlane.xlu0 %3247
    %3249 = vmax.xlane.f32.xlu0 %v3238
    %v3250 = vpop.xlane.xlu0 %3249
    %3251 = vmax.xlane.f32.xlu0 %v3239
    %v3252 = vpop.xlane.xlu0 %3251
    %3253 = vmax.xlane.f32.xlu0 %v3240
    %v3254 = vpop.xlane.xlu0 %3253
    %3255 = vmax.xlane.f32.xlu0 %v3241
    %v3256 = vpop.xlane.xlu0 %3255
    %3257 = vmax.xlane.f32.xlu0 %v3242
    %v3258 = vpop.xlane.xlu0 %3257
    %v3259 = vsub.f32 %v3235, %v3244
    %v3260 = vsub.f32 %v3236, %v3246
    %v3261 = vsub.f32 %v3237, %v3248
    %v3262 = vsub.f32 %v3238, %v3250
    %v3263 = vsub.f32 %v3239, %v3252
    %v3264 = vsub.f32 %v3240, %v3254
    %v3265 = vsub.f32 %v3241, %v3256
    %v3266 = vsub.f32 %v3242, %v3258
    %v3267 = vmul.f32 %v3259, 1.442695
    %v3268 = vpow.pop %v3267
    %v3269 = vmul.f32 %v3260, 1.442695
    %v3270 = vpow.pop %v3269
    %v3271 = vmul.f32 %v3261, 1.442695
    %v3272 = vpow.pop %v3271
    %v3273 = vmul.f32 %v3262, 1.442695
    %v3274 = vpow.pop %v3273
    %v3275 = vmul.f32 %v3263, 1.442695
    %v3276 = vpow.pop %v3275
    %v3277 = vmul.f32 %v3264, 1.442695
    %v3278 = vpow.pop %v3277
    %v3279 = vmul.f32 %v3265, 1.442695
    %v3280 = vpow.pop %v3279
    %v3281 = vmul.f32 %v3266, 1.442695
    %v3282 = vpow.pop %v3281
    %v3283 = vld [vmem:[#allocation4] sm:$0xff]
    %v3284 = vld [vmem:[#allocation4 + $0x8] sm:$0xff]
    %v3285 = vld [vmem:[#allocation4 + $0x10] sm:$0xff]
    %v3286 = vld [vmem:[#allocation4 + $0x18] sm:$0xff]
    %v3287 = vld [vmem:[#allocation4 + $0x20] sm:$0xff]
    %v3288 = vld [vmem:[#allocation4 + $0x28] sm:$0xff]
    %v3289 = vld [vmem:[#allocation4 + $0x30] sm:$0xff]
    %v3290 = vld [vmem:[#allocation4 + $0x38] sm:$0xff]
    %v3291 = vld [vmem:[#allocation4 + $0x40] sm:$0xff]
    %v3292 = vld [vmem:[#allocation4 + $0x48] sm:$0xff]
    %v3293 = vld [vmem:[#allocation4 + $0x50] sm:$0xff]
    %v3294 = vld [vmem:[#allocation4 + $0x58] sm:$0xff]
    %v3295 = vld [vmem:[#allocation4 + $0x60] sm:$0xff]
    %v3296 = vld [vmem:[#allocation4 + $0x68] sm:$0xff]
    %v3297 = vld [vmem:[#allocation4 + $0x70] sm:$0xff]
    %v3298 = vld [vmem:[#allocation4 + $0x78] sm:$0xff]
    %3299 = vmatprep.subr.mxu0 0.0
    %3300 = vmatpush1.msra.mxu0 %v3283
    %3301 = vmatprep.subr.mxu0 0.0
    %3302 = vmatpush1.msra.mxu0 %v3284
    %3303 = vmatprep.subr.mxu0 0.0
    %3304 = vmatpush1.msra.mxu0 %v3285
    %3305 = vmatprep.subr.mxu0 0.0
    %3306 = vmatpush1.msra.mxu0 %v3286
    %3307 = vmatprep.subr.mxu0 0.0
    %3308 = vmatpush1.msra.mxu0 %v3287
    %3309 = vmatprep.subr.mxu0 0.0
    %3310 = vmatpush1.msra.mxu0 %v3288
    %3311 = vmatprep.subr.mxu0 0.0
    %3312 = vmatpush1.msra.mxu0 %v3289
    %3313 = vmatprep.subr.mxu0 0.0
    %3314 = vmatpush1.msra.mxu0 %v3290
    %3315 = vmatprep.subr.mxu0 0.0
    %3316 = vmatpush1.msra.mxu0 %v3291
    %3317 = vmatprep.subr.mxu0 0.0
    %3318 = vmatpush1.msra.mxu0 %v3292
    %3319 = vmatprep.subr.mxu0 0.0
    %3320 = vmatpush1.msra.mxu0 %v3293
    %3321 = vmatprep.subr.mxu0 0.0
    %3322 = vmatpush1.msra.mxu0 %v3294
    %3323 = vmatprep.subr.mxu0 0.0
    %3324 = vmatpush1.msra.mxu0 %v3295
    %3325 = vmatprep.subr.mxu0 0.0
    %3326 = vmatpush1.msra.mxu0 %v3296
    %3327 = vmatprep.subr.mxu0 0.0
    %3328 = vmatpush1.msra.mxu0 %v3297
    %3329 = vmatprep.subr.mxu0 0.0
    %3330 = vmatpush1.msra.mxu0 %v3298
    %3331 = vmatprep.subr.mxu0 0.0
    %3332 = vmatpush1.msra.mxu0 0.0
    %3333 = vmatprep.subr.mxu0 0.0
    %3334 = vmatpush1.msra.mxu0 0.0
    %3335 = vmatprep.subr.mxu0 0.0
    %3336 = vmatpush1.msra.mxu0 0.0
    %3337 = vmatprep.subr.mxu0 0.0
    %3338 = vmatpush1.msra.mxu0 0.0
    %3339 = vmatprep.subr.mxu0 0.0
    %3340 = vmatpush1.msra.mxu0 0.0
    %3341 = vmatprep.subr.mxu0 0.0
    %3342 = vmatpush1.msra.mxu0 0.0
    %3343 = vmatprep.subr.mxu0 0.0
    %3344 = vmatpush1.msra.mxu0 0.0
    %3345 = vmatprep.subr.mxu0 0.0
    %3346 = vmatpush1.msra.mxu0 0.0
    %3347 = vmatprep.subr.mxu0 0.0
    %3348 = vmatpush1.msra.mxu0 0.0
    %3349 = vmatprep.subr.mxu0 0.0
    %3350 = vmatpush1.msra.mxu0 0.0
    %3351 = vmatprep.subr.mxu0 0.0
    %3352 = vmatpush1.msra.mxu0 0.0
    %3353 = vmatprep.subr.mxu0 0.0
    %3354 = vmatpush1.msra.mxu0 0.0
    %3355 = vmatprep.subr.mxu0 0.0
    %3356 = vmatpush1.msra.mxu0 0.0
    %3357 = vmatprep.subr.mxu0 0.0
    %3358 = vmatpush1.msra.mxu0 0.0
    %3359 = vmatprep.subr.mxu0 0.0
    %3360 = vmatpush1.msra.mxu0 0.0
    %3361 = vmatprep.subr.mxu0 0.0
    %3362 = vmatpush1.msra.mxu0 0.0
    %3363 = vmatprep.mubr.f32.mxu0 0.0
    %3364 = vmatmul.mubr.f32.gmra.mrb[0].mxu0 %v3268
    %v3365 = vpop.f32.mrb[0].mxu0
    %v3366 = vadd.f32 0.0, %v3365
    %v3367 = vpop.f32.mrb[0].mxu0
    %3368 = vmatprep.mubr.f32.mxu0 0.0
    %3369 = vmatmul.mubr.f32.gmra.mrb[0].mxu0 %v3270
    %v3370 = vpop.f32.mrb[0].mxu0
    %v3371 = vadd.f32 0.0, %v3370
    %v3372 = vpop.f32.mrb[0].mxu0
    %3373 = vmatprep.mubr.f32.mxu0 0.0
    %3374 = vmatmul.mubr.f32.gmra.mrb[0].mxu0 %v3272
    %v3375 = vpop.f32.mrb[0].mxu0
    %v3376 = vadd.f32 0.0, %v3375
    %v3377 = vpop.f32.mrb[0].mxu0
    %3378 = vmatprep.mubr.f32.mxu0 0.0
    %3379 = vmatmul.mubr.f32.gmra.mrb[0].mxu0 %v3274
    %v3380 = vpop.f32.mrb[0].mxu0
    %v3381 = vadd.f32 0.0, %v3380
    %v3382 = vpop.f32.mrb[0].mxu0
    %3383 = vmatprep.mubr.f32.mxu0 0.0
    %3384 = vmatmul.mubr.f32.gmra.mrb[0].mxu0 %v3276
    %v3385 = vpop.f32.mrb[0].mxu0
    %v3386 = vadd.f32 0.0, %v3385
    %v3387 = vpop.f32.mrb[0].mxu0
    %3388 = vmatprep.mubr.f32.mxu0 0.0
    %3389 = vmatmul.mubr.f32.gmra.mrb[0].mxu0 %v3278
    %v3390 = vpop.f32.mrb[0].mxu0
    %v3391 = vadd.f32 0.0, %v3390
    %v3392 = vpop.f32.mrb[0].mxu0
    %3393 = vmatprep.mubr.f32.mxu0 0.0
    %3394 = vmatmul.mubr.f32.gmra.mrb[0].mxu0 %v3280
    %v3395 = vpop.f32.mrb[0].mxu0
    %v3396 = vadd.f32 0.0, %v3395
    %v3397 = vpop.f32.mrb[0].mxu0
    %3398 = vmatprep.mubr.f32.mxu0 0.0
    %3399 = vmatmul.mubr.f32.gmra.mrb[0].mxu0 %v3282
    %v3400 = vpop.f32.mrb[0].mxu0
    %v3401 = vadd.f32 0.0, %v3400
    %v3402 = vpop.f32.mrb[0].mxu0
    %3403 = vdwg.mxu0
    %v3404 = vld [vmem:[%s2] sm:$0xff]
    %v3405 = vld [vmem:[%s2 + $0x8] sm:$0xff]
    %v3406 = vld [vmem:[%s2 + $0x10] sm:$0xff]
    %v3407 = vld [vmem:[%s2 + $0x18] sm:$0xff]
    %v3408 = vld [vmem:[%s2 + $0x20] sm:$0xff]
    %v3409 = vld [vmem:[%s2 + $0x28] sm:$0xff]
    %v3410 = vld [vmem:[%s2 + $0x30] sm:$0xff]
    %v3411 = vld [vmem:[%s2 + $0x38] sm:$0xff]
    %v3412 = vld [vmem:[%s2 + $0x40] sm:$0xff]
    %v3413 = vld [vmem:[%s2 + $0x48] sm:$0xff]
    %v3414 = vld [vmem:[%s2 + $0x50] sm:$0xff]
    %v3415 = vld [vmem:[%s2 + $0x58] sm:$0xff]
    %v3416 = vld [vmem:[%s2 + $0x60] sm:$0xff]
    %v3417 = vld [vmem:[%s2 + $0x68] sm:$0xff]
    %v3418 = vld [vmem:[%s2 + $0x70] sm:$0xff]
    %v3419 = vld [vmem:[%s2 + $0x78] sm:$0xff]
    %3420 = vmatprep.subr.mxu0 0.0
    %3421 = vmatpush1.msra.mxu0 %v3404
    %3422 = vmatprep.subr.mxu0 0.0
    %3423 = vmatpush1.msra.mxu0 %v3405
    %3424 = vmatprep.subr.mxu0 0.0
    %3425 = vmatpush1.msra.mxu0 %v3406
    %3426 = vmatprep.subr.mxu0 0.0
    %3427 = vmatpush1.msra.mxu0 %v3407
    %3428 = vmatprep.subr.mxu0 0.0
    %3429 = vmatpush1.msra.mxu0 %v3408
    %3430 = vmatprep.subr.mxu0 0.0
    %3431 = vmatpush1.msra.mxu0 %v3409
    %3432 = vmatprep.subr.mxu0 0.0
    %3433 = vmatpush1.msra.mxu0 %v3410
    %3434 = vmatprep.subr.mxu0 0.0
    %3435 = vmatpush1.msra.mxu0 %v3411
    %3436 = vmatprep.subr.mxu0 0.0
    %3437 = vmatpush1.msra.mxu0 %v3412
    %3438 = vmatprep.subr.mxu0 0.0
    %3439 = vmatpush1.msra.mxu0 %v3413
    %3440 = vmatprep.subr.mxu0 0.0
    %3441 = vmatpush1.msra.mxu0 %v3414
    %3442 = vmatprep.subr.mxu0 0.0
    %3443 = vmatpush1.msra.mxu0 %v3415
    %3444 = vmatprep.subr.mxu0 0.0
    %3445 = vmatpush1.msra.mxu0 %v3416
    %3446 = vmatprep.subr.mxu0 0.0
    %3447 = vmatpush1.msra.mxu0 %v3417
    %3448 = vmatprep.subr.mxu0 0.0
    %3449 = vmatpush1.msra.mxu0 %v3418
    %3450 = vmatprep.subr.mxu0 0.0
    %3451 = vmatpush1.msra.mxu0 %v3419
    %3452 = vmatprep.subr.mxu0 0.0
    %3453 = vmatpush1.msra.mxu0 0.0
    %3454 = vmatprep.subr.mxu0 0.0
    %3455 = vmatpush1.msra.mxu0 0.0
    %3456 = vmatprep.subr.mxu0 0.0
    %3457 = vmatpush1.msra.mxu0 0.0
    %3458 = vmatprep.subr.mxu0 0.0
    %3459 = vmatpush1.msra.mxu0 0.0
    %3460 = vmatprep.subr.mxu0 0.0
    %3461 = vmatpush1.msra.mxu0 0.0
    %3462 = vmatprep.subr.mxu0 0.0
    %3463 = vmatpush1.msra.mxu0 0.0
    %3464 = vmatprep.subr.mxu0 0.0
    %3465 = vmatpush1.msra.mxu0 0.0
    %3466 = vmatprep.subr.mxu0 0.0
    %3467 = vmatpush1.msra.mxu0 0.0
    %3468 = vmatprep.subr.mxu0 0.0
    %3469 = vmatpush1.msra.mxu0 0.0
    %3470 = vmatprep.subr.mxu0 0.0
    %3471 = vmatpush1.msra.mxu0 0.0
    %3472 = vmatprep.subr.mxu0 0.0
    %3473 = vmatpush1.msra.mxu0 0.0
    %3474 = vmatprep.subr.mxu0 0.0
    %3475 = vmatpush1.msra.mxu0 0.0
    %3476 = vmatprep.subr.mxu0 0.0
    %3477 = vmatpush1.msra.mxu0 0.0
    %3478 = vmatprep.subr.mxu0 0.0
    %3479 = vmatpush1.msra.mxu0 0.0
    %3480 = vmatprep.subr.mxu0 0.0
    %3481 = vmatpush1.msra.mxu0 0.0
    %3482 = vmatprep.subr.mxu0 0.0
    %3483 = vmatpush1.msra.mxu0 0.0
    %3484 = vmatprep.mubr.f32.mxu0 0.0
    %3485 = vmatmul.mubr.f32.gmra.mrb[0].mxu0 %v3268
    %v3486 = vpop.f32.mrb[0].mxu0
    %v3487 = vadd.f32 0.0, %v3486
    %v3488 = vpop.f32.mrb[0].mxu0
    %3489 = vmatprep.mubr.f32.mxu0 0.0
    %3490 = vmatmul.mubr.f32.gmra.mrb[0].mxu0 %v3270
    %v3491 = vpop.f32.mrb[0].mxu0
    %v3492 = vadd.f32 0.0, %v3491
    %v3493 = vpop.f32.mrb[0].mxu0
    %3494 = vmatprep.mubr.f32.mxu0 0.0
    %3495 = vmatmul.mubr.f32.gmra.mrb[0].mxu0 %v3272
    %v3496 = vpop.f32.mrb[0].mxu0
    %v3497 = vadd.f32 0.0, %v3496
    %v3498 = vpop.f32.mrb[0].mxu0
    %3499 = vmatprep.mubr.f32.mxu0 0.0
    %3500 = vmatmul.mubr.f32.gmra.mrb[0].mxu0 %v3274
    %v3501 = vpop.f32.mrb[0].mxu0
    %v3502 = vadd.f32 0.0, %v3501
    %v3503 = vpop.f32.mrb[0].mxu0
    %3504 = vmatprep.mubr.f32.mxu0 0.0
    %3505 = vmatmul.mubr.f32.gmra.mrb[0].mxu0 %v3276
    %v3506 = vpop.f32.mrb[0].mxu0
    %v3507 = vadd.f32 0.0, %v3506
    %v3508 = vpop.f32.mrb[0].mxu0
    %3509 = vmatprep.mubr.f32.mxu0 0.0
    %3510 = vmatmul.mubr.f32.gmra.mrb[0].mxu0 %v3278
    %v3511 = vpop.f32.mrb[0].mxu0
    %v3512 = vadd.f32 0.0, %v3511
    %v3513 = vpop.f32.mrb[0].mxu0
    %3514 = vmatprep.mubr.f32.mxu0 0.0
    %3515 = vmatmul.mubr.f32.gmra.mrb[0].mxu0 %v3280
    %v3516 = vpop.f32.mrb[0].mxu0
    %v3517 = vadd.f32 0.0, %v3516
    %v3518 = vpop.f32.mrb[0].mxu0
    %3519 = vmatprep.mubr.f32.mxu0 0.0
    %3520 = vmatmul.mubr.f32.gmra.mrb[0].mxu0 %v3282
    %v3521 = vpop.f32.mrb[0].mxu0
    %v3522 = vadd.f32 0.0, %v3521
    %v3523 = vpop.f32.mrb[0].mxu0
    %3524 = vdwg.mxu0
    %v3525 = vrcp.pop %v3487
    %v3526 = vrcp.pop %v3492
    %v3527 = vrcp.pop %v3497
    %v3528 = vrcp.pop %v3502
    %v3529 = vrcp.pop %v3507
    %v3530 = vrcp.pop %v3512
    %v3531 = vrcp.pop %v3517
    %v3532 = vrcp.pop %v3522
    %3534 = vset.pattern.permute.xlu0 0
    %3535 = vperm.xlu0 %3534, %v3525
    %v3536 = vpop.permute.xlu0 %3535
    %3539 = vset.pattern.permute.xlu0 0
    %3540 = vperm.xlu0 %3539, %v3526
    %v3541 = vpop.permute.xlu0 %3540
    %3544 = vset.pattern.permute.xlu0 0
    %3545 = vperm.xlu0 %3544, %v3527
    %v3546 = vpop.permute.xlu0 %3545
    %3549 = vset.pattern.permute.xlu0 0
    %3550 = vperm.xlu0 %3549, %v3528
    %v3551 = vpop.permute.xlu0 %3550
    %3554 = vset.pattern.permute.xlu0 0
    %3555 = vperm.xlu0 %3554, %v3529
    %v3556 = vpop.permute.xlu0 %3555
    %3559 = vset.pattern.permute.xlu0 0
    %3560 = vperm.xlu0 %3559, %v3530
    %v3561 = vpop.permute.xlu0 %3560
    %3564 = vset.pattern.permute.xlu0 0
    %3565 = vperm.xlu0 %3564, %v3531
    %v3566 = vpop.permute.xlu0 %3565
    %3569 = vset.pattern.permute.xlu0 0
    %3570 = vperm.xlu0 %3569, %v3532
    %v3571 = vpop.permute.xlu0 %3570
    %v3573 = vmul.f32 %v3366, %v3536
    %v3574 = vmul.f32 %v3371, %v3541
    %v3575 = vmul.f32 %v3376, %v3546
    %v3576 = vmul.f32 %v3381, %v3551
    %v3577 = vmul.f32 %v3386, %v3556
    %v3578 = vmul.f32 %v3391, %v3561
    %v3579 = vmul.f32 %v3396, %v3566
    %v3580 = vmul.f32 %v3401, %v3571
    %v3581 = vld [vmem:[%s3] sm:$0xff]
    %v3582 = vld [vmem:[%s3 + $0x8] sm:$0xff]
    %v3583 = vld [vmem:[%s3 + $0x10] sm:$0xff]
    %v3584 = vld [vmem:[%s3 + $0x18] sm:$0xff]
    %3585 = vset.pattern.permute.xlu0 1
    %3586 = vperm.xlu0 %3585, %v3034
    %v3587 = vpop.permute.xlu0 %3586
    %3589 = vset.pattern.permute.xlu0 1
    %3590 = vperm.xlu0 %3589, %v3039
    %v3591 = vpop.permute.xlu0 %3590
    %3593 = vset.pattern.permute.xlu0 1
    %3594 = vperm.xlu0 %3593, %v3044
    %v3595 = vpop.permute.xlu0 %3594
    %3597 = vset.pattern.permute.xlu0 1
    %3598 = vperm.xlu0 %3597, %v3049
    %v3599 = vpop.permute.xlu0 %3598
    %3601 = vset.pattern.permute.xlu0 1
    %3602 = vperm.xlu0 %3601, %v3054
    %v3603 = vpop.permute.xlu0 %3602
    %3605 = vset.pattern.permute.xlu0 1
    %3606 = vperm.xlu0 %3605, %v3059
    %v3607 = vpop.permute.xlu0 %3606
    %3609 = vset.pattern.permute.xlu0 1
    %3610 = vperm.xlu0 %3609, %v3064
    %v3611 = vpop.permute.xlu0 %3610
    %3613 = vset.pattern.permute.xlu0 1
    %3614 = vperm.xlu0 %3613, %v3069
    %v3615 = vpop.permute.xlu0 %3614
    %v3617 = vlaneseq
    %v3618 = vshrl.u32 %v3617, 7
    %v3619 = vsub.s32 1, %v3618
    %v3620 = vrot.slane %v3140, %v3619
    %v3621 = vadd.f32 %v3587, %v3620
    %v3622 = vadd.f32 %v3591, %v3620
    %v3623 = vadd.f32 %v3595, %v3620
    %v3624 = vadd.f32 %v3599, %v3620
    %v3625 = vadd.f32 %v3603, %v3620
    %v3626 = vadd.f32 %v3607, %v3620
    %v3627 = vadd.f32 %v3611, %v3620
    %v3628 = vadd.f32 %v3615, %v3620
    %v3629 = vmul.f32 %v3621, 0.2
    %v3630 = vmul.f32 %v3622, 0.2
    %v3631 = vmul.f32 %v3623, 0.2
    %v3632 = vmul.f32 %v3624, 0.2
    %v3633 = vmul.f32 %v3625, 0.2
    %v3634 = vmul.f32 %v3626, 0.2
    %v3635 = vmul.f32 %v3627, 0.2
    %v3636 = vmul.f32 %v3628, 0.2
    %v3637 = vmax.f32 %v3621, %v3629
    %v3638 = vmax.f32 %v3622, %v3630
    %v3639 = vmax.f32 %v3623, %v3631
    %v3640 = vmax.f32 %v3624, %v3632
    %v3641 = vmax.f32 %v3625, %v3633
    %v3642 = vmax.f32 %v3626, %v3634
    %v3643 = vmax.f32 %v3627, %v3635
    %v3644 = vmax.f32 %v3628, %v3636
    %v3645 = vadd.f32 %v3637, %v3227
    %v3646 = vadd.f32 %v3638, %v3228
    %v3647 = vadd.f32 %v3639, %v3229
    %v3648 = vadd.f32 %v3640, %v3230
    %v3649 = vadd.f32 %v3641, %v3231
    %v3650 = vadd.f32 %v3642, %v3232
    %v3651 = vadd.f32 %v3643, %v3233
    %v3652 = vadd.f32 %v3644, %v3234
    %3653 = vmax.xlane.f32.xlu0 %v3645
    %v3654 = vpop.xlane.xlu0 %3653
    %3655 = vmax.xlane.f32.xlu0 %v3646
    %v3656 = vpop.xlane.xlu0 %3655
    %3657 = vmax.xlane.f32.xlu0 %v3647
    %v3658 = vpop.xlane.xlu0 %3657
    %3659 = vmax.xlane.f32.xlu0 %v3648
    %v3660 = vpop.xlane.xlu0 %3659
    %3661 = vmax.xlane.f32.xlu0 %v3649
    %v3662 = vpop.xlane.xlu0 %3661
    %3663 = vmax.xlane.f32.xlu0 %v3650
    %v3664 = vpop.xlane.xlu0 %3663
    %3665 = vmax.xlane.f32.xlu0 %v3651
    %v3666 = vpop.xlane.xlu0 %3665
    %3667 = vmax.xlane.f32.xlu0 %v3652
    %v3668 = vpop.xlane.xlu0 %3667
    %v3669 = vsub.f32 %v3645, %v3654
    %v3670 = vsub.f32 %v3646, %v3656
    %v3671 = vsub.f32 %v3647, %v3658
    %v3672 = vsub.f32 %v3648, %v3660
    %v3673 = vsub.f32 %v3649, %v3662
    %v3674 = vsub.f32 %v3650, %v3664
    %v3675 = vsub.f32 %v3651, %v3666
    %v3676 = vsub.f32 %v3652, %v3668
    %v3677 = vmul.f32 %v3669, 1.442695
    %v3678 = vpow.pop %v3677
    %v3679 = vmul.f32 %v3670, 1.442695
    %v3680 = vpow.pop %v3679
    %v3681 = vmul.f32 %v3671, 1.442695
    %v3682 = vpow.pop %v3681
    %v3683 = vmul.f32 %v3672, 1.442695
    %v3684 = vpow.pop %v3683
    %v3685 = vmul.f32 %v3673, 1.442695
    %v3686 = vpow.pop %v3685
    %v3687 = vmul.f32 %v3674, 1.442695
    %v3688 = vpow.pop %v3687
    %v3689 = vmul.f32 %v3675, 1.442695
    %v3690 = vpow.pop %v3689
    %v3691 = vmul.f32 %v3676, 1.442695
    %v3692 = vpow.pop %v3691
    %3709 = vrot.lane.b32.xlu0 %v3283, 96
    %v3710 = vpop.permute.xlu0 %3709
    %3711 = vrot.lane.b32.xlu0 %v3284, 96
    %v3712 = vpop.permute.xlu0 %3711
    %3713 = vrot.lane.b32.xlu0 %v3285, 96
    %v3714 = vpop.permute.xlu0 %3713
    %3715 = vrot.lane.b32.xlu0 %v3286, 96
    %v3716 = vpop.permute.xlu0 %3715
    %3717 = vrot.lane.b32.xlu0 %v3287, 96
    %v3718 = vpop.permute.xlu0 %3717
    %3719 = vrot.lane.b32.xlu0 %v3288, 96
    %v3720 = vpop.permute.xlu0 %3719
    %3721 = vrot.lane.b32.xlu0 %v3289, 96
    %v3722 = vpop.permute.xlu0 %3721
    %3723 = vrot.lane.b32.xlu0 %v3290, 96
    %v3724 = vpop.permute.xlu0 %3723
    %3725 = vrot.lane.b32.xlu0 %v3291, 96
    %v3726 = vpop.permute.xlu0 %3725
    %3727 = vrot.lane.b32.xlu0 %v3292, 96
    %v3728 = vpop.permute.xlu0 %3727
    %3729 = vrot.lane.b32.xlu0 %v3293, 96
    %v3730 = vpop.permute.xlu0 %3729
    %3731 = vrot.lane.b32.xlu0 %v3294, 96
    %v3732 = vpop.permute.xlu0 %3731
    %3733 = vrot.lane.b32.xlu0 %v3295, 96
    %v3734 = vpop.permute.xlu0 %3733
    %3735 = vrot.lane.b32.xlu0 %v3296, 96
    %v3736 = vpop.permute.xlu0 %3735
    %3737 = vrot.lane.b32.xlu0 %v3297, 96
    %v3738 = vpop.permute.xlu0 %3737
    %3739 = vrot.lane.b32.xlu0 %v3298, 96
    %v3740 = vpop.permute.xlu0 %3739
    %3757 = vmatprep.subr.mxu0 0.0
    %3758 = vmatpush1.msra.mxu0 %v3710
    %3759 = vmatprep.subr.mxu0 0.0
    %3760 = vmatpush1.msra.mxu0 %v3712
    %3761 = vmatprep.subr.mxu0 0.0
    %3762 = vmatpush1.msra.mxu0 %v3714
    %3763 = vmatprep.subr.mxu0 0.0
    %3764 = vmatpush1.msra.mxu0 %v3716
    %3765 = vmatprep.subr.mxu0 0.0
    %3766 = vmatpush1.msra.mxu0 %v3718
    %3767 = vmatprep.subr.mxu0 0.0
    %3768 = vmatpush1.msra.mxu0 %v3720
    %3769 = vmatprep.subr.mxu0 0.0
    %3770 = vmatpush1.msra.mxu0 %v3722
    %3771 = vmatprep.subr.mxu0 0.0
    %3772 = vmatpush1.msra.mxu0 %v3724
    %3773 = vmatprep.subr.mxu0 0.0
    %3774 = vmatpush1.msra.mxu0 %v3726
    %3775 = vmatprep.subr.mxu0 0.0
    %3776 = vmatpush1.msra.mxu0 %v3728
    %3777 = vmatprep.subr.mxu0 0.0
    %3778 = vmatpush1.msra.mxu0 %v3730
    %3779 = vmatprep.subr.mxu0 0.0
    %3780 = vmatpush1.msra.mxu0 %v3732
    %3781 = vmatprep.subr.mxu0 0.0
    %3782 = vmatpush1.msra.mxu0 %v3734
    %3783 = vmatprep.subr.mxu0 0.0
    %3784 = vmatpush1.msra.mxu0 %v3736
    %3785 = vmatprep.subr.mxu0 0.0
    %3786 = vmatpush1.msra.mxu0 %v3738
    %3787 = vmatprep.subr.mxu0 0.0
    %3788 = vmatpush1.msra.mxu0 %v3740
    %3789 = vmatprep.subr.mxu0 0.0
    %3790 = vmatpush1.msra.mxu0 0.0
    %3791 = vmatprep.subr.mxu0 0.0
    %3792 = vmatpush1.msra.mxu0 0.0
    %3793 = vmatprep.subr.mxu0 0.0
    %3794 = vmatpush1.msra.mxu0 0.0
    %3795 = vmatprep.subr.mxu0 0.0
    %3796 = vmatpush1.msra.mxu0 0.0
    %3797 = vmatprep.subr.mxu0 0.0
    %3798 = vmatpush1.msra.mxu0 0.0
    %3799 = vmatprep.subr.mxu0 0.0
    %3800 = vmatpush1.msra.mxu0 0.0
    %3801 = vmatprep.subr.mxu0 0.0
    %3802 = vmatpush1.msra.mxu0 0.0
    %3803 = vmatprep.subr.mxu0 0.0
    %3804 = vmatpush1.msra.mxu0 0.0
    %3805 = vmatprep.subr.mxu0 0.0
    %3806 = vmatpush1.msra.mxu0 0.0
    %3807 = vmatprep.subr.mxu0 0.0
    %3808 = vmatpush1.msra.mxu0 0.0
    %3809 = vmatprep.subr.mxu0 0.0
    %3810 = vmatpush1.msra.mxu0 0.0
    %3811 = vmatprep.subr.mxu0 0.0
    %3812 = vmatpush1.msra.mxu0 0.0
    %3813 = vmatprep.subr.mxu0 0.0
    %3814 = vmatpush1.msra.mxu0 0.0
    %3815 = vmatprep.subr.mxu0 0.0
    %3816 = vmatpush1.msra.mxu0 0.0
    %3817 = vmatprep.subr.mxu0 0.0
    %3818 = vmatpush1.msra.mxu0 0.0
    %3819 = vmatprep.subr.mxu0 0.0
    %3820 = vmatpush1.msra.mxu0 0.0
    %3821 = vmatprep.mubr.f32.mxu0 0.0
    %3822 = vmatmul.mubr.f32.gmra.mrb[0].mxu0 %v3678
    %v3823 = vpop.f32.mrb[0].mxu0
    %v3824 = vadd.f32 0.0, %v3823
    %v3825 = vpop.f32.mrb[0].mxu0
    %3826 = vmatprep.mubr.f32.mxu0 0.0
    %3827 = vmatmul.mubr.f32.gmra.mrb[0].mxu0 %v3680
    %v3828 = vpop.f32.mrb[0].mxu0
    %v3829 = vadd.f32 0.0, %v3828
    %v3830 = vpop.f32.mrb[0].mxu0
    %3831 = vmatprep.mubr.f32.mxu0 0.0
    %3832 = vmatmul.mubr.f32.gmra.mrb[0].mxu0 %v3682
    %v3833 = vpop.f32.mrb[0].mxu0
    %v3834 = vadd.f32 0.0, %v3833
    %v3835 = vpop.f32.mrb[0].mxu0
    %3836 = vmatprep.mubr.f32.mxu0 0.0
    %3837 = vmatmul.mubr.f32.gmra.mrb[0].mxu0 %v3684
    %v3838 = vpop.f32.mrb[0].mxu0
    %v3839 = vadd.f32 0.0, %v3838
    %v3840 = vpop.f32.mrb[0].mxu0
    %3841 = vmatprep.mubr.f32.mxu0 0.0
    %3842 = vmatmul.mubr.f32.gmra.mrb[0].mxu0 %v3686
    %v3843 = vpop.f32.mrb[0].mxu0
    %v3844 = vadd.f32 0.0, %v3843
    %v3845 = vpop.f32.mrb[0].mxu0
    %3846 = vmatprep.mubr.f32.mxu0 0.0
    %3847 = vmatmul.mubr.f32.gmra.mrb[0].mxu0 %v3688
    %v3848 = vpop.f32.mrb[0].mxu0
    %v3849 = vadd.f32 0.0, %v3848
    %v3850 = vpop.f32.mrb[0].mxu0
    %3851 = vmatprep.mubr.f32.mxu0 0.0
    %3852 = vmatmul.mubr.f32.gmra.mrb[0].mxu0 %v3690
    %v3853 = vpop.f32.mrb[0].mxu0
    %v3854 = vadd.f32 0.0, %v3853
    %v3855 = vpop.f32.mrb[0].mxu0
    %3856 = vmatprep.mubr.f32.mxu0 0.0
    %3857 = vmatmul.mubr.f32.gmra.mrb[0].mxu0 %v3692
    %v3858 = vpop.f32.mrb[0].mxu0
    %v3859 = vadd.f32 0.0, %v3858
    %v3860 = vpop.f32.mrb[0].mxu0
    %3861 = vdwg.mxu0
    %3862 = vmatprep.subr.mxu0 0.0
    %3863 = vmatpush1.msra.mxu0 %v3404
    %3864 = vmatprep.subr.mxu0 0.0
    %3865 = vmatpush1.msra.mxu0 %v3405
    %3866 = vmatprep.subr.mxu0 0.0
    %3867 = vmatpush1.msra.mxu0 %v3406
    %3868 = vmatprep.subr.mxu0 0.0
    %3869 = vmatpush1.msra.mxu0 %v3407
    %3870 = vmatprep.subr.mxu0 0.0
    %3871 = vmatpush1.msra.mxu0 %v3408
    %3872 = vmatprep.subr.mxu0 0.0
    %3873 = vmatpush1.msra.mxu0 %v3409
    %3874 = vmatprep.subr.mxu0 0.0
    %3875 = vmatpush1.msra.mxu0 %v3410
    %3876 = vmatprep.subr.mxu0 0.0
    %3877 = vmatpush1.msra.mxu0 %v3411
    %3878 = vmatprep.subr.mxu0 0.0
    %3879 = vmatpush1.msra.mxu0 %v3412
    %3880 = vmatprep.subr.mxu0 0.0
    %3881 = vmatpush1.msra.mxu0 %v3413
    %3882 = vmatprep.subr.mxu0 0.0
    %3883 = vmatpush1.msra.mxu0 %v3414
    %3884 = vmatprep.subr.mxu0 0.0
    %3885 = vmatpush1.msra.mxu0 %v3415
    %3886 = vmatprep.subr.mxu0 0.0
    %3887 = vmatpush1.msra.mxu0 %v3416
    %3888 = vmatprep.subr.mxu0 0.0
    %3889 = vmatpush1.msra.mxu0 %v3417
    %3890 = vmatprep.subr.mxu0 0.0
    %3891 = vmatpush1.msra.mxu0 %v3418
    %3892 = vmatprep.subr.mxu0 0.0
    %3893 = vmatpush1.msra.mxu0 %v3419
    %3894 = vmatprep.subr.mxu0 0.0
    %3895 = vmatpush1.msra.mxu0 0.0
    %3896 = vmatprep.subr.mxu0 0.0
    %3897 = vmatpush1.msra.mxu0 0.0
    %3898 = vmatprep.subr.mxu0 0.0
    %3899 = vmatpush1.msra.mxu0 0.0
    %3900 = vmatprep.subr.mxu0 0.0
    %3901 = vmatpush1.msra.mxu0 0.0
    %3902 = vmatprep.subr.mxu0 0.0
    %3903 = vmatpush1.msra.mxu0 0.0
    %3904 = vmatprep.subr.mxu0 0.0
    %3905 = vmatpush1.msra.mxu0 0.0
    %3906 = vmatprep.subr.mxu0 0.0
    %3907 = vmatpush1.msra.mxu0 0.0
    %3908 = vmatprep.subr.mxu0 0.0
    %3909 = vmatpush1.msra.mxu0 0.0
    %3910 = vmatprep.subr.mxu0 0.0
    %3911 = vmatpush1.msra.mxu0 0.0
    %3912 = vmatprep.subr.mxu0 0.0
    %3913 = vmatpush1.msra.mxu0 0.0
    %3914 = vmatprep.subr.mxu0 0.0
    %3915 = vmatpush1.msra.mxu0 0.0
    %3916 = vmatprep.subr.mxu0 0.0
    %3917 = vmatpush1.msra.mxu0 0.0
    %3918 = vmatprep.subr.mxu0 0.0
    %3919 = vmatpush1.msra.mxu0 0.0
    %3920 = vmatprep.subr.mxu0 0.0
    %3921 = vmatpush1.msra.mxu0 0.0
    %3922 = vmatprep.subr.mxu0 0.0
    %3923 = vmatpush1.msra.mxu0 0.0
    %3924 = vmatprep.subr.mxu0 0.0
    %3925 = vmatpush1.msra.mxu0 0.0
    %3926 = vmatprep.mubr.f32.mxu0 0.0
    %3927 = vmatmul.mubr.f32.gmra.mrb[0].mxu0 %v3678
    %v3928 = vpop.f32.mrb[0].mxu0
    %v3929 = vadd.f32 0.0, %v3928
    %v3930 = vpop.f32.mrb[0].mxu0
    %3931 = vmatprep.mubr.f32.mxu0 0.0
    %3932 = vmatmul.mubr.f32.gmra.mrb[0].mxu0 %v3680
    %v3933 = vpop.f32.mrb[0].mxu0
    %v3934 = vadd.f32 0.0, %v3933
    %v3935 = vpop.f32.mrb[0].mxu0
    %3936 = vmatprep.mubr.f32.mxu0 0.0
    %3937 = vmatmul.mubr.f32.gmra.mrb[0].mxu0 %v3682
    %v3938 = vpop.f32.mrb[0].mxu0
    %v3939 = vadd.f32 0.0, %v3938
    %v3940 = vpop.f32.mrb[0].mxu0
    %3941 = vmatprep.mubr.f32.mxu0 0.0
    %3942 = vmatmul.mubr.f32.gmra.mrb[0].mxu0 %v3684
    %v3943 = vpop.f32.mrb[0].mxu0
    %v3944 = vadd.f32 0.0, %v3943
    %v3945 = vpop.f32.mrb[0].mxu0
    %3946 = vmatprep.mubr.f32.mxu0 0.0
    %3947 = vmatmul.mubr.f32.gmra.mrb[0].mxu0 %v3686
    %v3948 = vpop.f32.mrb[0].mxu0
    %v3949 = vadd.f32 0.0, %v3948
    %v3950 = vpop.f32.mrb[0].mxu0
    %3951 = vmatprep.mubr.f32.mxu0 0.0
    %3952 = vmatmul.mubr.f32.gmra.mrb[0].mxu0 %v3688
    %v3953 = vpop.f32.mrb[0].mxu0
    %v3954 = vadd.f32 0.0, %v3953
    %v3955 = vpop.f32.mrb[0].mxu0
    %3956 = vmatprep.mubr.f32.mxu0 0.0
    %3957 = vmatmul.mubr.f32.gmra.mrb[0].mxu0 %v3690
    %v3958 = vpop.f32.mrb[0].mxu0
    %v3959 = vadd.f32 0.0, %v3958
    %v3960 = vpop.f32.mrb[0].mxu0
    %3961 = vmatprep.mubr.f32.mxu0 0.0
    %3962 = vmatmul.mubr.f32.gmra.mrb[0].mxu0 %v3692
    %v3963 = vpop.f32.mrb[0].mxu0
    %v3964 = vadd.f32 0.0, %v3963
    %v3965 = vpop.f32.mrb[0].mxu0
    %3966 = vdwg.mxu0
    %v3967 = vrcp.pop %v3929
    %v3968 = vrcp.pop %v3934
    %v3969 = vrcp.pop %v3939
    %v3970 = vrcp.pop %v3944
    %v3971 = vrcp.pop %v3949
    %v3972 = vrcp.pop %v3954
    %v3973 = vrcp.pop %v3959
    %v3974 = vrcp.pop %v3964
    %3976 = vset.pattern.permute.xlu0 0
    %3977 = vperm.xlu0 %3976, %v3967
    %v3978 = vpop.permute.xlu0 %3977
    %3981 = vset.pattern.permute.xlu0 0
    %3982 = vperm.xlu0 %3981, %v3968
    %v3983 = vpop.permute.xlu0 %3982
    %3986 = vset.pattern.permute.xlu0 0
    %3987 = vperm.xlu0 %3986, %v3969
    %v3988 = vpop.permute.xlu0 %3987
    %3991 = vset.pattern.permute.xlu0 0
    %3992 = vperm.xlu0 %3991, %v3970
    %v3993 = vpop.permute.xlu0 %3992
    %3996 = vset.pattern.permute.xlu0 0
    %3997 = vperm.xlu0 %3996, %v3971
    %v3998 = vpop.permute.xlu0 %3997
    %4001 = vset.pattern.permute.xlu0 0
    %4002 = vperm.xlu0 %4001, %v3972
    %v4003 = vpop.permute.xlu0 %4002
    %4006 = vset.pattern.permute.xlu0 0
    %4007 = vperm.xlu0 %4006, %v3973
    %v4008 = vpop.permute.xlu0 %4007
    %4011 = vset.pattern.permute.xlu0 0
    %4012 = vperm.xlu0 %4011, %v3974
    %v4013 = vpop.permute.xlu0 %4012
    %v4015 = vmul.f32 %v3824, %v3978
    %v4016 = vmul.f32 %v3829, %v3983
    %v4017 = vmul.f32 %v3834, %v3988
    %v4018 = vmul.f32 %v3839, %v3993
    %v4019 = vmul.f32 %v3844, %v3998
    %v4020 = vmul.f32 %v3849, %v4003
    %v4021 = vmul.f32 %v3854, %v4008
    %v4022 = vmul.f32 %v3859, %v4013
    %v4023 = vld [vmem:[%s3 + $0x20] sm:$0xff]
    %v4024 = vld [vmem:[%s3 + $0x28] sm:$0xff]
    %v4025 = vld [vmem:[%s3 + $0x30] sm:$0xff]
    %v4026 = vld [vmem:[%s3 + $0x38] sm:$0xff]
    %v4028 = vsel %vm1358, %v4015, 0
    %v4031 = vsel %vm1358, %v4016, 0
    %v4034 = vsel %vm1358, %v4017, 0
    %v4037 = vsel %vm1358, %v4018, 0
    %v4040 = vsel %vm1358, %v4019, 0
    %v4043 = vsel %vm1358, %v4020, 0
    %v4046 = vsel %vm1358, %v4021, 0
    %v4049 = vsel %vm1358, %v4022, 0
    %4051 = vmatprep.subr.mxu0 0.0
    %4052 = vmatpush1.msra.mxu0 %v4023
    %4053 = vmatprep.subr.mxu0 0.0
    %4054 = vmatpush1.msra.mxu0 %v4024
    %4055 = vmatprep.subr.mxu0 0.0
    %4056 = vmatpush1.msra.mxu0 %v4025
    %4057 = vmatprep.subr.mxu0 0.0
    %4058 = vmatpush1.msra.mxu0 %v4026
    %4059 = vmatprep.subr.mxu0 0.0
    %4060 = vmatpush1.msra.mxu0 0.0
    %4061 = vmatprep.subr.mxu0 0.0
    %4062 = vmatpush1.msra.mxu0 0.0
    %4063 = vmatprep.subr.mxu0 0.0
    %4064 = vmatpush1.msra.mxu0 0.0
    %4065 = vmatprep.subr.mxu0 0.0
    %4066 = vmatpush1.msra.mxu0 0.0
    %4067 = vmatprep.subr.mxu0 0.0
    %4068 = vmatpush1.msra.mxu0 0.0
    %4069 = vmatprep.subr.mxu0 0.0
    %4070 = vmatpush1.msra.mxu0 0.0
    %4071 = vmatprep.subr.mxu0 0.0
    %4072 = vmatpush1.msra.mxu0 0.0
    %4073 = vmatprep.subr.mxu0 0.0
    %4074 = vmatpush1.msra.mxu0 0.0
    %4075 = vmatprep.subr.mxu0 0.0
    %4076 = vmatpush1.msra.mxu0 0.0
    %4077 = vmatprep.subr.mxu0 0.0
    %4078 = vmatpush1.msra.mxu0 0.0
    %4079 = vmatprep.subr.mxu0 0.0
    %4080 = vmatpush1.msra.mxu0 0.0
    %4081 = vmatprep.subr.mxu0 0.0
    %4082 = vmatpush1.msra.mxu0 0.0
    %4083 = vmatprep.subr.mxu0 0.0
    %4084 = vmatpush1.msra.mxu0 0.0
    %4085 = vmatprep.subr.mxu0 0.0
    %4086 = vmatpush1.msra.mxu0 0.0
    %4087 = vmatprep.subr.mxu0 0.0
    %4088 = vmatpush1.msra.mxu0 0.0
    %4089 = vmatprep.subr.mxu0 0.0
    %4090 = vmatpush1.msra.mxu0 0.0
    %4091 = vmatprep.subr.mxu0 0.0
    %4092 = vmatpush1.msra.mxu0 0.0
    %4093 = vmatprep.subr.mxu0 0.0
    %4094 = vmatpush1.msra.mxu0 0.0
    %4095 = vmatprep.subr.mxu0 0.0
    %4096 = vmatpush1.msra.mxu0 0.0
    %4097 = vmatprep.subr.mxu0 0.0
    %4098 = vmatpush1.msra.mxu0 0.0
    %4099 = vmatprep.subr.mxu0 0.0
    %4100 = vmatpush1.msra.mxu0 0.0
    %4101 = vmatprep.subr.mxu0 0.0
    %4102 = vmatpush1.msra.mxu0 0.0
    %4103 = vmatprep.subr.mxu0 0.0
    %4104 = vmatpush1.msra.mxu0 0.0
    %4105 = vmatprep.subr.mxu0 0.0
    %4106 = vmatpush1.msra.mxu0 0.0
    %4107 = vmatprep.subr.mxu0 0.0
    %4108 = vmatpush1.msra.mxu0 0.0
    %4109 = vmatprep.subr.mxu0 0.0
    %4110 = vmatpush1.msra.mxu0 0.0
    %4111 = vmatprep.subr.mxu0 0.0
    %4112 = vmatpush1.msra.mxu0 0.0
    %4113 = vmatprep.subr.mxu0 0.0
    %4114 = vmatpush1.msra.mxu0 0.0
    %4115 = vmatprep.mubr.f32.mxu0 0.0
    %4116 = vmatmul.mubr.f32.gmra.mrb[0].mxu0 %v4028
    %v4117 = vpop.f32.mrb[0].mxu0
    %v4118 = vadd.f32 0.0, %v4117
    %v4119 = vpop.f32.mrb[0].mxu0
    %4120 = vmatprep.mubr.f32.mxu0 0.0
    %4121 = vmatmul.mubr.f32.gmra.mrb[0].mxu0 %v4031
    %v4122 = vpop.f32.mrb[0].mxu0
    %v4123 = vadd.f32 0.0, %v4122
    %v4124 = vpop.f32.mrb[0].mxu0
    %4125 = vmatprep.mubr.f32.mxu0 0.0
    %4126 = vmatmul.mubr.f32.gmra.mrb[0].mxu0 %v4034
    %v4127 = vpop.f32.mrb[0].mxu0
    %v4128 = vadd.f32 0.0, %v4127
    %v4129 = vpop.f32.mrb[0].mxu0
    %4130 = vmatprep.mubr.f32.mxu0 0.0
    %4131 = vmatmul.mubr.f32.gmra.mrb[0].mxu0 %v4037
    %v4132 = vpop.f32.mrb[0].mxu0
    %v4133 = vadd.f32 0.0, %v4132
    %v4134 = vpop.f32.mrb[0].mxu0
    %4135 = vmatprep.mubr.f32.mxu0 0.0
    %4136 = vmatmul.mubr.f32.gmra.mrb[0].mxu0 %v4040
    %v4137 = vpop.f32.mrb[0].mxu0
    %v4138 = vadd.f32 0.0, %v4137
    %v4139 = vpop.f32.mrb[0].mxu0
    %4140 = vmatprep.mubr.f32.mxu0 0.0
    %4141 = vmatmul.mubr.f32.gmra.mrb[0].mxu0 %v4043
    %v4142 = vpop.f32.mrb[0].mxu0
    %v4143 = vadd.f32 0.0, %v4142
    %v4144 = vpop.f32.mrb[0].mxu0
    %4145 = vmatprep.mubr.f32.mxu0 0.0
    %4146 = vmatmul.mubr.f32.gmra.mrb[0].mxu0 %v4046
    %v4147 = vpop.f32.mrb[0].mxu0
    %v4148 = vadd.f32 0.0, %v4147
    %v4149 = vpop.f32.mrb[0].mxu0
    %4150 = vmatprep.mubr.f32.mxu0 0.0
    %4151 = vmatmul.mubr.f32.gmra.mrb[0].mxu0 %v4049
    %v4152 = vpop.f32.mrb[0].mxu0
    %v4153 = vadd.f32 0.0, %v4152
    %v4154 = vpop.f32.mrb[0].mxu0
    %4155 = vdwg.mxu0
    %v4157 = vsel %vm1358, %v3573, 0
    %v4160 = vsel %vm1358, %v3574, 0
    %v4163 = vsel %vm1358, %v3575, 0
    %v4166 = vsel %vm1358, %v3576, 0
    %v4169 = vsel %vm1358, %v3577, 0
    %v4172 = vsel %vm1358, %v3578, 0
    %v4175 = vsel %vm1358, %v3579, 0
    %v4178 = vsel %vm1358, %v3580, 0
    %4180 = vmatprep.subr.mxu0 0.0
    %4181 = vmatpush1.msra.mxu0 %v3581
    %4182 = vmatprep.subr.mxu0 0.0
    %4183 = vmatpush1.msra.mxu0 %v3582
    %4184 = vmatprep.subr.mxu0 0.0
    %4185 = vmatpush1.msra.mxu0 %v3583
    %4186 = vmatprep.subr.mxu0 0.0
    %4187 = vmatpush1.msra.mxu0 %v3584
    %4188 = vmatprep.subr.mxu0 0.0
    %4189 = vmatpush1.msra.mxu0 0.0
    %4190 = vmatprep.subr.mxu0 0.0
    %4191 = vmatpush1.msra.mxu0 0.0
    %4192 = vmatprep.subr.mxu0 0.0
    %4193 = vmatpush1.msra.mxu0 0.0
    %4194 = vmatprep.subr.mxu0 0.0
    %4195 = vmatpush1.msra.mxu0 0.0
    %4196 = vmatprep.subr.mxu0 0.0
    %4197 = vmatpush1.msra.mxu0 0.0
    %4198 = vmatprep.subr.mxu0 0.0
    %4199 = vmatpush1.msra.mxu0 0.0
    %4200 = vmatprep.subr.mxu0 0.0
    %4201 = vmatpush1.msra.mxu0 0.0
    %4202 = vmatprep.subr.mxu0 0.0
    %4203 = vmatpush1.msra.mxu0 0.0
    %4204 = vmatprep.subr.mxu0 0.0
    %4205 = vmatpush1.msra.mxu0 0.0
    %4206 = vmatprep.subr.mxu0 0.0
    %4207 = vmatpush1.msra.mxu0 0.0
    %4208 = vmatprep.subr.mxu0 0.0
    %4209 = vmatpush1.msra.mxu0 0.0
    %4210 = vmatprep.subr.mxu0 0.0
    %4211 = vmatpush1.msra.mxu0 0.0
    %4212 = vmatprep.subr.mxu0 0.0
    %4213 = vmatpush1.msra.mxu0 0.0
    %4214 = vmatprep.subr.mxu0 0.0
    %4215 = vmatpush1.msra.mxu0 0.0
    %4216 = vmatprep.subr.mxu0 0.0
    %4217 = vmatpush1.msra.mxu0 0.0
    %4218 = vmatprep.subr.mxu0 0.0
    %4219 = vmatpush1.msra.mxu0 0.0
    %4220 = vmatprep.subr.mxu0 0.0
    %4221 = vmatpush1.msra.mxu0 0.0
    %4222 = vmatprep.subr.mxu0 0.0
    %4223 = vmatpush1.msra.mxu0 0.0
    %4224 = vmatprep.subr.mxu0 0.0
    %4225 = vmatpush1.msra.mxu0 0.0
    %4226 = vmatprep.subr.mxu0 0.0
    %4227 = vmatpush1.msra.mxu0 0.0
    %4228 = vmatprep.subr.mxu0 0.0
    %4229 = vmatpush1.msra.mxu0 0.0
    %4230 = vmatprep.subr.mxu0 0.0
    %4231 = vmatpush1.msra.mxu0 0.0
    %4232 = vmatprep.subr.mxu0 0.0
    %4233 = vmatpush1.msra.mxu0 0.0
    %4234 = vmatprep.subr.mxu0 0.0
    %4235 = vmatpush1.msra.mxu0 0.0
    %4236 = vmatprep.subr.mxu0 0.0
    %4237 = vmatpush1.msra.mxu0 0.0
    %4238 = vmatprep.subr.mxu0 0.0
    %4239 = vmatpush1.msra.mxu0 0.0
    %4240 = vmatprep.subr.mxu0 0.0
    %4241 = vmatpush1.msra.mxu0 0.0
    %4242 = vmatprep.subr.mxu0 0.0
    %4243 = vmatpush1.msra.mxu0 0.0
    %4244 = vmatprep.mubr.f32.mxu0 0.0
    %4245 = vmatmul.mubr.f32.gmra.mrb[0].mxu0 %v4157
    %v4246 = vpop.f32.mrb[0].mxu0
    %v4247 = vadd.f32 %v4118, %v4246
    %v4248 = vpop.f32.mrb[0].mxu0
    %4249 = vmatprep.mubr.f32.mxu0 0.0
    %4250 = vmatmul.mubr.f32.gmra.mrb[0].mxu0 %v4160
    %v4251 = vpop.f32.mrb[0].mxu0
    %v4252 = vadd.f32 %v4123, %v4251
    %v4253 = vpop.f32.mrb[0].mxu0
    %4254 = vmatprep.mubr.f32.mxu0 0.0
    %4255 = vmatmul.mubr.f32.gmra.mrb[0].mxu0 %v4163
    %v4256 = vpop.f32.mrb[0].mxu0
    %v4257 = vadd.f32 %v4128, %v4256
    %v4258 = vpop.f32.mrb[0].mxu0
    %4259 = vmatprep.mubr.f32.mxu0 0.0
    %4260 = vmatmul.mubr.f32.gmra.mrb[0].mxu0 %v4166
    %v4261 = vpop.f32.mrb[0].mxu0
    %v4262 = vadd.f32 %v4133, %v4261
    %v4263 = vpop.f32.mrb[0].mxu0
    %4264 = vmatprep.mubr.f32.mxu0 0.0
    %4265 = vmatmul.mubr.f32.gmra.mrb[0].mxu0 %v4169
    %v4266 = vpop.f32.mrb[0].mxu0
    %v4267 = vadd.f32 %v4138, %v4266
    %v4268 = vpop.f32.mrb[0].mxu0
    %4269 = vmatprep.mubr.f32.mxu0 0.0
    %4270 = vmatmul.mubr.f32.gmra.mrb[0].mxu0 %v4172
    %v4271 = vpop.f32.mrb[0].mxu0
    %v4272 = vadd.f32 %v4143, %v4271
    %v4273 = vpop.f32.mrb[0].mxu0
    %4274 = vmatprep.mubr.f32.mxu0 0.0
    %4275 = vmatmul.mubr.f32.gmra.mrb[0].mxu0 %v4175
    %v4276 = vpop.f32.mrb[0].mxu0
    %v4277 = vadd.f32 %v4148, %v4276
    %v4278 = vpop.f32.mrb[0].mxu0
    %4279 = vmatprep.mubr.f32.mxu0 0.0
    %4280 = vmatmul.mubr.f32.gmra.mrb[0].mxu0 %v4178
    %v4281 = vpop.f32.mrb[0].mxu0
    %v4282 = vadd.f32 %v4153, %v4281
    %v4283 = vpop.f32.mrb[0].mxu0
    %4284 = vdwg.mxu0
    %4285 = vset.pattern.permute.xlu0 2
    %4286 = vperm.xlu0 %4285, %v3034
    %v4287 = vpop.permute.xlu0 %4286
    %4289 = vset.pattern.permute.xlu0 2
    %4290 = vperm.xlu0 %4289, %v3039
    %v4291 = vpop.permute.xlu0 %4290
    %4293 = vset.pattern.permute.xlu0 2
    %4294 = vperm.xlu0 %4293, %v3044
    %v4295 = vpop.permute.xlu0 %4294
    %4297 = vset.pattern.permute.xlu0 2
    %4298 = vperm.xlu0 %4297, %v3049
    %v4299 = vpop.permute.xlu0 %4298
    %4301 = vset.pattern.permute.xlu0 2
    %4302 = vperm.xlu0 %4301, %v3054
    %v4303 = vpop.permute.xlu0 %4302
    %4305 = vset.pattern.permute.xlu0 2
    %4306 = vperm.xlu0 %4305, %v3059
    %v4307 = vpop.permute.xlu0 %4306
    %4309 = vset.pattern.permute.xlu0 2
    %4310 = vperm.xlu0 %4309, %v3064
    %v4311 = vpop.permute.xlu0 %4310
    %4313 = vset.pattern.permute.xlu0 2
    %4314 = vperm.xlu0 %4313, %v3069
    %v4315 = vpop.permute.xlu0 %4314
    %v4317 = vlaneseq
    %v4318 = vshrl.u32 %v4317, 7
    %v4319 = vsub.s32 2, %v4318
    %v4320 = vrot.slane %v3140, %v4319
    %v4321 = vadd.f32 %v4287, %v4320
    %v4322 = vadd.f32 %v4291, %v4320
    %v4323 = vadd.f32 %v4295, %v4320
    %v4324 = vadd.f32 %v4299, %v4320
    %v4325 = vadd.f32 %v4303, %v4320
    %v4326 = vadd.f32 %v4307, %v4320
    %v4327 = vadd.f32 %v4311, %v4320
    %v4328 = vadd.f32 %v4315, %v4320
    %v4329 = vmul.f32 %v4321, 0.2
    %v4330 = vmul.f32 %v4322, 0.2
    %v4331 = vmul.f32 %v4323, 0.2
    %v4332 = vmul.f32 %v4324, 0.2
    %v4333 = vmul.f32 %v4325, 0.2
    %v4334 = vmul.f32 %v4326, 0.2
    %v4335 = vmul.f32 %v4327, 0.2
    %v4336 = vmul.f32 %v4328, 0.2
    %v4337 = vmax.f32 %v4321, %v4329
    %v4338 = vmax.f32 %v4322, %v4330
    %v4339 = vmax.f32 %v4323, %v4331
    %v4340 = vmax.f32 %v4324, %v4332
    %v4341 = vmax.f32 %v4325, %v4333
    %v4342 = vmax.f32 %v4326, %v4334
    %v4343 = vmax.f32 %v4327, %v4335
    %v4344 = vmax.f32 %v4328, %v4336
    %v4345 = vadd.f32 %v4337, %v3227
    %v4346 = vadd.f32 %v4338, %v3228
    %v4347 = vadd.f32 %v4339, %v3229
    %v4348 = vadd.f32 %v4340, %v3230
    %v4349 = vadd.f32 %v4341, %v3231
    %v4350 = vadd.f32 %v4342, %v3232
    %v4351 = vadd.f32 %v4343, %v3233
    %v4352 = vadd.f32 %v4344, %v3234
    %4353 = vmax.xlane.f32.xlu0 %v4345
    %v4354 = vpop.xlane.xlu0 %4353
    %4355 = vmax.xlane.f32.xlu0 %v4346
    %v4356 = vpop.xlane.xlu0 %4355
    %4357 = vmax.xlane.f32.xlu0 %v4347
    %v4358 = vpop.xlane.xlu0 %4357
    %4359 = vmax.xlane.f32.xlu0 %v4348
    %v4360 = vpop.xlane.xlu0 %4359
    %4361 = vmax.xlane.f32.xlu0 %v4349
    %v4362 = vpop.xlane.xlu0 %4361
    %4363 = vmax.xlane.f32.xlu0 %v4350
    %v4364 = vpop.xlane.xlu0 %4363
    %4365 = vmax.xlane.f32.xlu0 %v4351
    %v4366 = vpop.xlane.xlu0 %4365
    %4367 = vmax.xlane.f32.xlu0 %v4352
    %v4368 = vpop.xlane.xlu0 %4367
    %v4369 = vsub.f32 %v4345, %v4354
    %v4370 = vsub.f32 %v4346, %v4356
    %v4371 = vsub.f32 %v4347, %v4358
    %v4372 = vsub.f32 %v4348, %v4360
    %v4373 = vsub.f32 %v4349, %v4362
    %v4374 = vsub.f32 %v4350, %v4364
    %v4375 = vsub.f32 %v4351, %v4366
    %v4376 = vsub.f32 %v4352, %v4368
    %v4377 = vmul.f32 %v4369, 1.442695
    %v4378 = vpow.pop %v4377
    %v4379 = vmul.f32 %v4370, 1.442695
    %v4380 = vpow.pop %v4379
    %v4381 = vmul.f32 %v4371, 1.442695
    %v4382 = vpow.pop %v4381
    %v4383 = vmul.f32 %v4372, 1.442695
    %v4384 = vpow.pop %v4383
    %v4385 = vmul.f32 %v4373, 1.442695
    %v4386 = vpow.pop %v4385
    %v4387 = vmul.f32 %v4374, 1.442695
    %v4388 = vpow.pop %v4387
    %v4389 = vmul.f32 %v4375, 1.442695
    %v4390 = vpow.pop %v4389
    %v4391 = vmul.f32 %v4376, 1.442695
    %v4392 = vpow.pop %v4391
    %4393 = vrot.lane.b32.xlu0 %v3283, 64
    %v4394 = vpop.permute.xlu0 %4393
    %4395 = vrot.lane.b32.xlu0 %v3284, 64
    %v4396 = vpop.permute.xlu0 %4395
    %4397 = vrot.lane.b32.xlu0 %v3285, 64
    %v4398 = vpop.permute.xlu0 %4397
    %4399 = vrot.lane.b32.xlu0 %v3286, 64
    %v4400 = vpop.permute.xlu0 %4399
    %4401 = vrot.lane.b32.xlu0 %v3287, 64
    %v4402 = vpop.permute.xlu0 %4401
    %4403 = vrot.lane.b32.xlu0 %v3288, 64
    %v4404 = vpop.permute.xlu0 %4403
    %4405 = vrot.lane.b32.xlu0 %v3289, 64
    %v4406 = vpop.permute.xlu0 %4405
    %4407 = vrot.lane.b32.xlu0 %v3290, 64
    %v4408 = vpop.permute.xlu0 %4407
    %4409 = vrot.lane.b32.xlu0 %v3291, 64
    %v4410 = vpop.permute.xlu0 %4409
    %4411 = vrot.lane.b32.xlu0 %v3292, 64
    %v4412 = vpop.permute.xlu0 %4411
    %4413 = vrot.lane.b32.xlu0 %v3293, 64
    %v4414 = vpop.permute.xlu0 %4413
    %4415 = vrot.lane.b32.xlu0 %v3294, 64
    %v4416 = vpop.permute.xlu0 %4415
    %4417 = vrot.lane.b32.xlu0 %v3295, 64
    %v4418 = vpop.permute.xlu0 %4417
    %4419 = vrot.lane.b32.xlu0 %v3296, 64
    %v4420 = vpop.permute.xlu0 %4419
    %4421 = vrot.lane.b32.xlu0 %v3297, 64
    %v4422 = vpop.permute.xlu0 %4421
    %4423 = vrot.lane.b32.xlu0 %v3298, 64
    %v4424 = vpop.permute.xlu0 %4423
    %4441 = vmatprep.subr.mxu0 0.0
    %4442 = vmatpush1.msra.mxu0 %v4394
    %4443 = vmatprep.subr.mxu0 0.0
    %4444 = vmatpush1.msra.mxu0 %v4396
    %4445 = vmatprep.subr.mxu0 0.0
    %4446 = vmatpush1.msra.mxu0 %v4398
    %4447 = vmatprep.subr.mxu0 0.0
    %4448 = vmatpush1.msra.mxu0 %v4400
    %4449 = vmatprep.subr.mxu0 0.0
    %4450 = vmatpush1.msra.mxu0 %v4402
    %4451 = vmatprep.subr.mxu0 0.0
    %4452 = vmatpush1.msra.mxu0 %v4404
    %4453 = vmatprep.subr.mxu0 0.0
    %4454 = vmatpush1.msra.mxu0 %v4406
    %4455 = vmatprep.subr.mxu0 0.0
    %4456 = vmatpush1.msra.mxu0 %v4408
    %4457 = vmatprep.subr.mxu0 0.0
    %4458 = vmatpush1.msra.mxu0 %v4410
    %4459 = vmatprep.subr.mxu0 0.0
    %4460 = vmatpush1.msra.mxu0 %v4412
    %4461 = vmatprep.subr.mxu0 0.0
    %4462 = vmatpush1.msra.mxu0 %v4414
    %4463 = vmatprep.subr.mxu0 0.0
    %4464 = vmatpush1.msra.mxu0 %v4416
    %4465 = vmatprep.subr.mxu0 0.0
    %4466 = vmatpush1.msra.mxu0 %v4418
    %4467 = vmatprep.subr.mxu0 0.0
    %4468 = vmatpush1.msra.mxu0 %v4420
    %4469 = vmatprep.subr.mxu0 0.0
    %4470 = vmatpush1.msra.mxu0 %v4422
    %4471 = vmatprep.subr.mxu0 0.0
    %4472 = vmatpush1.msra.mxu0 %v4424
    %4473 = vmatprep.subr.mxu0 0.0
    %4474 = vmatpush1.msra.mxu0 0.0
    %4475 = vmatprep.subr.mxu0 0.0
    %4476 = vmatpush1.msra.mxu0 0.0
    %4477 = vmatprep.subr.mxu0 0.0
    %4478 = vmatpush1.msra.mxu0 0.0
    %4479 = vmatprep.subr.mxu0 0.0
    %4480 = vmatpush1.msra.mxu0 0.0
    %4481 = vmatprep.subr.mxu0 0.0
    %4482 = vmatpush1.msra.mxu0 0.0
    %4483 = vmatprep.subr.mxu0 0.0
    %4484 = vmatpush1.msra.mxu0 0.0
    %4485 = vmatprep.subr.mxu0 0.0
    %4486 = vmatpush1.msra.mxu0 0.0
    %4487 = vmatprep.subr.mxu0 0.0
    %4488 = vmatpush1.msra.mxu0 0.0
    %4489 = vmatprep.subr.mxu0 0.0
    %4490 = vmatpush1.msra.mxu0 0.0
    %4491 = vmatprep.subr.mxu0 0.0
    %4492 = vmatpush1.msra.mxu0 0.0
    %4493 = vmatprep.subr.mxu0 0.0
    %4494 = vmatpush1.msra.mxu0 0.0
    %4495 = vmatprep.subr.mxu0 0.0
    %4496 = vmatpush1.msra.mxu0 0.0
    %4497 = vmatprep.subr.mxu0 0.0
    %4498 = vmatpush1.msra.mxu0 0.0
    %4499 = vmatprep.subr.mxu0 0.0
    %4500 = vmatpush1.msra.mxu0 0.0
    %4501 = vmatprep.subr.mxu0 0.0
    %4502 = vmatpush1.msra.mxu0 0.0
    %4503 = vmatprep.subr.mxu0 0.0
    %4504 = vmatpush1.msra.mxu0 0.0
    %4505 = vmatprep.mubr.f32.mxu0 0.0
    %4506 = vmatmul.mubr.f32.gmra.mrb[0].mxu0 %v4378
    %v4507 = vpop.f32.mrb[0].mxu0
    %v4508 = vadd.f32 0.0, %v4507
    %v4509 = vpop.f32.mrb[0].mxu0
    %4510 = vmatprep.mubr.f32.mxu0 0.0
    %4511 = vmatmul.mubr.f32.gmra.mrb[0].mxu0 %v4380
    %v4512 = vpop.f32.mrb[0].mxu0
    %v4513 = vadd.f32 0.0, %v4512
    %v4514 = vpop.f32.mrb[0].mxu0
    %4515 = vmatprep.mubr.f32.mxu0 0.0
    %4516 = vmatmul.mubr.f32.gmra.mrb[0].mxu0 %v4382
    %v4517 = vpop.f32.mrb[0].mxu0
    %v4518 = vadd.f32 0.0, %v4517
    %v4519 = vpop.f32.mrb[0].mxu0
    %4520 = vmatprep.mubr.f32.mxu0 0.0
    %4521 = vmatmul.mubr.f32.gmra.mrb[0].mxu0 %v4384
    %v4522 = vpop.f32.mrb[0].mxu0
    %v4523 = vadd.f32 0.0, %v4522
    %v4524 = vpop.f32.mrb[0].mxu0
    %4525 = vmatprep.mubr.f32.mxu0 0.0
    %4526 = vmatmul.mubr.f32.gmra.mrb[0].mxu0 %v4386
    %v4527 = vpop.f32.mrb[0].mxu0
    %v4528 = vadd.f32 0.0, %v4527
    %v4529 = vpop.f32.mrb[0].mxu0
    %4530 = vmatprep.mubr.f32.mxu0 0.0
    %4531 = vmatmul.mubr.f32.gmra.mrb[0].mxu0 %v4388
    %v4532 = vpop.f32.mrb[0].mxu0
    %v4533 = vadd.f32 0.0, %v4532
    %v4534 = vpop.f32.mrb[0].mxu0
    %4535 = vmatprep.mubr.f32.mxu0 0.0
    %4536 = vmatmul.mubr.f32.gmra.mrb[0].mxu0 %v4390
    %v4537 = vpop.f32.mrb[0].mxu0
    %v4538 = vadd.f32 0.0, %v4537
    %v4539 = vpop.f32.mrb[0].mxu0
    %4540 = vmatprep.mubr.f32.mxu0 0.0
    %4541 = vmatmul.mubr.f32.gmra.mrb[0].mxu0 %v4392
    %v4542 = vpop.f32.mrb[0].mxu0
    %v4543 = vadd.f32 0.0, %v4542
    %v4544 = vpop.f32.mrb[0].mxu0
    %4545 = vdwg.mxu0
    %4546 = vmatprep.subr.mxu0 0.0
    %4547 = vmatpush1.msra.mxu0 %v3404
    %4548 = vmatprep.subr.mxu0 0.0
    %4549 = vmatpush1.msra.mxu0 %v3405
    %4550 = vmatprep.subr.mxu0 0.0
    %4551 = vmatpush1.msra.mxu0 %v3406
    %4552 = vmatprep.subr.mxu0 0.0
    %4553 = vmatpush1.msra.mxu0 %v3407
    %4554 = vmatprep.subr.mxu0 0.0
    %4555 = vmatpush1.msra.mxu0 %v3408
    %4556 = vmatprep.subr.mxu0 0.0
    %4557 = vmatpush1.msra.mxu0 %v3409
    %4558 = vmatprep.subr.mxu0 0.0
    %4559 = vmatpush1.msra.mxu0 %v3410
    %4560 = vmatprep.subr.mxu0 0.0
    %4561 = vmatpush1.msra.mxu0 %v3411
    %4562 = vmatprep.subr.mxu0 0.0
    %4563 = vmatpush1.msra.mxu0 %v3412
    %4564 = vmatprep.subr.mxu0 0.0
    %4565 = vmatpush1.msra.mxu0 %v3413
    %4566 = vmatprep.subr.mxu0 0.0
    %4567 = vmatpush1.msra.mxu0 %v3414
    %4568 = vmatprep.subr.mxu0 0.0
    %4569 = vmatpush1.msra.mxu0 %v3415
    %4570 = vmatprep.subr.mxu0 0.0
    %4571 = vmatpush1.msra.mxu0 %v3416
    %4572 = vmatprep.subr.mxu0 0.0
    %4573 = vmatpush1.msra.mxu0 %v3417
    %4574 = vmatprep.subr.mxu0 0.0
    %4575 = vmatpush1.msra.mxu0 %v3418
    %4576 = vmatprep.subr.mxu0 0.0
    %4577 = vmatpush1.msra.mxu0 %v3419
    %4578 = vmatprep.subr.mxu0 0.0
    %4579 = vmatpush1.msra.mxu0 0.0
    %4580 = vmatprep.subr.mxu0 0.0
    %4581 = vmatpush1.msra.mxu0 0.0
    %4582 = vmatprep.subr.mxu0 0.0
    %4583 = vmatpush1.msra.mxu0 0.0
    %4584 = vmatprep.subr.mxu0 0.0
    %4585 = vmatpush1.msra.mxu0 0.0
    %4586 = vmatprep.subr.mxu0 0.0
    %4587 = vmatpush1.msra.mxu0 0.0
    %4588 = vmatprep.subr.mxu0 0.0
    %4589 = vmatpush1.msra.mxu0 0.0
    %4590 = vmatprep.subr.mxu0 0.0
    %4591 = vmatpush1.msra.mxu0 0.0
    %4592 = vmatprep.subr.mxu0 0.0
    %4593 = vmatpush1.msra.mxu0 0.0
    %4594 = vmatprep.subr.mxu0 0.0
    %4595 = vmatpush1.msra.mxu0 0.0
    %4596 = vmatprep.subr.mxu0 0.0
    %4597 = vmatpush1.msra.mxu0 0.0
    %4598 = vmatprep.subr.mxu0 0.0
    %4599 = vmatpush1.msra.mxu0 0.0
    %4600 = vmatprep.subr.mxu0 0.0
    %4601 = vmatpush1.msra.mxu0 0.0
    %4602 = vmatprep.subr.mxu0 0.0
    %4603 = vmatpush1.msra.mxu0 0.0
    %4604 = vmatprep.subr.mxu0 0.0
    %4605 = vmatpush1.msra.mxu0 0.0
    %4606 = vmatprep.subr.mxu0 0.0
    %4607 = vmatpush1.msra.mxu0 0.0
    %4608 = vmatprep.subr.mxu0 0.0
    %4609 = vmatpush1.msra.mxu0 0.0
    %4610 = vmatprep.mubr.f32.mxu0 0.0
    %4611 = vmatmul.mubr.f32.gmra.mrb[0].mxu0 %v4378
    %v4612 = vpop.f32.mrb[0].mxu0
    %v4613 = vadd.f32 0.0, %v4612
    %v4614 = vpop.f32.mrb[0].mxu0
    %4615 = vmatprep.mubr.f32.mxu0 0.0
    %4616 = vmatmul.mubr.f32.gmra.mrb[0].mxu0 %v4380
    %v4617 = vpop.f32.mrb[0].mxu0
    %v4618 = vadd.f32 0.0, %v4617
    %v4619 = vpop.f32.mrb[0].mxu0
    %4620 = vmatprep.mubr.f32.mxu0 0.0
    %4621 = vmatmul.mubr.f32.gmra.mrb[0].mxu0 %v4382
    %v4622 = vpop.f32.mrb[0].mxu0
    %v4623 = vadd.f32 0.0, %v4622
    %v4624 = vpop.f32.mrb[0].mxu0
    %4625 = vmatprep.mubr.f32.mxu0 0.0
    %4626 = vmatmul.mubr.f32.gmra.mrb[0].mxu0 %v4384
    %v4627 = vpop.f32.mrb[0].mxu0
    %v4628 = vadd.f32 0.0, %v4627
    %v4629 = vpop.f32.mrb[0].mxu0
    %4630 = vmatprep.mubr.f32.mxu0 0.0
    %4631 = vmatmul.mubr.f32.gmra.mrb[0].mxu0 %v4386
    %v4632 = vpop.f32.mrb[0].mxu0
    %v4633 = vadd.f32 0.0, %v4632
    %v4634 = vpop.f32.mrb[0].mxu0
    %4635 = vmatprep.mubr.f32.mxu0 0.0
    %4636 = vmatmul.mubr.f32.gmra.mrb[0].mxu0 %v4388
    %v4637 = vpop.f32.mrb[0].mxu0
    %v4638 = vadd.f32 0.0, %v4637
    %v4639 = vpop.f32.mrb[0].mxu0
    %4640 = vmatprep.mubr.f32.mxu0 0.0
    %4641 = vmatmul.mubr.f32.gmra.mrb[0].mxu0 %v4390
    %v4642 = vpop.f32.mrb[0].mxu0
    %v4643 = vadd.f32 0.0, %v4642
    %v4644 = vpop.f32.mrb[0].mxu0
    %4645 = vmatprep.mubr.f32.mxu0 0.0
    %4646 = vmatmul.mubr.f32.gmra.mrb[0].mxu0 %v4392
    %v4647 = vpop.f32.mrb[0].mxu0
    %v4648 = vadd.f32 0.0, %v4647
    %v4649 = vpop.f32.mrb[0].mxu0
    %4650 = vdwg.mxu0
    %v4651 = vrcp.pop %v4613
    %v4652 = vrcp.pop %v4618
    %v4653 = vrcp.pop %v4623
    %v4654 = vrcp.pop %v4628
    %v4655 = vrcp.pop %v4633
    %v4656 = vrcp.pop %v4638
    %v4657 = vrcp.pop %v4643
    %v4658 = vrcp.pop %v4648
    %4660 = vset.pattern.permute.xlu0 0
    %4661 = vperm.xlu0 %4660, %v4651
    %v4662 = vpop.permute.xlu0 %4661
    %4665 = vset.pattern.permute.xlu0 0
    %4666 = vperm.xlu0 %4665, %v4652
    %v4667 = vpop.permute.xlu0 %4666
    %4670 = vset.pattern.permute.xlu0 0
    %4671 = vperm.xlu0 %4670, %v4653
    %v4672 = vpop.permute.xlu0 %4671
    %4675 = vset.pattern.permute.xlu0 0
    %4676 = vperm.xlu0 %4675, %v4654
    %v4677 = vpop.permute.xlu0 %4676
    %4680 = vset.pattern.permute.xlu0 0
    %4681 = vperm.xlu0 %4680, %v4655
    %v4682 = vpop.permute.xlu0 %4681
    %4685 = vset.pattern.permute.xlu0 0
    %4686 = vperm.xlu0 %4685, %v4656
    %v4687 = vpop.permute.xlu0 %4686
    %4690 = vset.pattern.permute.xlu0 0
    %4691 = vperm.xlu0 %4690, %v4657
    %v4692 = vpop.permute.xlu0 %4691
    %4695 = vset.pattern.permute.xlu0 0
    %4696 = vperm.xlu0 %4695, %v4658
    %v4697 = vpop.permute.xlu0 %4696
    %v4699 = vmul.f32 %v4508, %v4662
    %v4700 = vmul.f32 %v4513, %v4667
    %v4701 = vmul.f32 %v4518, %v4672
    %v4702 = vmul.f32 %v4523, %v4677
    %v4703 = vmul.f32 %v4528, %v4682
    %v4704 = vmul.f32 %v4533, %v4687
    %v4705 = vmul.f32 %v4538, %v4692
    %v4706 = vmul.f32 %v4543, %v4697
    %v4707 = vld [vmem:[%s3 + $0x40] sm:$0xff]
    %v4708 = vld [vmem:[%s3 + $0x48] sm:$0xff]
    %v4709 = vld [vmem:[%s3 + $0x50] sm:$0xff]
    %v4710 = vld [vmem:[%s3 + $0x58] sm:$0xff]
    %v4712 = vsel %vm1358, %v4699, 0
    %v4715 = vsel %vm1358, %v4700, 0
    %v4718 = vsel %vm1358, %v4701, 0
    %v4721 = vsel %vm1358, %v4702, 0
    %v4724 = vsel %vm1358, %v4703, 0
    %v4727 = vsel %vm1358, %v4704, 0
    %v4730 = vsel %vm1358, %v4705, 0
    %v4733 = vsel %vm1358, %v4706, 0
    %4735 = vmatprep.subr.mxu0 0.0
    %4736 = vmatpush1.msra.mxu0 %v4707
    %4737 = vmatprep.subr.mxu0 0.0
    %4738 = vmatpush1.msra.mxu0 %v4708
    %4739 = vmatprep.subr.mxu0 0.0
    %4740 = vmatpush1.msra.mxu0 %v4709
    %4741 = vmatprep.subr.mxu0 0.0
    %4742 = vmatpush1.msra.mxu0 %v4710
    %4743 = vmatprep.subr.mxu0 0.0
    %4744 = vmatpush1.msra.mxu0 0.0
    %4745 = vmatprep.subr.mxu0 0.0
    %4746 = vmatpush1.msra.mxu0 0.0
    %4747 = vmatprep.subr.mxu0 0.0
    %4748 = vmatpush1.msra.mxu0 0.0
    %4749 = vmatprep.subr.mxu0 0.0
    %4750 = vmatpush1.msra.mxu0 0.0
    %4751 = vmatprep.subr.mxu0 0.0
    %4752 = vmatpush1.msra.mxu0 0.0
    %4753 = vmatprep.subr.mxu0 0.0
    %4754 = vmatpush1.msra.mxu0 0.0
    %4755 = vmatprep.subr.mxu0 0.0
    %4756 = vmatpush1.msra.mxu0 0.0
    %4757 = vmatprep.subr.mxu0 0.0
    %4758 = vmatpush1.msra.mxu0 0.0
    %4759 = vmatprep.subr.mxu0 0.0
    %4760 = vmatpush1.msra.mxu0 0.0
    %4761 = vmatprep.subr.mxu0 0.0
    %4762 = vmatpush1.msra.mxu0 0.0
    %4763 = vmatprep.subr.mxu0 0.0
    %4764 = vmatpush1.msra.mxu0 0.0
    %4765 = vmatprep.subr.mxu0 0.0
    %4766 = vmatpush1.msra.mxu0 0.0
    %4767 = vmatprep.subr.mxu0 0.0
    %4768 = vmatpush1.msra.mxu0 0.0
    %4769 = vmatprep.subr.mxu0 0.0
    %4770 = vmatpush1.msra.mxu0 0.0
    %4771 = vmatprep.subr.mxu0 0.0
    %4772 = vmatpush1.msra.mxu0 0.0
    %4773 = vmatprep.subr.mxu0 0.0
    %4774 = vmatpush1.msra.mxu0 0.0
    %4775 = vmatprep.subr.mxu0 0.0
    %4776 = vmatpush1.msra.mxu0 0.0
    %4777 = vmatprep.subr.mxu0 0.0
    %4778 = vmatpush1.msra.mxu0 0.0
    %4779 = vmatprep.subr.mxu0 0.0
    %4780 = vmatpush1.msra.mxu0 0.0
    %4781 = vmatprep.subr.mxu0 0.0
    %4782 = vmatpush1.msra.mxu0 0.0
    %4783 = vmatprep.subr.mxu0 0.0
    %4784 = vmatpush1.msra.mxu0 0.0
    %4785 = vmatprep.subr.mxu0 0.0
    %4786 = vmatpush1.msra.mxu0 0.0
    %4787 = vmatprep.subr.mxu0 0.0
    %4788 = vmatpush1.msra.mxu0 0.0
    %4789 = vmatprep.subr.mxu0 0.0
    %4790 = vmatpush1.msra.mxu0 0.0
    %4791 = vmatprep.subr.mxu0 0.0
    %4792 = vmatpush1.msra.mxu0 0.0
    %4793 = vmatprep.subr.mxu0 0.0
    %4794 = vmatpush1.msra.mxu0 0.0
    %4795 = vmatprep.subr.mxu0 0.0
    %4796 = vmatpush1.msra.mxu0 0.0
    %4797 = vmatprep.subr.mxu0 0.0
    %4798 = vmatpush1.msra.mxu0 0.0
    %4799 = vmatprep.mubr.f32.mxu0 0.0
    %4800 = vmatmul.mubr.f32.gmra.mrb[0].mxu0 %v4712
    %v4801 = vpop.f32.mrb[0].mxu0
    %v4802 = vadd.f32 0.0, %v4801
    %v4803 = vpop.f32.mrb[0].mxu0
    %4804 = vmatprep.mubr.f32.mxu0 0.0
    %4805 = vmatmul.mubr.f32.gmra.mrb[0].mxu0 %v4715
    %v4806 = vpop.f32.mrb[0].mxu0
    %v4807 = vadd.f32 0.0, %v4806
    %v4808 = vpop.f32.mrb[0].mxu0
    %4809 = vmatprep.mubr.f32.mxu0 0.0
    %4810 = vmatmul.mubr.f32.gmra.mrb[0].mxu0 %v4718
    %v4811 = vpop.f32.mrb[0].mxu0
    %v4812 = vadd.f32 0.0, %v4811
    %v4813 = vpop.f32.mrb[0].mxu0
    %4814 = vmatprep.mubr.f32.mxu0 0.0
    %4815 = vmatmul.mubr.f32.gmra.mrb[0].mxu0 %v4721
    %v4816 = vpop.f32.mrb[0].mxu0
    %v4817 = vadd.f32 0.0, %v4816
    %v4818 = vpop.f32.mrb[0].mxu0
    %4819 = vmatprep.mubr.f32.mxu0 0.0
    %4820 = vmatmul.mubr.f32.gmra.mrb[0].mxu0 %v4724
    %v4821 = vpop.f32.mrb[0].mxu0
    %v4822 = vadd.f32 0.0, %v4821
    %v4823 = vpop.f32.mrb[0].mxu0
    %4824 = vmatprep.mubr.f32.mxu0 0.0
    %4825 = vmatmul.mubr.f32.gmra.mrb[0].mxu0 %v4727
    %v4826 = vpop.f32.mrb[0].mxu0
    %v4827 = vadd.f32 0.0, %v4826
    %v4828 = vpop.f32.mrb[0].mxu0
    %4829 = vmatprep.mubr.f32.mxu0 0.0
    %4830 = vmatmul.mubr.f32.gmra.mrb[0].mxu0 %v4730
    %v4831 = vpop.f32.mrb[0].mxu0
    %v4832 = vadd.f32 0.0, %v4831
    %v4833 = vpop.f32.mrb[0].mxu0
    %4834 = vmatprep.mubr.f32.mxu0 0.0
    %4835 = vmatmul.mubr.f32.gmra.mrb[0].mxu0 %v4733
    %v4836 = vpop.f32.mrb[0].mxu0
    %v4837 = vadd.f32 0.0, %v4836
    %v4838 = vpop.f32.mrb[0].mxu0
    %4839 = vdwg.mxu0
    %v4840 = vadd.f32 %v4247, %v4802
    %v4841 = vadd.f32 %v4252, %v4807
    %v4842 = vadd.f32 %v4257, %v4812
    %v4843 = vadd.f32 %v4262, %v4817
    %v4844 = vadd.f32 %v4267, %v4822
    %v4845 = vadd.f32 %v4272, %v4827
    %v4846 = vadd.f32 %v4277, %v4832
    %v4847 = vadd.f32 %v4282, %v4837
    %4848 = vset.pattern.permute.xlu0 3
    %4849 = vperm.xlu0 %4848, %v3034
    %v4850 = vpop.permute.xlu0 %4849
    %4852 = vset.pattern.permute.xlu0 3
    %4853 = vperm.xlu0 %4852, %v3039
    %v4854 = vpop.permute.xlu0 %4853
    %4856 = vset.pattern.permute.xlu0 3
    %4857 = vperm.xlu0 %4856, %v3044
    %v4858 = vpop.permute.xlu0 %4857
    %4860 = vset.pattern.permute.xlu0 3
    %4861 = vperm.xlu0 %4860, %v3049
    %v4862 = vpop.permute.xlu0 %4861
    %4864 = vset.pattern.permute.xlu0 3
    %4865 = vperm.xlu0 %4864, %v3054
    %v4866 = vpop.permute.xlu0 %4865
    %4868 = vset.pattern.permute.xlu0 3
    %4869 = vperm.xlu0 %4868, %v3059
    %v4870 = vpop.permute.xlu0 %4869
    %4872 = vset.pattern.permute.xlu0 3
    %4873 = vperm.xlu0 %4872, %v3064
    %v4874 = vpop.permute.xlu0 %4873
    %4876 = vset.pattern.permute.xlu0 3
    %4877 = vperm.xlu0 %4876, %v3069
    %v4878 = vpop.permute.xlu0 %4877
    %v4880 = vlaneseq
    %v4881 = vshrl.u32 %v4880, 7
    %v4882 = vsub.s32 3, %v4881
    %v4883 = vrot.slane %v3140, %v4882
    %v4884 = vadd.f32 %v4850, %v4883
    %v4885 = vadd.f32 %v4854, %v4883
    %v4886 = vadd.f32 %v4858, %v4883
    %v4887 = vadd.f32 %v4862, %v4883
    %v4888 = vadd.f32 %v4866, %v4883
    %v4889 = vadd.f32 %v4870, %v4883
    %v4890 = vadd.f32 %v4874, %v4883
    %v4891 = vadd.f32 %v4878, %v4883
    %v4892 = vmul.f32 %v4884, 0.2
    %v4893 = vmul.f32 %v4885, 0.2
    %v4894 = vmul.f32 %v4886, 0.2
    %v4895 = vmul.f32 %v4887, 0.2
    %v4896 = vmul.f32 %v4888, 0.2
    %v4897 = vmul.f32 %v4889, 0.2
    %v4898 = vmul.f32 %v4890, 0.2
    %v4899 = vmul.f32 %v4891, 0.2
    %v4900 = vmax.f32 %v4884, %v4892
    %v4901 = vmax.f32 %v4885, %v4893
    %v4902 = vmax.f32 %v4886, %v4894
    %v4903 = vmax.f32 %v4887, %v4895
    %v4904 = vmax.f32 %v4888, %v4896
    %v4905 = vmax.f32 %v4889, %v4897
    %v4906 = vmax.f32 %v4890, %v4898
    %v4907 = vmax.f32 %v4891, %v4899
    %v4908 = vadd.f32 %v4900, %v3227
    %v4909 = vadd.f32 %v4901, %v3228
    %v4910 = vadd.f32 %v4902, %v3229
    %v4911 = vadd.f32 %v4903, %v3230
    %v4912 = vadd.f32 %v4904, %v3231
    %v4913 = vadd.f32 %v4905, %v3232
    %v4914 = vadd.f32 %v4906, %v3233
    %v4915 = vadd.f32 %v4907, %v3234
    %4916 = vmax.xlane.f32.xlu0 %v4908
    %v4917 = vpop.xlane.xlu0 %4916
    %4918 = vmax.xlane.f32.xlu0 %v4909
    %v4919 = vpop.xlane.xlu0 %4918
    %4920 = vmax.xlane.f32.xlu0 %v4910
    %v4921 = vpop.xlane.xlu0 %4920
    %4922 = vmax.xlane.f32.xlu0 %v4911
    %v4923 = vpop.xlane.xlu0 %4922
    %4924 = vmax.xlane.f32.xlu0 %v4912
    %v4925 = vpop.xlane.xlu0 %4924
    %4926 = vmax.xlane.f32.xlu0 %v4913
    %v4927 = vpop.xlane.xlu0 %4926
    %4928 = vmax.xlane.f32.xlu0 %v4914
    %v4929 = vpop.xlane.xlu0 %4928
    %4930 = vmax.xlane.f32.xlu0 %v4915
    %v4931 = vpop.xlane.xlu0 %4930
    %v4932 = vsub.f32 %v4908, %v4917
    %v4933 = vsub.f32 %v4909, %v4919
    %v4934 = vsub.f32 %v4910, %v4921
    %v4935 = vsub.f32 %v4911, %v4923
    %v4936 = vsub.f32 %v4912, %v4925
    %v4937 = vsub.f32 %v4913, %v4927
    %v4938 = vsub.f32 %v4914, %v4929
    %v4939 = vsub.f32 %v4915, %v4931
    %v4940 = vmul.f32 %v4932, 1.442695
    %v4941 = vpow.pop %v4940
    %v4942 = vmul.f32 %v4933, 1.442695
    %v4943 = vpow.pop %v4942
    %v4944 = vmul.f32 %v4934, 1.442695
    %v4945 = vpow.pop %v4944
    %v4946 = vmul.f32 %v4935, 1.442695
    %v4947 = vpow.pop %v4946
    %v4948 = vmul.f32 %v4936, 1.442695
    %v4949 = vpow.pop %v4948
    %v4950 = vmul.f32 %v4937, 1.442695
    %v4951 = vpow.pop %v4950
    %v4952 = vmul.f32 %v4938, 1.442695
    %v4953 = vpow.pop %v4952
    %v4954 = vmul.f32 %v4939, 1.442695
    %v4955 = vpow.pop %v4954
    %4956 = vrot.lane.b32.xlu0 %v3283, 32
    %v4957 = vpop.permute.xlu0 %4956
    %4958 = vrot.lane.b32.xlu0 %v3284, 32
    %v4959 = vpop.permute.xlu0 %4958
    %4960 = vrot.lane.b32.xlu0 %v3285, 32
    %v4961 = vpop.permute.xlu0 %4960
    %4962 = vrot.lane.b32.xlu0 %v3286, 32
    %v4963 = vpop.permute.xlu0 %4962
    %4964 = vrot.lane.b32.xlu0 %v3287, 32
    %v4965 = vpop.permute.xlu0 %4964
    %4966 = vrot.lane.b32.xlu0 %v3288, 32
    %v4967 = vpop.permute.xlu0 %4966
    %4968 = vrot.lane.b32.xlu0 %v3289, 32
    %v4969 = vpop.permute.xlu0 %4968
    %4970 = vrot.lane.b32.xlu0 %v3290, 32
    %v4971 = vpop.permute.xlu0 %4970
    %4972 = vrot.lane.b32.xlu0 %v3291, 32
    %v4973 = vpop.permute.xlu0 %4972
    %4974 = vrot.lane.b32.xlu0 %v3292, 32
    %v4975 = vpop.permute.xlu0 %4974
    %4976 = vrot.lane.b32.xlu0 %v3293, 32
    %v4977 = vpop.permute.xlu0 %4976
    %4978 = vrot.lane.b32.xlu0 %v3294, 32
    %v4979 = vpop.permute.xlu0 %4978
    %4980 = vrot.lane.b32.xlu0 %v3295, 32
    %v4981 = vpop.permute.xlu0 %4980
    %4982 = vrot.lane.b32.xlu0 %v3296, 32
    %v4983 = vpop.permute.xlu0 %4982
    %4984 = vrot.lane.b32.xlu0 %v3297, 32
    %v4985 = vpop.permute.xlu0 %4984
    %4986 = vrot.lane.b32.xlu0 %v3298, 32
    %v4987 = vpop.permute.xlu0 %4986
    %5004 = vmatprep.subr.mxu0 0.0
    %5005 = vmatpush1.msra.mxu0 %v4957
    %5006 = vmatprep.subr.mxu0 0.0
    %5007 = vmatpush1.msra.mxu0 %v4959
    %5008 = vmatprep.subr.mxu0 0.0
    %5009 = vmatpush1.msra.mxu0 %v4961
    %5010 = vmatprep.subr.mxu0 0.0
    %5011 = vmatpush1.msra.mxu0 %v4963
    %5012 = vmatprep.subr.mxu0 0.0
    %5013 = vmatpush1.msra.mxu0 %v4965
    %5014 = vmatprep.subr.mxu0 0.0
    %5015 = vmatpush1.msra.mxu0 %v4967
    %5016 = vmatprep.subr.mxu0 0.0
    %5017 = vmatpush1.msra.mxu0 %v4969
    %5018 = vmatprep.subr.mxu0 0.0
    %5019 = vmatpush1.msra.mxu0 %v4971
    %5020 = vmatprep.subr.mxu0 0.0
    %5021 = vmatpush1.msra.mxu0 %v4973
    %5022 = vmatprep.subr.mxu0 0.0
    %5023 = vmatpush1.msra.mxu0 %v4975
    %5024 = vmatprep.subr.mxu0 0.0
    %5025 = vmatpush1.msra.mxu0 %v4977
    %5026 = vmatprep.subr.mxu0 0.0
    %5027 = vmatpush1.msra.mxu0 %v4979
    %5028 = vmatprep.subr.mxu0 0.0
    %5029 = vmatpush1.msra.mxu0 %v4981
    %5030 = vmatprep.subr.mxu0 0.0
    %5031 = vmatpush1.msra.mxu0 %v4983
    %5032 = vmatprep.subr.mxu0 0.0
    %5033 = vmatpush1.msra.mxu0 %v4985
    %5034 = vmatprep.subr.mxu0 0.0
    %5035 = vmatpush1.msra.mxu0 %v4987
    %5036 = vmatprep.subr.mxu0 0.0
    %5037 = vmatpush1.msra.mxu0 0.0
    %5038 = vmatprep.subr.mxu0 0.0
    %5039 = vmatpush1.msra.mxu0 0.0
    %5040 = vmatprep.subr.mxu0 0.0
    %5041 = vmatpush1.msra.mxu0 0.0
    %5042 = vmatprep.subr.mxu0 0.0
    %5043 = vmatpush1.msra.mxu0 0.0
    %5044 = vmatprep.subr.mxu0 0.0
    %5045 = vmatpush1.msra.mxu0 0.0
    %5046 = vmatprep.subr.mxu0 0.0
    %5047 = vmatpush1.msra.mxu0 0.0
    %5048 = vmatprep.subr.mxu0 0.0
    %5049 = vmatpush1.msra.mxu0 0.0
    %5050 = vmatprep.subr.mxu0 0.0
    %5051 = vmatpush1.msra.mxu0 0.0
    %5052 = vmatprep.subr.mxu0 0.0
    %5053 = vmatpush1.msra.mxu0 0.0
    %5054 = vmatprep.subr.mxu0 0.0
    %5055 = vmatpush1.msra.mxu0 0.0
    %5056 = vmatprep.subr.mxu0 0.0
    %5057 = vmatpush1.msra.mxu0 0.0
    %5058 = vmatprep.subr.mxu0 0.0
    %5059 = vmatpush1.msra.mxu0 0.0
    %5060 = vmatprep.subr.mxu0 0.0
    %5061 = vmatpush1.msra.mxu0 0.0
    %5062 = vmatprep.subr.mxu0 0.0
    %5063 = vmatpush1.msra.mxu0 0.0
    %5064 = vmatprep.subr.mxu0 0.0
    %5065 = vmatpush1.msra.mxu0 0.0
    %5066 = vmatprep.subr.mxu0 0.0
    %5067 = vmatpush1.msra.mxu0 0.0
    %5068 = vmatprep.mubr.f32.mxu0 0.0
    %5069 = vmatmul.mubr.f32.gmra.mrb[0].mxu0 %v4941
    %v5070 = vpop.f32.mrb[0].mxu0
    %v5071 = vadd.f32 0.0, %v5070
    %v5072 = vpop.f32.mrb[0].mxu0
    %5073 = vmatprep.mubr.f32.mxu0 0.0
    %5074 = vmatmul.mubr.f32.gmra.mrb[0].mxu0 %v4943
    %v5075 = vpop.f32.mrb[0].mxu0
    %v5076 = vadd.f32 0.0, %v5075
    %v5077 = vpop.f32.mrb[0].mxu0
    %5078 = vmatprep.mubr.f32.mxu0 0.0
    %5079 = vmatmul.mubr.f32.gmra.mrb[0].mxu0 %v4945
    %v5080 = vpop.f32.mrb[0].mxu0
    %v5081 = vadd.f32 0.0, %v5080
    %v5082 = vpop.f32.mrb[0].mxu0
    %5083 = vmatprep.mubr.f32.mxu0 0.0
    %5084 = vmatmul.mubr.f32.gmra.mrb[0].mxu0 %v4947
    %v5085 = vpop.f32.mrb[0].mxu0
    %v5086 = vadd.f32 0.0, %v5085
    %v5087 = vpop.f32.mrb[0].mxu0
    %5088 = vmatprep.mubr.f32.mxu0 0.0
    %5089 = vmatmul.mubr.f32.gmra.mrb[0].mxu0 %v4949
    %v5090 = vpop.f32.mrb[0].mxu0
    %v5091 = vadd.f32 0.0, %v5090
    %v5092 = vpop.f32.mrb[0].mxu0
    %5093 = vmatprep.mubr.f32.mxu0 0.0
    %5094 = vmatmul.mubr.f32.gmra.mrb[0].mxu0 %v4951
    %v5095 = vpop.f32.mrb[0].mxu0
    %v5096 = vadd.f32 0.0, %v5095
    %v5097 = vpop.f32.mrb[0].mxu0
    %5098 = vmatprep.mubr.f32.mxu0 0.0
    %5099 = vmatmul.mubr.f32.gmra.mrb[0].mxu0 %v4953
    %v5100 = vpop.f32.mrb[0].mxu0
    %v5101 = vadd.f32 0.0, %v5100
    %v5102 = vpop.f32.mrb[0].mxu0
    %5103 = vmatprep.mubr.f32.mxu0 0.0
    %5104 = vmatmul.mubr.f32.gmra.mrb[0].mxu0 %v4955
    %v5105 = vpop.f32.mrb[0].mxu0
    %v5106 = vadd.f32 0.0, %v5105
    %v5107 = vpop.f32.mrb[0].mxu0
    %5108 = vdwg.mxu0
    %5109 = vmatprep.subr.mxu0 0.0
    %5110 = vmatpush1.msra.mxu0 %v3404
    %5111 = vmatprep.subr.mxu0 0.0
    %5112 = vmatpush1.msra.mxu0 %v3405
    %5113 = vmatprep.subr.mxu0 0.0
    %5114 = vmatpush1.msra.mxu0 %v3406
    %5115 = vmatprep.subr.mxu0 0.0
    %5116 = vmatpush1.msra.mxu0 %v3407
    %5117 = vmatprep.subr.mxu0 0.0
    %5118 = vmatpush1.msra.mxu0 %v3408
    %5119 = vmatprep.subr.mxu0 0.0
    %5120 = vmatpush1.msra.mxu0 %v3409
    %5121 = vmatprep.subr.mxu0 0.0
    %5122 = vmatpush1.msra.mxu0 %v3410
    %5123 = vmatprep.subr.mxu0 0.0
    %5124 = vmatpush1.msra.mxu0 %v3411
    %5125 = vmatprep.subr.mxu0 0.0
    %5126 = vmatpush1.msra.mxu0 %v3412
    %5127 = vmatprep.subr.mxu0 0.0
    %5128 = vmatpush1.msra.mxu0 %v3413
    %5129 = vmatprep.subr.mxu0 0.0
    %5130 = vmatpush1.msra.mxu0 %v3414
    %5131 = vmatprep.subr.mxu0 0.0
    %5132 = vmatpush1.msra.mxu0 %v3415
    %5133 = vmatprep.subr.mxu0 0.0
    %5134 = vmatpush1.msra.mxu0 %v3416
    %5135 = vmatprep.subr.mxu0 0.0
    %5136 = vmatpush1.msra.mxu0 %v3417
    %5137 = vmatprep.subr.mxu0 0.0
    %5138 = vmatpush1.msra.mxu0 %v3418
    %5139 = vmatprep.subr.mxu0 0.0
    %5140 = vmatpush1.msra.mxu0 %v3419
    %5141 = vmatprep.subr.mxu0 0.0
    %5142 = vmatpush1.msra.mxu0 0.0
    %5143 = vmatprep.subr.mxu0 0.0
    %5144 = vmatpush1.msra.mxu0 0.0
    %5145 = vmatprep.subr.mxu0 0.0
    %5146 = vmatpush1.msra.mxu0 0.0
    %5147 = vmatprep.subr.mxu0 0.0
    %5148 = vmatpush1.msra.mxu0 0.0
    %5149 = vmatprep.subr.mxu0 0.0
    %5150 = vmatpush1.msra.mxu0 0.0
    %5151 = vmatprep.subr.mxu0 0.0
    %5152 = vmatpush1.msra.mxu0 0.0
    %5153 = vmatprep.subr.mxu0 0.0
    %5154 = vmatpush1.msra.mxu0 0.0
    %5155 = vmatprep.subr.mxu0 0.0
    %5156 = vmatpush1.msra.mxu0 0.0
    %5157 = vmatprep.subr.mxu0 0.0
    %5158 = vmatpush1.msra.mxu0 0.0
    %5159 = vmatprep.subr.mxu0 0.0
    %5160 = vmatpush1.msra.mxu0 0.0
    %5161 = vmatprep.subr.mxu0 0.0
    %5162 = vmatpush1.msra.mxu0 0.0
    %5163 = vmatprep.subr.mxu0 0.0
    %5164 = vmatpush1.msra.mxu0 0.0
    %5165 = vmatprep.subr.mxu0 0.0
    %5166 = vmatpush1.msra.mxu0 0.0
    %5167 = vmatprep.subr.mxu0 0.0
    %5168 = vmatpush1.msra.mxu0 0.0
    %5169 = vmatprep.subr.mxu0 0.0
    %5170 = vmatpush1.msra.mxu0 0.0
    %5171 = vmatprep.subr.mxu0 0.0
    %5172 = vmatpush1.msra.mxu0 0.0
    %5173 = vmatprep.mubr.f32.mxu0 0.0
    %5174 = vmatmul.mubr.f32.gmra.mrb[0].mxu0 %v4941
    %v5175 = vpop.f32.mrb[0].mxu0
    %v5176 = vadd.f32 0.0, %v5175
    %v5177 = vpop.f32.mrb[0].mxu0
    %5178 = vmatprep.mubr.f32.mxu0 0.0
    %5179 = vmatmul.mubr.f32.gmra.mrb[0].mxu0 %v4943
    %v5180 = vpop.f32.mrb[0].mxu0
    %v5181 = vadd.f32 0.0, %v5180
    %v5182 = vpop.f32.mrb[0].mxu0
    %5183 = vmatprep.mubr.f32.mxu0 0.0
    %5184 = vmatmul.mubr.f32.gmra.mrb[0].mxu0 %v4945
    %v5185 = vpop.f32.mrb[0].mxu0
    %v5186 = vadd.f32 0.0, %v5185
    %v5187 = vpop.f32.mrb[0].mxu0
    %5188 = vmatprep.mubr.f32.mxu0 0.0
    %5189 = vmatmul.mubr.f32.gmra.mrb[0].mxu0 %v4947
    %v5190 = vpop.f32.mrb[0].mxu0
    %v5191 = vadd.f32 0.0, %v5190
    %v5192 = vpop.f32.mrb[0].mxu0
    %5193 = vmatprep.mubr.f32.mxu0 0.0
    %5194 = vmatmul.mubr.f32.gmra.mrb[0].mxu0 %v4949
    %v5195 = vpop.f32.mrb[0].mxu0
    %v5196 = vadd.f32 0.0, %v5195
    %v5197 = vpop.f32.mrb[0].mxu0
    %5198 = vmatprep.mubr.f32.mxu0 0.0
    %5199 = vmatmul.mubr.f32.gmra.mrb[0].mxu0 %v4951
    %v5200 = vpop.f32.mrb[0].mxu0
    %v5201 = vadd.f32 0.0, %v5200
    %v5202 = vpop.f32.mrb[0].mxu0
    %5203 = vmatprep.mubr.f32.mxu0 0.0
    %5204 = vmatmul.mubr.f32.gmra.mrb[0].mxu0 %v4953
    %v5205 = vpop.f32.mrb[0].mxu0
    %v5206 = vadd.f32 0.0, %v5205
    %v5207 = vpop.f32.mrb[0].mxu0
    %5208 = vmatprep.mubr.f32.mxu0 0.0
    %5209 = vmatmul.mubr.f32.gmra.mrb[0].mxu0 %v4955
    %v5210 = vpop.f32.mrb[0].mxu0
    %v5211 = vadd.f32 0.0, %v5210
    %v5212 = vpop.f32.mrb[0].mxu0
    %5213 = vdwg.mxu0
    %v5214 = vrcp.pop %v5176
    %v5215 = vrcp.pop %v5181
    %v5216 = vrcp.pop %v5186
    %v5217 = vrcp.pop %v5191
    %v5218 = vrcp.pop %v5196
    %v5219 = vrcp.pop %v5201
    %v5220 = vrcp.pop %v5206
    %v5221 = vrcp.pop %v5211
    %5223 = vset.pattern.permute.xlu0 0
    %5224 = vperm.xlu0 %5223, %v5214
    %v5225 = vpop.permute.xlu0 %5224
    %5228 = vset.pattern.permute.xlu0 0
    %5229 = vperm.xlu0 %5228, %v5215
    %v5230 = vpop.permute.xlu0 %5229
    %5233 = vset.pattern.permute.xlu0 0
    %5234 = vperm.xlu0 %5233, %v5216
    %v5235 = vpop.permute.xlu0 %5234
    %5238 = vset.pattern.permute.xlu0 0
    %5239 = vperm.xlu0 %5238, %v5217
    %v5240 = vpop.permute.xlu0 %5239
    %5243 = vset.pattern.permute.xlu0 0
    %5244 = vperm.xlu0 %5243, %v5218
    %v5245 = vpop.permute.xlu0 %5244
    %5248 = vset.pattern.permute.xlu0 0
    %5249 = vperm.xlu0 %5248, %v5219
    %v5250 = vpop.permute.xlu0 %5249
    %5253 = vset.pattern.permute.xlu0 0
    %5254 = vperm.xlu0 %5253, %v5220
    %v5255 = vpop.permute.xlu0 %5254
    %5258 = vset.pattern.permute.xlu0 0
    %5259 = vperm.xlu0 %5258, %v5221
    %v5260 = vpop.permute.xlu0 %5259
    %v5262 = vmul.f32 %v5071, %v5225
    %v5263 = vmul.f32 %v5076, %v5230
    %v5264 = vmul.f32 %v5081, %v5235
    %v5265 = vmul.f32 %v5086, %v5240
    %v5266 = vmul.f32 %v5091, %v5245
    %v5267 = vmul.f32 %v5096, %v5250
    %v5268 = vmul.f32 %v5101, %v5255
    %v5269 = vmul.f32 %v5106, %v5260
    %v5270 = vld [vmem:[%s3 + $0x60] sm:$0xff]
    %v5271 = vld [vmem:[%s3 + $0x68] sm:$0xff]
    %v5272 = vld [vmem:[%s3 + $0x70] sm:$0xff]
    %v5273 = vld [vmem:[%s3 + $0x78] sm:$0xff]
    %v5275 = vsel %vm1358, %v5262, 0
    %v5278 = vsel %vm1358, %v5263, 0
    %v5281 = vsel %vm1358, %v5264, 0
    %v5284 = vsel %vm1358, %v5265, 0
    %v5287 = vsel %vm1358, %v5266, 0
    %v5290 = vsel %vm1358, %v5267, 0
    %v5293 = vsel %vm1358, %v5268, 0
    %v5296 = vsel %vm1358, %v5269, 0
    %5298 = vmatprep.subr.mxu0 0.0
    %5299 = vmatpush1.msra.mxu0 %v5270
    %5300 = vmatprep.subr.mxu0 0.0
    %5301 = vmatpush1.msra.mxu0 %v5271
    %5302 = vmatprep.subr.mxu0 0.0
    %5303 = vmatpush1.msra.mxu0 %v5272
    %5304 = vmatprep.subr.mxu0 0.0
    %5305 = vmatpush1.msra.mxu0 %v5273
    %5306 = vmatprep.subr.mxu0 0.0
    %5307 = vmatpush1.msra.mxu0 0.0
    %5308 = vmatprep.subr.mxu0 0.0
    %5309 = vmatpush1.msra.mxu0 0.0
    %5310 = vmatprep.subr.mxu0 0.0
    %5311 = vmatpush1.msra.mxu0 0.0
    %5312 = vmatprep.subr.mxu0 0.0
    %5313 = vmatpush1.msra.mxu0 0.0
    %5314 = vmatprep.subr.mxu0 0.0
    %5315 = vmatpush1.msra.mxu0 0.0
    %5316 = vmatprep.subr.mxu0 0.0
    %5317 = vmatpush1.msra.mxu0 0.0
    %5318 = vmatprep.subr.mxu0 0.0
    %5319 = vmatpush1.msra.mxu0 0.0
    %5320 = vmatprep.subr.mxu0 0.0
    %5321 = vmatpush1.msra.mxu0 0.0
    %5322 = vmatprep.subr.mxu0 0.0
    %5323 = vmatpush1.msra.mxu0 0.0
    %5324 = vmatprep.subr.mxu0 0.0
    %5325 = vmatpush1.msra.mxu0 0.0
    %5326 = vmatprep.subr.mxu0 0.0
    %5327 = vmatpush1.msra.mxu0 0.0
    %5328 = vmatprep.subr.mxu0 0.0
    %5329 = vmatpush1.msra.mxu0 0.0
    %5330 = vmatprep.subr.mxu0 0.0
    %5331 = vmatpush1.msra.mxu0 0.0
    %5332 = vmatprep.subr.mxu0 0.0
    %5333 = vmatpush1.msra.mxu0 0.0
    %5334 = vmatprep.subr.mxu0 0.0
    %5335 = vmatpush1.msra.mxu0 0.0
    %5336 = vmatprep.subr.mxu0 0.0
    %5337 = vmatpush1.msra.mxu0 0.0
    %5338 = vmatprep.subr.mxu0 0.0
    %5339 = vmatpush1.msra.mxu0 0.0
    %5340 = vmatprep.subr.mxu0 0.0
    %5341 = vmatpush1.msra.mxu0 0.0
    %5342 = vmatprep.subr.mxu0 0.0
    %5343 = vmatpush1.msra.mxu0 0.0
    %5344 = vmatprep.subr.mxu0 0.0
    %5345 = vmatpush1.msra.mxu0 0.0
    %5346 = vmatprep.subr.mxu0 0.0
    %5347 = vmatpush1.msra.mxu0 0.0
    %5348 = vmatprep.subr.mxu0 0.0
    %5349 = vmatpush1.msra.mxu0 0.0
    %5350 = vmatprep.subr.mxu0 0.0
    %5351 = vmatpush1.msra.mxu0 0.0
    %5352 = vmatprep.subr.mxu0 0.0
    %5353 = vmatpush1.msra.mxu0 0.0
    %5354 = vmatprep.subr.mxu0 0.0
    %5355 = vmatpush1.msra.mxu0 0.0
    %5356 = vmatprep.subr.mxu0 0.0
    %5357 = vmatpush1.msra.mxu0 0.0
    %5358 = vmatprep.subr.mxu0 0.0
    %5359 = vmatpush1.msra.mxu0 0.0
    %5360 = vmatprep.subr.mxu0 0.0
    %5361 = vmatpush1.msra.mxu0 0.0
    %5362 = vmatprep.mubr.f32.mxu0 0.0
    %5363 = vmatmul.mubr.f32.gmra.mrb[0].mxu0 %v5275
    %v5364 = vpop.f32.mrb[0].mxu0
    %v5365 = vadd.f32 0.0, %v5364
    %v5366 = vpop.f32.mrb[0].mxu0
    %5367 = vmatprep.mubr.f32.mxu0 0.0
    %5368 = vmatmul.mubr.f32.gmra.mrb[0].mxu0 %v5278
    %v5369 = vpop.f32.mrb[0].mxu0
    %v5370 = vadd.f32 0.0, %v5369
    %v5371 = vpop.f32.mrb[0].mxu0
    %5372 = vmatprep.mubr.f32.mxu0 0.0
    %5373 = vmatmul.mubr.f32.gmra.mrb[0].mxu0 %v5281
    %v5374 = vpop.f32.mrb[0].mxu0
    %v5375 = vadd.f32 0.0, %v5374
    %v5376 = vpop.f32.mrb[0].mxu0
    %5377 = vmatprep.mubr.f32.mxu0 0.0
    %5378 = vmatmul.mubr.f32.gmra.mrb[0].mxu0 %v5284
    %v5379 = vpop.f32.mrb[0].mxu0
    %v5380 = vadd.f32 0.0, %v5379
    %v5381 = vpop.f32.mrb[0].mxu0
    %5382 = vmatprep.mubr.f32.mxu0 0.0
    %5383 = vmatmul.mubr.f32.gmra.mrb[0].mxu0 %v5287
    %v5384 = vpop.f32.mrb[0].mxu0
    %v5385 = vadd.f32 0.0, %v5384
    %v5386 = vpop.f32.mrb[0].mxu0
    %5387 = vmatprep.mubr.f32.mxu0 0.0
    %5388 = vmatmul.mubr.f32.gmra.mrb[0].mxu0 %v5290
    %v5389 = vpop.f32.mrb[0].mxu0
    %v5390 = vadd.f32 0.0, %v5389
    %v5391 = vpop.f32.mrb[0].mxu0
    %5392 = vmatprep.mubr.f32.mxu0 0.0
    %5393 = vmatmul.mubr.f32.gmra.mrb[0].mxu0 %v5293
    %v5394 = vpop.f32.mrb[0].mxu0
    %v5395 = vadd.f32 0.0, %v5394
    %v5396 = vpop.f32.mrb[0].mxu0
    %5397 = vmatprep.mubr.f32.mxu0 0.0
    %5398 = vmatmul.mubr.f32.gmra.mrb[0].mxu0 %v5296
    %v5399 = vpop.f32.mrb[0].mxu0
    %v5400 = vadd.f32 0.0, %v5399
    %v5401 = vpop.f32.mrb[0].mxu0
    %5402 = vdwg.mxu0
    %v5403 = vadd.f32 %v4840, %v5365
    %v5404 = vadd.f32 %v4841, %v5370
    %v5405 = vadd.f32 %v4842, %v5375
    %v5406 = vadd.f32 %v4843, %v5380
    %v5407 = vadd.f32 %v4844, %v5385
    %v5408 = vadd.f32 %v4845, %v5390
    %v5409 = vadd.f32 %v4846, %v5395
    %v5410 = vadd.f32 %v4847, %v5400
    %v5411 = vld [vmem:[%s11] sm:$0x1]
    %v5413 = vlaneseq
    %v5414 = vshrl.u32 %v5413, 7
    %v5415 = vsub.s32 0, %v5414
    %v5416 = vrot.slane %v5411, %v5415
    %v5418 = vadd.f32 %v5403, %v5416
    %v5419 = vadd.f32 %v5404, %v5416
    %v5420 = vadd.f32 %v5405, %v5416
    %v5421 = vadd.f32 %v5406, %v5416
    %v5422 = vadd.f32 %v5407, %v5416
    %v5423 = vadd.f32 %v5408, %v5416
    %v5424 = vadd.f32 %v5409, %v5416
    %v5425 = vadd.f32 %v5410, %v5416
    %v5426 = vmax.f32 %v5418, 0.0
    %v5427 = vmax.f32 %v5419, 0.0
    %v5428 = vmax.f32 %v5420, 0.0
    %v5429 = vmax.f32 %v5421, 0.0
    %v5430 = vmax.f32 %v5422, 0.0
    %v5431 = vmax.f32 %v5423, 0.0
    %v5432 = vmax.f32 %v5424, 0.0
    %v5433 = vmax.f32 %v5425, 0.0
    %5434 = vst [vmem:[#allocation3] sm:$0xff] %v5426
    %5435 = vst [vmem:[#allocation3 + $0x8] sm:$0xff] %v5427
    %5436 = vst [vmem:[#allocation3 + $0x10] sm:$0xff] %v5428
    %5437 = vst [vmem:[#allocation3 + $0x18] sm:$0xff] %v5429
    %5438 = vst [vmem:[#allocation3 + $0x20] sm:$0xff] %v5430
    %5439 = vst [vmem:[#allocation3 + $0x28] sm:$0xff] %v5431
    %5440 = vst [vmem:[#allocation3 + $0x30] sm:$0xff] %v5432
    %5441 = vst [vmem:[#allocation3 + $0x38] sm:$0xff] %v5433
    %v5442 = vld [vmem:[#allocation3] sm:$0xff]
    %v5443 = vld [vmem:[#allocation3 + $0x8] sm:$0xff]
    %v5444 = vld [vmem:[#allocation3 + $0x10] sm:$0xff]
    %v5445 = vld [vmem:[#allocation3 + $0x18] sm:$0xff]
    %v5446 = vld [vmem:[#allocation3 + $0x20] sm:$0xff]
    %v5447 = vld [vmem:[#allocation3 + $0x28] sm:$0xff]
    %v5448 = vld [vmem:[#allocation3 + $0x30] sm:$0xff]
    %v5449 = vld [vmem:[#allocation3 + $0x38] sm:$0xff]
    %v5450 = vld [vmem:[#allocation3 + $0x40] sm:$0xff]
    %v5451 = vld [vmem:[#allocation3 + $0x48] sm:$0xff]
    %v5452 = vld [vmem:[#allocation3 + $0x50] sm:$0xff]
    %v5453 = vld [vmem:[#allocation3 + $0x58] sm:$0xff]
    %v5454 = vld [vmem:[#allocation3 + $0x60] sm:$0xff]
    %v5455 = vld [vmem:[#allocation3 + $0x68] sm:$0xff]
    %v5456 = vld [vmem:[#allocation3 + $0x70] sm:$0xff]
    %v5457 = vld [vmem:[#allocation3 + $0x78] sm:$0xff]
    %v5458 = vld [vmem:[%s12] sm:$0xff]
    %v5459 = vld [vmem:[%s12 + $0x8] sm:$0xff]
    %v5460 = vld [vmem:[%s12 + $0x10] sm:$0xff]
    %v5461 = vld [vmem:[%s12 + $0x18] sm:$0xff]
    %v5462 = vld [vmem:[%s12 + $0x20] sm:$0xff]
    %v5463 = vld [vmem:[%s12 + $0x28] sm:$0xff]
    %v5464 = vld [vmem:[%s12 + $0x30] sm:$0xff]
    %v5465 = vld [vmem:[%s12 + $0x38] sm:$0xff]
    %v5466 = vld [vmem:[%s12 + $0x40] sm:$0xff]
    %v5467 = vld [vmem:[%s12 + $0x48] sm:$0xff]
    %v5468 = vld [vmem:[%s12 + $0x50] sm:$0xff]
    %v5469 = vld [vmem:[%s12 + $0x58] sm:$0xff]
    %v5470 = vld [vmem:[%s12 + $0x60] sm:$0xff]
    %v5471 = vld [vmem:[%s12 + $0x68] sm:$0xff]
    %v5472 = vld [vmem:[%s12 + $0x70] sm:$0xff]
    %v5473 = vld [vmem:[%s12 + $0x78] sm:$0xff]
    %5474 = vmatprep.subr.mxu0 0.0
    %5475 = vmatpush1.msra.mxu0 %v5458
    %5476 = vmatprep.subr.mxu0 0.0
    %5477 = vmatpush1.msra.mxu0 %v5459
    %5478 = vmatprep.subr.mxu0 0.0
    %5479 = vmatpush1.msra.mxu0 %v5460
    %5480 = vmatprep.subr.mxu0 0.0
    %5481 = vmatpush1.msra.mxu0 %v5461
    %5482 = vmatprep.subr.mxu0 0.0
    %5483 = vmatpush1.msra.mxu0 %v5462
    %5484 = vmatprep.subr.mxu0 0.0
    %5485 = vmatpush1.msra.mxu0 %v5463
    %5486 = vmatprep.subr.mxu0 0.0
    %5487 = vmatpush1.msra.mxu0 %v5464
    %5488 = vmatprep.subr.mxu0 0.0
    %5489 = vmatpush1.msra.mxu0 %v5465
    %5490 = vmatprep.subr.mxu0 0.0
    %5491 = vmatpush1.msra.mxu0 %v5466
    %5492 = vmatprep.subr.mxu0 0.0
    %5493 = vmatpush1.msra.mxu0 %v5467
    %5494 = vmatprep.subr.mxu0 0.0
    %5495 = vmatpush1.msra.mxu0 %v5468
    %5496 = vmatprep.subr.mxu0 0.0
    %5497 = vmatpush1.msra.mxu0 %v5469
    %5498 = vmatprep.subr.mxu0 0.0
    %5499 = vmatpush1.msra.mxu0 %v5470
    %5500 = vmatprep.subr.mxu0 0.0
    %5501 = vmatpush1.msra.mxu0 %v5471
    %5502 = vmatprep.subr.mxu0 0.0
    %5503 = vmatpush1.msra.mxu0 %v5472
    %5504 = vmatprep.subr.mxu0 0.0
    %5505 = vmatpush1.msra.mxu0 %v5473
    %5506 = vmatprep.subr.mxu0 0.0
    %5507 = vmatpush1.msra.mxu0 0.0
    %5508 = vmatprep.subr.mxu0 0.0
    %5509 = vmatpush1.msra.mxu0 0.0
    %5510 = vmatprep.subr.mxu0 0.0
    %5511 = vmatpush1.msra.mxu0 0.0
    %5512 = vmatprep.subr.mxu0 0.0
    %5513 = vmatpush1.msra.mxu0 0.0
    %5514 = vmatprep.subr.mxu0 0.0
    %5515 = vmatpush1.msra.mxu0 0.0
    %5516 = vmatprep.subr.mxu0 0.0
    %5517 = vmatpush1.msra.mxu0 0.0
    %5518 = vmatprep.subr.mxu0 0.0
    %5519 = vmatpush1.msra.mxu0 0.0
    %5520 = vmatprep.subr.mxu0 0.0
    %5521 = vmatpush1.msra.mxu0 0.0
    %5522 = vmatprep.subr.mxu0 0.0
    %5523 = vmatpush1.msra.mxu0 0.0
    %5524 = vmatprep.subr.mxu0 0.0
    %5525 = vmatpush1.msra.mxu0 0.0
    %5526 = vmatprep.subr.mxu0 0.0
    %5527 = vmatpush1.msra.mxu0 0.0
    %5528 = vmatprep.subr.mxu0 0.0
    %5529 = vmatpush1.msra.mxu0 0.0
    %5530 = vmatprep.subr.mxu0 0.0
    %5531 = vmatpush1.msra.mxu0 0.0
    %5532 = vmatprep.subr.mxu0 0.0
    %5533 = vmatpush1.msra.mxu0 0.0
    %5534 = vmatprep.subr.mxu0 0.0
    %5535 = vmatpush1.msra.mxu0 0.0
    %5536 = vmatprep.subr.mxu0 0.0
    %5537 = vmatpush1.msra.mxu0 0.0
    %5538 = vmatprep.mubr.f32.mxu0 0.0
    %5539 = vmatmul.mubr.f32.gmra.mrb[0].mxu0 %v5442
    %v5540 = vpop.f32.mrb[0].mxu0
    %v5541 = vadd.f32 0.0, %v5540
    %v5542 = vpop.f32.mrb[0].mxu0
    %5543 = vmatprep.mubr.f32.mxu0 0.0
    %5544 = vmatmul.mubr.f32.gmra.mrb[0].mxu0 %v5443
    %v5545 = vpop.f32.mrb[0].mxu0
    %v5546 = vadd.f32 0.0, %v5545
    %v5547 = vpop.f32.mrb[0].mxu0
    %5548 = vmatprep.mubr.f32.mxu0 0.0
    %5549 = vmatmul.mubr.f32.gmra.mrb[0].mxu0 %v5444
    %v5550 = vpop.f32.mrb[0].mxu0
    %v5551 = vadd.f32 0.0, %v5550
    %v5552 = vpop.f32.mrb[0].mxu0
    %5553 = vmatprep.mubr.f32.mxu0 0.0
    %5554 = vmatmul.mubr.f32.gmra.mrb[0].mxu0 %v5445
    %v5555 = vpop.f32.mrb[0].mxu0
    %v5556 = vadd.f32 0.0, %v5555
    %v5557 = vpop.f32.mrb[0].mxu0
    %5558 = vmatprep.mubr.f32.mxu0 0.0
    %5559 = vmatmul.mubr.f32.gmra.mrb[0].mxu0 %v5446
    %v5560 = vpop.f32.mrb[0].mxu0
    %v5561 = vadd.f32 0.0, %v5560
    %v5562 = vpop.f32.mrb[0].mxu0
    %5563 = vmatprep.mubr.f32.mxu0 0.0
    %5564 = vmatmul.mubr.f32.gmra.mrb[0].mxu0 %v5447
    %v5565 = vpop.f32.mrb[0].mxu0
    %v5566 = vadd.f32 0.0, %v5565
    %v5567 = vpop.f32.mrb[0].mxu0
    %5568 = vmatprep.mubr.f32.mxu0 0.0
    %5569 = vmatmul.mubr.f32.gmra.mrb[0].mxu0 %v5448
    %v5570 = vpop.f32.mrb[0].mxu0
    %v5571 = vadd.f32 0.0, %v5570
    %v5572 = vpop.f32.mrb[0].mxu0
    %5573 = vmatprep.mubr.f32.mxu0 0.0
    %5574 = vmatmul.mubr.f32.gmra.mrb[0].mxu0 %v5449
    %v5575 = vpop.f32.mrb[0].mxu0
    %v5576 = vadd.f32 0.0, %v5575
    %v5577 = vpop.f32.mrb[0].mxu0
    %5578 = vmatprep.mubr.f32.mxu0 0.0
    %5579 = vmatmul.mubr.f32.gmra.mrb[0].mxu0 %v5450
    %v5580 = vpop.f32.mrb[0].mxu0
    %v5581 = vadd.f32 0.0, %v5580
    %v5582 = vpop.f32.mrb[0].mxu0
    %5583 = vmatprep.mubr.f32.mxu0 0.0
    %5584 = vmatmul.mubr.f32.gmra.mrb[0].mxu0 %v5451
    %v5585 = vpop.f32.mrb[0].mxu0
    %v5586 = vadd.f32 0.0, %v5585
    %v5587 = vpop.f32.mrb[0].mxu0
    %5588 = vmatprep.mubr.f32.mxu0 0.0
    %5589 = vmatmul.mubr.f32.gmra.mrb[0].mxu0 %v5452
    %v5590 = vpop.f32.mrb[0].mxu0
    %v5591 = vadd.f32 0.0, %v5590
    %v5592 = vpop.f32.mrb[0].mxu0
    %5593 = vmatprep.mubr.f32.mxu0 0.0
    %5594 = vmatmul.mubr.f32.gmra.mrb[0].mxu0 %v5453
    %v5595 = vpop.f32.mrb[0].mxu0
    %v5596 = vadd.f32 0.0, %v5595
    %v5597 = vpop.f32.mrb[0].mxu0
    %5598 = vmatprep.mubr.f32.mxu0 0.0
    %5599 = vmatmul.mubr.f32.gmra.mrb[0].mxu0 %v5454
    %v5600 = vpop.f32.mrb[0].mxu0
    %v5601 = vadd.f32 0.0, %v5600
    %v5602 = vpop.f32.mrb[0].mxu0
    %5603 = vmatprep.mubr.f32.mxu0 0.0
    %5604 = vmatmul.mubr.f32.gmra.mrb[0].mxu0 %v5455
    %v5605 = vpop.f32.mrb[0].mxu0
    %v5606 = vadd.f32 0.0, %v5605
    %v5607 = vpop.f32.mrb[0].mxu0
    %5608 = vmatprep.mubr.f32.mxu0 0.0
    %5609 = vmatmul.mubr.f32.gmra.mrb[0].mxu0 %v5456
    %v5610 = vpop.f32.mrb[0].mxu0
    %v5611 = vadd.f32 0.0, %v5610
    %v5612 = vpop.f32.mrb[0].mxu0
    %5613 = vmatprep.mubr.f32.mxu0 0.0
    %5614 = vmatmul.mubr.f32.gmra.mrb[0].mxu0 %v5457
    %v5615 = vpop.f32.mrb[0].mxu0
    %v5616 = vadd.f32 0.0, %v5615
    %v5617 = vpop.f32.mrb[0].mxu0
    %5618 = vdwg.mxu0
    %v5619 = vld [vmem:[%s14] sm:$0xff]
    %v5620 = vld [vmem:[%s14 + $0x8] sm:$0xff]
    %v5621 = vld [vmem:[%s14 + $0x10] sm:$0xff]
    %v5622 = vld [vmem:[%s14 + $0x18] sm:$0xff]
    %v5623 = vld [vmem:[%s14 + $0x20] sm:$0xff]
    %v5624 = vld [vmem:[%s14 + $0x28] sm:$0xff]
    %v5625 = vld [vmem:[%s14 + $0x30] sm:$0xff]
    %v5626 = vld [vmem:[%s14 + $0x38] sm:$0xff]
    %v5627 = vld [vmem:[%s14 + $0x40] sm:$0xff]
    %v5628 = vld [vmem:[%s14 + $0x48] sm:$0xff]
    %v5629 = vld [vmem:[%s14 + $0x50] sm:$0xff]
    %v5630 = vld [vmem:[%s14 + $0x58] sm:$0xff]
    %v5631 = vld [vmem:[%s14 + $0x60] sm:$0xff]
    %v5632 = vld [vmem:[%s14 + $0x68] sm:$0xff]
    %v5633 = vld [vmem:[%s14 + $0x70] sm:$0xff]
    %v5634 = vld [vmem:[%s14 + $0x78] sm:$0xff]
    %5635 = vmatprep.subr.mxu0 0.0
    %5636 = vmatpush1.msra.mxu0 %v5619
    %5637 = vmatprep.subr.mxu0 0.0
    %5638 = vmatpush1.msra.mxu0 %v5620
    %5639 = vmatprep.subr.mxu0 0.0
    %5640 = vmatpush1.msra.mxu0 %v5621
    %5641 = vmatprep.subr.mxu0 0.0
    %5642 = vmatpush1.msra.mxu0 %v5622
    %5643 = vmatprep.subr.mxu0 0.0
    %5644 = vmatpush1.msra.mxu0 %v5623
    %5645 = vmatprep.subr.mxu0 0.0
    %5646 = vmatpush1.msra.mxu0 %v5624
    %5647 = vmatprep.subr.mxu0 0.0
    %5648 = vmatpush1.msra.mxu0 %v5625
    %5649 = vmatprep.subr.mxu0 0.0
    %5650 = vmatpush1.msra.mxu0 %v5626
    %5651 = vmatprep.subr.mxu0 0.0
    %5652 = vmatpush1.msra.mxu0 %v5627
    %5653 = vmatprep.subr.mxu0 0.0
    %5654 = vmatpush1.msra.mxu0 %v5628
    %5655 = vmatprep.subr.mxu0 0.0
    %5656 = vmatpush1.msra.mxu0 %v5629
    %5657 = vmatprep.subr.mxu0 0.0
    %5658 = vmatpush1.msra.mxu0 %v5630
    %5659 = vmatprep.subr.mxu0 0.0
    %5660 = vmatpush1.msra.mxu0 %v5631
    %5661 = vmatprep.subr.mxu0 0.0
    %5662 = vmatpush1.msra.mxu0 %v5632
    %5663 = vmatprep.subr.mxu0 0.0
    %5664 = vmatpush1.msra.mxu0 %v5633
    %5665 = vmatprep.subr.mxu0 0.0
    %5666 = vmatpush1.msra.mxu0 %v5634
    %5667 = vmatprep.subr.mxu0 0.0
    %5668 = vmatpush1.msra.mxu0 0.0
    %5669 = vmatprep.subr.mxu0 0.0
    %5670 = vmatpush1.msra.mxu0 0.0
    %5671 = vmatprep.subr.mxu0 0.0
    %5672 = vmatpush1.msra.mxu0 0.0
    %5673 = vmatprep.subr.mxu0 0.0
    %5674 = vmatpush1.msra.mxu0 0.0
    %5675 = vmatprep.subr.mxu0 0.0
    %5676 = vmatpush1.msra.mxu0 0.0
    %5677 = vmatprep.subr.mxu0 0.0
    %5678 = vmatpush1.msra.mxu0 0.0
    %5679 = vmatprep.subr.mxu0 0.0
    %5680 = vmatpush1.msra.mxu0 0.0
    %5681 = vmatprep.subr.mxu0 0.0
    %5682 = vmatpush1.msra.mxu0 0.0
    %5683 = vmatprep.subr.mxu0 0.0
    %5684 = vmatpush1.msra.mxu0 0.0
    %5685 = vmatprep.subr.mxu0 0.0
    %5686 = vmatpush1.msra.mxu0 0.0
    %5687 = vmatprep.subr.mxu0 0.0
    %5688 = vmatpush1.msra.mxu0 0.0
    %5689 = vmatprep.subr.mxu0 0.0
    %5690 = vmatpush1.msra.mxu0 0.0
    %5691 = vmatprep.subr.mxu0 0.0
    %5692 = vmatpush1.msra.mxu0 0.0
    %5693 = vmatprep.subr.mxu0 0.0
    %5694 = vmatpush1.msra.mxu0 0.0
    %5695 = vmatprep.subr.mxu0 0.0
    %5696 = vmatpush1.msra.mxu0 0.0
    %5697 = vmatprep.subr.mxu0 0.0
    %5698 = vmatpush1.msra.mxu0 0.0
    %5699 = vmatprep.mubr.f32.mxu0 0.0
    %5700 = vmatmul.mubr.f32.gmra.mrb[0].mxu0 %v5541
    %v5701 = vpop.f32.mrb[0].mxu0
    %v5702 = vadd.f32 0.0, %v5701
    %v5703 = vpop.f32.mrb[0].mxu0
    %5704 = vmatprep.mubr.f32.mxu0 0.0
    %5705 = vmatmul.mubr.f32.gmra.mrb[0].mxu0 %v5546
    %v5706 = vpop.f32.mrb[0].mxu0
    %v5707 = vadd.f32 0.0, %v5706
    %v5708 = vpop.f32.mrb[0].mxu0
    %5709 = vmatprep.mubr.f32.mxu0 0.0
    %5710 = vmatmul.mubr.f32.gmra.mrb[0].mxu0 %v5551
    %v5711 = vpop.f32.mrb[0].mxu0
    %v5712 = vadd.f32 0.0, %v5711
    %v5713 = vpop.f32.mrb[0].mxu0
    %5714 = vmatprep.mubr.f32.mxu0 0.0
    %5715 = vmatmul.mubr.f32.gmra.mrb[0].mxu0 %v5556
    %v5716 = vpop.f32.mrb[0].mxu0
    %v5717 = vadd.f32 0.0, %v5716
    %v5718 = vpop.f32.mrb[0].mxu0
    %5719 = vmatprep.mubr.f32.mxu0 0.0
    %5720 = vmatmul.mubr.f32.gmra.mrb[0].mxu0 %v5561
    %v5721 = vpop.f32.mrb[0].mxu0
    %v5722 = vadd.f32 0.0, %v5721
    %v5723 = vpop.f32.mrb[0].mxu0
    %5724 = vmatprep.mubr.f32.mxu0 0.0
    %5725 = vmatmul.mubr.f32.gmra.mrb[0].mxu0 %v5566
    %v5726 = vpop.f32.mrb[0].mxu0
    %v5727 = vadd.f32 0.0, %v5726
    %v5728 = vpop.f32.mrb[0].mxu0
    %5729 = vmatprep.mubr.f32.mxu0 0.0
    %5730 = vmatmul.mubr.f32.gmra.mrb[0].mxu0 %v5571
    %v5731 = vpop.f32.mrb[0].mxu0
    %v5732 = vadd.f32 0.0, %v5731
    %v5733 = vpop.f32.mrb[0].mxu0
    %5734 = vmatprep.mubr.f32.mxu0 0.0
    %5735 = vmatmul.mubr.f32.gmra.mrb[0].mxu0 %v5576
    %v5736 = vpop.f32.mrb[0].mxu0
    %v5737 = vadd.f32 0.0, %v5736
    %v5738 = vpop.f32.mrb[0].mxu0
    %5739 = vdwg.mxu0
    %v5740 = vld [vmem:[%s13] sm:$0x1]
    %5741 = vmatprep.subr.mxu0 0.0
    %5742 = vmatpush1.xpose.msra.mxu0 %v5541
    %5743 = vmatprep.subr.mxu0 0.0
    %5744 = vmatpush1.xpose.msra.mxu0 %v5546
    %5745 = vmatprep.subr.mxu0 0.0
    %5746 = vmatpush1.xpose.msra.mxu0 %v5551
    %5747 = vmatprep.subr.mxu0 0.0
    %5748 = vmatpush1.xpose.msra.mxu0 %v5556
    %5749 = vmatprep.subr.mxu0 0.0
    %5750 = vmatpush1.xpose.msra.mxu0 %v5561
    %5751 = vmatprep.subr.mxu0 0.0
    %5752 = vmatpush1.xpose.msra.mxu0 %v5566
    %5753 = vmatprep.subr.mxu0 0.0
    %5754 = vmatpush1.xpose.msra.mxu0 %v5571
    %5755 = vmatprep.subr.mxu0 0.0
    %5756 = vmatpush1.xpose.msra.mxu0 %v5576
    %5757 = vmatprep.subr.mxu0 0.0
    %5758 = vmatpush1.xpose.msra.mxu0 %v5581
    %5759 = vmatprep.subr.mxu0 0.0
    %5760 = vmatpush1.xpose.msra.mxu0 %v5586
    %5761 = vmatprep.subr.mxu0 0.0
    %5762 = vmatpush1.xpose.msra.mxu0 %v5591
    %5763 = vmatprep.subr.mxu0 0.0
    %5764 = vmatpush1.xpose.msra.mxu0 %v5596
    %5765 = vmatprep.subr.mxu0 0.0
    %5766 = vmatpush1.xpose.msra.mxu0 %v5601
    %5767 = vmatprep.subr.mxu0 0.0
    %5768 = vmatpush1.xpose.msra.mxu0 %v5606
    %5769 = vmatprep.subr.mxu0 0.0
    %5770 = vmatpush1.xpose.msra.mxu0 %v5611
    %5771 = vmatprep.subr.mxu0 0.0
    %5772 = vmatpush1.xpose.msra.mxu0 %v5616
    %5773 = vmatprep.subr.mxu0 0.0
    %5774 = vmatpush1.xpose.msra.mxu0 0.0
    %5775 = vmatprep.subr.mxu0 0.0
    %5776 = vmatpush1.xpose.msra.mxu0 0.0
    %5777 = vmatprep.subr.mxu0 0.0
    %5778 = vmatpush1.xpose.msra.mxu0 0.0
    %5779 = vmatprep.subr.mxu0 0.0
    %5780 = vmatpush1.xpose.msra.mxu0 0.0
    %5781 = vmatprep.subr.mxu0 0.0
    %5782 = vmatpush1.xpose.msra.mxu0 0.0
    %5783 = vmatprep.subr.mxu0 0.0
    %5784 = vmatpush1.xpose.msra.mxu0 0.0
    %5785 = vmatprep.subr.mxu0 0.0
    %5786 = vmatpush1.xpose.msra.mxu0 0.0
    %5787 = vmatprep.subr.mxu0 0.0
    %5788 = vmatpush1.xpose.msra.mxu0 0.0
    %5789 = vmatprep.subr.mxu0 0.0
    %5790 = vmatpush1.xpose.msra.mxu0 0.0
    %5791 = vmatprep.subr.mxu0 0.0
    %5792 = vmatpush1.xpose.msra.mxu0 0.0
    %5793 = vmatprep.subr.mxu0 0.0
    %5794 = vmatpush1.xpose.msra.mxu0 0.0
    %5795 = vmatprep.subr.mxu0 0.0
    %5796 = vmatpush1.xpose.msra.mxu0 0.0
    %5797 = vmatprep.subr.mxu0 0.0
    %5798 = vmatpush1.xpose.msra.mxu0 0.0
    %5799 = vmatprep.subr.mxu0 0.0
    %5800 = vmatpush1.xpose.msra.mxu0 0.0
    %5801 = vmatprep.subr.mxu0 0.0
    %5802 = vmatpush1.xpose.msra.mxu0 0.0
    %5803 = vmatprep.subr.mxu0 0.0
    %5804 = vmatpush1.xpose.msra.mxu0 0.0
    %5805 = vmatprep.mubr.f32.mxu0 0.0
    %5806 = vmatmul.mubr.f32.gmra.mrb[0].mxu0 %v5740
    %v5807 = vpop.f32.mrb[0].mxu0
    %v5808 = vadd.f32 0.0, %v5807
    %v5809 = vpop.f32.mrb[0].mxu0
    %5810 = vdwg.mxu0
    %5811 = vst [vmem:[#allocation4] sm:$0xff] %v5541
    %5812 = vst [vmem:[#allocation4 + $0x8] sm:$0xff] %v5546
    %5813 = vst [vmem:[#allocation4 + $0x10] sm:$0xff] %v5551
    %5814 = vst [vmem:[#allocation4 + $0x18] sm:$0xff] %v5556
    %5815 = vst [vmem:[#allocation4 + $0x20] sm:$0xff] %v5561
    %5816 = vst [vmem:[#allocation4 + $0x28] sm:$0xff] %v5566
    %5817 = vst [vmem:[#allocation4 + $0x30] sm:$0xff] %v5571
    %5818 = vst [vmem:[#allocation4 + $0x38] sm:$0xff] %v5576
    %5819 = vst [vmem:[#allocation4 + $0x40] sm:$0xff] %v5581
    %5820 = vst [vmem:[#allocation4 + $0x48] sm:$0xff] %v5586
    %5821 = vst [vmem:[#allocation4 + $0x50] sm:$0xff] %v5591
    %5822 = vst [vmem:[#allocation4 + $0x58] sm:$0xff] %v5596
    %5823 = vst [vmem:[#allocation4 + $0x60] sm:$0xff] %v5601
    %5824 = vst [vmem:[#allocation4 + $0x68] sm:$0xff] %v5606
    %5825 = vst [vmem:[#allocation4 + $0x70] sm:$0xff] %v5611
    %5826 = vst [vmem:[#allocation4 + $0x78] sm:$0xff] %v5616
    %5828 = vset.pattern.permute.xlu0 0
    %5829 = vperm.xlu0 %5828, %v5702
    %v5830 = vpop.permute.xlu0 %5829
    %5833 = vset.pattern.permute.xlu0 0
    %5834 = vperm.xlu0 %5833, %v5707
    %v5835 = vpop.permute.xlu0 %5834
    %5838 = vset.pattern.permute.xlu0 0
    %5839 = vperm.xlu0 %5838, %v5712
    %v5840 = vpop.permute.xlu0 %5839
    %5843 = vset.pattern.permute.xlu0 0
    %5844 = vperm.xlu0 %5843, %v5717
    %v5845 = vpop.permute.xlu0 %5844
    %5848 = vset.pattern.permute.xlu0 0
    %5849 = vperm.xlu0 %5848, %v5722
    %v5850 = vpop.permute.xlu0 %5849
    %5853 = vset.pattern.permute.xlu0 0
    %5854 = vperm.xlu0 %5853, %v5727
    %v5855 = vpop.permute.xlu0 %5854
    %5858 = vset.pattern.permute.xlu0 0
    %5859 = vperm.xlu0 %5858, %v5732
    %v5860 = vpop.permute.xlu0 %5859
    %5863 = vset.pattern.permute.xlu0 0
    %5864 = vperm.xlu0 %5863, %v5737
    %v5865 = vpop.permute.xlu0 %5864
    %v5867 = vlaneseq
    %v5868 = vshrl.u32 %v5867, 7
    %v5869 = vsub.s32 0, %v5868
    %v5870 = vrot.slane %v5808, %v5869
    %v5871 = vadd.f32 %v5830, %v5870
    %v5872 = vadd.f32 %v5835, %v5870
    %v5873 = vadd.f32 %v5840, %v5870
    %v5874 = vadd.f32 %v5845, %v5870
    %v5875 = vadd.f32 %v5850, %v5870
    %v5876 = vadd.f32 %v5855, %v5870
    %v5877 = vadd.f32 %v5860, %v5870
    %v5878 = vadd.f32 %v5865, %v5870
    %v5879 = vmul.f32 %v5871, 0.2
    %v5880 = vmul.f32 %v5872, 0.2
    %v5881 = vmul.f32 %v5873, 0.2
    %v5882 = vmul.f32 %v5874, 0.2
    %v5883 = vmul.f32 %v5875, 0.2
    %v5884 = vmul.f32 %v5876, 0.2
    %v5885 = vmul.f32 %v5877, 0.2
    %v5886 = vmul.f32 %v5878, 0.2
    %v5887 = vmax.f32 %v5871, %v5879
    %v5888 = vmax.f32 %v5872, %v5880
    %v5889 = vmax.f32 %v5873, %v5881
    %v5890 = vmax.f32 %v5874, %v5882
    %v5891 = vmax.f32 %v5875, %v5883
    %v5892 = vmax.f32 %v5876, %v5884
    %v5893 = vmax.f32 %v5877, %v5885
    %v5894 = vmax.f32 %v5878, %v5886
    %v5895 = vld [vmem:[%s1] sm:$0xff]
    %v5896 = vld [vmem:[%s1 + $0x8] sm:$0xff]
    %v5897 = vld [vmem:[%s1 + $0x10] sm:$0xff]
    %v5898 = vld [vmem:[%s1 + $0x18] sm:$0xff]
    %v5899 = vld [vmem:[%s1 + $0x20] sm:$0xff]
    %v5900 = vld [vmem:[%s1 + $0x28] sm:$0xff]
    %v5901 = vld [vmem:[%s1 + $0x30] sm:$0xff]
    %v5902 = vld [vmem:[%s1 + $0x38] sm:$0xff]
    %v5903 = vadd.f32 %v5887, %v5895
    %v5904 = vadd.f32 %v5888, %v5896
    %v5905 = vadd.f32 %v5889, %v5897
    %v5906 = vadd.f32 %v5890, %v5898
    %v5907 = vadd.f32 %v5891, %v5899
    %v5908 = vadd.f32 %v5892, %v5900
    %v5909 = vadd.f32 %v5893, %v5901
    %v5910 = vadd.f32 %v5894, %v5902
    %5911 = vmax.xlane.f32.xlu0 %v5903
    %v5912 = vpop.xlane.xlu0 %5911
    %5913 = vmax.xlane.f32.xlu0 %v5904
    %v5914 = vpop.xlane.xlu0 %5913
    %5915 = vmax.xlane.f32.xlu0 %v5905
    %v5916 = vpop.xlane.xlu0 %5915
    %5917 = vmax.xlane.f32.xlu0 %v5906
    %v5918 = vpop.xlane.xlu0 %5917
    %5919 = vmax.xlane.f32.xlu0 %v5907
    %v5920 = vpop.xlane.xlu0 %5919
    %5921 = vmax.xlane.f32.xlu0 %v5908
    %v5922 = vpop.xlane.xlu0 %5921
    %5923 = vmax.xlane.f32.xlu0 %v5909
    %v5924 = vpop.xlane.xlu0 %5923
    %5925 = vmax.xlane.f32.xlu0 %v5910
    %v5926 = vpop.xlane.xlu0 %5925
    %v5927 = vsub.f32 %v5903, %v5912
    %v5928 = vsub.f32 %v5904, %v5914
    %v5929 = vsub.f32 %v5905, %v5916
    %v5930 = vsub.f32 %v5906, %v5918
    %v5931 = vsub.f32 %v5907, %v5920
    %v5932 = vsub.f32 %v5908, %v5922
    %v5933 = vsub.f32 %v5909, %v5924
    %v5934 = vsub.f32 %v5910, %v5926
    %v5935 = vmul.f32 %v5927, 1.442695
    %v5936 = vpow.pop %v5935
    %v5937 = vmul.f32 %v5928, 1.442695
    %v5938 = vpow.pop %v5937
    %v5939 = vmul.f32 %v5929, 1.442695
    %v5940 = vpow.pop %v5939
    %v5941 = vmul.f32 %v5930, 1.442695
    %v5942 = vpow.pop %v5941
    %v5943 = vmul.f32 %v5931, 1.442695
    %v5944 = vpow.pop %v5943
    %v5945 = vmul.f32 %v5932, 1.442695
    %v5946 = vpow.pop %v5945
    %v5947 = vmul.f32 %v5933, 1.442695
    %v5948 = vpow.pop %v5947
    %v5949 = vmul.f32 %v5934, 1.442695
    %v5950 = vpow.pop %v5949
    %v5951 = vld [vmem:[#allocation4] sm:$0xff]
    %v5952 = vld [vmem:[#allocation4 + $0x8] sm:$0xff]
    %v5953 = vld [vmem:[#allocation4 + $0x10] sm:$0xff]
    %v5954 = vld [vmem:[#allocation4 + $0x18] sm:$0xff]
    %v5955 = vld [vmem:[#allocation4 + $0x20] sm:$0xff]
    %v5956 = vld [vmem:[#allocation4 + $0x28] sm:$0xff]
    %v5957 = vld [vmem:[#allocation4 + $0x30] sm:$0xff]
    %v5958 = vld [vmem:[#allocation4 + $0x38] sm:$0xff]
    %v5959 = vld [vmem:[#allocation4 + $0x40] sm:$0xff]
    %v5960 = vld [vmem:[#allocation4 + $0x48] sm:$0xff]
    %v5961 = vld [vmem:[#allocation4 + $0x50] sm:$0xff]
    %v5962 = vld [vmem:[#allocation4 + $0x58] sm:$0xff]
    %v5963 = vld [vmem:[#allocation4 + $0x60] sm:$0xff]
    %v5964 = vld [vmem:[#allocation4 + $0x68] sm:$0xff]
    %v5965 = vld [vmem:[#allocation4 + $0x70] sm:$0xff]
    %v5966 = vld [vmem:[#allocation4 + $0x78] sm:$0xff]
    %5967 = vmatprep.subr.mxu0 0.0
    %5968 = vmatpush1.msra.mxu0 %v5951
    %5969 = vmatprep.subr.mxu0 0.0
    %5970 = vmatpush1.msra.mxu0 %v5952
    %5971 = vmatprep.subr.mxu0 0.0
    %5972 = vmatpush1.msra.mxu0 %v5953
    %5973 = vmatprep.subr.mxu0 0.0
    %5974 = vmatpush1.msra.mxu0 %v5954
    %5975 = vmatprep.subr.mxu0 0.0
    %5976 = vmatpush1.msra.mxu0 %v5955
    %5977 = vmatprep.subr.mxu0 0.0
    %5978 = vmatpush1.msra.mxu0 %v5956
    %5979 = vmatprep.subr.mxu0 0.0
    %5980 = vmatpush1.msra.mxu0 %v5957
    %5981 = vmatprep.subr.mxu0 0.0
    %5982 = vmatpush1.msra.mxu0 %v5958
    %5983 = vmatprep.subr.mxu0 0.0
    %5984 = vmatpush1.msra.mxu0 %v5959
    %5985 = vmatprep.subr.mxu0 0.0
    %5986 = vmatpush1.msra.mxu0 %v5960
    %5987 = vmatprep.subr.mxu0 0.0
    %5988 = vmatpush1.msra.mxu0 %v5961
    %5989 = vmatprep.subr.mxu0 0.0
    %5990 = vmatpush1.msra.mxu0 %v5962
    %5991 = vmatprep.subr.mxu0 0.0
    %5992 = vmatpush1.msra.mxu0 %v5963
    %5993 = vmatprep.subr.mxu0 0.0
    %5994 = vmatpush1.msra.mxu0 %v5964
    %5995 = vmatprep.subr.mxu0 0.0
    %5996 = vmatpush1.msra.mxu0 %v5965
    %5997 = vmatprep.subr.mxu0 0.0
    %5998 = vmatpush1.msra.mxu0 %v5966
    %5999 = vmatprep.subr.mxu0 0.0
    %6000 = vmatpush1.msra.mxu0 0.0
    %6001 = vmatprep.subr.mxu0 0.0
    %6002 = vmatpush1.msra.mxu0 0.0
    %6003 = vmatprep.subr.mxu0 0.0
    %6004 = vmatpush1.msra.mxu0 0.0
    %6005 = vmatprep.subr.mxu0 0.0
    %6006 = vmatpush1.msra.mxu0 0.0
    %6007 = vmatprep.subr.mxu0 0.0
    %6008 = vmatpush1.msra.mxu0 0.0
    %6009 = vmatprep.subr.mxu0 0.0
    %6010 = vmatpush1.msra.mxu0 0.0
    %6011 = vmatprep.subr.mxu0 0.0
    %6012 = vmatpush1.msra.mxu0 0.0
    %6013 = vmatprep.subr.mxu0 0.0
    %6014 = vmatpush1.msra.mxu0 0.0
    %6015 = vmatprep.subr.mxu0 0.0
    %6016 = vmatpush1.msra.mxu0 0.0
    %6017 = vmatprep.subr.mxu0 0.0
    %6018 = vmatpush1.msra.mxu0 0.0
    %6019 = vmatprep.subr.mxu0 0.0
    %6020 = vmatpush1.msra.mxu0 0.0
    %6021 = vmatprep.subr.mxu0 0.0
    %6022 = vmatpush1.msra.mxu0 0.0
    %6023 = vmatprep.subr.mxu0 0.0
    %6024 = vmatpush1.msra.mxu0 0.0
    %6025 = vmatprep.subr.mxu0 0.0
    %6026 = vmatpush1.msra.mxu0 0.0
    %6027 = vmatprep.subr.mxu0 0.0
    %6028 = vmatpush1.msra.mxu0 0.0
    %6029 = vmatprep.subr.mxu0 0.0
    %6030 = vmatpush1.msra.mxu0 0.0
    %6031 = vmatprep.mubr.f32.mxu0 0.0
    %6032 = vmatmul.mubr.f32.gmra.mrb[0].mxu0 %v5936
    %v6033 = vpop.f32.mrb[0].mxu0
    %v6034 = vadd.f32 0.0, %v6033
    %v6035 = vpop.f32.mrb[0].mxu0
    %6036 = vmatprep.mubr.f32.mxu0 0.0
    %6037 = vmatmul.mubr.f32.gmra.mrb[0].mxu0 %v5938
    %v6038 = vpop.f32.mrb[0].mxu0
    %v6039 = vadd.f32 0.0, %v6038
    %v6040 = vpop.f32.mrb[0].mxu0
    %6041 = vmatprep.mubr.f32.mxu0 0.0
    %6042 = vmatmul.mubr.f32.gmra.mrb[0].mxu0 %v5940
    %v6043 = vpop.f32.mrb[0].mxu0
    %v6044 = vadd.f32 0.0, %v6043
    %v6045 = vpop.f32.mrb[0].mxu0
    %6046 = vmatprep.mubr.f32.mxu0 0.0
    %6047 = vmatmul.mubr.f32.gmra.mrb[0].mxu0 %v5942
    %v6048 = vpop.f32.mrb[0].mxu0
    %v6049 = vadd.f32 0.0, %v6048
    %v6050 = vpop.f32.mrb[0].mxu0
    %6051 = vmatprep.mubr.f32.mxu0 0.0
    %6052 = vmatmul.mubr.f32.gmra.mrb[0].mxu0 %v5944
    %v6053 = vpop.f32.mrb[0].mxu0
    %v6054 = vadd.f32 0.0, %v6053
    %v6055 = vpop.f32.mrb[0].mxu0
    %6056 = vmatprep.mubr.f32.mxu0 0.0
    %6057 = vmatmul.mubr.f32.gmra.mrb[0].mxu0 %v5946
    %v6058 = vpop.f32.mrb[0].mxu0
    %v6059 = vadd.f32 0.0, %v6058
    %v6060 = vpop.f32.mrb[0].mxu0
    %6061 = vmatprep.mubr.f32.mxu0 0.0
    %6062 = vmatmul.mubr.f32.gmra.mrb[0].mxu0 %v5948
    %v6063 = vpop.f32.mrb[0].mxu0
    %v6064 = vadd.f32 0.0, %v6063
    %v6065 = vpop.f32.mrb[0].mxu0
    %6066 = vmatprep.mubr.f32.mxu0 0.0
    %6067 = vmatmul.mubr.f32.gmra.mrb[0].mxu0 %v5950
    %v6068 = vpop.f32.mrb[0].mxu0
    %v6069 = vadd.f32 0.0, %v6068
    %v6070 = vpop.f32.mrb[0].mxu0
    %6071 = vdwg.mxu0
    %v6072 = vld [vmem:[%s2] sm:$0xff]
    %v6073 = vld [vmem:[%s2 + $0x8] sm:$0xff]
    %v6074 = vld [vmem:[%s2 + $0x10] sm:$0xff]
    %v6075 = vld [vmem:[%s2 + $0x18] sm:$0xff]
    %v6076 = vld [vmem:[%s2 + $0x20] sm:$0xff]
    %v6077 = vld [vmem:[%s2 + $0x28] sm:$0xff]
    %v6078 = vld [vmem:[%s2 + $0x30] sm:$0xff]
    %v6079 = vld [vmem:[%s2 + $0x38] sm:$0xff]
    %v6080 = vld [vmem:[%s2 + $0x40] sm:$0xff]
    %v6081 = vld [vmem:[%s2 + $0x48] sm:$0xff]
    %v6082 = vld [vmem:[%s2 + $0x50] sm:$0xff]
    %v6083 = vld [vmem:[%s2 + $0x58] sm:$0xff]
    %v6084 = vld [vmem:[%s2 + $0x60] sm:$0xff]
    %v6085 = vld [vmem:[%s2 + $0x68] sm:$0xff]
    %v6086 = vld [vmem:[%s2 + $0x70] sm:$0xff]
    %v6087 = vld [vmem:[%s2 + $0x78] sm:$0xff]
    %6088 = vmatprep.subr.mxu0 0.0
    %6089 = vmatpush1.msra.mxu0 %v6072
    %6090 = vmatprep.subr.mxu0 0.0
    %6091 = vmatpush1.msra.mxu0 %v6073
    %6092 = vmatprep.subr.mxu0 0.0
    %6093 = vmatpush1.msra.mxu0 %v6074
    %6094 = vmatprep.subr.mxu0 0.0
    %6095 = vmatpush1.msra.mxu0 %v6075
    %6096 = vmatprep.subr.mxu0 0.0
    %6097 = vmatpush1.msra.mxu0 %v6076
    %6098 = vmatprep.subr.mxu0 0.0
    %6099 = vmatpush1.msra.mxu0 %v6077
    %6100 = vmatprep.subr.mxu0 0.0
    %6101 = vmatpush1.msra.mxu0 %v6078
    %6102 = vmatprep.subr.mxu0 0.0
    %6103 = vmatpush1.msra.mxu0 %v6079
    %6104 = vmatprep.subr.mxu0 0.0
    %6105 = vmatpush1.msra.mxu0 %v6080
    %6106 = vmatprep.subr.mxu0 0.0
    %6107 = vmatpush1.msra.mxu0 %v6081
    %6108 = vmatprep.subr.mxu0 0.0
    %6109 = vmatpush1.msra.mxu0 %v6082
    %6110 = vmatprep.subr.mxu0 0.0
    %6111 = vmatpush1.msra.mxu0 %v6083
    %6112 = vmatprep.subr.mxu0 0.0
    %6113 = vmatpush1.msra.mxu0 %v6084
    %6114 = vmatprep.subr.mxu0 0.0
    %6115 = vmatpush1.msra.mxu0 %v6085
    %6116 = vmatprep.subr.mxu0 0.0
    %6117 = vmatpush1.msra.mxu0 %v6086
    %6118 = vmatprep.subr.mxu0 0.0
    %6119 = vmatpush1.msra.mxu0 %v6087
    %6120 = vmatprep.subr.mxu0 0.0
    %6121 = vmatpush1.msra.mxu0 0.0
    %6122 = vmatprep.subr.mxu0 0.0
    %6123 = vmatpush1.msra.mxu0 0.0
    %6124 = vmatprep.subr.mxu0 0.0
    %6125 = vmatpush1.msra.mxu0 0.0
    %6126 = vmatprep.subr.mxu0 0.0
    %6127 = vmatpush1.msra.mxu0 0.0
    %6128 = vmatprep.subr.mxu0 0.0
    %6129 = vmatpush1.msra.mxu0 0.0
    %6130 = vmatprep.subr.mxu0 0.0
    %6131 = vmatpush1.msra.mxu0 0.0
    %6132 = vmatprep.subr.mxu0 0.0
    %6133 = vmatpush1.msra.mxu0 0.0
    %6134 = vmatprep.subr.mxu0 0.0
    %6135 = vmatpush1.msra.mxu0 0.0
    %6136 = vmatprep.subr.mxu0 0.0
    %6137 = vmatpush1.msra.mxu0 0.0
    %6138 = vmatprep.subr.mxu0 0.0
    %6139 = vmatpush1.msra.mxu0 0.0
    %6140 = vmatprep.subr.mxu0 0.0
    %6141 = vmatpush1.msra.mxu0 0.0
    %6142 = vmatprep.subr.mxu0 0.0
    %6143 = vmatpush1.msra.mxu0 0.0
    %6144 = vmatprep.subr.mxu0 0.0
    %6145 = vmatpush1.msra.mxu0 0.0
    %6146 = vmatprep.subr.mxu0 0.0
    %6147 = vmatpush1.msra.mxu0 0.0
    %6148 = vmatprep.subr.mxu0 0.0
    %6149 = vmatpush1.msra.mxu0 0.0
    %6150 = vmatprep.subr.mxu0 0.0
    %6151 = vmatpush1.msra.mxu0 0.0
    %6152 = vmatprep.mubr.f32.mxu0 0.0
    %6153 = vmatmul.mubr.f32.gmra.mrb[0].mxu0 %v5936
    %v6154 = vpop.f32.mrb[0].mxu0
    %v6155 = vadd.f32 0.0, %v6154
    %v6156 = vpop.f32.mrb[0].mxu0
    %6157 = vmatprep.mubr.f32.mxu0 0.0
    %6158 = vmatmul.mubr.f32.gmra.mrb[0].mxu0 %v5938
    %v6159 = vpop.f32.mrb[0].mxu0
    %v6160 = vadd.f32 0.0, %v6159
    %v6161 = vpop.f32.mrb[0].mxu0
    %6162 = vmatprep.mubr.f32.mxu0 0.0
    %6163 = vmatmul.mubr.f32.gmra.mrb[0].mxu0 %v5940
    %v6164 = vpop.f32.mrb[0].mxu0
    %v6165 = vadd.f32 0.0, %v6164
    %v6166 = vpop.f32.mrb[0].mxu0
    %6167 = vmatprep.mubr.f32.mxu0 0.0
    %6168 = vmatmul.mubr.f32.gmra.mrb[0].mxu0 %v5942
    %v6169 = vpop.f32.mrb[0].mxu0
    %v6170 = vadd.f32 0.0, %v6169
    %v6171 = vpop.f32.mrb[0].mxu0
    %6172 = vmatprep.mubr.f32.mxu0 0.0
    %6173 = vmatmul.mubr.f32.gmra.mrb[0].mxu0 %v5944
    %v6174 = vpop.f32.mrb[0].mxu0
    %v6175 = vadd.f32 0.0, %v6174
    %v6176 = vpop.f32.mrb[0].mxu0
    %6177 = vmatprep.mubr.f32.mxu0 0.0
    %6178 = vmatmul.mubr.f32.gmra.mrb[0].mxu0 %v5946
    %v6179 = vpop.f32.mrb[0].mxu0
    %v6180 = vadd.f32 0.0, %v6179
    %v6181 = vpop.f32.mrb[0].mxu0
    %6182 = vmatprep.mubr.f32.mxu0 0.0
    %6183 = vmatmul.mubr.f32.gmra.mrb[0].mxu0 %v5948
    %v6184 = vpop.f32.mrb[0].mxu0
    %v6185 = vadd.f32 0.0, %v6184
    %v6186 = vpop.f32.mrb[0].mxu0
    %6187 = vmatprep.mubr.f32.mxu0 0.0
    %6188 = vmatmul.mubr.f32.gmra.mrb[0].mxu0 %v5950
    %v6189 = vpop.f32.mrb[0].mxu0
    %v6190 = vadd.f32 0.0, %v6189
    %v6191 = vpop.f32.mrb[0].mxu0
    %6192 = vdwg.mxu0
    %v6193 = vrcp.pop %v6155
    %v6194 = vrcp.pop %v6160
    %v6195 = vrcp.pop %v6165
    %v6196 = vrcp.pop %v6170
    %v6197 = vrcp.pop %v6175
    %v6198 = vrcp.pop %v6180
    %v6199 = vrcp.pop %v6185
    %v6200 = vrcp.pop %v6190
    %6202 = vset.pattern.permute.xlu0 0
    %6203 = vperm.xlu0 %6202, %v6193
    %v6204 = vpop.permute.xlu0 %6203
    %6207 = vset.pattern.permute.xlu0 0
    %6208 = vperm.xlu0 %6207, %v6194
    %v6209 = vpop.permute.xlu0 %6208
    %6212 = vset.pattern.permute.xlu0 0
    %6213 = vperm.xlu0 %6212, %v6195
    %v6214 = vpop.permute.xlu0 %6213
    %6217 = vset.pattern.permute.xlu0 0
    %6218 = vperm.xlu0 %6217, %v6196
    %v6219 = vpop.permute.xlu0 %6218
    %6222 = vset.pattern.permute.xlu0 0
    %6223 = vperm.xlu0 %6222, %v6197
    %v6224 = vpop.permute.xlu0 %6223
    %6227 = vset.pattern.permute.xlu0 0
    %6228 = vperm.xlu0 %6227, %v6198
    %v6229 = vpop.permute.xlu0 %6228
    %6232 = vset.pattern.permute.xlu0 0
    %6233 = vperm.xlu0 %6232, %v6199
    %v6234 = vpop.permute.xlu0 %6233
    %6237 = vset.pattern.permute.xlu0 0
    %6238 = vperm.xlu0 %6237, %v6200
    %v6239 = vpop.permute.xlu0 %6238
    %v6241 = vmul.f32 %v6034, %v6204
    %v6242 = vmul.f32 %v6039, %v6209
    %v6243 = vmul.f32 %v6044, %v6214
    %v6244 = vmul.f32 %v6049, %v6219
    %v6245 = vmul.f32 %v6054, %v6224
    %v6246 = vmul.f32 %v6059, %v6229
    %v6247 = vmul.f32 %v6064, %v6234
    %v6248 = vmul.f32 %v6069, %v6239
    %v6249 = vld [vmem:[%s15] sm:$0x1]
    %v6251 = vlaneseq
    %v6252 = vshrl.u32 %v6251, 7
    %v6253 = vsub.s32 0, %v6252
    %v6254 = vrot.slane %v6249, %v6253
    %v6256 = vadd.f32 %v6241, %v6254
    %v6257 = vadd.f32 %v6242, %v6254
    %v6258 = vadd.f32 %v6243, %v6254
    %v6259 = vadd.f32 %v6244, %v6254
    %v6260 = vadd.f32 %v6245, %v6254
    %v6261 = vadd.f32 %v6246, %v6254
    %v6262 = vadd.f32 %v6247, %v6254
    %v6263 = vadd.f32 %v6248, %v6254
    %6264 = vst [vmem:[#allocation5] sm:$0xff] %v6256
    %6265 = vst [vmem:[#allocation5 + $0x8] sm:$0xff] %v6257
    %6266 = vst [vmem:[#allocation5 + $0x10] sm:$0xff] %v6258
    %6267 = vst [vmem:[#allocation5 + $0x18] sm:$0xff] %v6259
    %6268 = vst [vmem:[#allocation5 + $0x20] sm:$0xff] %v6260
    %6269 = vst [vmem:[#allocation5 + $0x28] sm:$0xff] %v6261
    %6270 = vst [vmem:[#allocation5 + $0x30] sm:$0xff] %v6262
    %6271 = vst [vmem:[#allocation5 + $0x38] sm:$0xff] %v6263
    // Predicated region
    $region66: #{gat_forward.1} parent=1 // pred_check
      _
    $region67: #{gat_forward.1} parent=1 // pred_check_branch
      %6273 = sbr.rel (0) target = $region69
    $region68: #{gat_forward.1} parent=1 // pred_region
      %s6275 = ssub.s32 1024, 1024
      %6276 = vsyncadd [#allocation6], %s6275
      %s6277 = sshll.u32 [#allocation5], 4
      %s6278 = int_to_ptr.vmem [resolvable:$true] %s6277
      %6283 = dma.vmem_to_hbm [thread:$0]  %s6278, 1024, %s16, [#allocation6], 128, 128, 8
    $region69: #{gat_forward.1} parent=1 // pred_fallthru
      _
    // Predicated region
    $region70: #{gat_forward.1} parent=1 // pred_check
      _
    $region71: #{gat_forward.1} parent=1 // pred_check_branch
      %6285 = sbr.rel (0) target = $region73
    $region72: #{gat_forward.1} parent=1 // pred_region
      %6286 = dma.done [#allocation6], 1024
    $region73: #{gat_forward.1} parent=1 // pred_fallthru
      _
    %6287 = vsyncpa [#allocation6], 1

</llo_original>
